<compile_context>
chip_gen: v7x
topology: tpu7x:2x2x1
jax: 0.10.0
libtpu: 0.0.40
codegen_flags: <defaults>
</compile_context>

<pallas_src>
from math import exp

import numpy as np
import jax
import jax.numpy as jnp
from jax import lax
from jax.experimental import pallas as pl
from jax.experimental.pallas import tpu as pltpu

WINDOW_SIZE = 11
PAD = WINDOW_SIZE // 2
SIGMA = 1.5
C1 = 0.01 ** 2
C2 = 0.03 ** 2


def _gaussian_1d(window_size=WINDOW_SIZE, sigma=SIGMA):
    # Matches torch's gaussian(): normalized 1-D gaussian.
    g = np.array(
        [exp(-((x - window_size // 2) ** 2) / float(2 * sigma ** 2))
         for x in range(window_size)],
        dtype=np.float64,
    )
    return g / g.sum()


_G1D = _gaussian_1d()


def _band_matrix(n):
    """Banded matrix M with M[a, b] = g[b - a + PAD] for |a-b| <= PAD else 0.

    Right-multiplying (rows, n) @ M == 1-D "same" zero-padded gaussian conv
    along the last axis; left-multiplying M @ (n, cols) == the same conv along
    the first axis (M is symmetric because the gaussian is).
    """
    idx = np.arange(n)
    k = idx[None, :] - idx[:, None] + PAD
    valid = (k >= 0) & (k < WINDOW_SIZE)
    m = np.where(valid, _G1D[np.clip(k, 0, WINDOW_SIZE - 1)], 0.0)
    return m.astype(np.float32)


def _ssim_kernel(img1_ref, img2_ref, vbd_ref, hbd_ref, out_ref):
    """Blocks: img1/img2 = (P*H, W); vbd = (P*H, P*H) block-diag vertical band;
    hbd = (W, W) horizontal band; out = (P*H, 1) per-row SSIM sums."""
    x = img1_ref[...]                    # (PH, W) f32
    y = img2_ref[...]
    vbd = vbd_ref[...]                   # (PH, PH)
    hbd = hbd_ref[...]                   # (W, W)

    def gfilt(q):
        # Horizontal "same" conv along W as a banded matmul (MXU).
        h = jnp.dot(q, hbd, preferred_element_type=jnp.float32,
                    precision=lax.Precision.HIGHEST)
        # Vertical "same" conv along H: planes are stacked on the row axis, so
        # left-multiply by the block-diagonal I_P (x) VB band (MXU).
        return jnp.dot(vbd, h, preferred_element_type=jnp.float32,
                       precision=lax.Precision.HIGHEST)

    mu1 = gfilt(x)
    mu2 = gfilt(y)
    s11 = gfilt(x * x)
    s22 = gfilt(y * y)
    s12 = gfilt(x * y)

    mu1_sq = mu1 * mu1
    mu2_sq = mu2 * mu2
    mu1_mu2 = mu1 * mu2
    sigma1_sq = s11 - mu1_sq
    sigma2_sq = s22 - mu2_sq
    sigma12 = s12 - mu1_mu2

    num = (2.0 * mu1_mu2 + C1) * (2.0 * sigma12 + C2)
    den = (mu1_sq + mu2_sq + C1) * (sigma1_sq + sigma2_sq + C2)
    # EUP approximate reciprocal + one Newton step (~f32 accurate, keeps the
    # divide off the VPU).
    r = pl.reciprocal(den, approx=True)
    r = r * (2.0 - den * r)
    ssim_map = num * r

    # In-kernel spatial reduction over the lane axis: per-row sums only.
    out_ref[...] = jnp.sum(ssim_map, axis=1, keepdims=True)   # (PH, 1)


def _round_up(v, m):
    return -(-v // m) * m


def _tile_bytes(rows, cols, itemsize=4):
    """f32 VMEM footprint of a (rows, cols) buffer after (8,128) tile padding."""
    return _round_up(max(rows, 1), 8) * _round_up(max(cols, 1), 128) * itemsize


def _pick_planes_per_step(B, H, W, vmem_budget_bytes=24 * 1024 * 1024,
                          max_block_rows=512):
    """Planes per grid step, with (8,128)-tile-padding-aware VMEM accounting.

    Budgeted for v7x's 64 MiB VMEM (v5e/v6e have >= 128 MiB of headroom);
    caps P*H so the block-diagonal vertical band stays small/MXU-friendly;
    keeps >= 2 grid steps (and prefers an even count) so a dual-TensorCore
    chip balances work across both cores.
    """
    best = 1
    p_cap = max(1, min(B, max_block_rows // max(H, 1)))
    for p in range(1, p_cap + 1):
        ph = p * H
        if ph % 8 != 0 and p != B:
            continue                      # BlockSpec sublane divisibility
        need = (2 * 2 * _tile_bytes(ph, W)   # two inputs, double-buffered
                + 2 * _tile_bytes(ph, 1)     # output block
                + 2 * _tile_bytes(ph, ph)    # block-diag vertical band
                + 2 * _tile_bytes(W, W)      # horizontal band
                + 16 * _tile_bytes(ph, W))   # live temporaries inside the body
        if need <= vmem_budget_bytes:
            best = p
    best = min(best, max(1, (B + 1) // 2))   # >= 2 grid steps when possible
    while best > 1 and (best * H) % 8 != 0:
        best -= 1
    # Prefer an even number of grid steps so the "parallel" axis load-balances
    # across both TensorCores on v7x.
    nblocks = -(-B // best)
    if nblocks > 1 and nblocks % 2 == 1:
        alt = -(-B // (nblocks + 1))
        if alt >= 1 and (alt * H) % 8 == 0:
            best = alt
    return int(best)


def ssim_loss(img1, img2, size_average=True):
    """Equivalent of SSIM().forward(img1, img2) == 1 - ssim(img1, img2)."""
    N, C, H, W = img1.shape
    B = N * C
    # NCHW row-major flattens to (B*H, W) with zero data movement; planes are
    # contiguous groups of H rows -> they stack on the matmul M dimension.
    x1 = img1.reshape(B * H, W).astype(jnp.float32)
    x2 = img2.reshape(B * H, W).astype(jnp.float32)

    P = _pick_planes_per_step(B, H, W)
    nblocks = -(-B // P)                # cdiv
    B_pad = nblocks * P
    if B_pad != B:
        pad_rows = (B_pad - B) * H
        # Zero planes give ssim == 1 everywhere; they are sliced off below.
        x1 = jnp.pad(x1, ((0, pad_rows), (0, 0)))
        x2 = jnp.pad(x2, ((0, pad_rows), (0, 0)))

    PH = P * H
    vb = _band_matrix(H)                            # (H, H) vertical band
    hbd = jnp.asarray(_band_matrix(W))              # (W, W) horizontal band
    vbd = jnp.asarray(np.kron(np.eye(P, dtype=np.float32), vb))  # (PH, PH)

    # TODO(synk): spatial halo tiling (H strips with 2*PAD row overlap and
    # per-strip band matrices) for planes too large to fit a block in VMEM.

    row_sums = pl.pallas_call(
        _ssim_kernel,
        out_shape=jax.ShapeDtypeStruct((B_pad * H, 1), jnp.float32),
        grid_spec=pltpu.PrefetchScalarGridSpec(
            num_scalar_prefetch=0,
            grid=(nblocks,),
            in_specs=[
                pl.BlockSpec((PH, W), lambda i: (i, 0)),
                pl.BlockSpec((PH, W), lambda i: (i, 0)),
                pl.BlockSpec((PH, PH), lambda i: (0, 0)),   # constant band
                pl.BlockSpec((W, W), lambda i: (0, 0)),     # constant band
            ],
            out_specs=pl.BlockSpec((PH, 1), lambda i: (i, 0)),
        ),
        compiler_params=pltpu.CompilerParams(
            dimension_semantics=("parallel",),
            vmem_limit_bytes=48 * 1024 * 1024,
        ),
    )(x1, x2, vbd, hbd)

    plane_sums = row_sums[:B * H, 0].reshape(B, H).sum(axis=1)   # (B,)
    plane_means = plane_sums / float(H * W)
    if size_average:
        # torch: 1 - ssim_map.mean()
        return 1.0 - jnp.mean(plane_means)
    else:
        # torch: 1 - ssim_map.mean(1).mean(1).mean(1)  -> shape (N,)
        return 1.0 - jnp.mean(plane_means.reshape(N, C), axis=1)


# ----------------------------- numpy reference ------------------------------
def _conv_same_np(x, w2d):
    H, W = x.shape
    ws = w2d.shape[0]
    pad = ws // 2
    xp = np.pad(x, pad)
    out = np.zeros((H, W), dtype=np.float64)
    for ky in range(ws):
        for kx in range(ws):
            out += w2d[ky, kx] * xp[ky:ky + H, kx:kx + W]
    return out


def _ssim_maps_ref(img1, img2):
    a4 = np.asarray(img1, dtype=np.float64)
    b4 = np.asarray(img2, dtype=np.float64)
    w2d = np.outer(_G1D, _G1D)
    N, C, H, W = a4.shape
    maps = np.zeros_like(a4)
    for n in range(N):
        for c in range(C):
            a, b = a4[n, c], b4[n, c]
            mu1 = _conv_same_np(a, w2d)
            mu2 = _conv_same_np(b, w2d)
            s11 = _conv_same_np(a * a, w2d) - mu1 ** 2
            s22 = _conv_same_np(b * b, w2d) - mu2 ** 2
            s12 = _conv_same_np(a * b, w2d) - mu1 * mu2
            maps[n, c] = ((2 * mu1 * mu2 + C1) * (2 * s12 + C2)) / (
                (mu1 ** 2 + mu2 ** 2 + C1) * (s11 + s22 + C2))
    return maps


if __name__ == "__main__":
    key = jax.random.PRNGKey(0)
    k1, k2 = jax.random.split(key)
    # SMALL shapes consistent with the module's NCHW forward.
    img1 = jax.random.uniform(k1, (2, 4, 16, 16), dtype=jnp.float32)
    img2 = jax.random.uniform(k2, (2, 4, 16, 16), dtype=jnp.float32)

    loss = jax.block_until_ready(ssim_loss(img1, img2, size_average=True))
    loss_per_batch = jax.block_until_ready(ssim_loss(img1, img2, size_average=False))

    assert loss.shape == () and bool(jnp.isfinite(loss))
    assert loss_per_batch.shape == (2,)

    # correctness check against a plain numpy reference of the torch module
    maps_ref = _ssim_maps_ref(np.asarray(img1), np.asarray(img2))
    ref_avg = 1.0 - maps_ref.mean()
    ref_per_batch = 1.0 - maps_ref.mean(axis=(1, 2, 3))
    assert np.allclose(np.asarray(loss), ref_avg, atol=1e-4), (loss, ref_avg)
    assert np.allclose(np.asarray(loss_per_batch), ref_per_batch, atol=1e-4)

    print("KERNEL_OK")
</pallas_src>

<mosaic_0001>
module attributes {stable_mosaic.version = 11 : i64} {
  func.func @_ssim_kernel(%arg0: i32, %arg1: memref<64x16xf32, #tpu.memory_space<vmem>>, %arg2: memref<64x16xf32, #tpu.memory_space<vmem>>, %arg3: memref<64x64xf32, #tpu.memory_space<vmem>>, %arg4: memref<16x16xf32, #tpu.memory_space<vmem>>, %arg5: memref<64x1xf32, #tpu.memory_space<vmem>>) attributes {dimension_semantics = [#tpu.dimension_semantics<parallel>], iteration_bounds = array<i64: 2>, scalar_prefetch = 0 : i64, scratch_operands = 0 : i64, tpu.core_type = #tpu.core_type<tc>, window_params = [{transform_indices = @transform_0, window_bounds = array<i64: 64, 16>}, {transform_indices = @transform_1, window_bounds = array<i64: 64, 16>}, {pipeline_mode = #tpu.pipeline_mode<synchronous>, transform_indices = @transform_2, window_bounds = array<i64: 64, 64>}, {pipeline_mode = #tpu.pipeline_mode<synchronous>, transform_indices = @transform_3, window_bounds = array<i64: 16, 16>}, {transform_indices = @transform_4, window_bounds = array<i64: 64, 1>}]} {
    %c0 = arith.constant 0 : index
    %c0_0 = arith.constant 0 : index
    %0 = vector.load %arg1[%c0, %c0_0] : memref<64x16xf32, #tpu.memory_space<vmem>>, vector<64x16xf32>
    %c0_1 = arith.constant 0 : index
    %c0_2 = arith.constant 0 : index
    %1 = vector.load %arg2[%c0_1, %c0_2] : memref<64x16xf32, #tpu.memory_space<vmem>>, vector<64x16xf32>
    %c0_3 = arith.constant 0 : index
    %c0_4 = arith.constant 0 : index
    %2 = vector.load %arg3[%c0_3, %c0_4] : memref<64x64xf32, #tpu.memory_space<vmem>>, vector<64x64xf32>
    %c0_5 = arith.constant 0 : index
    %c0_6 = arith.constant 0 : index
    %3 = vector.load %arg4[%c0_5, %c0_6] : memref<16x16xf32, #tpu.memory_space<vmem>>, vector<16x16xf32>
    %cst = arith.constant dense<0.000000e+00> : vector<64x16xf32>
    %4 = tpu.matmul %0, %3, %cst {dimension_numbers = #tpu.dot_dimension_numbers<[1], [0], [0], [1], [0, 0, 1, 1], [], []>, precision = #tpu.contract_precision<fp32>} : vector<64x16xf32>, vector<16x16xf32>, vector<64x16xf32> -> vector<64x16xf32>
    %cst_7 = arith.constant dense<0.000000e+00> : vector<64x16xf32>
    %5 = tpu.matmul %2, %4, %cst_7 {dimension_numbers = #tpu.dot_dimension_numbers<[1], [0], [0], [1], [0, 0, 1, 1], [], []>, precision = #tpu.contract_precision<fp32>} : vector<64x64xf32>, vector<64x16xf32>, vector<64x16xf32> -> vector<64x16xf32>
    %cst_8 = arith.constant dense<0.000000e+00> : vector<64x16xf32>
    %6 = tpu.matmul %1, %3, %cst_8 {dimension_numbers = #tpu.dot_dimension_numbers<[1], [0], [0], [1], [0, 0, 1, 1], [], []>, precision = #tpu.contract_precision<fp32>} : vector<64x16xf32>, vector<16x16xf32>, vector<64x16xf32> -> vector<64x16xf32>
    %cst_9 = arith.constant dense<0.000000e+00> : vector<64x16xf32>
    %7 = tpu.matmul %2, %6, %cst_9 {dimension_numbers = #tpu.dot_dimension_numbers<[1], [0], [0], [1], [0, 0, 1, 1], [], []>, precision = #tpu.contract_precision<fp32>} : vector<64x64xf32>, vector<64x16xf32>, vector<64x16xf32> -> vector<64x16xf32>
    %8 = arith.mulf %0, %0 : vector<64x16xf32>
    %cst_10 = arith.constant dense<0.000000e+00> : vector<64x16xf32>
    %9 = tpu.matmul %8, %3, %cst_10 {dimension_numbers = #tpu.dot_dimension_numbers<[1], [0], [0], [1], [0, 0, 1, 1], [], []>, precision = #tpu.contract_precision<fp32>} : vector<64x16xf32>, vector<16x16xf32>, vector<64x16xf32> -> vector<64x16xf32>
    %cst_11 = arith.constant dense<0.000000e+00> : vector<64x16xf32>
    %10 = tpu.matmul %2, %9, %cst_11 {dimension_numbers = #tpu.dot_dimension_numbers<[1], [0], [0], [1], [0, 0, 1, 1], [], []>, precision = #tpu.contract_precision<fp32>} : vector<64x64xf32>, vector<64x16xf32>, vector<64x16xf32> -> vector<64x16xf32>
    %11 = arith.mulf %1, %1 : vector<64x16xf32>
    %cst_12 = arith.constant dense<0.000000e+00> : vector<64x16xf32>
    %12 = tpu.matmul %11, %3, %cst_12 {dimension_numbers = #tpu.dot_dimension_numbers<[1], [0], [0], [1], [0, 0, 1, 1], [], []>, precision = #tpu.contract_precision<fp32>} : vector<64x16xf32>, vector<16x16xf32>, vector<64x16xf32> -> vector<64x16xf32>
    %cst_13 = arith.constant dense<0.000000e+00> : vector<64x16xf32>
    %13 = tpu.matmul %2, %12, %cst_13 {dimension_numbers = #tpu.dot_dimension_numbers<[1], [0], [0], [1], [0, 0, 1, 1], [], []>, precision = #tpu.contract_precision<fp32>} : vector<64x64xf32>, vector<64x16xf32>, vector<64x16xf32> -> vector<64x16xf32>
    %14 = arith.mulf %0, %1 : vector<64x16xf32>
    %cst_14 = arith.constant dense<0.000000e+00> : vector<64x16xf32>
    %15 = tpu.matmul %14, %3, %cst_14 {dimension_numbers = #tpu.dot_dimension_numbers<[1], [0], [0], [1], [0, 0, 1, 1], [], []>, precision = #tpu.contract_precision<fp32>} : vector<64x16xf32>, vector<16x16xf32>, vector<64x16xf32> -> vector<64x16xf32>
    %cst_15 = arith.constant dense<0.000000e+00> : vector<64x16xf32>
    %16 = tpu.matmul %2, %15, %cst_15 {dimension_numbers = #tpu.dot_dimension_numbers<[1], [0], [0], [1], [0, 0, 1, 1], [], []>, precision = #tpu.contract_precision<fp32>} : vector<64x64xf32>, vector<64x16xf32>, vector<64x16xf32> -> vector<64x16xf32>
    %17 = arith.mulf %5, %5 : vector<64x16xf32>
    %18 = arith.mulf %7, %7 : vector<64x16xf32>
    %19 = arith.mulf %5, %7 : vector<64x16xf32>
    %20 = arith.subf %10, %17 : vector<64x16xf32>
    %21 = arith.subf %13, %18 : vector<64x16xf32>
    %22 = arith.subf %16, %19 : vector<64x16xf32>
    %cst_16 = arith.constant 2.000000e+00 : f32
    %23 = vector.broadcast %cst_16 : f32 to vector<64x16xf32>
    %24 = arith.mulf %23, %19 : vector<64x16xf32>
    %cst_17 = arith.constant 9.99999974E-5 : f32
    %25 = vector.broadcast %cst_17 : f32 to vector<64x16xf32>
    %26 = arith.addf %24, %25 : vector<64x16xf32>
    %cst_18 = arith.constant 2.000000e+00 : f32
    %27 = vector.broadcast %cst_18 : f32 to vector<64x16xf32>
    %28 = arith.mulf %27, %22 : vector<64x16xf32>
    %cst_19 = arith.constant 8.99999984E-4 : f32
    %29 = vector.broadcast %cst_19 : f32 to vector<64x16xf32>
    %30 = arith.addf %28, %29 : vector<64x16xf32>
    %31 = arith.mulf %26, %30 : vector<64x16xf32>
    %32 = arith.addf %17, %18 : vector<64x16xf32>
    %cst_20 = arith.constant 9.99999974E-5 : f32
    %33 = vector.broadcast %cst_20 : f32 to vector<64x16xf32>
    %34 = arith.addf %32, %33 : vector<64x16xf32>
    %35 = arith.addf %20, %21 : vector<64x16xf32>
    %cst_21 = arith.constant 8.99999984E-4 : f32
    %36 = vector.broadcast %cst_21 : f32 to vector<64x16xf32>
    %37 = arith.addf %35, %36 : vector<64x16xf32>
    %38 = arith.mulf %34, %37 : vector<64x16xf32>
    %39 = tpu.reciprocal %38 {approx = true} : vector<64x16xf32> -> vector<64x16xf32>
    %40 = arith.mulf %38, %39 : vector<64x16xf32>
    %cst_22 = arith.constant 2.000000e+00 : f32
    %41 = vector.broadcast %cst_22 : f32 to vector<64x16xf32>
    %42 = arith.subf %41, %40 : vector<64x16xf32>
    %43 = arith.mulf %39, %42 : vector<64x16xf32>
    %44 = arith.mulf %31, %43 : vector<64x16xf32>
    %cst_23 = arith.constant dense<0.000000e+00> : vector<64xf32>
    %45 = vector.multi_reduction <add>, %44, %cst_23 [1] : vector<64x16xf32> to vector<64xf32>
    %46 = vector.shape_cast %45 : vector<64xf32> to vector<64x1xf32>
    %c0_24 = arith.constant 0 : index
    %c0_25 = arith.constant 0 : index
    %47 = vector.load %arg5[%c0_24, %c0_25] : memref<64x1xf32, #tpu.memory_space<vmem>>, vector<64x1xf32>
    tpu.vector_store %arg5[%c0_24, %c0_25], %46 {strides = array<i32>} : memref<64x1xf32, #tpu.memory_space<vmem>>, vector<64x1xf32>,
    return
  }
  func.func @transform_0(%arg0: i32) -> (i32, i32) {
    %c0_i32 = arith.constant 0 : i32
    %c0_i32_0 = arith.constant 0 : i32
    return %arg0, %c0_i32 : i32, i32
  }
  func.func @transform_1(%arg0: i32) -> (i32, i32) {
    %c0_i32 = arith.constant 0 : i32
    %c0_i32_0 = arith.constant 0 : i32
    return %arg0, %c0_i32 : i32, i32
  }
  func.func @transform_2(%arg0: i32) -> (i32, i32) {
    %c0_i32 = arith.constant 0 : i32
    %c0_i32_0 = arith.constant 0 : i32
    %c0_i32_1 = arith.constant 0 : i32
    return %c0_i32, %c0_i32_0 : i32, i32
  }
  func.func @transform_3(%arg0: i32) -> (i32, i32) {
    %c0_i32 = arith.constant 0 : i32
    %c0_i32_0 = arith.constant 0 : i32
    %c0_i32_1 = arith.constant 0 : i32
    return %c0_i32, %c0_i32_0 : i32, i32
  }
  func.func @transform_4(%arg0: i32) -> (i32, i32) {
    %c0_i32 = arith.constant 0 : i32
    %c0_i32_0 = arith.constant 0 : i32
    return %arg0, %c0_i32 : i32, i32
  }
}

</mosaic_0001>

<llo_original>
// kernel: tpu_custom_call.1
$region0: #{tpu_custom_call.1}
  #allocation0 [shape = 'u32[]', space=smem, size = 0x4, offset = 0x4, fixed_abs, tag = 'smem constant byte address 0x4 - core index']
  #allocation1 [shape = 'u32[144,128]{1,0:T(1,128)}', space=vmem, size = 0x12000, scoped, tag = 'internal scratch']
  %s0 = inlined_call_operand.vmem [shape: f32[128,16], index: 0, kind: input, shape index: {}]
  %s1 = inlined_call_operand.vmem [shape: f32[128,16], index: 1, kind: input, shape index: {}]
  %s2 = inlined_call_operand.vmem [shape: f32[64,64], index: 2, kind: input, shape index: {}]
  %s3 = inlined_call_operand.vmem [shape: f32[16,16], index: 3, kind: input, shape index: {}]
  %s4 = inlined_call_operand.vmem [shape: f32[128,1], index: 4, kind: output, shape index: {}]
  %s5 = sld [smem:[#allocation0]]
  $region49: #{tpu_custom_call.1} parent=0
    _
  %s7 = ssub.s32 1, %s5
  %s8 = scalar_select 0, %s7, %s5
  loop: start=0, step=1, limit=4
  $region2: #{tpu_custom_call.1} parent=0 // loop_pre_header
    _
  $region3: #{tpu_custom_call.1} parent=0 // loop_header
    %s10 = sphi 0, %s14
    %p11 = scmp.ge.s32.totalorder %s10, 4
    %s20 = sphi 0, %s22
    %s23 = sphi 0, %s20
    %s24 = sphi 0, %s23
    %s40 = sphi 0, %s24
    %s46 = sphi 0, %s48
    %s49 = sphi 0, %s46
    %s50 = sphi 0, %s49
    %s66 = sphi 0, %s50
    %s70 = sphi 0, %s70
    %s72 = sphi 0, %s70
    %s73 = sphi 0, %s72
    %s87 = sphi 0, %s73
    %s91 = sphi 0, %s91
    %s93 = sphi 0, %s91
    %s94 = sphi 0, %s93
    %s108 = sphi 0, %s94
    %s114 = sphi 0, %s116
    %s117 = sphi 0, %s114
    %s118 = sphi 0, %s117
    %s134 = sphi 0, %s118
  $region4: #{tpu_custom_call.1} parent=0 // loop_header_branch
    %13 = sbr.rel (%p11) target = $region8
  $region5: #{tpu_custom_call.1} parent=0 // loop_body
    %s15 = ssub.s32 %s10, 1
    %s16 = ssub.s32 %s10, 2
    %s17 = sadd.s32 %s10, 1
    %s18 = ssub.s32 %s10, %s17
    %p19 = scmp.eq.s32.totalorder %s18, 0
    %s21 = sadd.s32 %s20, 1
    %s22 = scalar_select %p19, %s20, %s21
    %p25 = pneg %p19
    %p26 = scmp.eq.s32.totalorder %s10, 1
    %p27 = por %p25, %p26
    %p28 = scmp.ne.s32.totalorder %s20, %s23
    %p29 = scmp.eq.s32.totalorder %s10, 0
    %p30 = por %p28, %p29
    %p31 = scmp.ne.s32.totalorder %s20, %s23
    %p32 = scmp.eq.s32.totalorder %s15, 1
    %p33 = por %p31, %p32
    %p34 = scmp.ne.s32.totalorder %s23, %s24
    %p35 = scmp.eq.s32.totalorder %s15, 0
    %p36 = por %p34, %p35
    %p37 = scmp.ne.s32.totalorder %s23, %s24
    %p38 = scmp.eq.s32.totalorder %s16, 1
    %p39 = por %p37, %p38
    %p41 = scmp.ne.s32.totalorder %s24, %s40
    %p42 = scmp.eq.s32.totalorder %s16, 0
    %p43 = por %p41, %p42
    %s44 = ssub.s32 %s10, %s17
    %p45 = scmp.eq.s32.totalorder %s44, 0
    %s47 = sadd.s32 %s46, 1
    %s48 = scalar_select %p45, %s46, %s47
    %p51 = pneg %p45
    %p52 = scmp.eq.s32.totalorder %s10, 1
    %p53 = por %p51, %p52
    %p54 = scmp.ne.s32.totalorder %s46, %s49
    %p55 = scmp.eq.s32.totalorder %s10, 0
    %p56 = por %p54, %p55
    %p57 = scmp.ne.s32.totalorder %s46, %s49
    %p58 = scmp.eq.s32.totalorder %s15, 1
    %p59 = por %p57, %p58
    %p60 = scmp.ne.s32.totalorder %s49, %s50
    %p61 = scmp.eq.s32.totalorder %s15, 0
    %p62 = por %p60, %p61
    %p63 = scmp.ne.s32.totalorder %s49, %s50
    %p64 = scmp.eq.s32.totalorder %s16, 1
    %p65 = por %p63, %p64
    %p67 = scmp.ne.s32.totalorder %s50, %s66
    %p68 = scmp.eq.s32.totalorder %s16, 0
    %p69 = por %p67, %p68
    %s71 = sadd.s32 %s70, 1
    %p74 = scmp.eq.s32.totalorder %s10, 1
    %p75 = scmp.ne.s32.totalorder %s70, %s72
    %p76 = scmp.eq.s32.totalorder %s10, 0
    %p77 = por %p75, %p76
    %p78 = scmp.ne.s32.totalorder %s70, %s72
    %p79 = scmp.eq.s32.totalorder %s15, 1
    %p80 = por %p78, %p79
    %p81 = scmp.ne.s32.totalorder %s72, %s73
    %p82 = scmp.eq.s32.totalorder %s15, 0
    %p83 = por %p81, %p82
    %p84 = scmp.ne.s32.totalorder %s72, %s73
    %p85 = scmp.eq.s32.totalorder %s16, 1
    %p86 = por %p84, %p85
    %p88 = scmp.ne.s32.totalorder %s73, %s87
    %p89 = scmp.eq.s32.totalorder %s16, 0
    %p90 = por %p88, %p89
    %s92 = sadd.s32 %s91, 1
    %p95 = scmp.eq.s32.totalorder %s10, 1
    %p96 = scmp.ne.s32.totalorder %s91, %s93
    %p97 = scmp.eq.s32.totalorder %s10, 0
    %p98 = por %p96, %p97
    %p99 = scmp.ne.s32.totalorder %s91, %s93
    %p100 = scmp.eq.s32.totalorder %s15, 1
    %p101 = por %p99, %p100
    %p102 = scmp.ne.s32.totalorder %s93, %s94
    %p103 = scmp.eq.s32.totalorder %s15, 0
    %p104 = por %p102, %p103
    %p105 = scmp.ne.s32.totalorder %s93, %s94
    %p106 = scmp.eq.s32.totalorder %s16, 1
    %p107 = por %p105, %p106
    %p109 = scmp.ne.s32.totalorder %s94, %s108
    %p110 = scmp.eq.s32.totalorder %s16, 0
    %p111 = por %p109, %p110
    %s112 = ssub.s32 %s10, %s17
    %p113 = scmp.eq.s32.totalorder %s112, 0
    %s115 = sadd.s32 %s114, 1
    %s116 = scalar_select %p113, %s114, %s115
    %p119 = pneg %p113
    %p120 = scmp.eq.s32.totalorder %s10, 1
    %p121 = por %p119, %p120
    %p122 = scmp.ne.s32.totalorder %s114, %s117
    %p123 = scmp.eq.s32.totalorder %s10, 0
    %p124 = por %p122, %p123
    %p125 = scmp.ne.s32.totalorder %s114, %s117
    %p126 = scmp.eq.s32.totalorder %s15, 1
    %p127 = por %p125, %p126
    %p128 = scmp.ne.s32.totalorder %s117, %s118
    %p129 = scmp.eq.s32.totalorder %s15, 0
    %p130 = por %p128, %p129
    %p131 = scmp.ne.s32.totalorder %s117, %s118
    %p132 = scmp.eq.s32.totalorder %s16, 1
    %p133 = por %p131, %p132
    %p135 = scmp.ne.s32.totalorder %s118, %s134
    %p136 = scmp.eq.s32.totalorder %s16, 0
    %p137 = por %p135, %p136
    %p138 = scmp.le.s32.totalorder 1, %s10
    %p139 = scmp.lt.s32.totalorder %s10, 3
    %p140 = pnand %p138, %p139
    %p141 = pneg %p140
    // Predicated region
    $region9: #{tpu_custom_call.1} parent=5 // pred_check
      _
    $region10: #{tpu_custom_call.1} parent=5 // pred_check_branch
      %143 = sbr.rel (%p140) target = $region12
    $region11: #{tpu_custom_call.1} parent=5 // pred_region
      %s144 = ssub.s32 %s10, 1
      // Predicated region
      $region13: #{tpu_custom_call.1} parent=11 // pred_check
        %p145 = pneg %p83
      $region14: #{tpu_custom_call.1} parent=11 // pred_check_branch
        %147 = sbr.rel (%p145) target = $region16
      $region15: #{tpu_custom_call.1} parent=11 // pred_region
        _
      $region16: #{tpu_custom_call.1} parent=11 // pred_fallthru
        _
      // Predicated region
      $region17: #{tpu_custom_call.1} parent=11 // pred_check
        %p148 = pneg %p104
      $region18: #{tpu_custom_call.1} parent=11 // pred_check_branch
        %150 = sbr.rel (%p148) target = $region20
      $region19: #{tpu_custom_call.1} parent=11 // pred_region
        _
      $region20: #{tpu_custom_call.1} parent=11 // pred_fallthru
        _
    $region12: #{tpu_custom_call.1} parent=5 // pred_fallthru
      _
    %p151 = scmp.lt.s32.totalorder %s10, 2
    // Predicated region
    $region21: #{tpu_custom_call.1} parent=5 // pred_check
      %p152 = pneg %p151
    $region22: #{tpu_custom_call.1} parent=5 // pred_check_branch
      %154 = sbr.rel (%p152) target = $region24
    $region23: #{tpu_custom_call.1} parent=5 // pred_region
      // Predicated region
      $region25: #{tpu_custom_call.1} parent=23 // pred_check
        %p155 = pneg %p30
      $region26: #{tpu_custom_call.1} parent=23 // pred_check_branch
        %157 = sbr.rel (%p155) target = $region28
      $region27: #{tpu_custom_call.1} parent=23 // pred_region
        %s158 = smul.u32 8, %s10
        %p159 = scmp.lt.s32.totalorder %s158, 15
        %s160 = scalar_select %p159, %s158, 15
        %s161 = smul.addr %s160, 8
        %s162 = scalar_lea.vmem %s0, %s161
        %s163 = smul.u32 8, %s10
      $region28: #{tpu_custom_call.1} parent=23 // pred_fallthru
        _
      // Predicated region
      $region29: #{tpu_custom_call.1} parent=23 // pred_check
        %p164 = pneg %p56
      $region30: #{tpu_custom_call.1} parent=23 // pred_check_branch
        %166 = sbr.rel (%p164) target = $region32
      $region31: #{tpu_custom_call.1} parent=23 // pred_region
        %s167 = smul.u32 8, %s10
        %p168 = scmp.lt.s32.totalorder %s167, 15
        %s169 = scalar_select %p168, %s167, 15
        %s170 = smul.addr %s169, 8
        %s171 = scalar_lea.vmem %s1, %s170
        %s172 = smul.u32 8, %s10
      $region32: #{tpu_custom_call.1} parent=23 // pred_fallthru
        _
    $region24: #{tpu_custom_call.1} parent=5 // pred_fallthru
      _
    %p173 = scmp.le.s32.totalorder 1, %s10
    %p174 = scmp.lt.s32.totalorder %s10, 3
    %p175 = pnand %p173, %p174
    %p176 = pneg %p175
    // Predicated region
    $region33: #{tpu_custom_call.1} parent=5 // pred_check
      _
    $region34: #{tpu_custom_call.1} parent=5 // pred_check_branch
      %178 = sbr.rel (%p175) target = $region36
    $region35: #{tpu_custom_call.1} parent=5 // pred_region
      %s179 = ssub.s32 %s10, 1
      %s180 = smul.u32 8, %s15
      %p181 = scmp.lt.s32.totalorder %s180, 15
      %s182 = scalar_select %p181, %s180, 15
      %s183 = smul.addr %s182, 8
      %s184 = scalar_lea.vmem %s0, %s183
      %p185 = pneg %p36
      %p186 = pneg %p33
      %s187 = smul.u32 8, %s15
      %p188 = scmp.lt.s32.totalorder %s187, 15
      %s189 = scalar_select %p188, %s187, 15
      %s190 = smul.addr %s189, 8
      %s191 = scalar_lea.vmem %s1, %s190
      %p192 = pneg %p62
      %p193 = pneg %p59
      %p194 = pneg %p83
      %p195 = pneg %p80
      %p196 = pneg %p104
      %p197 = pneg %p101
      %p198 = pneg %p130
      %p199 = pneg %p127
      %s200 = smul.u32 8, %s15
      %p201 = scmp.lt.s32.totalorder %s200, 15
      %s202 = scalar_select %p201, %s200, 15
      %s203 = smul.addr %s202, 8
      %s204 = scalar_lea.vmem %s4, %s203
      %s205 = smul.u32 8, %s15
      %p206 = scmp.lt.s32.totalorder %s205, 15
      %s207 = scalar_select %p206, %s205, 15
      %s208 = smul.addr %s207, 8
      %s209 = scalar_lea.vmem %s0, %s208
      %s210 = smul.u32 8, %s15
      %s211 = smul.u32 8, %s15
      %p212 = scmp.lt.s32.totalorder %s211, 15
      %s213 = scalar_select %p212, %s211, 15
      %s214 = smul.addr %s213, 8
      %s215 = scalar_lea.vmem %s1, %s214
      %s216 = smul.u32 8, %s15
      %s217 = smul.u32 8, %s15
      %p218 = scmp.lt.s32.totalorder %s217, 15
      %s219 = scalar_select %p218, %s217, 15
      %s220 = smul.addr %s219, 8
      %s221 = scalar_lea.vmem %s4, %s220
      %s222 = smul.u32 8, %s15
      %v223 = vld [vmem:[%s209] sm:$0xff]
      %v224 = vld [vmem:[%s209 + $0x8] sm:$0xff]
      %v225 = vld [vmem:[%s209 + $0x10] sm:$0xff]
      %v226 = vld [vmem:[%s209 + $0x18] sm:$0xff]
      %v227 = vld [vmem:[%s209 + $0x20] sm:$0xff]
      %v228 = vld [vmem:[%s209 + $0x28] sm:$0xff]
      %v229 = vld [vmem:[%s209 + $0x30] sm:$0xff]
      %v230 = vld [vmem:[%s209 + $0x38] sm:$0xff]
      %v231 = vld [vmem:[%s215] sm:$0xff]
      %v232 = vld [vmem:[%s215 + $0x8] sm:$0xff]
      %v233 = vld [vmem:[%s215 + $0x10] sm:$0xff]
      %v234 = vld [vmem:[%s215 + $0x18] sm:$0xff]
      %v235 = vld [vmem:[%s215 + $0x20] sm:$0xff]
      %v236 = vld [vmem:[%s215 + $0x28] sm:$0xff]
      %v237 = vld [vmem:[%s215 + $0x30] sm:$0xff]
      %v238 = vld [vmem:[%s215 + $0x38] sm:$0xff]
      %v239 = vld [vmem:[%s2] sm:$0xff]
      %v240 = vld [vmem:[%s2 + $0x8] sm:$0xff]
      %v241 = vld [vmem:[%s2 + $0x10] sm:$0xff]
      %v242 = vld [vmem:[%s2 + $0x18] sm:$0xff]
      %v243 = vld [vmem:[%s2 + $0x20] sm:$0xff]
      %v244 = vld [vmem:[%s2 + $0x28] sm:$0xff]
      %v245 = vld [vmem:[%s2 + $0x30] sm:$0xff]
      %v246 = vld [vmem:[%s2 + $0x38] sm:$0xff]
      %v247 = vld [vmem:[%s3] sm:$0xff]
      %v248 = vld [vmem:[%s3 + $0x8] sm:$0xff]
      %vm249 = vcmask 130048
      %v251 = vsel %vm249, %v223, 0
      %v254 = vsel %vm249, %v224, 0
      %v257 = vsel %vm249, %v225, 0
      %v260 = vsel %vm249, %v226, 0
      %v263 = vsel %vm249, %v227, 0
      %v266 = vsel %vm249, %v228, 0
      %v269 = vsel %vm249, %v229, 0
      %v272 = vsel %vm249, %v230, 0
      %274 = vmatprep.subr.mxu0 0.0
      %v275 = vand.u32 %v247, 4294901760
      %276 = vmatpush1.msra.mxu0 %v275
      %277 = vmatprep.subr.mxu0 0.0
      %v278 = vand.u32 %v248, 4294901760
      %279 = vmatpush1.msra.mxu0 %v278
      %280 = vmatprep.subr.mxu0 0.0
      %281 = vmatpush1.msra.mxu0 0.0
      %282 = vmatprep.subr.mxu0 0.0
      %283 = vmatpush1.msra.mxu0 0.0
      %284 = vmatprep.subr.mxu0 0.0
      %285 = vmatpush1.msra.mxu0 0.0
      %286 = vmatprep.subr.mxu0 0.0
      %287 = vmatpush1.msra.mxu0 0.0
      %288 = vmatprep.subr.mxu0 0.0
      %289 = vmatpush1.msra.mxu0 0.0
      %290 = vmatprep.subr.mxu0 0.0
      %291 = vmatpush1.msra.mxu0 0.0
      %292 = vmatprep.subr.mxu0 0.0
      %293 = vmatpush1.msra.mxu0 0.0
      %294 = vmatprep.subr.mxu0 0.0
      %295 = vmatpush1.msra.mxu0 0.0
      %296 = vmatprep.subr.mxu0 0.0
      %297 = vmatpush1.msra.mxu0 0.0
      %298 = vmatprep.subr.mxu0 0.0
      %299 = vmatpush1.msra.mxu0 0.0
      %300 = vmatprep.subr.mxu0 0.0
      %301 = vmatpush1.msra.mxu0 0.0
      %302 = vmatprep.subr.mxu0 0.0
      %303 = vmatpush1.msra.mxu0 0.0
      %304 = vmatprep.subr.mxu0 0.0
      %305 = vmatpush1.msra.mxu0 0.0
      %306 = vmatprep.subr.mxu0 0.0
      %307 = vmatpush1.msra.mxu0 0.0
      %308 = vmatprep.subr.mxu0 0.0
      %309 = vmatpush1.msra.mxu0 0.0
      %310 = vmatprep.subr.mxu0 0.0
      %311 = vmatpush1.msra.mxu0 0.0
      %312 = vmatprep.subr.mxu0 0.0
      %313 = vmatpush1.msra.mxu0 0.0
      %314 = vmatprep.subr.mxu0 0.0
      %315 = vmatpush1.msra.mxu0 0.0
      %316 = vmatprep.subr.mxu0 0.0
      %317 = vmatpush1.msra.mxu0 0.0
      %318 = vmatprep.subr.mxu0 0.0
      %319 = vmatpush1.msra.mxu0 0.0
      %320 = vmatprep.subr.mxu0 0.0
      %321 = vmatpush1.msra.mxu0 0.0
      %322 = vmatprep.subr.mxu0 0.0
      %323 = vmatpush1.msra.mxu0 0.0
      %324 = vmatprep.subr.mxu0 0.0
      %325 = vmatpush1.msra.mxu0 0.0
      %326 = vmatprep.subr.mxu0 0.0
      %327 = vmatpush1.msra.mxu0 0.0
      %328 = vmatprep.subr.mxu0 0.0
      %329 = vmatpush1.msra.mxu0 0.0
      %330 = vmatprep.subr.mxu0 0.0
      %331 = vmatpush1.msra.mxu0 0.0
      %332 = vmatprep.subr.mxu0 0.0
      %333 = vmatpush1.msra.mxu0 0.0
      %334 = vmatprep.subr.mxu0 0.0
      %335 = vmatpush1.msra.mxu0 0.0
      %336 = vmatprep.subr.mxu0 0.0
      %337 = vmatpush1.msra.mxu0 0.0
      %338 = vmatprep.subr.mxu0 0.0
      %339 = vmatpush1.msra.mxu0 0.0
      %340 = vmatprep.mubr.f32.mxu0 0.0
      %v341 = vand.u32 %v251, 4294901760
      %v342 = vsub.f32 %v251, %v341
      %v343 = vand.u32 %v342, 4294901760
      %v344 = vsub.f32 %v342, %v343
      %v345 = vand.u32 %v344, 4294901760
      %346 = vmatmul.mubr.f32.gmra.mrb[0].mxu0 %v345
      %v347 = vpop.f32.mrb[0].mxu0
      %v348 = vadd.f32 0.0, %v347
      %v349 = vpop.f32.mrb[0].mxu0
      %350 = vmatprep.mubr.f32.mxu0 0.0
      %v351 = vand.u32 %v254, 4294901760
      %v352 = vsub.f32 %v254, %v351
      %v353 = vand.u32 %v352, 4294901760
      %v354 = vsub.f32 %v352, %v353
      %v355 = vand.u32 %v354, 4294901760
      %356 = vmatmul.mubr.f32.gmra.mrb[0].mxu0 %v355
      %v357 = vpop.f32.mrb[0].mxu0
      %v358 = vadd.f32 0.0, %v357
      %v359 = vpop.f32.mrb[0].mxu0
      %360 = vmatprep.mubr.f32.mxu0 0.0
      %v361 = vand.u32 %v257, 4294901760
      %v362 = vsub.f32 %v257, %v361
      %v363 = vand.u32 %v362, 4294901760
      %v364 = vsub.f32 %v362, %v363
      %v365 = vand.u32 %v364, 4294901760
      %366 = vmatmul.mubr.f32.gmra.mrb[0].mxu0 %v365
      %v367 = vpop.f32.mrb[0].mxu0
      %v368 = vadd.f32 0.0, %v367
      %v369 = vpop.f32.mrb[0].mxu0
      %370 = vmatprep.mubr.f32.mxu0 0.0
      %v371 = vand.u32 %v260, 4294901760
      %v372 = vsub.f32 %v260, %v371
      %v373 = vand.u32 %v372, 4294901760
      %v374 = vsub.f32 %v372, %v373
      %v375 = vand.u32 %v374, 4294901760
      %376 = vmatmul.mubr.f32.gmra.mrb[0].mxu0 %v375
      %v377 = vpop.f32.mrb[0].mxu0
      %v378 = vadd.f32 0.0, %v377
      %v379 = vpop.f32.mrb[0].mxu0
      %380 = vmatprep.mubr.f32.mxu0 0.0
      %v381 = vand.u32 %v263, 4294901760
      %v382 = vsub.f32 %v263, %v381
      %v383 = vand.u32 %v382, 4294901760
      %v384 = vsub.f32 %v382, %v383
      %v385 = vand.u32 %v384, 4294901760
      %386 = vmatmul.mubr.f32.gmra.mrb[0].mxu0 %v385
      %v387 = vpop.f32.mrb[0].mxu0
      %v388 = vadd.f32 0.0, %v387
      %v389 = vpop.f32.mrb[0].mxu0
      %390 = vmatprep.mubr.f32.mxu0 0.0
      %v391 = vand.u32 %v266, 4294901760
      %v392 = vsub.f32 %v266, %v391
      %v393 = vand.u32 %v392, 4294901760
      %v394 = vsub.f32 %v392, %v393
      %v395 = vand.u32 %v394, 4294901760
      %396 = vmatmul.mubr.f32.gmra.mrb[0].mxu0 %v395
      %v397 = vpop.f32.mrb[0].mxu0
      %v398 = vadd.f32 0.0, %v397
      %v399 = vpop.f32.mrb[0].mxu0
      %400 = vmatprep.mubr.f32.mxu0 0.0
      %v401 = vand.u32 %v269, 4294901760
      %v402 = vsub.f32 %v269, %v401
      %v403 = vand.u32 %v402, 4294901760
      %v404 = vsub.f32 %v402, %v403
      %v405 = vand.u32 %v404, 4294901760
      %406 = vmatmul.mubr.f32.gmra.mrb[0].mxu0 %v405
      %v407 = vpop.f32.mrb[0].mxu0
      %v408 = vadd.f32 0.0, %v407
      %v409 = vpop.f32.mrb[0].mxu0
      %410 = vmatprep.mubr.f32.mxu0 0.0
      %v411 = vand.u32 %v272, 4294901760
      %v412 = vsub.f32 %v272, %v411
      %v413 = vand.u32 %v412, 4294901760
      %v414 = vsub.f32 %v412, %v413
      %v415 = vand.u32 %v414, 4294901760
      %416 = vmatmul.mubr.f32.gmra.mrb[0].mxu0 %v415
      %v417 = vpop.f32.mrb[0].mxu0
      %v418 = vadd.f32 0.0, %v417
      %v419 = vpop.f32.mrb[0].mxu0
      %420 = vdwg.mxu0
      %421 = vmatprep.subr.mxu0 0.0
      %v422 = vand.u32 %v247, 4294901760
      %v423 = vsub.f32 %v247, %v422
      %v424 = vand.u32 %v423, 4294901760
      %v425 = vsub.f32 %v423, %v424
      %v426 = vand.u32 %v425, 4294901760
      %427 = vmatpush1.msra.mxu0 %v426
      %428 = vmatprep.subr.mxu0 0.0
      %v429 = vand.u32 %v248, 4294901760
      %v430 = vsub.f32 %v248, %v429
      %v431 = vand.u32 %v430, 4294901760
      %v432 = vsub.f32 %v430, %v431
      %v433 = vand.u32 %v432, 4294901760
      %434 = vmatpush1.msra.mxu0 %v433
      %435 = vmatprep.subr.mxu0 0.0
      %436 = vmatpush1.msra.mxu0 0.0
      %437 = vmatprep.subr.mxu0 0.0
      %438 = vmatpush1.msra.mxu0 0.0
      %439 = vmatprep.subr.mxu0 0.0
      %440 = vmatpush1.msra.mxu0 0.0
      %441 = vmatprep.subr.mxu0 0.0
      %442 = vmatpush1.msra.mxu0 0.0
      %443 = vmatprep.subr.mxu0 0.0
      %444 = vmatpush1.msra.mxu0 0.0
      %445 = vmatprep.subr.mxu0 0.0
      %446 = vmatpush1.msra.mxu0 0.0
      %447 = vmatprep.subr.mxu0 0.0
      %448 = vmatpush1.msra.mxu0 0.0
      %449 = vmatprep.subr.mxu0 0.0
      %450 = vmatpush1.msra.mxu0 0.0
      %451 = vmatprep.subr.mxu0 0.0
      %452 = vmatpush1.msra.mxu0 0.0
      %453 = vmatprep.subr.mxu0 0.0
      %454 = vmatpush1.msra.mxu0 0.0
      %455 = vmatprep.subr.mxu0 0.0
      %456 = vmatpush1.msra.mxu0 0.0
      %457 = vmatprep.subr.mxu0 0.0
      %458 = vmatpush1.msra.mxu0 0.0
      %459 = vmatprep.subr.mxu0 0.0
      %460 = vmatpush1.msra.mxu0 0.0
      %461 = vmatprep.subr.mxu0 0.0
      %462 = vmatpush1.msra.mxu0 0.0
      %463 = vmatprep.subr.mxu0 0.0
      %464 = vmatpush1.msra.mxu0 0.0
      %465 = vmatprep.subr.mxu0 0.0
      %466 = vmatpush1.msra.mxu0 0.0
      %467 = vmatprep.subr.mxu0 0.0
      %468 = vmatpush1.msra.mxu0 0.0
      %469 = vmatprep.subr.mxu0 0.0
      %470 = vmatpush1.msra.mxu0 0.0
      %471 = vmatprep.subr.mxu0 0.0
      %472 = vmatpush1.msra.mxu0 0.0
      %473 = vmatprep.subr.mxu0 0.0
      %474 = vmatpush1.msra.mxu0 0.0
      %475 = vmatprep.subr.mxu0 0.0
      %476 = vmatpush1.msra.mxu0 0.0
      %477 = vmatprep.subr.mxu0 0.0
      %478 = vmatpush1.msra.mxu0 0.0
      %479 = vmatprep.subr.mxu0 0.0
      %480 = vmatpush1.msra.mxu0 0.0
      %481 = vmatprep.subr.mxu0 0.0
      %482 = vmatpush1.msra.mxu0 0.0
      %483 = vmatprep.subr.mxu0 0.0
      %484 = vmatpush1.msra.mxu0 0.0
      %485 = vmatprep.subr.mxu0 0.0
      %486 = vmatpush1.msra.mxu0 0.0
      %487 = vmatprep.subr.mxu0 0.0
      %488 = vmatpush1.msra.mxu0 0.0
      %489 = vmatprep.subr.mxu0 0.0
      %490 = vmatpush1.msra.mxu0 0.0
      %491 = vmatprep.subr.mxu0 0.0
      %492 = vmatpush1.msra.mxu0 0.0
      %493 = vmatprep.subr.mxu0 0.0
      %494 = vmatpush1.msra.mxu0 0.0
      %495 = vmatprep.mubr.f32.mxu0 0.0
      %v496 = vand.u32 %v251, 4294901760
      %497 = vmatmul.mubr.f32.gmra.mrb[0].mxu0 %v496
      %v498 = vpop.f32.mrb[0].mxu0
      %v499 = vadd.f32 %v348, %v498
      %v500 = vpop.f32.mrb[0].mxu0
      %501 = vmatprep.mubr.f32.mxu0 0.0
      %v502 = vand.u32 %v254, 4294901760
      %503 = vmatmul.mubr.f32.gmra.mrb[0].mxu0 %v502
      %v504 = vpop.f32.mrb[0].mxu0
      %v505 = vadd.f32 %v358, %v504
      %v506 = vpop.f32.mrb[0].mxu0
      %507 = vmatprep.mubr.f32.mxu0 0.0
      %v508 = vand.u32 %v257, 4294901760
      %509 = vmatmul.mubr.f32.gmra.mrb[0].mxu0 %v508
      %v510 = vpop.f32.mrb[0].mxu0
      %v511 = vadd.f32 %v368, %v510
      %v512 = vpop.f32.mrb[0].mxu0
      %513 = vmatprep.mubr.f32.mxu0 0.0
      %v514 = vand.u32 %v260, 4294901760
      %515 = vmatmul.mubr.f32.gmra.mrb[0].mxu0 %v514
      %v516 = vpop.f32.mrb[0].mxu0
      %v517 = vadd.f32 %v378, %v516
      %v518 = vpop.f32.mrb[0].mxu0
      %519 = vmatprep.mubr.f32.mxu0 0.0
      %v520 = vand.u32 %v263, 4294901760
      %521 = vmatmul.mubr.f32.gmra.mrb[0].mxu0 %v520
      %v522 = vpop.f32.mrb[0].mxu0
      %v523 = vadd.f32 %v388, %v522
      %v524 = vpop.f32.mrb[0].mxu0
      %525 = vmatprep.mubr.f32.mxu0 0.0
      %v526 = vand.u32 %v266, 4294901760
      %527 = vmatmul.mubr.f32.gmra.mrb[0].mxu0 %v526
      %v528 = vpop.f32.mrb[0].mxu0
      %v529 = vadd.f32 %v398, %v528
      %v530 = vpop.f32.mrb[0].mxu0
      %531 = vmatprep.mubr.f32.mxu0 0.0
      %v532 = vand.u32 %v269, 4294901760
      %533 = vmatmul.mubr.f32.gmra.mrb[0].mxu0 %v532
      %v534 = vpop.f32.mrb[0].mxu0
      %v535 = vadd.f32 %v408, %v534
      %v536 = vpop.f32.mrb[0].mxu0
      %537 = vmatprep.mubr.f32.mxu0 0.0
      %v538 = vand.u32 %v272, 4294901760
      %539 = vmatmul.mubr.f32.gmra.mrb[0].mxu0 %v538
      %v540 = vpop.f32.mrb[0].mxu0
      %v541 = vadd.f32 %v418, %v540
      %v542 = vpop.f32.mrb[0].mxu0
      %543 = vdwg.mxu0
      %544 = vmatprep.subr.mxu0 0.0
      %v545 = vand.u32 %v247, 4294901760
      %v546 = vsub.f32 %v247, %v545
      %547 = vmatpush1.msra.mxu0 %v546
      %548 = vmatprep.subr.mxu0 0.0
      %v549 = vand.u32 %v248, 4294901760
      %v550 = vsub.f32 %v248, %v549
      %551 = vmatpush1.msra.mxu0 %v550
      %552 = vmatprep.subr.mxu0 0.0
      %553 = vmatpush1.msra.mxu0 0.0
      %554 = vmatprep.subr.mxu0 0.0
      %555 = vmatpush1.msra.mxu0 0.0
      %556 = vmatprep.subr.mxu0 0.0
      %557 = vmatpush1.msra.mxu0 0.0
      %558 = vmatprep.subr.mxu0 0.0
      %559 = vmatpush1.msra.mxu0 0.0
      %560 = vmatprep.subr.mxu0 0.0
      %561 = vmatpush1.msra.mxu0 0.0
      %562 = vmatprep.subr.mxu0 0.0
      %563 = vmatpush1.msra.mxu0 0.0
      %564 = vmatprep.subr.mxu0 0.0
      %565 = vmatpush1.msra.mxu0 0.0
      %566 = vmatprep.subr.mxu0 0.0
      %567 = vmatpush1.msra.mxu0 0.0
      %568 = vmatprep.subr.mxu0 0.0
      %569 = vmatpush1.msra.mxu0 0.0
      %570 = vmatprep.subr.mxu0 0.0
      %571 = vmatpush1.msra.mxu0 0.0
      %572 = vmatprep.subr.mxu0 0.0
      %573 = vmatpush1.msra.mxu0 0.0
      %574 = vmatprep.subr.mxu0 0.0
      %575 = vmatpush1.msra.mxu0 0.0
      %576 = vmatprep.subr.mxu0 0.0
      %577 = vmatpush1.msra.mxu0 0.0
      %578 = vmatprep.subr.mxu0 0.0
      %579 = vmatpush1.msra.mxu0 0.0
      %580 = vmatprep.subr.mxu0 0.0
      %581 = vmatpush1.msra.mxu0 0.0
      %582 = vmatprep.subr.mxu0 0.0
      %583 = vmatpush1.msra.mxu0 0.0
      %584 = vmatprep.subr.mxu0 0.0
      %585 = vmatpush1.msra.mxu0 0.0
      %586 = vmatprep.subr.mxu0 0.0
      %587 = vmatpush1.msra.mxu0 0.0
      %588 = vmatprep.subr.mxu0 0.0
      %589 = vmatpush1.msra.mxu0 0.0
      %590 = vmatprep.subr.mxu0 0.0
      %591 = vmatpush1.msra.mxu0 0.0
      %592 = vmatprep.subr.mxu0 0.0
      %593 = vmatpush1.msra.mxu0 0.0
      %594 = vmatprep.subr.mxu0 0.0
      %595 = vmatpush1.msra.mxu0 0.0
      %596 = vmatprep.subr.mxu0 0.0
      %597 = vmatpush1.msra.mxu0 0.0
      %598 = vmatprep.subr.mxu0 0.0
      %599 = vmatpush1.msra.mxu0 0.0
      %600 = vmatprep.subr.mxu0 0.0
      %601 = vmatpush1.msra.mxu0 0.0
      %602 = vmatprep.subr.mxu0 0.0
      %603 = vmatpush1.msra.mxu0 0.0
      %604 = vmatprep.subr.mxu0 0.0
      %605 = vmatpush1.msra.mxu0 0.0
      %606 = vmatprep.subr.mxu0 0.0
      %607 = vmatpush1.msra.mxu0 0.0
      %608 = vmatprep.subr.mxu0 0.0
      %609 = vmatpush1.msra.mxu0 0.0
      %610 = vmatprep.subr.mxu0 0.0
      %611 = vmatpush1.msra.mxu0 0.0
      %612 = vmatprep.mubr.f32.mxu0 0.0
      %v613 = vand.u32 %v251, 4294901760
      %v614 = vsub.f32 %v251, %v613
      %615 = vmatmul.mubr.f32.gmra.mrb[0].mxu0 %v614
      %v616 = vpop.f32.mrb[0].mxu0
      %v617 = vadd.f32 %v499, %v616
      %v618 = vpop.f32.mrb[0].mxu0
      %619 = vmatprep.mubr.f32.mxu0 0.0
      %v620 = vand.u32 %v254, 4294901760
      %v621 = vsub.f32 %v254, %v620
      %622 = vmatmul.mubr.f32.gmra.mrb[0].mxu0 %v621
      %v623 = vpop.f32.mrb[0].mxu0
      %v624 = vadd.f32 %v505, %v623
      %v625 = vpop.f32.mrb[0].mxu0
      %626 = vmatprep.mubr.f32.mxu0 0.0
      %v627 = vand.u32 %v257, 4294901760
      %v628 = vsub.f32 %v257, %v627
      %629 = vmatmul.mubr.f32.gmra.mrb[0].mxu0 %v628
      %v630 = vpop.f32.mrb[0].mxu0
      %v631 = vadd.f32 %v511, %v630
      %v632 = vpop.f32.mrb[0].mxu0
      %633 = vmatprep.mubr.f32.mxu0 0.0
      %v634 = vand.u32 %v260, 4294901760
      %v635 = vsub.f32 %v260, %v634
      %636 = vmatmul.mubr.f32.gmra.mrb[0].mxu0 %v635
      %v637 = vpop.f32.mrb[0].mxu0
      %v638 = vadd.f32 %v517, %v637
      %v639 = vpop.f32.mrb[0].mxu0
      %640 = vmatprep.mubr.f32.mxu0 0.0
      %v641 = vand.u32 %v263, 4294901760
      %v642 = vsub.f32 %v263, %v641
      %643 = vmatmul.mubr.f32.gmra.mrb[0].mxu0 %v642
      %v644 = vpop.f32.mrb[0].mxu0
      %v645 = vadd.f32 %v523, %v644
      %v646 = vpop.f32.mrb[0].mxu0
      %647 = vmatprep.mubr.f32.mxu0 0.0
      %v648 = vand.u32 %v266, 4294901760
      %v649 = vsub.f32 %v266, %v648
      %650 = vmatmul.mubr.f32.gmra.mrb[0].mxu0 %v649
      %v651 = vpop.f32.mrb[0].mxu0
      %v652 = vadd.f32 %v529, %v651
      %v653 = vpop.f32.mrb[0].mxu0
      %654 = vmatprep.mubr.f32.mxu0 0.0
      %v655 = vand.u32 %v269, 4294901760
      %v656 = vsub.f32 %v269, %v655
      %657 = vmatmul.mubr.f32.gmra.mrb[0].mxu0 %v656
      %v658 = vpop.f32.mrb[0].mxu0
      %v659 = vadd.f32 %v535, %v658
      %v660 = vpop.f32.mrb[0].mxu0
      %661 = vmatprep.mubr.f32.mxu0 0.0
      %v662 = vand.u32 %v272, 4294901760
      %v663 = vsub.f32 %v272, %v662
      %664 = vmatmul.mubr.f32.gmra.mrb[0].mxu0 %v663
      %v665 = vpop.f32.mrb[0].mxu0
      %v666 = vadd.f32 %v541, %v665
      %v667 = vpop.f32.mrb[0].mxu0
      %668 = vdwg.mxu0
      %669 = vmatprep.subr.mxu0 0.0
      %v670 = vand.u32 %v247, 4294901760
      %671 = vmatpush1.msra.mxu0 %v670
      %672 = vmatprep.subr.mxu0 0.0
      %v673 = vand.u32 %v248, 4294901760
      %674 = vmatpush1.msra.mxu0 %v673
      %675 = vmatprep.subr.mxu0 0.0
      %676 = vmatpush1.msra.mxu0 0.0
      %677 = vmatprep.subr.mxu0 0.0
      %678 = vmatpush1.msra.mxu0 0.0
      %679 = vmatprep.subr.mxu0 0.0
      %680 = vmatpush1.msra.mxu0 0.0
      %681 = vmatprep.subr.mxu0 0.0
      %682 = vmatpush1.msra.mxu0 0.0
      %683 = vmatprep.subr.mxu0 0.0
      %684 = vmatpush1.msra.mxu0 0.0
      %685 = vmatprep.subr.mxu0 0.0
      %686 = vmatpush1.msra.mxu0 0.0
      %687 = vmatprep.subr.mxu0 0.0
      %688 = vmatpush1.msra.mxu0 0.0
      %689 = vmatprep.subr.mxu0 0.0
      %690 = vmatpush1.msra.mxu0 0.0
      %691 = vmatprep.subr.mxu0 0.0
      %692 = vmatpush1.msra.mxu0 0.0
      %693 = vmatprep.subr.mxu0 0.0
      %694 = vmatpush1.msra.mxu0 0.0
      %695 = vmatprep.subr.mxu0 0.0
      %696 = vmatpush1.msra.mxu0 0.0
      %697 = vmatprep.subr.mxu0 0.0
      %698 = vmatpush1.msra.mxu0 0.0
      %699 = vmatprep.subr.mxu0 0.0
      %700 = vmatpush1.msra.mxu0 0.0
      %701 = vmatprep.subr.mxu0 0.0
      %702 = vmatpush1.msra.mxu0 0.0
      %703 = vmatprep.subr.mxu0 0.0
      %704 = vmatpush1.msra.mxu0 0.0
      %705 = vmatprep.subr.mxu0 0.0
      %706 = vmatpush1.msra.mxu0 0.0
      %707 = vmatprep.subr.mxu0 0.0
      %708 = vmatpush1.msra.mxu0 0.0
      %709 = vmatprep.subr.mxu0 0.0
      %710 = vmatpush1.msra.mxu0 0.0
      %711 = vmatprep.subr.mxu0 0.0
      %712 = vmatpush1.msra.mxu0 0.0
      %713 = vmatprep.subr.mxu0 0.0
      %714 = vmatpush1.msra.mxu0 0.0
      %715 = vmatprep.subr.mxu0 0.0
      %716 = vmatpush1.msra.mxu0 0.0
      %717 = vmatprep.subr.mxu0 0.0
      %718 = vmatpush1.msra.mxu0 0.0
      %719 = vmatprep.subr.mxu0 0.0
      %720 = vmatpush1.msra.mxu0 0.0
      %721 = vmatprep.subr.mxu0 0.0
      %722 = vmatpush1.msra.mxu0 0.0
      %723 = vmatprep.subr.mxu0 0.0
      %724 = vmatpush1.msra.mxu0 0.0
      %725 = vmatprep.subr.mxu0 0.0
      %726 = vmatpush1.msra.mxu0 0.0
      %727 = vmatprep.subr.mxu0 0.0
      %728 = vmatpush1.msra.mxu0 0.0
      %729 = vmatprep.subr.mxu0 0.0
      %730 = vmatpush1.msra.mxu0 0.0
      %731 = vmatprep.subr.mxu0 0.0
      %732 = vmatpush1.msra.mxu0 0.0
      %733 = vmatprep.subr.mxu0 0.0
      %734 = vmatpush1.msra.mxu0 0.0
      %735 = vmatprep.mubr.f32.mxu0 0.0
      %v736 = vand.u32 %v251, 4294901760
      %v737 = vsub.f32 %v251, %v736
      %v738 = vand.u32 %v737, 4294901760
      %739 = vmatmul.mubr.f32.gmra.mrb[0].mxu0 %v738
      %v740 = vpop.f32.mrb[0].mxu0
      %v741 = vadd.f32 %v617, %v740
      %v742 = vpop.f32.mrb[0].mxu0
      %743 = vmatprep.mubr.f32.mxu0 0.0
      %v744 = vand.u32 %v254, 4294901760
      %v745 = vsub.f32 %v254, %v744
      %v746 = vand.u32 %v745, 4294901760
      %747 = vmatmul.mubr.f32.gmra.mrb[0].mxu0 %v746
      %v748 = vpop.f32.mrb[0].mxu0
      %v749 = vadd.f32 %v624, %v748
      %v750 = vpop.f32.mrb[0].mxu0
      %751 = vmatprep.mubr.f32.mxu0 0.0
      %v752 = vand.u32 %v257, 4294901760
      %v753 = vsub.f32 %v257, %v752
      %v754 = vand.u32 %v753, 4294901760
      %755 = vmatmul.mubr.f32.gmra.mrb[0].mxu0 %v754
      %v756 = vpop.f32.mrb[0].mxu0
      %v757 = vadd.f32 %v631, %v756
      %v758 = vpop.f32.mrb[0].mxu0
      %759 = vmatprep.mubr.f32.mxu0 0.0
      %v760 = vand.u32 %v260, 4294901760
      %v761 = vsub.f32 %v260, %v760
      %v762 = vand.u32 %v761, 4294901760
      %763 = vmatmul.mubr.f32.gmra.mrb[0].mxu0 %v762
      %v764 = vpop.f32.mrb[0].mxu0
      %v765 = vadd.f32 %v638, %v764
      %v766 = vpop.f32.mrb[0].mxu0
      %767 = vmatprep.mubr.f32.mxu0 0.0
      %v768 = vand.u32 %v263, 4294901760
      %v769 = vsub.f32 %v263, %v768
      %v770 = vand.u32 %v769, 4294901760
      %771 = vmatmul.mubr.f32.gmra.mrb[0].mxu0 %v770
      %v772 = vpop.f32.mrb[0].mxu0
      %v773 = vadd.f32 %v645, %v772
      %v774 = vpop.f32.mrb[0].mxu0
      %775 = vmatprep.mubr.f32.mxu0 0.0
      %v776 = vand.u32 %v266, 4294901760
      %v777 = vsub.f32 %v266, %v776
      %v778 = vand.u32 %v777, 4294901760
      %779 = vmatmul.mubr.f32.gmra.mrb[0].mxu0 %v778
      %v780 = vpop.f32.mrb[0].mxu0
      %v781 = vadd.f32 %v652, %v780
      %v782 = vpop.f32.mrb[0].mxu0
      %783 = vmatprep.mubr.f32.mxu0 0.0
      %v784 = vand.u32 %v269, 4294901760
      %v785 = vsub.f32 %v269, %v784
      %v786 = vand.u32 %v785, 4294901760
      %787 = vmatmul.mubr.f32.gmra.mrb[0].mxu0 %v786
      %v788 = vpop.f32.mrb[0].mxu0
      %v789 = vadd.f32 %v659, %v788
      %v790 = vpop.f32.mrb[0].mxu0
      %791 = vmatprep.mubr.f32.mxu0 0.0
      %v792 = vand.u32 %v272, 4294901760
      %v793 = vsub.f32 %v272, %v792
      %v794 = vand.u32 %v793, 4294901760
      %795 = vmatmul.mubr.f32.gmra.mrb[0].mxu0 %v794
      %v796 = vpop.f32.mrb[0].mxu0
      %v797 = vadd.f32 %v666, %v796
      %v798 = vpop.f32.mrb[0].mxu0
      %799 = vdwg.mxu0
      %800 = vmatprep.subr.mxu0 0.0
      %v801 = vand.u32 %v247, 4294901760
      %v802 = vsub.f32 %v247, %v801
      %v803 = vand.u32 %v802, 4294901760
      %804 = vmatpush1.msra.mxu0 %v803
      %805 = vmatprep.subr.mxu0 0.0
      %v806 = vand.u32 %v248, 4294901760
      %v807 = vsub.f32 %v248, %v806
      %v808 = vand.u32 %v807, 4294901760
      %809 = vmatpush1.msra.mxu0 %v808
      %810 = vmatprep.subr.mxu0 0.0
      %811 = vmatpush1.msra.mxu0 0.0
      %812 = vmatprep.subr.mxu0 0.0
      %813 = vmatpush1.msra.mxu0 0.0
      %814 = vmatprep.subr.mxu0 0.0
      %815 = vmatpush1.msra.mxu0 0.0
      %816 = vmatprep.subr.mxu0 0.0
      %817 = vmatpush1.msra.mxu0 0.0
      %818 = vmatprep.subr.mxu0 0.0
      %819 = vmatpush1.msra.mxu0 0.0
      %820 = vmatprep.subr.mxu0 0.0
      %821 = vmatpush1.msra.mxu0 0.0
      %822 = vmatprep.subr.mxu0 0.0
      %823 = vmatpush1.msra.mxu0 0.0
      %824 = vmatprep.subr.mxu0 0.0
      %825 = vmatpush1.msra.mxu0 0.0
      %826 = vmatprep.subr.mxu0 0.0
      %827 = vmatpush1.msra.mxu0 0.0
      %828 = vmatprep.subr.mxu0 0.0
      %829 = vmatpush1.msra.mxu0 0.0
      %830 = vmatprep.subr.mxu0 0.0
      %831 = vmatpush1.msra.mxu0 0.0
      %832 = vmatprep.subr.mxu0 0.0
      %833 = vmatpush1.msra.mxu0 0.0
      %834 = vmatprep.subr.mxu0 0.0
      %835 = vmatpush1.msra.mxu0 0.0
      %836 = vmatprep.subr.mxu0 0.0
      %837 = vmatpush1.msra.mxu0 0.0
      %838 = vmatprep.subr.mxu0 0.0
      %839 = vmatpush1.msra.mxu0 0.0
      %840 = vmatprep.subr.mxu0 0.0
      %841 = vmatpush1.msra.mxu0 0.0
      %842 = vmatprep.subr.mxu0 0.0
      %843 = vmatpush1.msra.mxu0 0.0
      %844 = vmatprep.subr.mxu0 0.0
      %845 = vmatpush1.msra.mxu0 0.0
      %846 = vmatprep.subr.mxu0 0.0
      %847 = vmatpush1.msra.mxu0 0.0
      %848 = vmatprep.subr.mxu0 0.0
      %849 = vmatpush1.msra.mxu0 0.0
      %850 = vmatprep.subr.mxu0 0.0
      %851 = vmatpush1.msra.mxu0 0.0
      %852 = vmatprep.subr.mxu0 0.0
      %853 = vmatpush1.msra.mxu0 0.0
      %854 = vmatprep.subr.mxu0 0.0
      %855 = vmatpush1.msra.mxu0 0.0
      %856 = vmatprep.subr.mxu0 0.0
      %857 = vmatpush1.msra.mxu0 0.0
      %858 = vmatprep.subr.mxu0 0.0
      %859 = vmatpush1.msra.mxu0 0.0
      %860 = vmatprep.subr.mxu0 0.0
      %861 = vmatpush1.msra.mxu0 0.0
      %862 = vmatprep.subr.mxu0 0.0
      %863 = vmatpush1.msra.mxu0 0.0
      %864 = vmatprep.subr.mxu0 0.0
      %865 = vmatpush1.msra.mxu0 0.0
      %866 = vmatprep.subr.mxu0 0.0
      %867 = vmatpush1.msra.mxu0 0.0
      %868 = vmatprep.subr.mxu0 0.0
      %869 = vmatpush1.msra.mxu0 0.0
      %870 = vmatprep.mubr.f32.mxu0 0.0
      %v871 = vand.u32 %v251, 4294901760
      %872 = vmatmul.mubr.f32.gmra.mrb[0].mxu0 %v871
      %v873 = vpop.f32.mrb[0].mxu0
      %v874 = vadd.f32 %v741, %v873
      %v875 = vpop.f32.mrb[0].mxu0
      %876 = vmatprep.mubr.f32.mxu0 0.0
      %v877 = vand.u32 %v254, 4294901760
      %878 = vmatmul.mubr.f32.gmra.mrb[0].mxu0 %v877
      %v879 = vpop.f32.mrb[0].mxu0
      %v880 = vadd.f32 %v749, %v879
      %v881 = vpop.f32.mrb[0].mxu0
      %882 = vmatprep.mubr.f32.mxu0 0.0
      %v883 = vand.u32 %v257, 4294901760
      %884 = vmatmul.mubr.f32.gmra.mrb[0].mxu0 %v883
      %v885 = vpop.f32.mrb[0].mxu0
      %v886 = vadd.f32 %v757, %v885
      %v887 = vpop.f32.mrb[0].mxu0
      %888 = vmatprep.mubr.f32.mxu0 0.0
      %v889 = vand.u32 %v260, 4294901760
      %890 = vmatmul.mubr.f32.gmra.mrb[0].mxu0 %v889
      %v891 = vpop.f32.mrb[0].mxu0
      %v892 = vadd.f32 %v765, %v891
      %v893 = vpop.f32.mrb[0].mxu0
      %894 = vmatprep.mubr.f32.mxu0 0.0
      %v895 = vand.u32 %v263, 4294901760
      %896 = vmatmul.mubr.f32.gmra.mrb[0].mxu0 %v895
      %v897 = vpop.f32.mrb[0].mxu0
      %v898 = vadd.f32 %v773, %v897
      %v899 = vpop.f32.mrb[0].mxu0
      %900 = vmatprep.mubr.f32.mxu0 0.0
      %v901 = vand.u32 %v266, 4294901760
      %902 = vmatmul.mubr.f32.gmra.mrb[0].mxu0 %v901
      %v903 = vpop.f32.mrb[0].mxu0
      %v904 = vadd.f32 %v781, %v903
      %v905 = vpop.f32.mrb[0].mxu0
      %906 = vmatprep.mubr.f32.mxu0 0.0
      %v907 = vand.u32 %v269, 4294901760
      %908 = vmatmul.mubr.f32.gmra.mrb[0].mxu0 %v907
      %v909 = vpop.f32.mrb[0].mxu0
      %v910 = vadd.f32 %v789, %v909
      %v911 = vpop.f32.mrb[0].mxu0
      %912 = vmatprep.mubr.f32.mxu0 0.0
      %v913 = vand.u32 %v272, 4294901760
      %914 = vmatmul.mubr.f32.gmra.mrb[0].mxu0 %v913
      %v915 = vpop.f32.mrb[0].mxu0
      %v916 = vadd.f32 %v797, %v915
      %v917 = vpop.f32.mrb[0].mxu0
      %918 = vdwg.mxu0
      %919 = vmatprep.subr.mxu0 0.0
      %v920 = vand.u32 %v247, 4294901760
      %921 = vmatpush1.msra.mxu0 %v920
      %922 = vmatprep.subr.mxu0 0.0
      %v923 = vand.u32 %v248, 4294901760
      %924 = vmatpush1.msra.mxu0 %v923
      %925 = vmatprep.subr.mxu0 0.0
      %926 = vmatpush1.msra.mxu0 0.0
      %927 = vmatprep.subr.mxu0 0.0
      %928 = vmatpush1.msra.mxu0 0.0
      %929 = vmatprep.subr.mxu0 0.0
      %930 = vmatpush1.msra.mxu0 0.0
      %931 = vmatprep.subr.mxu0 0.0
      %932 = vmatpush1.msra.mxu0 0.0
      %933 = vmatprep.subr.mxu0 0.0
      %934 = vmatpush1.msra.mxu0 0.0
      %935 = vmatprep.subr.mxu0 0.0
      %936 = vmatpush1.msra.mxu0 0.0
      %937 = vmatprep.subr.mxu0 0.0
      %938 = vmatpush1.msra.mxu0 0.0
      %939 = vmatprep.subr.mxu0 0.0
      %940 = vmatpush1.msra.mxu0 0.0
      %941 = vmatprep.subr.mxu0 0.0
      %942 = vmatpush1.msra.mxu0 0.0
      %943 = vmatprep.subr.mxu0 0.0
      %944 = vmatpush1.msra.mxu0 0.0
      %945 = vmatprep.subr.mxu0 0.0
      %946 = vmatpush1.msra.mxu0 0.0
      %947 = vmatprep.subr.mxu0 0.0
      %948 = vmatpush1.msra.mxu0 0.0
      %949 = vmatprep.subr.mxu0 0.0
      %950 = vmatpush1.msra.mxu0 0.0
      %951 = vmatprep.subr.mxu0 0.0
      %952 = vmatpush1.msra.mxu0 0.0
      %953 = vmatprep.subr.mxu0 0.0
      %954 = vmatpush1.msra.mxu0 0.0
      %955 = vmatprep.subr.mxu0 0.0
      %956 = vmatpush1.msra.mxu0 0.0
      %957 = vmatprep.subr.mxu0 0.0
      %958 = vmatpush1.msra.mxu0 0.0
      %959 = vmatprep.subr.mxu0 0.0
      %960 = vmatpush1.msra.mxu0 0.0
      %961 = vmatprep.subr.mxu0 0.0
      %962 = vmatpush1.msra.mxu0 0.0
      %963 = vmatprep.subr.mxu0 0.0
      %964 = vmatpush1.msra.mxu0 0.0
      %965 = vmatprep.subr.mxu0 0.0
      %966 = vmatpush1.msra.mxu0 0.0
      %967 = vmatprep.subr.mxu0 0.0
      %968 = vmatpush1.msra.mxu0 0.0
      %969 = vmatprep.subr.mxu0 0.0
      %970 = vmatpush1.msra.mxu0 0.0
      %971 = vmatprep.subr.mxu0 0.0
      %972 = vmatpush1.msra.mxu0 0.0
      %973 = vmatprep.subr.mxu0 0.0
      %974 = vmatpush1.msra.mxu0 0.0
      %975 = vmatprep.subr.mxu0 0.0
      %976 = vmatpush1.msra.mxu0 0.0
      %977 = vmatprep.subr.mxu0 0.0
      %978 = vmatpush1.msra.mxu0 0.0
      %979 = vmatprep.subr.mxu0 0.0
      %980 = vmatpush1.msra.mxu0 0.0
      %981 = vmatprep.subr.mxu0 0.0
      %982 = vmatpush1.msra.mxu0 0.0
      %983 = vmatprep.subr.mxu0 0.0
      %984 = vmatpush1.msra.mxu0 0.0
      %985 = vmatprep.mubr.f32.mxu0 0.0
      %v986 = vand.u32 %v251, 4294901760
      %987 = vmatmul.mubr.f32.gmra.mrb[0].mxu0 %v986
      %v988 = vpop.f32.mrb[0].mxu0
      %v989 = vadd.f32 %v874, %v988
      %v990 = vpop.f32.mrb[0].mxu0
      %991 = vmatprep.mubr.f32.mxu0 0.0
      %v992 = vand.u32 %v254, 4294901760
      %993 = vmatmul.mubr.f32.gmra.mrb[0].mxu0 %v992
      %v994 = vpop.f32.mrb[0].mxu0
      %v995 = vadd.f32 %v880, %v994
      %v996 = vpop.f32.mrb[0].mxu0
      %997 = vmatprep.mubr.f32.mxu0 0.0
      %v998 = vand.u32 %v257, 4294901760
      %999 = vmatmul.mubr.f32.gmra.mrb[0].mxu0 %v998
      %v1000 = vpop.f32.mrb[0].mxu0
      %v1001 = vadd.f32 %v886, %v1000
      %v1002 = vpop.f32.mrb[0].mxu0
      %1003 = vmatprep.mubr.f32.mxu0 0.0
      %v1004 = vand.u32 %v260, 4294901760
      %1005 = vmatmul.mubr.f32.gmra.mrb[0].mxu0 %v1004
      %v1006 = vpop.f32.mrb[0].mxu0
      %v1007 = vadd.f32 %v892, %v1006
      %v1008 = vpop.f32.mrb[0].mxu0
      %1009 = vmatprep.mubr.f32.mxu0 0.0
      %v1010 = vand.u32 %v263, 4294901760
      %1011 = vmatmul.mubr.f32.gmra.mrb[0].mxu0 %v1010
      %v1012 = vpop.f32.mrb[0].mxu0
      %v1013 = vadd.f32 %v898, %v1012
      %v1014 = vpop.f32.mrb[0].mxu0
      %1015 = vmatprep.mubr.f32.mxu0 0.0
      %v1016 = vand.u32 %v266, 4294901760
      %1017 = vmatmul.mubr.f32.gmra.mrb[0].mxu0 %v1016
      %v1018 = vpop.f32.mrb[0].mxu0
      %v1019 = vadd.f32 %v904, %v1018
      %v1020 = vpop.f32.mrb[0].mxu0
      %1021 = vmatprep.mubr.f32.mxu0 0.0
      %v1022 = vand.u32 %v269, 4294901760
      %1023 = vmatmul.mubr.f32.gmra.mrb[0].mxu0 %v1022
      %v1024 = vpop.f32.mrb[0].mxu0
      %v1025 = vadd.f32 %v910, %v1024
      %v1026 = vpop.f32.mrb[0].mxu0
      %1027 = vmatprep.mubr.f32.mxu0 0.0
      %v1028 = vand.u32 %v272, 4294901760
      %1029 = vmatmul.mubr.f32.gmra.mrb[0].mxu0 %v1028
      %v1030 = vpop.f32.mrb[0].mxu0
      %v1031 = vadd.f32 %v916, %v1030
      %v1032 = vpop.f32.mrb[0].mxu0
      %1033 = vdwg.mxu0
      %vm1034 = vcmask 523264
      %v1036 = vsel %vm1034, %v239, 0
      %v1039 = vsel %vm1034, %v240, 0
      %v1042 = vsel %vm1034, %v241, 0
      %v1045 = vsel %vm1034, %v242, 0
      %v1048 = vsel %vm1034, %v243, 0
      %v1051 = vsel %vm1034, %v244, 0
      %v1054 = vsel %vm1034, %v245, 0
      %v1057 = vsel %vm1034, %v246, 0
      %1059 = vmatprep.subr.mxu0 0.0
      %v1060 = vand.u32 %v989, 4294901760
      %1061 = vmatpush1.msra.mxu0 %v1060
      %1062 = vmatprep.subr.mxu0 0.0
      %v1063 = vand.u32 %v995, 4294901760
      %1064 = vmatpush1.msra.mxu0 %v1063
      %1065 = vmatprep.subr.mxu0 0.0
      %v1066 = vand.u32 %v1001, 4294901760
      %1067 = vmatpush1.msra.mxu0 %v1066
      %1068 = vmatprep.subr.mxu0 0.0
      %v1069 = vand.u32 %v1007, 4294901760
      %1070 = vmatpush1.msra.mxu0 %v1069
      %1071 = vmatprep.subr.mxu0 0.0
      %v1072 = vand.u32 %v1013, 4294901760
      %1073 = vmatpush1.msra.mxu0 %v1072
      %1074 = vmatprep.subr.mxu0 0.0
      %v1075 = vand.u32 %v1019, 4294901760
      %1076 = vmatpush1.msra.mxu0 %v1075
      %1077 = vmatprep.subr.mxu0 0.0
      %v1078 = vand.u32 %v1025, 4294901760
      %1079 = vmatpush1.msra.mxu0 %v1078
      %1080 = vmatprep.subr.mxu0 0.0
      %v1081 = vand.u32 %v1031, 4294901760
      %1082 = vmatpush1.msra.mxu0 %v1081
      %1083 = vmatprep.subr.mxu0 0.0
      %1084 = vmatpush1.msra.mxu0 0.0
      %1085 = vmatprep.subr.mxu0 0.0
      %1086 = vmatpush1.msra.mxu0 0.0
      %1087 = vmatprep.subr.mxu0 0.0
      %1088 = vmatpush1.msra.mxu0 0.0
      %1089 = vmatprep.subr.mxu0 0.0
      %1090 = vmatpush1.msra.mxu0 0.0
      %1091 = vmatprep.subr.mxu0 0.0
      %1092 = vmatpush1.msra.mxu0 0.0
      %1093 = vmatprep.subr.mxu0 0.0
      %1094 = vmatpush1.msra.mxu0 0.0
      %1095 = vmatprep.subr.mxu0 0.0
      %1096 = vmatpush1.msra.mxu0 0.0
      %1097 = vmatprep.subr.mxu0 0.0
      %1098 = vmatpush1.msra.mxu0 0.0
      %1099 = vmatprep.subr.mxu0 0.0
      %1100 = vmatpush1.msra.mxu0 0.0
      %1101 = vmatprep.subr.mxu0 0.0
      %1102 = vmatpush1.msra.mxu0 0.0
      %1103 = vmatprep.subr.mxu0 0.0
      %1104 = vmatpush1.msra.mxu0 0.0
      %1105 = vmatprep.subr.mxu0 0.0
      %1106 = vmatpush1.msra.mxu0 0.0
      %1107 = vmatprep.subr.mxu0 0.0
      %1108 = vmatpush1.msra.mxu0 0.0
      %1109 = vmatprep.subr.mxu0 0.0
      %1110 = vmatpush1.msra.mxu0 0.0
      %1111 = vmatprep.subr.mxu0 0.0
      %1112 = vmatpush1.msra.mxu0 0.0
      %1113 = vmatprep.subr.mxu0 0.0
      %1114 = vmatpush1.msra.mxu0 0.0
      %1115 = vmatprep.subr.mxu0 0.0
      %1116 = vmatpush1.msra.mxu0 0.0
      %1117 = vmatprep.subr.mxu0 0.0
      %1118 = vmatpush1.msra.mxu0 0.0
      %1119 = vmatprep.subr.mxu0 0.0
      %1120 = vmatpush1.msra.mxu0 0.0
      %1121 = vmatprep.subr.mxu0 0.0
      %1122 = vmatpush1.msra.mxu0 0.0
      %1123 = vmatprep.subr.mxu0 0.0
      %1124 = vmatpush1.msra.mxu0 0.0
      %1125 = vmatprep.subr.mxu0 0.0
      %1126 = vmatpush1.msra.mxu0 0.0
      %1127 = vmatprep.subr.mxu0 0.0
      %1128 = vmatpush1.msra.mxu0 0.0
      %1129 = vmatprep.subr.mxu0 0.0
      %1130 = vmatpush1.msra.mxu0 0.0
      %1131 = vmatprep.mubr.f32.mxu0 0.0
      %v1132 = vand.u32 %v1036, 4294901760
      %v1133 = vsub.f32 %v1036, %v1132
      %v1134 = vand.u32 %v1133, 4294901760
      %v1135 = vsub.f32 %v1133, %v1134
      %v1136 = vand.u32 %v1135, 4294901760
      %1137 = vmatmul.mubr.f32.gmra.mrb[0].mxu0 %v1136
      %v1138 = vpop.f32.mrb[0].mxu0
      %v1139 = vadd.f32 0.0, %v1138
      %v1140 = vpop.f32.mrb[0].mxu0
      %1141 = vmatprep.mubr.f32.mxu0 0.0
      %v1142 = vand.u32 %v1039, 4294901760
      %v1143 = vsub.f32 %v1039, %v1142
      %v1144 = vand.u32 %v1143, 4294901760
      %v1145 = vsub.f32 %v1143, %v1144
      %v1146 = vand.u32 %v1145, 4294901760
      %1147 = vmatmul.mubr.f32.gmra.mrb[0].mxu0 %v1146
      %v1148 = vpop.f32.mrb[0].mxu0
      %v1149 = vadd.f32 0.0, %v1148
      %v1150 = vpop.f32.mrb[0].mxu0
      %1151 = vmatprep.mubr.f32.mxu0 0.0
      %v1152 = vand.u32 %v1042, 4294901760
      %v1153 = vsub.f32 %v1042, %v1152
      %v1154 = vand.u32 %v1153, 4294901760
      %v1155 = vsub.f32 %v1153, %v1154
      %v1156 = vand.u32 %v1155, 4294901760
      %1157 = vmatmul.mubr.f32.gmra.mrb[0].mxu0 %v1156
      %v1158 = vpop.f32.mrb[0].mxu0
      %v1159 = vadd.f32 0.0, %v1158
      %v1160 = vpop.f32.mrb[0].mxu0
      %1161 = vmatprep.mubr.f32.mxu0 0.0
      %v1162 = vand.u32 %v1045, 4294901760
      %v1163 = vsub.f32 %v1045, %v1162
      %v1164 = vand.u32 %v1163, 4294901760
      %v1165 = vsub.f32 %v1163, %v1164
      %v1166 = vand.u32 %v1165, 4294901760
      %1167 = vmatmul.mubr.f32.gmra.mrb[0].mxu0 %v1166
      %v1168 = vpop.f32.mrb[0].mxu0
      %v1169 = vadd.f32 0.0, %v1168
      %v1170 = vpop.f32.mrb[0].mxu0
      %1171 = vmatprep.mubr.f32.mxu0 0.0
      %v1172 = vand.u32 %v1048, 4294901760
      %v1173 = vsub.f32 %v1048, %v1172
      %v1174 = vand.u32 %v1173, 4294901760
      %v1175 = vsub.f32 %v1173, %v1174
      %v1176 = vand.u32 %v1175, 4294901760
      %1177 = vmatmul.mubr.f32.gmra.mrb[0].mxu0 %v1176
      %v1178 = vpop.f32.mrb[0].mxu0
      %v1179 = vadd.f32 0.0, %v1178
      %v1180 = vpop.f32.mrb[0].mxu0
      %1181 = vmatprep.mubr.f32.mxu0 0.0
      %v1182 = vand.u32 %v1051, 4294901760
      %v1183 = vsub.f32 %v1051, %v1182
      %v1184 = vand.u32 %v1183, 4294901760
      %v1185 = vsub.f32 %v1183, %v1184
      %v1186 = vand.u32 %v1185, 4294901760
      %1187 = vmatmul.mubr.f32.gmra.mrb[0].mxu0 %v1186
      %v1188 = vpop.f32.mrb[0].mxu0
      %v1189 = vadd.f32 0.0, %v1188
      %v1190 = vpop.f32.mrb[0].mxu0
      %1191 = vmatprep.mubr.f32.mxu0 0.0
      %v1192 = vand.u32 %v1054, 4294901760
      %v1193 = vsub.f32 %v1054, %v1192
      %v1194 = vand.u32 %v1193, 4294901760
      %v1195 = vsub.f32 %v1193, %v1194
      %v1196 = vand.u32 %v1195, 4294901760
      %1197 = vmatmul.mubr.f32.gmra.mrb[0].mxu0 %v1196
      %v1198 = vpop.f32.mrb[0].mxu0
      %v1199 = vadd.f32 0.0, %v1198
      %v1200 = vpop.f32.mrb[0].mxu0
      %1201 = vmatprep.mubr.f32.mxu0 0.0
      %v1202 = vand.u32 %v1057, 4294901760
      %v1203 = vsub.f32 %v1057, %v1202
      %v1204 = vand.u32 %v1203, 4294901760
      %v1205 = vsub.f32 %v1203, %v1204
      %v1206 = vand.u32 %v1205, 4294901760
      %1207 = vmatmul.mubr.f32.gmra.mrb[0].mxu0 %v1206
      %v1208 = vpop.f32.mrb[0].mxu0
      %v1209 = vadd.f32 0.0, %v1208
      %v1210 = vpop.f32.mrb[0].mxu0
      %1211 = vdwg.mxu0
      %1212 = vmatprep.subr.mxu0 0.0
      %v1213 = vand.u32 %v989, 4294901760
      %v1214 = vsub.f32 %v989, %v1213
      %v1215 = vand.u32 %v1214, 4294901760
      %v1216 = vsub.f32 %v1214, %v1215
      %v1217 = vand.u32 %v1216, 4294901760
      %1218 = vmatpush1.msra.mxu0 %v1217
      %1219 = vmatprep.subr.mxu0 0.0
      %v1220 = vand.u32 %v995, 4294901760
      %v1221 = vsub.f32 %v995, %v1220
      %v1222 = vand.u32 %v1221, 4294901760
      %v1223 = vsub.f32 %v1221, %v1222
      %v1224 = vand.u32 %v1223, 4294901760
      %1225 = vmatpush1.msra.mxu0 %v1224
      %1226 = vmatprep.subr.mxu0 0.0
      %v1227 = vand.u32 %v1001, 4294901760
      %v1228 = vsub.f32 %v1001, %v1227
      %v1229 = vand.u32 %v1228, 4294901760
      %v1230 = vsub.f32 %v1228, %v1229
      %v1231 = vand.u32 %v1230, 4294901760
      %1232 = vmatpush1.msra.mxu0 %v1231
      %1233 = vmatprep.subr.mxu0 0.0
      %v1234 = vand.u32 %v1007, 4294901760
      %v1235 = vsub.f32 %v1007, %v1234
      %v1236 = vand.u32 %v1235, 4294901760
      %v1237 = vsub.f32 %v1235, %v1236
      %v1238 = vand.u32 %v1237, 4294901760
      %1239 = vmatpush1.msra.mxu0 %v1238
      %1240 = vmatprep.subr.mxu0 0.0
      %v1241 = vand.u32 %v1013, 4294901760
      %v1242 = vsub.f32 %v1013, %v1241
      %v1243 = vand.u32 %v1242, 4294901760
      %v1244 = vsub.f32 %v1242, %v1243
      %v1245 = vand.u32 %v1244, 4294901760
      %1246 = vmatpush1.msra.mxu0 %v1245
      %1247 = vmatprep.subr.mxu0 0.0
      %v1248 = vand.u32 %v1019, 4294901760
      %v1249 = vsub.f32 %v1019, %v1248
      %v1250 = vand.u32 %v1249, 4294901760
      %v1251 = vsub.f32 %v1249, %v1250
      %v1252 = vand.u32 %v1251, 4294901760
      %1253 = vmatpush1.msra.mxu0 %v1252
      %1254 = vmatprep.subr.mxu0 0.0
      %v1255 = vand.u32 %v1025, 4294901760
      %v1256 = vsub.f32 %v1025, %v1255
      %v1257 = vand.u32 %v1256, 4294901760
      %v1258 = vsub.f32 %v1256, %v1257
      %v1259 = vand.u32 %v1258, 4294901760
      %1260 = vmatpush1.msra.mxu0 %v1259
      %1261 = vmatprep.subr.mxu0 0.0
      %v1262 = vand.u32 %v1031, 4294901760
      %v1263 = vsub.f32 %v1031, %v1262
      %v1264 = vand.u32 %v1263, 4294901760
      %v1265 = vsub.f32 %v1263, %v1264
      %v1266 = vand.u32 %v1265, 4294901760
      %1267 = vmatpush1.msra.mxu0 %v1266
      %1268 = vmatprep.subr.mxu0 0.0
      %1269 = vmatpush1.msra.mxu0 0.0
      %1270 = vmatprep.subr.mxu0 0.0
      %1271 = vmatpush1.msra.mxu0 0.0
      %1272 = vmatprep.subr.mxu0 0.0
      %1273 = vmatpush1.msra.mxu0 0.0
      %1274 = vmatprep.subr.mxu0 0.0
      %1275 = vmatpush1.msra.mxu0 0.0
      %1276 = vmatprep.subr.mxu0 0.0
      %1277 = vmatpush1.msra.mxu0 0.0
      %1278 = vmatprep.subr.mxu0 0.0
      %1279 = vmatpush1.msra.mxu0 0.0
      %1280 = vmatprep.subr.mxu0 0.0
      %1281 = vmatpush1.msra.mxu0 0.0
      %1282 = vmatprep.subr.mxu0 0.0
      %1283 = vmatpush1.msra.mxu0 0.0
      %1284 = vmatprep.subr.mxu0 0.0
      %1285 = vmatpush1.msra.mxu0 0.0
      %1286 = vmatprep.subr.mxu0 0.0
      %1287 = vmatpush1.msra.mxu0 0.0
      %1288 = vmatprep.subr.mxu0 0.0
      %1289 = vmatpush1.msra.mxu0 0.0
      %1290 = vmatprep.subr.mxu0 0.0
      %1291 = vmatpush1.msra.mxu0 0.0
      %1292 = vmatprep.subr.mxu0 0.0
      %1293 = vmatpush1.msra.mxu0 0.0
      %1294 = vmatprep.subr.mxu0 0.0
      %1295 = vmatpush1.msra.mxu0 0.0
      %1296 = vmatprep.subr.mxu0 0.0
      %1297 = vmatpush1.msra.mxu0 0.0
      %1298 = vmatprep.subr.mxu0 0.0
      %1299 = vmatpush1.msra.mxu0 0.0
      %1300 = vmatprep.subr.mxu0 0.0
      %1301 = vmatpush1.msra.mxu0 0.0
      %1302 = vmatprep.subr.mxu0 0.0
      %1303 = vmatpush1.msra.mxu0 0.0
      %1304 = vmatprep.subr.mxu0 0.0
      %1305 = vmatpush1.msra.mxu0 0.0
      %1306 = vmatprep.subr.mxu0 0.0
      %1307 = vmatpush1.msra.mxu0 0.0
      %1308 = vmatprep.subr.mxu0 0.0
      %1309 = vmatpush1.msra.mxu0 0.0
      %1310 = vmatprep.subr.mxu0 0.0
      %1311 = vmatpush1.msra.mxu0 0.0
      %1312 = vmatprep.subr.mxu0 0.0
      %1313 = vmatpush1.msra.mxu0 0.0
      %1314 = vmatprep.subr.mxu0 0.0
      %1315 = vmatpush1.msra.mxu0 0.0
      %1316 = vmatprep.mubr.f32.mxu0 0.0
      %v1317 = vand.u32 %v1036, 4294901760
      %1318 = vmatmul.mubr.f32.gmra.mrb[0].mxu0 %v1317
      %v1319 = vpop.f32.mrb[0].mxu0
      %v1320 = vadd.f32 %v1139, %v1319
      %v1321 = vpop.f32.mrb[0].mxu0
      %1322 = vmatprep.mubr.f32.mxu0 0.0
      %v1323 = vand.u32 %v1039, 4294901760
      %1324 = vmatmul.mubr.f32.gmra.mrb[0].mxu0 %v1323
      %v1325 = vpop.f32.mrb[0].mxu0
      %v1326 = vadd.f32 %v1149, %v1325
      %v1327 = vpop.f32.mrb[0].mxu0
      %1328 = vmatprep.mubr.f32.mxu0 0.0
      %v1329 = vand.u32 %v1042, 4294901760
      %1330 = vmatmul.mubr.f32.gmra.mrb[0].mxu0 %v1329
      %v1331 = vpop.f32.mrb[0].mxu0
      %v1332 = vadd.f32 %v1159, %v1331
      %v1333 = vpop.f32.mrb[0].mxu0
      %1334 = vmatprep.mubr.f32.mxu0 0.0
      %v1335 = vand.u32 %v1045, 4294901760
      %1336 = vmatmul.mubr.f32.gmra.mrb[0].mxu0 %v1335
      %v1337 = vpop.f32.mrb[0].mxu0
      %v1338 = vadd.f32 %v1169, %v1337
      %v1339 = vpop.f32.mrb[0].mxu0
      %1340 = vmatprep.mubr.f32.mxu0 0.0
      %v1341 = vand.u32 %v1048, 4294901760
      %1342 = vmatmul.mubr.f32.gmra.mrb[0].mxu0 %v1341
      %v1343 = vpop.f32.mrb[0].mxu0
      %v1344 = vadd.f32 %v1179, %v1343
      %v1345 = vpop.f32.mrb[0].mxu0
      %1346 = vmatprep.mubr.f32.mxu0 0.0
      %v1347 = vand.u32 %v1051, 4294901760
      %1348 = vmatmul.mubr.f32.gmra.mrb[0].mxu0 %v1347
      %v1349 = vpop.f32.mrb[0].mxu0
      %v1350 = vadd.f32 %v1189, %v1349
      %v1351 = vpop.f32.mrb[0].mxu0
      %1352 = vmatprep.mubr.f32.mxu0 0.0
      %v1353 = vand.u32 %v1054, 4294901760
      %1354 = vmatmul.mubr.f32.gmra.mrb[0].mxu0 %v1353
      %v1355 = vpop.f32.mrb[0].mxu0
      %v1356 = vadd.f32 %v1199, %v1355
      %v1357 = vpop.f32.mrb[0].mxu0
      %1358 = vmatprep.mubr.f32.mxu0 0.0
      %v1359 = vand.u32 %v1057, 4294901760
      %1360 = vmatmul.mubr.f32.gmra.mrb[0].mxu0 %v1359
      %v1361 = vpop.f32.mrb[0].mxu0
      %v1362 = vadd.f32 %v1209, %v1361
      %v1363 = vpop.f32.mrb[0].mxu0
      %1364 = vdwg.mxu0
      %1365 = vmatprep.subr.mxu0 0.0
      %v1366 = vand.u32 %v989, 4294901760
      %v1367 = vsub.f32 %v989, %v1366
      %1368 = vmatpush1.msra.mxu0 %v1367
      %1369 = vmatprep.subr.mxu0 0.0
      %v1370 = vand.u32 %v995, 4294901760
      %v1371 = vsub.f32 %v995, %v1370
      %1372 = vmatpush1.msra.mxu0 %v1371
      %1373 = vmatprep.subr.mxu0 0.0
      %v1374 = vand.u32 %v1001, 4294901760
      %v1375 = vsub.f32 %v1001, %v1374
      %1376 = vmatpush1.msra.mxu0 %v1375
      %1377 = vmatprep.subr.mxu0 0.0
      %v1378 = vand.u32 %v1007, 4294901760
      %v1379 = vsub.f32 %v1007, %v1378
      %1380 = vmatpush1.msra.mxu0 %v1379
      %1381 = vmatprep.subr.mxu0 0.0
      %v1382 = vand.u32 %v1013, 4294901760
      %v1383 = vsub.f32 %v1013, %v1382
      %1384 = vmatpush1.msra.mxu0 %v1383
      %1385 = vmatprep.subr.mxu0 0.0
      %v1386 = vand.u32 %v1019, 4294901760
      %v1387 = vsub.f32 %v1019, %v1386
      %1388 = vmatpush1.msra.mxu0 %v1387
      %1389 = vmatprep.subr.mxu0 0.0
      %v1390 = vand.u32 %v1025, 4294901760
      %v1391 = vsub.f32 %v1025, %v1390
      %1392 = vmatpush1.msra.mxu0 %v1391
      %1393 = vmatprep.subr.mxu0 0.0
      %v1394 = vand.u32 %v1031, 4294901760
      %v1395 = vsub.f32 %v1031, %v1394
      %1396 = vmatpush1.msra.mxu0 %v1395
      %1397 = vmatprep.subr.mxu0 0.0
      %1398 = vmatpush1.msra.mxu0 0.0
      %1399 = vmatprep.subr.mxu0 0.0
      %1400 = vmatpush1.msra.mxu0 0.0
      %1401 = vmatprep.subr.mxu0 0.0
      %1402 = vmatpush1.msra.mxu0 0.0
      %1403 = vmatprep.subr.mxu0 0.0
      %1404 = vmatpush1.msra.mxu0 0.0
      %1405 = vmatprep.subr.mxu0 0.0
      %1406 = vmatpush1.msra.mxu0 0.0
      %1407 = vmatprep.subr.mxu0 0.0
      %1408 = vmatpush1.msra.mxu0 0.0
      %1409 = vmatprep.subr.mxu0 0.0
      %1410 = vmatpush1.msra.mxu0 0.0
      %1411 = vmatprep.subr.mxu0 0.0
      %1412 = vmatpush1.msra.mxu0 0.0
      %1413 = vmatprep.subr.mxu0 0.0
      %1414 = vmatpush1.msra.mxu0 0.0
      %1415 = vmatprep.subr.mxu0 0.0
      %1416 = vmatpush1.msra.mxu0 0.0
      %1417 = vmatprep.subr.mxu0 0.0
      %1418 = vmatpush1.msra.mxu0 0.0
      %1419 = vmatprep.subr.mxu0 0.0
      %1420 = vmatpush1.msra.mxu0 0.0
      %1421 = vmatprep.subr.mxu0 0.0
      %1422 = vmatpush1.msra.mxu0 0.0
      %1423 = vmatprep.subr.mxu0 0.0
      %1424 = vmatpush1.msra.mxu0 0.0
      %1425 = vmatprep.subr.mxu0 0.0
      %1426 = vmatpush1.msra.mxu0 0.0
      %1427 = vmatprep.subr.mxu0 0.0
      %1428 = vmatpush1.msra.mxu0 0.0
      %1429 = vmatprep.subr.mxu0 0.0
      %1430 = vmatpush1.msra.mxu0 0.0
      %1431 = vmatprep.subr.mxu0 0.0
      %1432 = vmatpush1.msra.mxu0 0.0
      %1433 = vmatprep.subr.mxu0 0.0
      %1434 = vmatpush1.msra.mxu0 0.0
      %1435 = vmatprep.subr.mxu0 0.0
      %1436 = vmatpush1.msra.mxu0 0.0
      %1437 = vmatprep.subr.mxu0 0.0
      %1438 = vmatpush1.msra.mxu0 0.0
      %1439 = vmatprep.subr.mxu0 0.0
      %1440 = vmatpush1.msra.mxu0 0.0
      %1441 = vmatprep.subr.mxu0 0.0
      %1442 = vmatpush1.msra.mxu0 0.0
      %1443 = vmatprep.subr.mxu0 0.0
      %1444 = vmatpush1.msra.mxu0 0.0
      %1445 = vmatprep.mubr.f32.mxu0 0.0
      %v1446 = vand.u32 %v1036, 4294901760
      %v1447 = vsub.f32 %v1036, %v1446
      %1448 = vmatmul.mubr.f32.gmra.mrb[0].mxu0 %v1447
      %v1449 = vpop.f32.mrb[0].mxu0
      %v1450 = vadd.f32 %v1320, %v1449
      %v1451 = vpop.f32.mrb[0].mxu0
      %1452 = vmatprep.mubr.f32.mxu0 0.0
      %v1453 = vand.u32 %v1039, 4294901760
      %v1454 = vsub.f32 %v1039, %v1453
      %1455 = vmatmul.mubr.f32.gmra.mrb[0].mxu0 %v1454
      %v1456 = vpop.f32.mrb[0].mxu0
      %v1457 = vadd.f32 %v1326, %v1456
      %v1458 = vpop.f32.mrb[0].mxu0
      %1459 = vmatprep.mubr.f32.mxu0 0.0
      %v1460 = vand.u32 %v1042, 4294901760
      %v1461 = vsub.f32 %v1042, %v1460
      %1462 = vmatmul.mubr.f32.gmra.mrb[0].mxu0 %v1461
      %v1463 = vpop.f32.mrb[0].mxu0
      %v1464 = vadd.f32 %v1332, %v1463
      %v1465 = vpop.f32.mrb[0].mxu0
      %1466 = vmatprep.mubr.f32.mxu0 0.0
      %v1467 = vand.u32 %v1045, 4294901760
      %v1468 = vsub.f32 %v1045, %v1467
      %1469 = vmatmul.mubr.f32.gmra.mrb[0].mxu0 %v1468
      %v1470 = vpop.f32.mrb[0].mxu0
      %v1471 = vadd.f32 %v1338, %v1470
      %v1472 = vpop.f32.mrb[0].mxu0
      %1473 = vmatprep.mubr.f32.mxu0 0.0
      %v1474 = vand.u32 %v1048, 4294901760
      %v1475 = vsub.f32 %v1048, %v1474
      %1476 = vmatmul.mubr.f32.gmra.mrb[0].mxu0 %v1475
      %v1477 = vpop.f32.mrb[0].mxu0
      %v1478 = vadd.f32 %v1344, %v1477
      %v1479 = vpop.f32.mrb[0].mxu0
      %1480 = vmatprep.mubr.f32.mxu0 0.0
      %v1481 = vand.u32 %v1051, 4294901760
      %v1482 = vsub.f32 %v1051, %v1481
      %1483 = vmatmul.mubr.f32.gmra.mrb[0].mxu0 %v1482
      %v1484 = vpop.f32.mrb[0].mxu0
      %v1485 = vadd.f32 %v1350, %v1484
      %v1486 = vpop.f32.mrb[0].mxu0
      %1487 = vmatprep.mubr.f32.mxu0 0.0
      %v1488 = vand.u32 %v1054, 4294901760
      %v1489 = vsub.f32 %v1054, %v1488
      %1490 = vmatmul.mubr.f32.gmra.mrb[0].mxu0 %v1489
      %v1491 = vpop.f32.mrb[0].mxu0
      %v1492 = vadd.f32 %v1356, %v1491
      %v1493 = vpop.f32.mrb[0].mxu0
      %1494 = vmatprep.mubr.f32.mxu0 0.0
      %v1495 = vand.u32 %v1057, 4294901760
      %v1496 = vsub.f32 %v1057, %v1495
      %1497 = vmatmul.mubr.f32.gmra.mrb[0].mxu0 %v1496
      %v1498 = vpop.f32.mrb[0].mxu0
      %v1499 = vadd.f32 %v1362, %v1498
      %v1500 = vpop.f32.mrb[0].mxu0
      %1501 = vdwg.mxu0
      %1502 = vmatprep.subr.mxu0 0.0
      %v1503 = vand.u32 %v989, 4294901760
      %1504 = vmatpush1.msra.mxu0 %v1503
      %1505 = vmatprep.subr.mxu0 0.0
      %v1506 = vand.u32 %v995, 4294901760
      %1507 = vmatpush1.msra.mxu0 %v1506
      %1508 = vmatprep.subr.mxu0 0.0
      %v1509 = vand.u32 %v1001, 4294901760
      %1510 = vmatpush1.msra.mxu0 %v1509
      %1511 = vmatprep.subr.mxu0 0.0
      %v1512 = vand.u32 %v1007, 4294901760
      %1513 = vmatpush1.msra.mxu0 %v1512
      %1514 = vmatprep.subr.mxu0 0.0
      %v1515 = vand.u32 %v1013, 4294901760
      %1516 = vmatpush1.msra.mxu0 %v1515
      %1517 = vmatprep.subr.mxu0 0.0
      %v1518 = vand.u32 %v1019, 4294901760
      %1519 = vmatpush1.msra.mxu0 %v1518
      %1520 = vmatprep.subr.mxu0 0.0
      %v1521 = vand.u32 %v1025, 4294901760
      %1522 = vmatpush1.msra.mxu0 %v1521
      %1523 = vmatprep.subr.mxu0 0.0
      %v1524 = vand.u32 %v1031, 4294901760
      %1525 = vmatpush1.msra.mxu0 %v1524
      %1526 = vmatprep.subr.mxu0 0.0
      %1527 = vmatpush1.msra.mxu0 0.0
      %1528 = vmatprep.subr.mxu0 0.0
      %1529 = vmatpush1.msra.mxu0 0.0
      %1530 = vmatprep.subr.mxu0 0.0
      %1531 = vmatpush1.msra.mxu0 0.0
      %1532 = vmatprep.subr.mxu0 0.0
      %1533 = vmatpush1.msra.mxu0 0.0
      %1534 = vmatprep.subr.mxu0 0.0
      %1535 = vmatpush1.msra.mxu0 0.0
      %1536 = vmatprep.subr.mxu0 0.0
      %1537 = vmatpush1.msra.mxu0 0.0
      %1538 = vmatprep.subr.mxu0 0.0
      %1539 = vmatpush1.msra.mxu0 0.0
      %1540 = vmatprep.subr.mxu0 0.0
      %1541 = vmatpush1.msra.mxu0 0.0
      %1542 = vmatprep.subr.mxu0 0.0
      %1543 = vmatpush1.msra.mxu0 0.0
      %1544 = vmatprep.subr.mxu0 0.0
      %1545 = vmatpush1.msra.mxu0 0.0
      %1546 = vmatprep.subr.mxu0 0.0
      %1547 = vmatpush1.msra.mxu0 0.0
      %1548 = vmatprep.subr.mxu0 0.0
      %1549 = vmatpush1.msra.mxu0 0.0
      %1550 = vmatprep.subr.mxu0 0.0
      %1551 = vmatpush1.msra.mxu0 0.0
      %1552 = vmatprep.subr.mxu0 0.0
      %1553 = vmatpush1.msra.mxu0 0.0
      %1554 = vmatprep.subr.mxu0 0.0
      %1555 = vmatpush1.msra.mxu0 0.0
      %1556 = vmatprep.subr.mxu0 0.0
      %1557 = vmatpush1.msra.mxu0 0.0
      %1558 = vmatprep.subr.mxu0 0.0
      %1559 = vmatpush1.msra.mxu0 0.0
      %1560 = vmatprep.subr.mxu0 0.0
      %1561 = vmatpush1.msra.mxu0 0.0
      %1562 = vmatprep.subr.mxu0 0.0
      %1563 = vmatpush1.msra.mxu0 0.0
      %1564 = vmatprep.subr.mxu0 0.0
      %1565 = vmatpush1.msra.mxu0 0.0
      %1566 = vmatprep.subr.mxu0 0.0
      %1567 = vmatpush1.msra.mxu0 0.0
      %1568 = vmatprep.subr.mxu0 0.0
      %1569 = vmatpush1.msra.mxu0 0.0
      %1570 = vmatprep.subr.mxu0 0.0
      %1571 = vmatpush1.msra.mxu0 0.0
      %1572 = vmatprep.subr.mxu0 0.0
      %1573 = vmatpush1.msra.mxu0 0.0
      %1574 = vmatprep.mubr.f32.mxu0 0.0
      %v1575 = vand.u32 %v1036, 4294901760
      %v1576 = vsub.f32 %v1036, %v1575
      %v1577 = vand.u32 %v1576, 4294901760
      %1578 = vmatmul.mubr.f32.gmra.mrb[0].mxu0 %v1577
      %v1579 = vpop.f32.mrb[0].mxu0
      %v1580 = vadd.f32 %v1450, %v1579
      %v1581 = vpop.f32.mrb[0].mxu0
      %1582 = vmatprep.mubr.f32.mxu0 0.0
      %v1583 = vand.u32 %v1039, 4294901760
      %v1584 = vsub.f32 %v1039, %v1583
      %v1585 = vand.u32 %v1584, 4294901760
      %1586 = vmatmul.mubr.f32.gmra.mrb[0].mxu0 %v1585
      %v1587 = vpop.f32.mrb[0].mxu0
      %v1588 = vadd.f32 %v1457, %v1587
      %v1589 = vpop.f32.mrb[0].mxu0
      %1590 = vmatprep.mubr.f32.mxu0 0.0
      %v1591 = vand.u32 %v1042, 4294901760
      %v1592 = vsub.f32 %v1042, %v1591
      %v1593 = vand.u32 %v1592, 4294901760
      %1594 = vmatmul.mubr.f32.gmra.mrb[0].mxu0 %v1593
      %v1595 = vpop.f32.mrb[0].mxu0
      %v1596 = vadd.f32 %v1464, %v1595
      %v1597 = vpop.f32.mrb[0].mxu0
      %1598 = vmatprep.mubr.f32.mxu0 0.0
      %v1599 = vand.u32 %v1045, 4294901760
      %v1600 = vsub.f32 %v1045, %v1599
      %v1601 = vand.u32 %v1600, 4294901760
      %1602 = vmatmul.mubr.f32.gmra.mrb[0].mxu0 %v1601
      %v1603 = vpop.f32.mrb[0].mxu0
      %v1604 = vadd.f32 %v1471, %v1603
      %v1605 = vpop.f32.mrb[0].mxu0
      %1606 = vmatprep.mubr.f32.mxu0 0.0
      %v1607 = vand.u32 %v1048, 4294901760
      %v1608 = vsub.f32 %v1048, %v1607
      %v1609 = vand.u32 %v1608, 4294901760
      %1610 = vmatmul.mubr.f32.gmra.mrb[0].mxu0 %v1609
      %v1611 = vpop.f32.mrb[0].mxu0
      %v1612 = vadd.f32 %v1478, %v1611
      %v1613 = vpop.f32.mrb[0].mxu0
      %1614 = vmatprep.mubr.f32.mxu0 0.0
      %v1615 = vand.u32 %v1051, 4294901760
      %v1616 = vsub.f32 %v1051, %v1615
      %v1617 = vand.u32 %v1616, 4294901760
      %1618 = vmatmul.mubr.f32.gmra.mrb[0].mxu0 %v1617
      %v1619 = vpop.f32.mrb[0].mxu0
      %v1620 = vadd.f32 %v1485, %v1619
      %v1621 = vpop.f32.mrb[0].mxu0
      %1622 = vmatprep.mubr.f32.mxu0 0.0
      %v1623 = vand.u32 %v1054, 4294901760
      %v1624 = vsub.f32 %v1054, %v1623
      %v1625 = vand.u32 %v1624, 4294901760
      %1626 = vmatmul.mubr.f32.gmra.mrb[0].mxu0 %v1625
      %v1627 = vpop.f32.mrb[0].mxu0
      %v1628 = vadd.f32 %v1492, %v1627
      %v1629 = vpop.f32.mrb[0].mxu0
      %1630 = vmatprep.mubr.f32.mxu0 0.0
      %v1631 = vand.u32 %v1057, 4294901760
      %v1632 = vsub.f32 %v1057, %v1631
      %v1633 = vand.u32 %v1632, 4294901760
      %1634 = vmatmul.mubr.f32.gmra.mrb[0].mxu0 %v1633
      %v1635 = vpop.f32.mrb[0].mxu0
      %v1636 = vadd.f32 %v1499, %v1635
      %v1637 = vpop.f32.mrb[0].mxu0
      %1638 = vdwg.mxu0
      %1639 = vmatprep.subr.mxu0 0.0
      %v1640 = vand.u32 %v989, 4294901760
      %v1641 = vsub.f32 %v989, %v1640
      %v1642 = vand.u32 %v1641, 4294901760
      %1643 = vmatpush1.msra.mxu0 %v1642
      %1644 = vmatprep.subr.mxu0 0.0
      %v1645 = vand.u32 %v995, 4294901760
      %v1646 = vsub.f32 %v995, %v1645
      %v1647 = vand.u32 %v1646, 4294901760
      %1648 = vmatpush1.msra.mxu0 %v1647
      %1649 = vmatprep.subr.mxu0 0.0
      %v1650 = vand.u32 %v1001, 4294901760
      %v1651 = vsub.f32 %v1001, %v1650
      %v1652 = vand.u32 %v1651, 4294901760
      %1653 = vmatpush1.msra.mxu0 %v1652
      %1654 = vmatprep.subr.mxu0 0.0
      %v1655 = vand.u32 %v1007, 4294901760
      %v1656 = vsub.f32 %v1007, %v1655
      %v1657 = vand.u32 %v1656, 4294901760
      %1658 = vmatpush1.msra.mxu0 %v1657
      %1659 = vmatprep.subr.mxu0 0.0
      %v1660 = vand.u32 %v1013, 4294901760
      %v1661 = vsub.f32 %v1013, %v1660
      %v1662 = vand.u32 %v1661, 4294901760
      %1663 = vmatpush1.msra.mxu0 %v1662
      %1664 = vmatprep.subr.mxu0 0.0
      %v1665 = vand.u32 %v1019, 4294901760
      %v1666 = vsub.f32 %v1019, %v1665
      %v1667 = vand.u32 %v1666, 4294901760
      %1668 = vmatpush1.msra.mxu0 %v1667
      %1669 = vmatprep.subr.mxu0 0.0
      %v1670 = vand.u32 %v1025, 4294901760
      %v1671 = vsub.f32 %v1025, %v1670
      %v1672 = vand.u32 %v1671, 4294901760
      %1673 = vmatpush1.msra.mxu0 %v1672
      %1674 = vmatprep.subr.mxu0 0.0
      %v1675 = vand.u32 %v1031, 4294901760
      %v1676 = vsub.f32 %v1031, %v1675
      %v1677 = vand.u32 %v1676, 4294901760
      %1678 = vmatpush1.msra.mxu0 %v1677
      %1679 = vmatprep.subr.mxu0 0.0
      %1680 = vmatpush1.msra.mxu0 0.0
      %1681 = vmatprep.subr.mxu0 0.0
      %1682 = vmatpush1.msra.mxu0 0.0
      %1683 = vmatprep.subr.mxu0 0.0
      %1684 = vmatpush1.msra.mxu0 0.0
      %1685 = vmatprep.subr.mxu0 0.0
      %1686 = vmatpush1.msra.mxu0 0.0
      %1687 = vmatprep.subr.mxu0 0.0
      %1688 = vmatpush1.msra.mxu0 0.0
      %1689 = vmatprep.subr.mxu0 0.0
      %1690 = vmatpush1.msra.mxu0 0.0
      %1691 = vmatprep.subr.mxu0 0.0
      %1692 = vmatpush1.msra.mxu0 0.0
      %1693 = vmatprep.subr.mxu0 0.0
      %1694 = vmatpush1.msra.mxu0 0.0
      %1695 = vmatprep.subr.mxu0 0.0
      %1696 = vmatpush1.msra.mxu0 0.0
      %1697 = vmatprep.subr.mxu0 0.0
      %1698 = vmatpush1.msra.mxu0 0.0
      %1699 = vmatprep.subr.mxu0 0.0
      %1700 = vmatpush1.msra.mxu0 0.0
      %1701 = vmatprep.subr.mxu0 0.0
      %1702 = vmatpush1.msra.mxu0 0.0
      %1703 = vmatprep.subr.mxu0 0.0
      %1704 = vmatpush1.msra.mxu0 0.0
      %1705 = vmatprep.subr.mxu0 0.0
      %1706 = vmatpush1.msra.mxu0 0.0
      %1707 = vmatprep.subr.mxu0 0.0
      %1708 = vmatpush1.msra.mxu0 0.0
      %1709 = vmatprep.subr.mxu0 0.0
      %1710 = vmatpush1.msra.mxu0 0.0
      %1711 = vmatprep.subr.mxu0 0.0
      %1712 = vmatpush1.msra.mxu0 0.0
      %1713 = vmatprep.subr.mxu0 0.0
      %1714 = vmatpush1.msra.mxu0 0.0
      %1715 = vmatprep.subr.mxu0 0.0
      %1716 = vmatpush1.msra.mxu0 0.0
      %1717 = vmatprep.subr.mxu0 0.0
      %1718 = vmatpush1.msra.mxu0 0.0
      %1719 = vmatprep.subr.mxu0 0.0
      %1720 = vmatpush1.msra.mxu0 0.0
      %1721 = vmatprep.subr.mxu0 0.0
      %1722 = vmatpush1.msra.mxu0 0.0
      %1723 = vmatprep.subr.mxu0 0.0
      %1724 = vmatpush1.msra.mxu0 0.0
      %1725 = vmatprep.subr.mxu0 0.0
      %1726 = vmatpush1.msra.mxu0 0.0
      %1727 = vmatprep.mubr.f32.mxu0 0.0
      %v1728 = vand.u32 %v1036, 4294901760
      %1729 = vmatmul.mubr.f32.gmra.mrb[0].mxu0 %v1728
      %v1730 = vpop.f32.mrb[0].mxu0
      %v1731 = vadd.f32 %v1580, %v1730
      %v1732 = vpop.f32.mrb[0].mxu0
      %1733 = vmatprep.mubr.f32.mxu0 0.0
      %v1734 = vand.u32 %v1039, 4294901760
      %1735 = vmatmul.mubr.f32.gmra.mrb[0].mxu0 %v1734
      %v1736 = vpop.f32.mrb[0].mxu0
      %v1737 = vadd.f32 %v1588, %v1736
      %v1738 = vpop.f32.mrb[0].mxu0
      %1739 = vmatprep.mubr.f32.mxu0 0.0
      %v1740 = vand.u32 %v1042, 4294901760
      %1741 = vmatmul.mubr.f32.gmra.mrb[0].mxu0 %v1740
      %v1742 = vpop.f32.mrb[0].mxu0
      %v1743 = vadd.f32 %v1596, %v1742
      %v1744 = vpop.f32.mrb[0].mxu0
      %1745 = vmatprep.mubr.f32.mxu0 0.0
      %v1746 = vand.u32 %v1045, 4294901760
      %1747 = vmatmul.mubr.f32.gmra.mrb[0].mxu0 %v1746
      %v1748 = vpop.f32.mrb[0].mxu0
      %v1749 = vadd.f32 %v1604, %v1748
      %v1750 = vpop.f32.mrb[0].mxu0
      %1751 = vmatprep.mubr.f32.mxu0 0.0
      %v1752 = vand.u32 %v1048, 4294901760
      %1753 = vmatmul.mubr.f32.gmra.mrb[0].mxu0 %v1752
      %v1754 = vpop.f32.mrb[0].mxu0
      %v1755 = vadd.f32 %v1612, %v1754
      %v1756 = vpop.f32.mrb[0].mxu0
      %1757 = vmatprep.mubr.f32.mxu0 0.0
      %v1758 = vand.u32 %v1051, 4294901760
      %1759 = vmatmul.mubr.f32.gmra.mrb[0].mxu0 %v1758
      %v1760 = vpop.f32.mrb[0].mxu0
      %v1761 = vadd.f32 %v1620, %v1760
      %v1762 = vpop.f32.mrb[0].mxu0
      %1763 = vmatprep.mubr.f32.mxu0 0.0
      %v1764 = vand.u32 %v1054, 4294901760
      %1765 = vmatmul.mubr.f32.gmra.mrb[0].mxu0 %v1764
      %v1766 = vpop.f32.mrb[0].mxu0
      %v1767 = vadd.f32 %v1628, %v1766
      %v1768 = vpop.f32.mrb[0].mxu0
      %1769 = vmatprep.mubr.f32.mxu0 0.0
      %v1770 = vand.u32 %v1057, 4294901760
      %1771 = vmatmul.mubr.f32.gmra.mrb[0].mxu0 %v1770
      %v1772 = vpop.f32.mrb[0].mxu0
      %v1773 = vadd.f32 %v1636, %v1772
      %v1774 = vpop.f32.mrb[0].mxu0
      %1775 = vdwg.mxu0
      %1776 = vmatprep.subr.mxu0 0.0
      %v1777 = vand.u32 %v989, 4294901760
      %1778 = vmatpush1.msra.mxu0 %v1777
      %1779 = vmatprep.subr.mxu0 0.0
      %v1780 = vand.u32 %v995, 4294901760
      %1781 = vmatpush1.msra.mxu0 %v1780
      %1782 = vmatprep.subr.mxu0 0.0
      %v1783 = vand.u32 %v1001, 4294901760
      %1784 = vmatpush1.msra.mxu0 %v1783
      %1785 = vmatprep.subr.mxu0 0.0
      %v1786 = vand.u32 %v1007, 4294901760
      %1787 = vmatpush1.msra.mxu0 %v1786
      %1788 = vmatprep.subr.mxu0 0.0
      %v1789 = vand.u32 %v1013, 4294901760
      %1790 = vmatpush1.msra.mxu0 %v1789
      %1791 = vmatprep.subr.mxu0 0.0
      %v1792 = vand.u32 %v1019, 4294901760
      %1793 = vmatpush1.msra.mxu0 %v1792
      %1794 = vmatprep.subr.mxu0 0.0
      %v1795 = vand.u32 %v1025, 4294901760
      %1796 = vmatpush1.msra.mxu0 %v1795
      %1797 = vmatprep.subr.mxu0 0.0
      %v1798 = vand.u32 %v1031, 4294901760
      %1799 = vmatpush1.msra.mxu0 %v1798
      %1800 = vmatprep.subr.mxu0 0.0
      %1801 = vmatpush1.msra.mxu0 0.0
      %1802 = vmatprep.subr.mxu0 0.0
      %1803 = vmatpush1.msra.mxu0 0.0
      %1804 = vmatprep.subr.mxu0 0.0
      %1805 = vmatpush1.msra.mxu0 0.0
      %1806 = vmatprep.subr.mxu0 0.0
      %1807 = vmatpush1.msra.mxu0 0.0
      %1808 = vmatprep.subr.mxu0 0.0
      %1809 = vmatpush1.msra.mxu0 0.0
      %1810 = vmatprep.subr.mxu0 0.0
      %1811 = vmatpush1.msra.mxu0 0.0
      %1812 = vmatprep.subr.mxu0 0.0
      %1813 = vmatpush1.msra.mxu0 0.0
      %1814 = vmatprep.subr.mxu0 0.0
      %1815 = vmatpush1.msra.mxu0 0.0
      %1816 = vmatprep.subr.mxu0 0.0
      %1817 = vmatpush1.msra.mxu0 0.0
      %1818 = vmatprep.subr.mxu0 0.0
      %1819 = vmatpush1.msra.mxu0 0.0
      %1820 = vmatprep.subr.mxu0 0.0
      %1821 = vmatpush1.msra.mxu0 0.0
      %1822 = vmatprep.subr.mxu0 0.0
      %1823 = vmatpush1.msra.mxu0 0.0
      %1824 = vmatprep.subr.mxu0 0.0
      %1825 = vmatpush1.msra.mxu0 0.0
      %1826 = vmatprep.subr.mxu0 0.0
      %1827 = vmatpush1.msra.mxu0 0.0
      %1828 = vmatprep.subr.mxu0 0.0
      %1829 = vmatpush1.msra.mxu0 0.0
      %1830 = vmatprep.subr.mxu0 0.0
      %1831 = vmatpush1.msra.mxu0 0.0
      %1832 = vmatprep.subr.mxu0 0.0
      %1833 = vmatpush1.msra.mxu0 0.0
      %1834 = vmatprep.subr.mxu0 0.0
      %1835 = vmatpush1.msra.mxu0 0.0
      %1836 = vmatprep.subr.mxu0 0.0
      %1837 = vmatpush1.msra.mxu0 0.0
      %1838 = vmatprep.subr.mxu0 0.0
      %1839 = vmatpush1.msra.mxu0 0.0
      %1840 = vmatprep.subr.mxu0 0.0
      %1841 = vmatpush1.msra.mxu0 0.0
      %1842 = vmatprep.subr.mxu0 0.0
      %1843 = vmatpush1.msra.mxu0 0.0
      %1844 = vmatprep.subr.mxu0 0.0
      %1845 = vmatpush1.msra.mxu0 0.0
      %1846 = vmatprep.subr.mxu0 0.0
      %1847 = vmatpush1.msra.mxu0 0.0
      %1848 = vmatprep.mubr.f32.mxu0 0.0
      %v1849 = vand.u32 %v1036, 4294901760
      %1850 = vmatmul.mubr.f32.gmra.mrb[0].mxu0 %v1849
      %v1851 = vpop.f32.mrb[0].mxu0
      %v1852 = vadd.f32 %v1731, %v1851
      %v1853 = vpop.f32.mrb[0].mxu0
      %1854 = vmatprep.mubr.f32.mxu0 0.0
      %v1855 = vand.u32 %v1039, 4294901760
      %1856 = vmatmul.mubr.f32.gmra.mrb[0].mxu0 %v1855
      %v1857 = vpop.f32.mrb[0].mxu0
      %v1858 = vadd.f32 %v1737, %v1857
      %v1859 = vpop.f32.mrb[0].mxu0
      %1860 = vmatprep.mubr.f32.mxu0 0.0
      %v1861 = vand.u32 %v1042, 4294901760
      %1862 = vmatmul.mubr.f32.gmra.mrb[0].mxu0 %v1861
      %v1863 = vpop.f32.mrb[0].mxu0
      %v1864 = vadd.f32 %v1743, %v1863
      %v1865 = vpop.f32.mrb[0].mxu0
      %1866 = vmatprep.mubr.f32.mxu0 0.0
      %v1867 = vand.u32 %v1045, 4294901760
      %1868 = vmatmul.mubr.f32.gmra.mrb[0].mxu0 %v1867
      %v1869 = vpop.f32.mrb[0].mxu0
      %v1870 = vadd.f32 %v1749, %v1869
      %v1871 = vpop.f32.mrb[0].mxu0
      %1872 = vmatprep.mubr.f32.mxu0 0.0
      %v1873 = vand.u32 %v1048, 4294901760
      %1874 = vmatmul.mubr.f32.gmra.mrb[0].mxu0 %v1873
      %v1875 = vpop.f32.mrb[0].mxu0
      %v1876 = vadd.f32 %v1755, %v1875
      %v1877 = vpop.f32.mrb[0].mxu0
      %1878 = vmatprep.mubr.f32.mxu0 0.0
      %v1879 = vand.u32 %v1051, 4294901760
      %1880 = vmatmul.mubr.f32.gmra.mrb[0].mxu0 %v1879
      %v1881 = vpop.f32.mrb[0].mxu0
      %v1882 = vadd.f32 %v1761, %v1881
      %v1883 = vpop.f32.mrb[0].mxu0
      %1884 = vmatprep.mubr.f32.mxu0 0.0
      %v1885 = vand.u32 %v1054, 4294901760
      %1886 = vmatmul.mubr.f32.gmra.mrb[0].mxu0 %v1885
      %v1887 = vpop.f32.mrb[0].mxu0
      %v1888 = vadd.f32 %v1767, %v1887
      %v1889 = vpop.f32.mrb[0].mxu0
      %1890 = vmatprep.mubr.f32.mxu0 0.0
      %v1891 = vand.u32 %v1057, 4294901760
      %1892 = vmatmul.mubr.f32.gmra.mrb[0].mxu0 %v1891
      %v1893 = vpop.f32.mrb[0].mxu0
      %v1894 = vadd.f32 %v1773, %v1893
      %v1895 = vpop.f32.mrb[0].mxu0
      %1896 = vdwg.mxu0
      %v1898 = vsel %vm249, %v231, 0
      %v1901 = vsel %vm249, %v232, 0
      %v1904 = vsel %vm249, %v233, 0
      %v1907 = vsel %vm249, %v234, 0
      %v1910 = vsel %vm249, %v235, 0
      %v1913 = vsel %vm249, %v236, 0
      %v1916 = vsel %vm249, %v237, 0
      %v1919 = vsel %vm249, %v238, 0
      %1921 = vmatprep.subr.mxu0 0.0
      %v1922 = vand.u32 %v247, 4294901760
      %1923 = vmatpush1.msra.mxu0 %v1922
      %1924 = vmatprep.subr.mxu0 0.0
      %v1925 = vand.u32 %v248, 4294901760
      %1926 = vmatpush1.msra.mxu0 %v1925
      %1927 = vmatprep.subr.mxu0 0.0
      %1928 = vmatpush1.msra.mxu0 0.0
      %1929 = vmatprep.subr.mxu0 0.0
      %1930 = vmatpush1.msra.mxu0 0.0
      %1931 = vmatprep.subr.mxu0 0.0
      %1932 = vmatpush1.msra.mxu0 0.0
      %1933 = vmatprep.subr.mxu0 0.0
      %1934 = vmatpush1.msra.mxu0 0.0
      %1935 = vmatprep.subr.mxu0 0.0
      %1936 = vmatpush1.msra.mxu0 0.0
      %1937 = vmatprep.subr.mxu0 0.0
      %1938 = vmatpush1.msra.mxu0 0.0
      %1939 = vmatprep.subr.mxu0 0.0
      %1940 = vmatpush1.msra.mxu0 0.0
      %1941 = vmatprep.subr.mxu0 0.0
      %1942 = vmatpush1.msra.mxu0 0.0
      %1943 = vmatprep.subr.mxu0 0.0
      %1944 = vmatpush1.msra.mxu0 0.0
      %1945 = vmatprep.subr.mxu0 0.0
      %1946 = vmatpush1.msra.mxu0 0.0
      %1947 = vmatprep.subr.mxu0 0.0
      %1948 = vmatpush1.msra.mxu0 0.0
      %1949 = vmatprep.subr.mxu0 0.0
      %1950 = vmatpush1.msra.mxu0 0.0
      %1951 = vmatprep.subr.mxu0 0.0
      %1952 = vmatpush1.msra.mxu0 0.0
      %1953 = vmatprep.subr.mxu0 0.0
      %1954 = vmatpush1.msra.mxu0 0.0
      %1955 = vmatprep.subr.mxu0 0.0
      %1956 = vmatpush1.msra.mxu0 0.0
      %1957 = vmatprep.subr.mxu0 0.0
      %1958 = vmatpush1.msra.mxu0 0.0
      %1959 = vmatprep.subr.mxu0 0.0
      %1960 = vmatpush1.msra.mxu0 0.0
      %1961 = vmatprep.subr.mxu0 0.0
      %1962 = vmatpush1.msra.mxu0 0.0
      %1963 = vmatprep.subr.mxu0 0.0
      %1964 = vmatpush1.msra.mxu0 0.0
      %1965 = vmatprep.subr.mxu0 0.0
      %1966 = vmatpush1.msra.mxu0 0.0
      %1967 = vmatprep.subr.mxu0 0.0
      %1968 = vmatpush1.msra.mxu0 0.0
      %1969 = vmatprep.subr.mxu0 0.0
      %1970 = vmatpush1.msra.mxu0 0.0
      %1971 = vmatprep.subr.mxu0 0.0
      %1972 = vmatpush1.msra.mxu0 0.0
      %1973 = vmatprep.subr.mxu0 0.0
      %1974 = vmatpush1.msra.mxu0 0.0
      %1975 = vmatprep.subr.mxu0 0.0
      %1976 = vmatpush1.msra.mxu0 0.0
      %1977 = vmatprep.subr.mxu0 0.0
      %1978 = vmatpush1.msra.mxu0 0.0
      %1979 = vmatprep.subr.mxu0 0.0
      %1980 = vmatpush1.msra.mxu0 0.0
      %1981 = vmatprep.subr.mxu0 0.0
      %1982 = vmatpush1.msra.mxu0 0.0
      %1983 = vmatprep.subr.mxu0 0.0
      %1984 = vmatpush1.msra.mxu0 0.0
      %1985 = vmatprep.subr.mxu0 0.0
      %1986 = vmatpush1.msra.mxu0 0.0
      %1987 = vmatprep.mubr.f32.mxu0 0.0
      %v1988 = vand.u32 %v1898, 4294901760
      %v1989 = vsub.f32 %v1898, %v1988
      %v1990 = vand.u32 %v1989, 4294901760
      %v1991 = vsub.f32 %v1989, %v1990
      %v1992 = vand.u32 %v1991, 4294901760
      %1993 = vmatmul.mubr.f32.gmra.mrb[0].mxu0 %v1992
      %v1994 = vpop.f32.mrb[0].mxu0
      %v1995 = vadd.f32 0.0, %v1994
      %v1996 = vpop.f32.mrb[0].mxu0
      %1997 = vmatprep.mubr.f32.mxu0 0.0
      %v1998 = vand.u32 %v1901, 4294901760
      %v1999 = vsub.f32 %v1901, %v1998
      %v2000 = vand.u32 %v1999, 4294901760
      %v2001 = vsub.f32 %v1999, %v2000
      %v2002 = vand.u32 %v2001, 4294901760
      %2003 = vmatmul.mubr.f32.gmra.mrb[0].mxu0 %v2002
      %v2004 = vpop.f32.mrb[0].mxu0
      %v2005 = vadd.f32 0.0, %v2004
      %v2006 = vpop.f32.mrb[0].mxu0
      %2007 = vmatprep.mubr.f32.mxu0 0.0
      %v2008 = vand.u32 %v1904, 4294901760
      %v2009 = vsub.f32 %v1904, %v2008
      %v2010 = vand.u32 %v2009, 4294901760
      %v2011 = vsub.f32 %v2009, %v2010
      %v2012 = vand.u32 %v2011, 4294901760
      %2013 = vmatmul.mubr.f32.gmra.mrb[0].mxu0 %v2012
      %v2014 = vpop.f32.mrb[0].mxu0
      %v2015 = vadd.f32 0.0, %v2014
      %v2016 = vpop.f32.mrb[0].mxu0
      %2017 = vmatprep.mubr.f32.mxu0 0.0
      %v2018 = vand.u32 %v1907, 4294901760
      %v2019 = vsub.f32 %v1907, %v2018
      %v2020 = vand.u32 %v2019, 4294901760
      %v2021 = vsub.f32 %v2019, %v2020
      %v2022 = vand.u32 %v2021, 4294901760
      %2023 = vmatmul.mubr.f32.gmra.mrb[0].mxu0 %v2022
      %v2024 = vpop.f32.mrb[0].mxu0
      %v2025 = vadd.f32 0.0, %v2024
      %v2026 = vpop.f32.mrb[0].mxu0
      %2027 = vmatprep.mubr.f32.mxu0 0.0
      %v2028 = vand.u32 %v1910, 4294901760
      %v2029 = vsub.f32 %v1910, %v2028
      %v2030 = vand.u32 %v2029, 4294901760
      %v2031 = vsub.f32 %v2029, %v2030
      %v2032 = vand.u32 %v2031, 4294901760
      %2033 = vmatmul.mubr.f32.gmra.mrb[0].mxu0 %v2032
      %v2034 = vpop.f32.mrb[0].mxu0
      %v2035 = vadd.f32 0.0, %v2034
      %v2036 = vpop.f32.mrb[0].mxu0
      %2037 = vmatprep.mubr.f32.mxu0 0.0
      %v2038 = vand.u32 %v1913, 4294901760
      %v2039 = vsub.f32 %v1913, %v2038
      %v2040 = vand.u32 %v2039, 4294901760
      %v2041 = vsub.f32 %v2039, %v2040
      %v2042 = vand.u32 %v2041, 4294901760
      %2043 = vmatmul.mubr.f32.gmra.mrb[0].mxu0 %v2042
      %v2044 = vpop.f32.mrb[0].mxu0
      %v2045 = vadd.f32 0.0, %v2044
      %v2046 = vpop.f32.mrb[0].mxu0
      %2047 = vmatprep.mubr.f32.mxu0 0.0
      %v2048 = vand.u32 %v1916, 4294901760
      %v2049 = vsub.f32 %v1916, %v2048
      %v2050 = vand.u32 %v2049, 4294901760
      %v2051 = vsub.f32 %v2049, %v2050
      %v2052 = vand.u32 %v2051, 4294901760
      %2053 = vmatmul.mubr.f32.gmra.mrb[0].mxu0 %v2052
      %v2054 = vpop.f32.mrb[0].mxu0
      %v2055 = vadd.f32 0.0, %v2054
      %v2056 = vpop.f32.mrb[0].mxu0
      %2057 = vmatprep.mubr.f32.mxu0 0.0
      %v2058 = vand.u32 %v1919, 4294901760
      %v2059 = vsub.f32 %v1919, %v2058
      %v2060 = vand.u32 %v2059, 4294901760
      %v2061 = vsub.f32 %v2059, %v2060
      %v2062 = vand.u32 %v2061, 4294901760
      %2063 = vmatmul.mubr.f32.gmra.mrb[0].mxu0 %v2062
      %v2064 = vpop.f32.mrb[0].mxu0
      %v2065 = vadd.f32 0.0, %v2064
      %v2066 = vpop.f32.mrb[0].mxu0
      %2067 = vdwg.mxu0
      %2068 = vmatprep.subr.mxu0 0.0
      %v2069 = vand.u32 %v247, 4294901760
      %v2070 = vsub.f32 %v247, %v2069
      %v2071 = vand.u32 %v2070, 4294901760
      %v2072 = vsub.f32 %v2070, %v2071
      %v2073 = vand.u32 %v2072, 4294901760
      %2074 = vmatpush1.msra.mxu0 %v2073
      %2075 = vmatprep.subr.mxu0 0.0
      %v2076 = vand.u32 %v248, 4294901760
      %v2077 = vsub.f32 %v248, %v2076
      %v2078 = vand.u32 %v2077, 4294901760
      %v2079 = vsub.f32 %v2077, %v2078
      %v2080 = vand.u32 %v2079, 4294901760
      %2081 = vmatpush1.msra.mxu0 %v2080
      %2082 = vmatprep.subr.mxu0 0.0
      %2083 = vmatpush1.msra.mxu0 0.0
      %2084 = vmatprep.subr.mxu0 0.0
      %2085 = vmatpush1.msra.mxu0 0.0
      %2086 = vmatprep.subr.mxu0 0.0
      %2087 = vmatpush1.msra.mxu0 0.0
      %2088 = vmatprep.subr.mxu0 0.0
      %2089 = vmatpush1.msra.mxu0 0.0
      %2090 = vmatprep.subr.mxu0 0.0
      %2091 = vmatpush1.msra.mxu0 0.0
      %2092 = vmatprep.subr.mxu0 0.0
      %2093 = vmatpush1.msra.mxu0 0.0
      %2094 = vmatprep.subr.mxu0 0.0
      %2095 = vmatpush1.msra.mxu0 0.0
      %2096 = vmatprep.subr.mxu0 0.0
      %2097 = vmatpush1.msra.mxu0 0.0
      %2098 = vmatprep.subr.mxu0 0.0
      %2099 = vmatpush1.msra.mxu0 0.0
      %2100 = vmatprep.subr.mxu0 0.0
      %2101 = vmatpush1.msra.mxu0 0.0
      %2102 = vmatprep.subr.mxu0 0.0
      %2103 = vmatpush1.msra.mxu0 0.0
      %2104 = vmatprep.subr.mxu0 0.0
      %2105 = vmatpush1.msra.mxu0 0.0
      %2106 = vmatprep.subr.mxu0 0.0
      %2107 = vmatpush1.msra.mxu0 0.0
      %2108 = vmatprep.subr.mxu0 0.0
      %2109 = vmatpush1.msra.mxu0 0.0
      %2110 = vmatprep.subr.mxu0 0.0
      %2111 = vmatpush1.msra.mxu0 0.0
      %2112 = vmatprep.subr.mxu0 0.0
      %2113 = vmatpush1.msra.mxu0 0.0
      %2114 = vmatprep.subr.mxu0 0.0
      %2115 = vmatpush1.msra.mxu0 0.0
      %2116 = vmatprep.subr.mxu0 0.0
      %2117 = vmatpush1.msra.mxu0 0.0
      %2118 = vmatprep.subr.mxu0 0.0
      %2119 = vmatpush1.msra.mxu0 0.0
      %2120 = vmatprep.subr.mxu0 0.0
      %2121 = vmatpush1.msra.mxu0 0.0
      %2122 = vmatprep.subr.mxu0 0.0
      %2123 = vmatpush1.msra.mxu0 0.0
      %2124 = vmatprep.subr.mxu0 0.0
      %2125 = vmatpush1.msra.mxu0 0.0
      %2126 = vmatprep.subr.mxu0 0.0
      %2127 = vmatpush1.msra.mxu0 0.0
      %2128 = vmatprep.subr.mxu0 0.0
      %2129 = vmatpush1.msra.mxu0 0.0
      %2130 = vmatprep.subr.mxu0 0.0
      %2131 = vmatpush1.msra.mxu0 0.0
      %2132 = vmatprep.subr.mxu0 0.0
      %2133 = vmatpush1.msra.mxu0 0.0
      %2134 = vmatprep.subr.mxu0 0.0
      %2135 = vmatpush1.msra.mxu0 0.0
      %2136 = vmatprep.subr.mxu0 0.0
      %2137 = vmatpush1.msra.mxu0 0.0
      %2138 = vmatprep.subr.mxu0 0.0
      %2139 = vmatpush1.msra.mxu0 0.0
      %2140 = vmatprep.subr.mxu0 0.0
      %2141 = vmatpush1.msra.mxu0 0.0
      %2142 = vmatprep.mubr.f32.mxu0 0.0
      %v2143 = vand.u32 %v1898, 4294901760
      %2144 = vmatmul.mubr.f32.gmra.mrb[0].mxu0 %v2143
      %v2145 = vpop.f32.mrb[0].mxu0
      %v2146 = vadd.f32 %v1995, %v2145
      %v2147 = vpop.f32.mrb[0].mxu0
      %2148 = vmatprep.mubr.f32.mxu0 0.0
      %v2149 = vand.u32 %v1901, 4294901760
      %2150 = vmatmul.mubr.f32.gmra.mrb[0].mxu0 %v2149
      %v2151 = vpop.f32.mrb[0].mxu0
      %v2152 = vadd.f32 %v2005, %v2151
      %v2153 = vpop.f32.mrb[0].mxu0
      %2154 = vmatprep.mubr.f32.mxu0 0.0
      %v2155 = vand.u32 %v1904, 4294901760
      %2156 = vmatmul.mubr.f32.gmra.mrb[0].mxu0 %v2155
      %v2157 = vpop.f32.mrb[0].mxu0
      %v2158 = vadd.f32 %v2015, %v2157
      %v2159 = vpop.f32.mrb[0].mxu0
      %2160 = vmatprep.mubr.f32.mxu0 0.0
      %v2161 = vand.u32 %v1907, 4294901760
      %2162 = vmatmul.mubr.f32.gmra.mrb[0].mxu0 %v2161
      %v2163 = vpop.f32.mrb[0].mxu0
      %v2164 = vadd.f32 %v2025, %v2163
      %v2165 = vpop.f32.mrb[0].mxu0
      %2166 = vmatprep.mubr.f32.mxu0 0.0
      %v2167 = vand.u32 %v1910, 4294901760
      %2168 = vmatmul.mubr.f32.gmra.mrb[0].mxu0 %v2167
      %v2169 = vpop.f32.mrb[0].mxu0
      %v2170 = vadd.f32 %v2035, %v2169
      %v2171 = vpop.f32.mrb[0].mxu0
      %2172 = vmatprep.mubr.f32.mxu0 0.0
      %v2173 = vand.u32 %v1913, 4294901760
      %2174 = vmatmul.mubr.f32.gmra.mrb[0].mxu0 %v2173
      %v2175 = vpop.f32.mrb[0].mxu0
      %v2176 = vadd.f32 %v2045, %v2175
      %v2177 = vpop.f32.mrb[0].mxu0
      %2178 = vmatprep.mubr.f32.mxu0 0.0
      %v2179 = vand.u32 %v1916, 4294901760
      %2180 = vmatmul.mubr.f32.gmra.mrb[0].mxu0 %v2179
      %v2181 = vpop.f32.mrb[0].mxu0
      %v2182 = vadd.f32 %v2055, %v2181
      %v2183 = vpop.f32.mrb[0].mxu0
      %2184 = vmatprep.mubr.f32.mxu0 0.0
      %v2185 = vand.u32 %v1919, 4294901760
      %2186 = vmatmul.mubr.f32.gmra.mrb[0].mxu0 %v2185
      %v2187 = vpop.f32.mrb[0].mxu0
      %v2188 = vadd.f32 %v2065, %v2187
      %v2189 = vpop.f32.mrb[0].mxu0
      %2190 = vdwg.mxu0
      %2191 = vmatprep.subr.mxu0 0.0
      %v2192 = vand.u32 %v247, 4294901760
      %v2193 = vsub.f32 %v247, %v2192
      %2194 = vmatpush1.msra.mxu0 %v2193
      %2195 = vmatprep.subr.mxu0 0.0
      %v2196 = vand.u32 %v248, 4294901760
      %v2197 = vsub.f32 %v248, %v2196
      %2198 = vmatpush1.msra.mxu0 %v2197
      %2199 = vmatprep.subr.mxu0 0.0
      %2200 = vmatpush1.msra.mxu0 0.0
      %2201 = vmatprep.subr.mxu0 0.0
      %2202 = vmatpush1.msra.mxu0 0.0
      %2203 = vmatprep.subr.mxu0 0.0
      %2204 = vmatpush1.msra.mxu0 0.0
      %2205 = vmatprep.subr.mxu0 0.0
      %2206 = vmatpush1.msra.mxu0 0.0
      %2207 = vmatprep.subr.mxu0 0.0
      %2208 = vmatpush1.msra.mxu0 0.0
      %2209 = vmatprep.subr.mxu0 0.0
      %2210 = vmatpush1.msra.mxu0 0.0
      %2211 = vmatprep.subr.mxu0 0.0
      %2212 = vmatpush1.msra.mxu0 0.0
      %2213 = vmatprep.subr.mxu0 0.0
      %2214 = vmatpush1.msra.mxu0 0.0
      %2215 = vmatprep.subr.mxu0 0.0
      %2216 = vmatpush1.msra.mxu0 0.0
      %2217 = vmatprep.subr.mxu0 0.0
      %2218 = vmatpush1.msra.mxu0 0.0
      %2219 = vmatprep.subr.mxu0 0.0
      %2220 = vmatpush1.msra.mxu0 0.0
      %2221 = vmatprep.subr.mxu0 0.0
      %2222 = vmatpush1.msra.mxu0 0.0
      %2223 = vmatprep.subr.mxu0 0.0
      %2224 = vmatpush1.msra.mxu0 0.0
      %2225 = vmatprep.subr.mxu0 0.0
      %2226 = vmatpush1.msra.mxu0 0.0
      %2227 = vmatprep.subr.mxu0 0.0
      %2228 = vmatpush1.msra.mxu0 0.0
      %2229 = vmatprep.subr.mxu0 0.0
      %2230 = vmatpush1.msra.mxu0 0.0
      %2231 = vmatprep.subr.mxu0 0.0
      %2232 = vmatpush1.msra.mxu0 0.0
      %2233 = vmatprep.subr.mxu0 0.0
      %2234 = vmatpush1.msra.mxu0 0.0
      %2235 = vmatprep.subr.mxu0 0.0
      %2236 = vmatpush1.msra.mxu0 0.0
      %2237 = vmatprep.subr.mxu0 0.0
      %2238 = vmatpush1.msra.mxu0 0.0
      %2239 = vmatprep.subr.mxu0 0.0
      %2240 = vmatpush1.msra.mxu0 0.0
      %2241 = vmatprep.subr.mxu0 0.0
      %2242 = vmatpush1.msra.mxu0 0.0
      %2243 = vmatprep.subr.mxu0 0.0
      %2244 = vmatpush1.msra.mxu0 0.0
      %2245 = vmatprep.subr.mxu0 0.0
      %2246 = vmatpush1.msra.mxu0 0.0
      %2247 = vmatprep.subr.mxu0 0.0
      %2248 = vmatpush1.msra.mxu0 0.0
      %2249 = vmatprep.subr.mxu0 0.0
      %2250 = vmatpush1.msra.mxu0 0.0
      %2251 = vmatprep.subr.mxu0 0.0
      %2252 = vmatpush1.msra.mxu0 0.0
      %2253 = vmatprep.subr.mxu0 0.0
      %2254 = vmatpush1.msra.mxu0 0.0
      %2255 = vmatprep.subr.mxu0 0.0
      %2256 = vmatpush1.msra.mxu0 0.0
      %2257 = vmatprep.subr.mxu0 0.0
      %2258 = vmatpush1.msra.mxu0 0.0
      %2259 = vmatprep.mubr.f32.mxu0 0.0
      %v2260 = vand.u32 %v1898, 4294901760
      %v2261 = vsub.f32 %v1898, %v2260
      %2262 = vmatmul.mubr.f32.gmra.mrb[0].mxu0 %v2261
      %v2263 = vpop.f32.mrb[0].mxu0
      %v2264 = vadd.f32 %v2146, %v2263
      %v2265 = vpop.f32.mrb[0].mxu0
      %2266 = vmatprep.mubr.f32.mxu0 0.0
      %v2267 = vand.u32 %v1901, 4294901760
      %v2268 = vsub.f32 %v1901, %v2267
      %2269 = vmatmul.mubr.f32.gmra.mrb[0].mxu0 %v2268
      %v2270 = vpop.f32.mrb[0].mxu0
      %v2271 = vadd.f32 %v2152, %v2270
      %v2272 = vpop.f32.mrb[0].mxu0
      %2273 = vmatprep.mubr.f32.mxu0 0.0
      %v2274 = vand.u32 %v1904, 4294901760
      %v2275 = vsub.f32 %v1904, %v2274
      %2276 = vmatmul.mubr.f32.gmra.mrb[0].mxu0 %v2275
      %v2277 = vpop.f32.mrb[0].mxu0
      %v2278 = vadd.f32 %v2158, %v2277
      %v2279 = vpop.f32.mrb[0].mxu0
      %2280 = vmatprep.mubr.f32.mxu0 0.0
      %v2281 = vand.u32 %v1907, 4294901760
      %v2282 = vsub.f32 %v1907, %v2281
      %2283 = vmatmul.mubr.f32.gmra.mrb[0].mxu0 %v2282
      %v2284 = vpop.f32.mrb[0].mxu0
      %v2285 = vadd.f32 %v2164, %v2284
      %v2286 = vpop.f32.mrb[0].mxu0
      %2287 = vmatprep.mubr.f32.mxu0 0.0
      %v2288 = vand.u32 %v1910, 4294901760
      %v2289 = vsub.f32 %v1910, %v2288
      %2290 = vmatmul.mubr.f32.gmra.mrb[0].mxu0 %v2289
      %v2291 = vpop.f32.mrb[0].mxu0
      %v2292 = vadd.f32 %v2170, %v2291
      %v2293 = vpop.f32.mrb[0].mxu0
      %2294 = vmatprep.mubr.f32.mxu0 0.0
      %v2295 = vand.u32 %v1913, 4294901760
      %v2296 = vsub.f32 %v1913, %v2295
      %2297 = vmatmul.mubr.f32.gmra.mrb[0].mxu0 %v2296
      %v2298 = vpop.f32.mrb[0].mxu0
      %v2299 = vadd.f32 %v2176, %v2298
      %v2300 = vpop.f32.mrb[0].mxu0
      %2301 = vmatprep.mubr.f32.mxu0 0.0
      %v2302 = vand.u32 %v1916, 4294901760
      %v2303 = vsub.f32 %v1916, %v2302
      %2304 = vmatmul.mubr.f32.gmra.mrb[0].mxu0 %v2303
      %v2305 = vpop.f32.mrb[0].mxu0
      %v2306 = vadd.f32 %v2182, %v2305
      %v2307 = vpop.f32.mrb[0].mxu0
      %2308 = vmatprep.mubr.f32.mxu0 0.0
      %v2309 = vand.u32 %v1919, 4294901760
      %v2310 = vsub.f32 %v1919, %v2309
      %2311 = vmatmul.mubr.f32.gmra.mrb[0].mxu0 %v2310
      %v2312 = vpop.f32.mrb[0].mxu0
      %v2313 = vadd.f32 %v2188, %v2312
      %v2314 = vpop.f32.mrb[0].mxu0
      %2315 = vdwg.mxu0
      %2316 = vmatprep.subr.mxu0 0.0
      %v2317 = vand.u32 %v247, 4294901760
      %2318 = vmatpush1.msra.mxu0 %v2317
      %2319 = vmatprep.subr.mxu0 0.0
      %v2320 = vand.u32 %v248, 4294901760
      %2321 = vmatpush1.msra.mxu0 %v2320
      %2322 = vmatprep.subr.mxu0 0.0
      %2323 = vmatpush1.msra.mxu0 0.0
      %2324 = vmatprep.subr.mxu0 0.0
      %2325 = vmatpush1.msra.mxu0 0.0
      %2326 = vmatprep.subr.mxu0 0.0
      %2327 = vmatpush1.msra.mxu0 0.0
      %2328 = vmatprep.subr.mxu0 0.0
      %2329 = vmatpush1.msra.mxu0 0.0
      %2330 = vmatprep.subr.mxu0 0.0
      %2331 = vmatpush1.msra.mxu0 0.0
      %2332 = vmatprep.subr.mxu0 0.0
      %2333 = vmatpush1.msra.mxu0 0.0
      %2334 = vmatprep.subr.mxu0 0.0
      %2335 = vmatpush1.msra.mxu0 0.0
      %2336 = vmatprep.subr.mxu0 0.0
      %2337 = vmatpush1.msra.mxu0 0.0
      %2338 = vmatprep.subr.mxu0 0.0
      %2339 = vmatpush1.msra.mxu0 0.0
      %2340 = vmatprep.subr.mxu0 0.0
      %2341 = vmatpush1.msra.mxu0 0.0
      %2342 = vmatprep.subr.mxu0 0.0
      %2343 = vmatpush1.msra.mxu0 0.0
      %2344 = vmatprep.subr.mxu0 0.0
      %2345 = vmatpush1.msra.mxu0 0.0
      %2346 = vmatprep.subr.mxu0 0.0
      %2347 = vmatpush1.msra.mxu0 0.0
      %2348 = vmatprep.subr.mxu0 0.0
      %2349 = vmatpush1.msra.mxu0 0.0
      %2350 = vmatprep.subr.mxu0 0.0
      %2351 = vmatpush1.msra.mxu0 0.0
      %2352 = vmatprep.subr.mxu0 0.0
      %2353 = vmatpush1.msra.mxu0 0.0
      %2354 = vmatprep.subr.mxu0 0.0
      %2355 = vmatpush1.msra.mxu0 0.0
      %2356 = vmatprep.subr.mxu0 0.0
      %2357 = vmatpush1.msra.mxu0 0.0
      %2358 = vmatprep.subr.mxu0 0.0
      %2359 = vmatpush1.msra.mxu0 0.0
      %2360 = vmatprep.subr.mxu0 0.0
      %2361 = vmatpush1.msra.mxu0 0.0
      %2362 = vmatprep.subr.mxu0 0.0
      %2363 = vmatpush1.msra.mxu0 0.0
      %2364 = vmatprep.subr.mxu0 0.0
      %2365 = vmatpush1.msra.mxu0 0.0
      %2366 = vmatprep.subr.mxu0 0.0
      %2367 = vmatpush1.msra.mxu0 0.0
      %2368 = vmatprep.subr.mxu0 0.0
      %2369 = vmatpush1.msra.mxu0 0.0
      %2370 = vmatprep.subr.mxu0 0.0
      %2371 = vmatpush1.msra.mxu0 0.0
      %2372 = vmatprep.subr.mxu0 0.0
      %2373 = vmatpush1.msra.mxu0 0.0
      %2374 = vmatprep.subr.mxu0 0.0
      %2375 = vmatpush1.msra.mxu0 0.0
      %2376 = vmatprep.subr.mxu0 0.0
      %2377 = vmatpush1.msra.mxu0 0.0
      %2378 = vmatprep.subr.mxu0 0.0
      %2379 = vmatpush1.msra.mxu0 0.0
      %2380 = vmatprep.subr.mxu0 0.0
      %2381 = vmatpush1.msra.mxu0 0.0
      %2382 = vmatprep.mubr.f32.mxu0 0.0
      %v2383 = vand.u32 %v1898, 4294901760
      %v2384 = vsub.f32 %v1898, %v2383
      %v2385 = vand.u32 %v2384, 4294901760
      %2386 = vmatmul.mubr.f32.gmra.mrb[0].mxu0 %v2385
      %v2387 = vpop.f32.mrb[0].mxu0
      %v2388 = vadd.f32 %v2264, %v2387
      %v2389 = vpop.f32.mrb[0].mxu0
      %2390 = vmatprep.mubr.f32.mxu0 0.0
      %v2391 = vand.u32 %v1901, 4294901760
      %v2392 = vsub.f32 %v1901, %v2391
      %v2393 = vand.u32 %v2392, 4294901760
      %2394 = vmatmul.mubr.f32.gmra.mrb[0].mxu0 %v2393
      %v2395 = vpop.f32.mrb[0].mxu0
      %v2396 = vadd.f32 %v2271, %v2395
      %v2397 = vpop.f32.mrb[0].mxu0
      %2398 = vmatprep.mubr.f32.mxu0 0.0
      %v2399 = vand.u32 %v1904, 4294901760
      %v2400 = vsub.f32 %v1904, %v2399
      %v2401 = vand.u32 %v2400, 4294901760
      %2402 = vmatmul.mubr.f32.gmra.mrb[0].mxu0 %v2401
      %v2403 = vpop.f32.mrb[0].mxu0
      %v2404 = vadd.f32 %v2278, %v2403
      %v2405 = vpop.f32.mrb[0].mxu0
      %2406 = vmatprep.mubr.f32.mxu0 0.0
      %v2407 = vand.u32 %v1907, 4294901760
      %v2408 = vsub.f32 %v1907, %v2407
      %v2409 = vand.u32 %v2408, 4294901760
      %2410 = vmatmul.mubr.f32.gmra.mrb[0].mxu0 %v2409
      %v2411 = vpop.f32.mrb[0].mxu0
      %v2412 = vadd.f32 %v2285, %v2411
      %v2413 = vpop.f32.mrb[0].mxu0
      %2414 = vmatprep.mubr.f32.mxu0 0.0
      %v2415 = vand.u32 %v1910, 4294901760
      %v2416 = vsub.f32 %v1910, %v2415
      %v2417 = vand.u32 %v2416, 4294901760
      %2418 = vmatmul.mubr.f32.gmra.mrb[0].mxu0 %v2417
      %v2419 = vpop.f32.mrb[0].mxu0
      %v2420 = vadd.f32 %v2292, %v2419
      %v2421 = vpop.f32.mrb[0].mxu0
      %2422 = vmatprep.mubr.f32.mxu0 0.0
      %v2423 = vand.u32 %v1913, 4294901760
      %v2424 = vsub.f32 %v1913, %v2423
      %v2425 = vand.u32 %v2424, 4294901760
      %2426 = vmatmul.mubr.f32.gmra.mrb[0].mxu0 %v2425
      %v2427 = vpop.f32.mrb[0].mxu0
      %v2428 = vadd.f32 %v2299, %v2427
      %v2429 = vpop.f32.mrb[0].mxu0
      %2430 = vmatprep.mubr.f32.mxu0 0.0
      %v2431 = vand.u32 %v1916, 4294901760
      %v2432 = vsub.f32 %v1916, %v2431
      %v2433 = vand.u32 %v2432, 4294901760
      %2434 = vmatmul.mubr.f32.gmra.mrb[0].mxu0 %v2433
      %v2435 = vpop.f32.mrb[0].mxu0
      %v2436 = vadd.f32 %v2306, %v2435
      %v2437 = vpop.f32.mrb[0].mxu0
      %2438 = vmatprep.mubr.f32.mxu0 0.0
      %v2439 = vand.u32 %v1919, 4294901760
      %v2440 = vsub.f32 %v1919, %v2439
      %v2441 = vand.u32 %v2440, 4294901760
      %2442 = vmatmul.mubr.f32.gmra.mrb[0].mxu0 %v2441
      %v2443 = vpop.f32.mrb[0].mxu0
      %v2444 = vadd.f32 %v2313, %v2443
      %v2445 = vpop.f32.mrb[0].mxu0
      %2446 = vdwg.mxu0
      %2447 = vmatprep.subr.mxu0 0.0
      %v2448 = vand.u32 %v247, 4294901760
      %v2449 = vsub.f32 %v247, %v2448
      %v2450 = vand.u32 %v2449, 4294901760
      %2451 = vmatpush1.msra.mxu0 %v2450
      %2452 = vmatprep.subr.mxu0 0.0
      %v2453 = vand.u32 %v248, 4294901760
      %v2454 = vsub.f32 %v248, %v2453
      %v2455 = vand.u32 %v2454, 4294901760
      %2456 = vmatpush1.msra.mxu0 %v2455
      %2457 = vmatprep.subr.mxu0 0.0
      %2458 = vmatpush1.msra.mxu0 0.0
      %2459 = vmatprep.subr.mxu0 0.0
      %2460 = vmatpush1.msra.mxu0 0.0
      %2461 = vmatprep.subr.mxu0 0.0
      %2462 = vmatpush1.msra.mxu0 0.0
      %2463 = vmatprep.subr.mxu0 0.0
      %2464 = vmatpush1.msra.mxu0 0.0
      %2465 = vmatprep.subr.mxu0 0.0
      %2466 = vmatpush1.msra.mxu0 0.0
      %2467 = vmatprep.subr.mxu0 0.0
      %2468 = vmatpush1.msra.mxu0 0.0
      %2469 = vmatprep.subr.mxu0 0.0
      %2470 = vmatpush1.msra.mxu0 0.0
      %2471 = vmatprep.subr.mxu0 0.0
      %2472 = vmatpush1.msra.mxu0 0.0
      %2473 = vmatprep.subr.mxu0 0.0
      %2474 = vmatpush1.msra.mxu0 0.0
      %2475 = vmatprep.subr.mxu0 0.0
      %2476 = vmatpush1.msra.mxu0 0.0
      %2477 = vmatprep.subr.mxu0 0.0
      %2478 = vmatpush1.msra.mxu0 0.0
      %2479 = vmatprep.subr.mxu0 0.0
      %2480 = vmatpush1.msra.mxu0 0.0
      %2481 = vmatprep.subr.mxu0 0.0
      %2482 = vmatpush1.msra.mxu0 0.0
      %2483 = vmatprep.subr.mxu0 0.0
      %2484 = vmatpush1.msra.mxu0 0.0
      %2485 = vmatprep.subr.mxu0 0.0
      %2486 = vmatpush1.msra.mxu0 0.0
      %2487 = vmatprep.subr.mxu0 0.0
      %2488 = vmatpush1.msra.mxu0 0.0
      %2489 = vmatprep.subr.mxu0 0.0
      %2490 = vmatpush1.msra.mxu0 0.0
      %2491 = vmatprep.subr.mxu0 0.0
      %2492 = vmatpush1.msra.mxu0 0.0
      %2493 = vmatprep.subr.mxu0 0.0
      %2494 = vmatpush1.msra.mxu0 0.0
      %2495 = vmatprep.subr.mxu0 0.0
      %2496 = vmatpush1.msra.mxu0 0.0
      %2497 = vmatprep.subr.mxu0 0.0
      %2498 = vmatpush1.msra.mxu0 0.0
      %2499 = vmatprep.subr.mxu0 0.0
      %2500 = vmatpush1.msra.mxu0 0.0
      %2501 = vmatprep.subr.mxu0 0.0
      %2502 = vmatpush1.msra.mxu0 0.0
      %2503 = vmatprep.subr.mxu0 0.0
      %2504 = vmatpush1.msra.mxu0 0.0
      %2505 = vmatprep.subr.mxu0 0.0
      %2506 = vmatpush1.msra.mxu0 0.0
      %2507 = vmatprep.subr.mxu0 0.0
      %2508 = vmatpush1.msra.mxu0 0.0
      %2509 = vmatprep.subr.mxu0 0.0
      %2510 = vmatpush1.msra.mxu0 0.0
      %2511 = vmatprep.subr.mxu0 0.0
      %2512 = vmatpush1.msra.mxu0 0.0
      %2513 = vmatprep.subr.mxu0 0.0
      %2514 = vmatpush1.msra.mxu0 0.0
      %2515 = vmatprep.subr.mxu0 0.0
      %2516 = vmatpush1.msra.mxu0 0.0
      %2517 = vmatprep.mubr.f32.mxu0 0.0
      %v2518 = vand.u32 %v1898, 4294901760
      %2519 = vmatmul.mubr.f32.gmra.mrb[0].mxu0 %v2518
      %v2520 = vpop.f32.mrb[0].mxu0
      %v2521 = vadd.f32 %v2388, %v2520
      %v2522 = vpop.f32.mrb[0].mxu0
      %2523 = vmatprep.mubr.f32.mxu0 0.0
      %v2524 = vand.u32 %v1901, 4294901760
      %2525 = vmatmul.mubr.f32.gmra.mrb[0].mxu0 %v2524
      %v2526 = vpop.f32.mrb[0].mxu0
      %v2527 = vadd.f32 %v2396, %v2526
      %v2528 = vpop.f32.mrb[0].mxu0
      %2529 = vmatprep.mubr.f32.mxu0 0.0
      %v2530 = vand.u32 %v1904, 4294901760
      %2531 = vmatmul.mubr.f32.gmra.mrb[0].mxu0 %v2530
      %v2532 = vpop.f32.mrb[0].mxu0
      %v2533 = vadd.f32 %v2404, %v2532
      %v2534 = vpop.f32.mrb[0].mxu0
      %2535 = vmatprep.mubr.f32.mxu0 0.0
      %v2536 = vand.u32 %v1907, 4294901760
      %2537 = vmatmul.mubr.f32.gmra.mrb[0].mxu0 %v2536
      %v2538 = vpop.f32.mrb[0].mxu0
      %v2539 = vadd.f32 %v2412, %v2538
      %v2540 = vpop.f32.mrb[0].mxu0
      %2541 = vmatprep.mubr.f32.mxu0 0.0
      %v2542 = vand.u32 %v1910, 4294901760
      %2543 = vmatmul.mubr.f32.gmra.mrb[0].mxu0 %v2542
      %v2544 = vpop.f32.mrb[0].mxu0
      %v2545 = vadd.f32 %v2420, %v2544
      %v2546 = vpop.f32.mrb[0].mxu0
      %2547 = vmatprep.mubr.f32.mxu0 0.0
      %v2548 = vand.u32 %v1913, 4294901760
      %2549 = vmatmul.mubr.f32.gmra.mrb[0].mxu0 %v2548
      %v2550 = vpop.f32.mrb[0].mxu0
      %v2551 = vadd.f32 %v2428, %v2550
      %v2552 = vpop.f32.mrb[0].mxu0
      %2553 = vmatprep.mubr.f32.mxu0 0.0
      %v2554 = vand.u32 %v1916, 4294901760
      %2555 = vmatmul.mubr.f32.gmra.mrb[0].mxu0 %v2554
      %v2556 = vpop.f32.mrb[0].mxu0
      %v2557 = vadd.f32 %v2436, %v2556
      %v2558 = vpop.f32.mrb[0].mxu0
      %2559 = vmatprep.mubr.f32.mxu0 0.0
      %v2560 = vand.u32 %v1919, 4294901760
      %2561 = vmatmul.mubr.f32.gmra.mrb[0].mxu0 %v2560
      %v2562 = vpop.f32.mrb[0].mxu0
      %v2563 = vadd.f32 %v2444, %v2562
      %v2564 = vpop.f32.mrb[0].mxu0
      %2565 = vdwg.mxu0
      %2566 = vmatprep.subr.mxu0 0.0
      %v2567 = vand.u32 %v247, 4294901760
      %2568 = vmatpush1.msra.mxu0 %v2567
      %2569 = vmatprep.subr.mxu0 0.0
      %v2570 = vand.u32 %v248, 4294901760
      %2571 = vmatpush1.msra.mxu0 %v2570
      %2572 = vmatprep.subr.mxu0 0.0
      %2573 = vmatpush1.msra.mxu0 0.0
      %2574 = vmatprep.subr.mxu0 0.0
      %2575 = vmatpush1.msra.mxu0 0.0
      %2576 = vmatprep.subr.mxu0 0.0
      %2577 = vmatpush1.msra.mxu0 0.0
      %2578 = vmatprep.subr.mxu0 0.0
      %2579 = vmatpush1.msra.mxu0 0.0
      %2580 = vmatprep.subr.mxu0 0.0
      %2581 = vmatpush1.msra.mxu0 0.0
      %2582 = vmatprep.subr.mxu0 0.0
      %2583 = vmatpush1.msra.mxu0 0.0
      %2584 = vmatprep.subr.mxu0 0.0
      %2585 = vmatpush1.msra.mxu0 0.0
      %2586 = vmatprep.subr.mxu0 0.0
      %2587 = vmatpush1.msra.mxu0 0.0
      %2588 = vmatprep.subr.mxu0 0.0
      %2589 = vmatpush1.msra.mxu0 0.0
      %2590 = vmatprep.subr.mxu0 0.0
      %2591 = vmatpush1.msra.mxu0 0.0
      %2592 = vmatprep.subr.mxu0 0.0
      %2593 = vmatpush1.msra.mxu0 0.0
      %2594 = vmatprep.subr.mxu0 0.0
      %2595 = vmatpush1.msra.mxu0 0.0
      %2596 = vmatprep.subr.mxu0 0.0
      %2597 = vmatpush1.msra.mxu0 0.0
      %2598 = vmatprep.subr.mxu0 0.0
      %2599 = vmatpush1.msra.mxu0 0.0
      %2600 = vmatprep.subr.mxu0 0.0
      %2601 = vmatpush1.msra.mxu0 0.0
      %2602 = vmatprep.subr.mxu0 0.0
      %2603 = vmatpush1.msra.mxu0 0.0
      %2604 = vmatprep.subr.mxu0 0.0
      %2605 = vmatpush1.msra.mxu0 0.0
      %2606 = vmatprep.subr.mxu0 0.0
      %2607 = vmatpush1.msra.mxu0 0.0
      %2608 = vmatprep.subr.mxu0 0.0
      %2609 = vmatpush1.msra.mxu0 0.0
      %2610 = vmatprep.subr.mxu0 0.0
      %2611 = vmatpush1.msra.mxu0 0.0
      %2612 = vmatprep.subr.mxu0 0.0
      %2613 = vmatpush1.msra.mxu0 0.0
      %2614 = vmatprep.subr.mxu0 0.0
      %2615 = vmatpush1.msra.mxu0 0.0
      %2616 = vmatprep.subr.mxu0 0.0
      %2617 = vmatpush1.msra.mxu0 0.0
      %2618 = vmatprep.subr.mxu0 0.0
      %2619 = vmatpush1.msra.mxu0 0.0
      %2620 = vmatprep.subr.mxu0 0.0
      %2621 = vmatpush1.msra.mxu0 0.0
      %2622 = vmatprep.subr.mxu0 0.0
      %2623 = vmatpush1.msra.mxu0 0.0
      %2624 = vmatprep.subr.mxu0 0.0
      %2625 = vmatpush1.msra.mxu0 0.0
      %2626 = vmatprep.subr.mxu0 0.0
      %2627 = vmatpush1.msra.mxu0 0.0
      %2628 = vmatprep.subr.mxu0 0.0
      %2629 = vmatpush1.msra.mxu0 0.0
      %2630 = vmatprep.subr.mxu0 0.0
      %2631 = vmatpush1.msra.mxu0 0.0
      %2632 = vmatprep.mubr.f32.mxu0 0.0
      %v2633 = vand.u32 %v1898, 4294901760
      %2634 = vmatmul.mubr.f32.gmra.mrb[0].mxu0 %v2633
      %v2635 = vpop.f32.mrb[0].mxu0
      %v2636 = vadd.f32 %v2521, %v2635
      %v2637 = vpop.f32.mrb[0].mxu0
      %2638 = vmatprep.mubr.f32.mxu0 0.0
      %v2639 = vand.u32 %v1901, 4294901760
      %2640 = vmatmul.mubr.f32.gmra.mrb[0].mxu0 %v2639
      %v2641 = vpop.f32.mrb[0].mxu0
      %v2642 = vadd.f32 %v2527, %v2641
      %v2643 = vpop.f32.mrb[0].mxu0
      %2644 = vmatprep.mubr.f32.mxu0 0.0
      %v2645 = vand.u32 %v1904, 4294901760
      %2646 = vmatmul.mubr.f32.gmra.mrb[0].mxu0 %v2645
      %v2647 = vpop.f32.mrb[0].mxu0
      %v2648 = vadd.f32 %v2533, %v2647
      %v2649 = vpop.f32.mrb[0].mxu0
      %2650 = vmatprep.mubr.f32.mxu0 0.0
      %v2651 = vand.u32 %v1907, 4294901760
      %2652 = vmatmul.mubr.f32.gmra.mrb[0].mxu0 %v2651
      %v2653 = vpop.f32.mrb[0].mxu0
      %v2654 = vadd.f32 %v2539, %v2653
      %v2655 = vpop.f32.mrb[0].mxu0
      %2656 = vmatprep.mubr.f32.mxu0 0.0
      %v2657 = vand.u32 %v1910, 4294901760
      %2658 = vmatmul.mubr.f32.gmra.mrb[0].mxu0 %v2657
      %v2659 = vpop.f32.mrb[0].mxu0
      %v2660 = vadd.f32 %v2545, %v2659
      %v2661 = vpop.f32.mrb[0].mxu0
      %2662 = vmatprep.mubr.f32.mxu0 0.0
      %v2663 = vand.u32 %v1913, 4294901760
      %2664 = vmatmul.mubr.f32.gmra.mrb[0].mxu0 %v2663
      %v2665 = vpop.f32.mrb[0].mxu0
      %v2666 = vadd.f32 %v2551, %v2665
      %v2667 = vpop.f32.mrb[0].mxu0
      %2668 = vmatprep.mubr.f32.mxu0 0.0
      %v2669 = vand.u32 %v1916, 4294901760
      %2670 = vmatmul.mubr.f32.gmra.mrb[0].mxu0 %v2669
      %v2671 = vpop.f32.mrb[0].mxu0
      %v2672 = vadd.f32 %v2557, %v2671
      %v2673 = vpop.f32.mrb[0].mxu0
      %2674 = vmatprep.mubr.f32.mxu0 0.0
      %v2675 = vand.u32 %v1919, 4294901760
      %2676 = vmatmul.mubr.f32.gmra.mrb[0].mxu0 %v2675
      %v2677 = vpop.f32.mrb[0].mxu0
      %v2678 = vadd.f32 %v2563, %v2677
      %v2679 = vpop.f32.mrb[0].mxu0
      %2680 = vdwg.mxu0
      %2681 = vmatprep.subr.mxu0 0.0
      %v2682 = vand.u32 %v2636, 4294901760
      %2683 = vmatpush1.msra.mxu0 %v2682
      %2684 = vmatprep.subr.mxu0 0.0
      %v2685 = vand.u32 %v2642, 4294901760
      %2686 = vmatpush1.msra.mxu0 %v2685
      %2687 = vmatprep.subr.mxu0 0.0
      %v2688 = vand.u32 %v2648, 4294901760
      %2689 = vmatpush1.msra.mxu0 %v2688
      %2690 = vmatprep.subr.mxu0 0.0
      %v2691 = vand.u32 %v2654, 4294901760
      %2692 = vmatpush1.msra.mxu0 %v2691
      %2693 = vmatprep.subr.mxu0 0.0
      %v2694 = vand.u32 %v2660, 4294901760
      %2695 = vmatpush1.msra.mxu0 %v2694
      %2696 = vmatprep.subr.mxu0 0.0
      %v2697 = vand.u32 %v2666, 4294901760
      %2698 = vmatpush1.msra.mxu0 %v2697
      %2699 = vmatprep.subr.mxu0 0.0
      %v2700 = vand.u32 %v2672, 4294901760
      %2701 = vmatpush1.msra.mxu0 %v2700
      %2702 = vmatprep.subr.mxu0 0.0
      %v2703 = vand.u32 %v2678, 4294901760
      %2704 = vmatpush1.msra.mxu0 %v2703
      %2705 = vmatprep.subr.mxu0 0.0
      %2706 = vmatpush1.msra.mxu0 0.0
      %2707 = vmatprep.subr.mxu0 0.0
      %2708 = vmatpush1.msra.mxu0 0.0
      %2709 = vmatprep.subr.mxu0 0.0
      %2710 = vmatpush1.msra.mxu0 0.0
      %2711 = vmatprep.subr.mxu0 0.0
      %2712 = vmatpush1.msra.mxu0 0.0
      %2713 = vmatprep.subr.mxu0 0.0
      %2714 = vmatpush1.msra.mxu0 0.0
      %2715 = vmatprep.subr.mxu0 0.0
      %2716 = vmatpush1.msra.mxu0 0.0
      %2717 = vmatprep.subr.mxu0 0.0
      %2718 = vmatpush1.msra.mxu0 0.0
      %2719 = vmatprep.subr.mxu0 0.0
      %2720 = vmatpush1.msra.mxu0 0.0
      %2721 = vmatprep.subr.mxu0 0.0
      %2722 = vmatpush1.msra.mxu0 0.0
      %2723 = vmatprep.subr.mxu0 0.0
      %2724 = vmatpush1.msra.mxu0 0.0
      %2725 = vmatprep.subr.mxu0 0.0
      %2726 = vmatpush1.msra.mxu0 0.0
      %2727 = vmatprep.subr.mxu0 0.0
      %2728 = vmatpush1.msra.mxu0 0.0
      %2729 = vmatprep.subr.mxu0 0.0
      %2730 = vmatpush1.msra.mxu0 0.0
      %2731 = vmatprep.subr.mxu0 0.0
      %2732 = vmatpush1.msra.mxu0 0.0
      %2733 = vmatprep.subr.mxu0 0.0
      %2734 = vmatpush1.msra.mxu0 0.0
      %2735 = vmatprep.subr.mxu0 0.0
      %2736 = vmatpush1.msra.mxu0 0.0
      %2737 = vmatprep.subr.mxu0 0.0
      %2738 = vmatpush1.msra.mxu0 0.0
      %2739 = vmatprep.subr.mxu0 0.0
      %2740 = vmatpush1.msra.mxu0 0.0
      %2741 = vmatprep.subr.mxu0 0.0
      %2742 = vmatpush1.msra.mxu0 0.0
      %2743 = vmatprep.subr.mxu0 0.0
      %2744 = vmatpush1.msra.mxu0 0.0
      %2745 = vmatprep.subr.mxu0 0.0
      %2746 = vmatpush1.msra.mxu0 0.0
      %2747 = vmatprep.subr.mxu0 0.0
      %2748 = vmatpush1.msra.mxu0 0.0
      %2749 = vmatprep.subr.mxu0 0.0
      %2750 = vmatpush1.msra.mxu0 0.0
      %2751 = vmatprep.subr.mxu0 0.0
      %2752 = vmatpush1.msra.mxu0 0.0
      %2753 = vmatprep.mubr.f32.mxu0 0.0
      %v2754 = vand.u32 %v1036, 4294901760
      %v2755 = vsub.f32 %v1036, %v2754
      %v2756 = vand.u32 %v2755, 4294901760
      %v2757 = vsub.f32 %v2755, %v2756
      %v2758 = vand.u32 %v2757, 4294901760
      %2759 = vmatmul.mubr.f32.gmra.mrb[0].mxu0 %v2758
      %v2760 = vpop.f32.mrb[0].mxu0
      %v2761 = vadd.f32 0.0, %v2760
      %v2762 = vpop.f32.mrb[0].mxu0
      %2763 = vmatprep.mubr.f32.mxu0 0.0
      %v2764 = vand.u32 %v1039, 4294901760
      %v2765 = vsub.f32 %v1039, %v2764
      %v2766 = vand.u32 %v2765, 4294901760
      %v2767 = vsub.f32 %v2765, %v2766
      %v2768 = vand.u32 %v2767, 4294901760
      %2769 = vmatmul.mubr.f32.gmra.mrb[0].mxu0 %v2768
      %v2770 = vpop.f32.mrb[0].mxu0
      %v2771 = vadd.f32 0.0, %v2770
      %v2772 = vpop.f32.mrb[0].mxu0
      %2773 = vmatprep.mubr.f32.mxu0 0.0
      %v2774 = vand.u32 %v1042, 4294901760
      %v2775 = vsub.f32 %v1042, %v2774
      %v2776 = vand.u32 %v2775, 4294901760
      %v2777 = vsub.f32 %v2775, %v2776
      %v2778 = vand.u32 %v2777, 4294901760
      %2779 = vmatmul.mubr.f32.gmra.mrb[0].mxu0 %v2778
      %v2780 = vpop.f32.mrb[0].mxu0
      %v2781 = vadd.f32 0.0, %v2780
      %v2782 = vpop.f32.mrb[0].mxu0
      %2783 = vmatprep.mubr.f32.mxu0 0.0
      %v2784 = vand.u32 %v1045, 4294901760
      %v2785 = vsub.f32 %v1045, %v2784
      %v2786 = vand.u32 %v2785, 4294901760
      %v2787 = vsub.f32 %v2785, %v2786
      %v2788 = vand.u32 %v2787, 4294901760
      %2789 = vmatmul.mubr.f32.gmra.mrb[0].mxu0 %v2788
      %v2790 = vpop.f32.mrb[0].mxu0
      %v2791 = vadd.f32 0.0, %v2790
      %v2792 = vpop.f32.mrb[0].mxu0
      %2793 = vmatprep.mubr.f32.mxu0 0.0
      %v2794 = vand.u32 %v1048, 4294901760
      %v2795 = vsub.f32 %v1048, %v2794
      %v2796 = vand.u32 %v2795, 4294901760
      %v2797 = vsub.f32 %v2795, %v2796
      %v2798 = vand.u32 %v2797, 4294901760
      %2799 = vmatmul.mubr.f32.gmra.mrb[0].mxu0 %v2798
      %v2800 = vpop.f32.mrb[0].mxu0
      %v2801 = vadd.f32 0.0, %v2800
      %v2802 = vpop.f32.mrb[0].mxu0
      %2803 = vmatprep.mubr.f32.mxu0 0.0
      %v2804 = vand.u32 %v1051, 4294901760
      %v2805 = vsub.f32 %v1051, %v2804
      %v2806 = vand.u32 %v2805, 4294901760
      %v2807 = vsub.f32 %v2805, %v2806
      %v2808 = vand.u32 %v2807, 4294901760
      %2809 = vmatmul.mubr.f32.gmra.mrb[0].mxu0 %v2808
      %v2810 = vpop.f32.mrb[0].mxu0
      %v2811 = vadd.f32 0.0, %v2810
      %v2812 = vpop.f32.mrb[0].mxu0
      %2813 = vmatprep.mubr.f32.mxu0 0.0
      %v2814 = vand.u32 %v1054, 4294901760
      %v2815 = vsub.f32 %v1054, %v2814
      %v2816 = vand.u32 %v2815, 4294901760
      %v2817 = vsub.f32 %v2815, %v2816
      %v2818 = vand.u32 %v2817, 4294901760
      %2819 = vmatmul.mubr.f32.gmra.mrb[0].mxu0 %v2818
      %v2820 = vpop.f32.mrb[0].mxu0
      %v2821 = vadd.f32 0.0, %v2820
      %v2822 = vpop.f32.mrb[0].mxu0
      %2823 = vmatprep.mubr.f32.mxu0 0.0
      %v2824 = vand.u32 %v1057, 4294901760
      %v2825 = vsub.f32 %v1057, %v2824
      %v2826 = vand.u32 %v2825, 4294901760
      %v2827 = vsub.f32 %v2825, %v2826
      %v2828 = vand.u32 %v2827, 4294901760
      %2829 = vmatmul.mubr.f32.gmra.mrb[0].mxu0 %v2828
      %v2830 = vpop.f32.mrb[0].mxu0
      %v2831 = vadd.f32 0.0, %v2830
      %v2832 = vpop.f32.mrb[0].mxu0
      %2833 = vdwg.mxu0
      %2834 = vmatprep.subr.mxu0 0.0
      %v2835 = vand.u32 %v2636, 4294901760
      %v2836 = vsub.f32 %v2636, %v2835
      %v2837 = vand.u32 %v2836, 4294901760
      %v2838 = vsub.f32 %v2836, %v2837
      %v2839 = vand.u32 %v2838, 4294901760
      %2840 = vmatpush1.msra.mxu0 %v2839
      %2841 = vmatprep.subr.mxu0 0.0
      %v2842 = vand.u32 %v2642, 4294901760
      %v2843 = vsub.f32 %v2642, %v2842
      %v2844 = vand.u32 %v2843, 4294901760
      %v2845 = vsub.f32 %v2843, %v2844
      %v2846 = vand.u32 %v2845, 4294901760
      %2847 = vmatpush1.msra.mxu0 %v2846
      %2848 = vmatprep.subr.mxu0 0.0
      %v2849 = vand.u32 %v2648, 4294901760
      %v2850 = vsub.f32 %v2648, %v2849
      %v2851 = vand.u32 %v2850, 4294901760
      %v2852 = vsub.f32 %v2850, %v2851
      %v2853 = vand.u32 %v2852, 4294901760
      %2854 = vmatpush1.msra.mxu0 %v2853
      %2855 = vmatprep.subr.mxu0 0.0
      %v2856 = vand.u32 %v2654, 4294901760
      %v2857 = vsub.f32 %v2654, %v2856
      %v2858 = vand.u32 %v2857, 4294901760
      %v2859 = vsub.f32 %v2857, %v2858
      %v2860 = vand.u32 %v2859, 4294901760
      %2861 = vmatpush1.msra.mxu0 %v2860
      %2862 = vmatprep.subr.mxu0 0.0
      %v2863 = vand.u32 %v2660, 4294901760
      %v2864 = vsub.f32 %v2660, %v2863
      %v2865 = vand.u32 %v2864, 4294901760
      %v2866 = vsub.f32 %v2864, %v2865
      %v2867 = vand.u32 %v2866, 4294901760
      %2868 = vmatpush1.msra.mxu0 %v2867
      %2869 = vmatprep.subr.mxu0 0.0
      %v2870 = vand.u32 %v2666, 4294901760
      %v2871 = vsub.f32 %v2666, %v2870
      %v2872 = vand.u32 %v2871, 4294901760
      %v2873 = vsub.f32 %v2871, %v2872
      %v2874 = vand.u32 %v2873, 4294901760
      %2875 = vmatpush1.msra.mxu0 %v2874
      %2876 = vmatprep.subr.mxu0 0.0
      %v2877 = vand.u32 %v2672, 4294901760
      %v2878 = vsub.f32 %v2672, %v2877
      %v2879 = vand.u32 %v2878, 4294901760
      %v2880 = vsub.f32 %v2878, %v2879
      %v2881 = vand.u32 %v2880, 4294901760
      %2882 = vmatpush1.msra.mxu0 %v2881
      %2883 = vmatprep.subr.mxu0 0.0
      %v2884 = vand.u32 %v2678, 4294901760
      %v2885 = vsub.f32 %v2678, %v2884
      %v2886 = vand.u32 %v2885, 4294901760
      %v2887 = vsub.f32 %v2885, %v2886
      %v2888 = vand.u32 %v2887, 4294901760
      %2889 = vmatpush1.msra.mxu0 %v2888
      %2890 = vmatprep.subr.mxu0 0.0
      %2891 = vmatpush1.msra.mxu0 0.0
      %2892 = vmatprep.subr.mxu0 0.0
      %2893 = vmatpush1.msra.mxu0 0.0
      %2894 = vmatprep.subr.mxu0 0.0
      %2895 = vmatpush1.msra.mxu0 0.0
      %2896 = vmatprep.subr.mxu0 0.0
      %2897 = vmatpush1.msra.mxu0 0.0
      %2898 = vmatprep.subr.mxu0 0.0
      %2899 = vmatpush1.msra.mxu0 0.0
      %2900 = vmatprep.subr.mxu0 0.0
      %2901 = vmatpush1.msra.mxu0 0.0
      %2902 = vmatprep.subr.mxu0 0.0
      %2903 = vmatpush1.msra.mxu0 0.0
      %2904 = vmatprep.subr.mxu0 0.0
      %2905 = vmatpush1.msra.mxu0 0.0
      %2906 = vmatprep.subr.mxu0 0.0
      %2907 = vmatpush1.msra.mxu0 0.0
      %2908 = vmatprep.subr.mxu0 0.0
      %2909 = vmatpush1.msra.mxu0 0.0
      %2910 = vmatprep.subr.mxu0 0.0
      %2911 = vmatpush1.msra.mxu0 0.0
      %2912 = vmatprep.subr.mxu0 0.0
      %2913 = vmatpush1.msra.mxu0 0.0
      %2914 = vmatprep.subr.mxu0 0.0
      %2915 = vmatpush1.msra.mxu0 0.0
      %2916 = vmatprep.subr.mxu0 0.0
      %2917 = vmatpush1.msra.mxu0 0.0
      %2918 = vmatprep.subr.mxu0 0.0
      %2919 = vmatpush1.msra.mxu0 0.0
      %2920 = vmatprep.subr.mxu0 0.0
      %2921 = vmatpush1.msra.mxu0 0.0
      %2922 = vmatprep.subr.mxu0 0.0
      %2923 = vmatpush1.msra.mxu0 0.0
      %2924 = vmatprep.subr.mxu0 0.0
      %2925 = vmatpush1.msra.mxu0 0.0
      %2926 = vmatprep.subr.mxu0 0.0
      %2927 = vmatpush1.msra.mxu0 0.0
      %2928 = vmatprep.subr.mxu0 0.0
      %2929 = vmatpush1.msra.mxu0 0.0
      %2930 = vmatprep.subr.mxu0 0.0
      %2931 = vmatpush1.msra.mxu0 0.0
      %2932 = vmatprep.subr.mxu0 0.0
      %2933 = vmatpush1.msra.mxu0 0.0
      %2934 = vmatprep.subr.mxu0 0.0
      %2935 = vmatpush1.msra.mxu0 0.0
      %2936 = vmatprep.subr.mxu0 0.0
      %2937 = vmatpush1.msra.mxu0 0.0
      %2938 = vmatprep.mubr.f32.mxu0 0.0
      %v2939 = vand.u32 %v1036, 4294901760
      %2940 = vmatmul.mubr.f32.gmra.mrb[0].mxu0 %v2939
      %v2941 = vpop.f32.mrb[0].mxu0
      %v2942 = vadd.f32 %v2761, %v2941
      %v2943 = vpop.f32.mrb[0].mxu0
      %2944 = vmatprep.mubr.f32.mxu0 0.0
      %v2945 = vand.u32 %v1039, 4294901760
      %2946 = vmatmul.mubr.f32.gmra.mrb[0].mxu0 %v2945
      %v2947 = vpop.f32.mrb[0].mxu0
      %v2948 = vadd.f32 %v2771, %v2947
      %v2949 = vpop.f32.mrb[0].mxu0
      %2950 = vmatprep.mubr.f32.mxu0 0.0
      %v2951 = vand.u32 %v1042, 4294901760
      %2952 = vmatmul.mubr.f32.gmra.mrb[0].mxu0 %v2951
      %v2953 = vpop.f32.mrb[0].mxu0
      %v2954 = vadd.f32 %v2781, %v2953
      %v2955 = vpop.f32.mrb[0].mxu0
      %2956 = vmatprep.mubr.f32.mxu0 0.0
      %v2957 = vand.u32 %v1045, 4294901760
      %2958 = vmatmul.mubr.f32.gmra.mrb[0].mxu0 %v2957
      %v2959 = vpop.f32.mrb[0].mxu0
      %v2960 = vadd.f32 %v2791, %v2959
      %v2961 = vpop.f32.mrb[0].mxu0
      %2962 = vmatprep.mubr.f32.mxu0 0.0
      %v2963 = vand.u32 %v1048, 4294901760
      %2964 = vmatmul.mubr.f32.gmra.mrb[0].mxu0 %v2963
      %v2965 = vpop.f32.mrb[0].mxu0
      %v2966 = vadd.f32 %v2801, %v2965
      %v2967 = vpop.f32.mrb[0].mxu0
      %2968 = vmatprep.mubr.f32.mxu0 0.0
      %v2969 = vand.u32 %v1051, 4294901760
      %2970 = vmatmul.mubr.f32.gmra.mrb[0].mxu0 %v2969
      %v2971 = vpop.f32.mrb[0].mxu0
      %v2972 = vadd.f32 %v2811, %v2971
      %v2973 = vpop.f32.mrb[0].mxu0
      %2974 = vmatprep.mubr.f32.mxu0 0.0
      %v2975 = vand.u32 %v1054, 4294901760
      %2976 = vmatmul.mubr.f32.gmra.mrb[0].mxu0 %v2975
      %v2977 = vpop.f32.mrb[0].mxu0
      %v2978 = vadd.f32 %v2821, %v2977
      %v2979 = vpop.f32.mrb[0].mxu0
      %2980 = vmatprep.mubr.f32.mxu0 0.0
      %v2981 = vand.u32 %v1057, 4294901760
      %2982 = vmatmul.mubr.f32.gmra.mrb[0].mxu0 %v2981
      %v2983 = vpop.f32.mrb[0].mxu0
      %v2984 = vadd.f32 %v2831, %v2983
      %v2985 = vpop.f32.mrb[0].mxu0
      %2986 = vdwg.mxu0
      %2987 = vmatprep.subr.mxu0 0.0
      %v2988 = vand.u32 %v2636, 4294901760
      %v2989 = vsub.f32 %v2636, %v2988
      %2990 = vmatpush1.msra.mxu0 %v2989
      %2991 = vmatprep.subr.mxu0 0.0
      %v2992 = vand.u32 %v2642, 4294901760
      %v2993 = vsub.f32 %v2642, %v2992
      %2994 = vmatpush1.msra.mxu0 %v2993
      %2995 = vmatprep.subr.mxu0 0.0
      %v2996 = vand.u32 %v2648, 4294901760
      %v2997 = vsub.f32 %v2648, %v2996
      %2998 = vmatpush1.msra.mxu0 %v2997
      %2999 = vmatprep.subr.mxu0 0.0
      %v3000 = vand.u32 %v2654, 4294901760
      %v3001 = vsub.f32 %v2654, %v3000
      %3002 = vmatpush1.msra.mxu0 %v3001
      %3003 = vmatprep.subr.mxu0 0.0
      %v3004 = vand.u32 %v2660, 4294901760
      %v3005 = vsub.f32 %v2660, %v3004
      %3006 = vmatpush1.msra.mxu0 %v3005
      %3007 = vmatprep.subr.mxu0 0.0
      %v3008 = vand.u32 %v2666, 4294901760
      %v3009 = vsub.f32 %v2666, %v3008
      %3010 = vmatpush1.msra.mxu0 %v3009
      %3011 = vmatprep.subr.mxu0 0.0
      %v3012 = vand.u32 %v2672, 4294901760
      %v3013 = vsub.f32 %v2672, %v3012
      %3014 = vmatpush1.msra.mxu0 %v3013
      %3015 = vmatprep.subr.mxu0 0.0
      %v3016 = vand.u32 %v2678, 4294901760
      %v3017 = vsub.f32 %v2678, %v3016
      %3018 = vmatpush1.msra.mxu0 %v3017
      %3019 = vmatprep.subr.mxu0 0.0
      %3020 = vmatpush1.msra.mxu0 0.0
      %3021 = vmatprep.subr.mxu0 0.0
      %3022 = vmatpush1.msra.mxu0 0.0
      %3023 = vmatprep.subr.mxu0 0.0
      %3024 = vmatpush1.msra.mxu0 0.0
      %3025 = vmatprep.subr.mxu0 0.0
      %3026 = vmatpush1.msra.mxu0 0.0
      %3027 = vmatprep.subr.mxu0 0.0
      %3028 = vmatpush1.msra.mxu0 0.0
      %3029 = vmatprep.subr.mxu0 0.0
      %3030 = vmatpush1.msra.mxu0 0.0
      %3031 = vmatprep.subr.mxu0 0.0
      %3032 = vmatpush1.msra.mxu0 0.0
      %3033 = vmatprep.subr.mxu0 0.0
      %3034 = vmatpush1.msra.mxu0 0.0
      %3035 = vmatprep.subr.mxu0 0.0
      %3036 = vmatpush1.msra.mxu0 0.0
      %3037 = vmatprep.subr.mxu0 0.0
      %3038 = vmatpush1.msra.mxu0 0.0
      %3039 = vmatprep.subr.mxu0 0.0
      %3040 = vmatpush1.msra.mxu0 0.0
      %3041 = vmatprep.subr.mxu0 0.0
      %3042 = vmatpush1.msra.mxu0 0.0
      %3043 = vmatprep.subr.mxu0 0.0
      %3044 = vmatpush1.msra.mxu0 0.0
      %3045 = vmatprep.subr.mxu0 0.0
      %3046 = vmatpush1.msra.mxu0 0.0
      %3047 = vmatprep.subr.mxu0 0.0
      %3048 = vmatpush1.msra.mxu0 0.0
      %3049 = vmatprep.subr.mxu0 0.0
      %3050 = vmatpush1.msra.mxu0 0.0
      %3051 = vmatprep.subr.mxu0 0.0
      %3052 = vmatpush1.msra.mxu0 0.0
      %3053 = vmatprep.subr.mxu0 0.0
      %3054 = vmatpush1.msra.mxu0 0.0
      %3055 = vmatprep.subr.mxu0 0.0
      %3056 = vmatpush1.msra.mxu0 0.0
      %3057 = vmatprep.subr.mxu0 0.0
      %3058 = vmatpush1.msra.mxu0 0.0
      %3059 = vmatprep.subr.mxu0 0.0
      %3060 = vmatpush1.msra.mxu0 0.0
      %3061 = vmatprep.subr.mxu0 0.0
      %3062 = vmatpush1.msra.mxu0 0.0
      %3063 = vmatprep.subr.mxu0 0.0
      %3064 = vmatpush1.msra.mxu0 0.0
      %3065 = vmatprep.subr.mxu0 0.0
      %3066 = vmatpush1.msra.mxu0 0.0
      %3067 = vmatprep.mubr.f32.mxu0 0.0
      %v3068 = vand.u32 %v1036, 4294901760
      %v3069 = vsub.f32 %v1036, %v3068
      %3070 = vmatmul.mubr.f32.gmra.mrb[0].mxu0 %v3069
      %v3071 = vpop.f32.mrb[0].mxu0
      %v3072 = vadd.f32 %v2942, %v3071
      %v3073 = vpop.f32.mrb[0].mxu0
      %3074 = vmatprep.mubr.f32.mxu0 0.0
      %v3075 = vand.u32 %v1039, 4294901760
      %v3076 = vsub.f32 %v1039, %v3075
      %3077 = vmatmul.mubr.f32.gmra.mrb[0].mxu0 %v3076
      %v3078 = vpop.f32.mrb[0].mxu0
      %v3079 = vadd.f32 %v2948, %v3078
      %v3080 = vpop.f32.mrb[0].mxu0
      %3081 = vmatprep.mubr.f32.mxu0 0.0
      %v3082 = vand.u32 %v1042, 4294901760
      %v3083 = vsub.f32 %v1042, %v3082
      %3084 = vmatmul.mubr.f32.gmra.mrb[0].mxu0 %v3083
      %v3085 = vpop.f32.mrb[0].mxu0
      %v3086 = vadd.f32 %v2954, %v3085
      %v3087 = vpop.f32.mrb[0].mxu0
      %3088 = vmatprep.mubr.f32.mxu0 0.0
      %v3089 = vand.u32 %v1045, 4294901760
      %v3090 = vsub.f32 %v1045, %v3089
      %3091 = vmatmul.mubr.f32.gmra.mrb[0].mxu0 %v3090
      %v3092 = vpop.f32.mrb[0].mxu0
      %v3093 = vadd.f32 %v2960, %v3092
      %v3094 = vpop.f32.mrb[0].mxu0
      %3095 = vmatprep.mubr.f32.mxu0 0.0
      %v3096 = vand.u32 %v1048, 4294901760
      %v3097 = vsub.f32 %v1048, %v3096
      %3098 = vmatmul.mubr.f32.gmra.mrb[0].mxu0 %v3097
      %v3099 = vpop.f32.mrb[0].mxu0
      %v3100 = vadd.f32 %v2966, %v3099
      %v3101 = vpop.f32.mrb[0].mxu0
      %3102 = vmatprep.mubr.f32.mxu0 0.0
      %v3103 = vand.u32 %v1051, 4294901760
      %v3104 = vsub.f32 %v1051, %v3103
      %3105 = vmatmul.mubr.f32.gmra.mrb[0].mxu0 %v3104
      %v3106 = vpop.f32.mrb[0].mxu0
      %v3107 = vadd.f32 %v2972, %v3106
      %v3108 = vpop.f32.mrb[0].mxu0
      %3109 = vmatprep.mubr.f32.mxu0 0.0
      %v3110 = vand.u32 %v1054, 4294901760
      %v3111 = vsub.f32 %v1054, %v3110
      %3112 = vmatmul.mubr.f32.gmra.mrb[0].mxu0 %v3111
      %v3113 = vpop.f32.mrb[0].mxu0
      %v3114 = vadd.f32 %v2978, %v3113
      %v3115 = vpop.f32.mrb[0].mxu0
      %3116 = vmatprep.mubr.f32.mxu0 0.0
      %v3117 = vand.u32 %v1057, 4294901760
      %v3118 = vsub.f32 %v1057, %v3117
      %3119 = vmatmul.mubr.f32.gmra.mrb[0].mxu0 %v3118
      %v3120 = vpop.f32.mrb[0].mxu0
      %v3121 = vadd.f32 %v2984, %v3120
      %v3122 = vpop.f32.mrb[0].mxu0
      %3123 = vdwg.mxu0
      %3124 = vmatprep.subr.mxu0 0.0
      %v3125 = vand.u32 %v2636, 4294901760
      %3126 = vmatpush1.msra.mxu0 %v3125
      %3127 = vmatprep.subr.mxu0 0.0
      %v3128 = vand.u32 %v2642, 4294901760
      %3129 = vmatpush1.msra.mxu0 %v3128
      %3130 = vmatprep.subr.mxu0 0.0
      %v3131 = vand.u32 %v2648, 4294901760
      %3132 = vmatpush1.msra.mxu0 %v3131
      %3133 = vmatprep.subr.mxu0 0.0
      %v3134 = vand.u32 %v2654, 4294901760
      %3135 = vmatpush1.msra.mxu0 %v3134
      %3136 = vmatprep.subr.mxu0 0.0
      %v3137 = vand.u32 %v2660, 4294901760
      %3138 = vmatpush1.msra.mxu0 %v3137
      %3139 = vmatprep.subr.mxu0 0.0
      %v3140 = vand.u32 %v2666, 4294901760
      %3141 = vmatpush1.msra.mxu0 %v3140
      %3142 = vmatprep.subr.mxu0 0.0
      %v3143 = vand.u32 %v2672, 4294901760
      %3144 = vmatpush1.msra.mxu0 %v3143
      %3145 = vmatprep.subr.mxu0 0.0
      %v3146 = vand.u32 %v2678, 4294901760
      %3147 = vmatpush1.msra.mxu0 %v3146
      %3148 = vmatprep.subr.mxu0 0.0
      %3149 = vmatpush1.msra.mxu0 0.0
      %3150 = vmatprep.subr.mxu0 0.0
      %3151 = vmatpush1.msra.mxu0 0.0
      %3152 = vmatprep.subr.mxu0 0.0
      %3153 = vmatpush1.msra.mxu0 0.0
      %3154 = vmatprep.subr.mxu0 0.0
      %3155 = vmatpush1.msra.mxu0 0.0
      %3156 = vmatprep.subr.mxu0 0.0
      %3157 = vmatpush1.msra.mxu0 0.0
      %3158 = vmatprep.subr.mxu0 0.0
      %3159 = vmatpush1.msra.mxu0 0.0
      %3160 = vmatprep.subr.mxu0 0.0
      %3161 = vmatpush1.msra.mxu0 0.0
      %3162 = vmatprep.subr.mxu0 0.0
      %3163 = vmatpush1.msra.mxu0 0.0
      %3164 = vmatprep.subr.mxu0 0.0
      %3165 = vmatpush1.msra.mxu0 0.0
      %3166 = vmatprep.subr.mxu0 0.0
      %3167 = vmatpush1.msra.mxu0 0.0
      %3168 = vmatprep.subr.mxu0 0.0
      %3169 = vmatpush1.msra.mxu0 0.0
      %3170 = vmatprep.subr.mxu0 0.0
      %3171 = vmatpush1.msra.mxu0 0.0
      %3172 = vmatprep.subr.mxu0 0.0
      %3173 = vmatpush1.msra.mxu0 0.0
      %3174 = vmatprep.subr.mxu0 0.0
      %3175 = vmatpush1.msra.mxu0 0.0
      %3176 = vmatprep.subr.mxu0 0.0
      %3177 = vmatpush1.msra.mxu0 0.0
      %3178 = vmatprep.subr.mxu0 0.0
      %3179 = vmatpush1.msra.mxu0 0.0
      %3180 = vmatprep.subr.mxu0 0.0
      %3181 = vmatpush1.msra.mxu0 0.0
      %3182 = vmatprep.subr.mxu0 0.0
      %3183 = vmatpush1.msra.mxu0 0.0
      %3184 = vmatprep.subr.mxu0 0.0
      %3185 = vmatpush1.msra.mxu0 0.0
      %3186 = vmatprep.subr.mxu0 0.0
      %3187 = vmatpush1.msra.mxu0 0.0
      %3188 = vmatprep.subr.mxu0 0.0
      %3189 = vmatpush1.msra.mxu0 0.0
      %3190 = vmatprep.subr.mxu0 0.0
      %3191 = vmatpush1.msra.mxu0 0.0
      %3192 = vmatprep.subr.mxu0 0.0
      %3193 = vmatpush1.msra.mxu0 0.0
      %3194 = vmatprep.subr.mxu0 0.0
      %3195 = vmatpush1.msra.mxu0 0.0
      %3196 = vmatprep.mubr.f32.mxu0 0.0
      %v3197 = vand.u32 %v1036, 4294901760
      %v3198 = vsub.f32 %v1036, %v3197
      %v3199 = vand.u32 %v3198, 4294901760
      %3200 = vmatmul.mubr.f32.gmra.mrb[0].mxu0 %v3199
      %v3201 = vpop.f32.mrb[0].mxu0
      %v3202 = vadd.f32 %v3072, %v3201
      %v3203 = vpop.f32.mrb[0].mxu0
      %3204 = vmatprep.mubr.f32.mxu0 0.0
      %v3205 = vand.u32 %v1039, 4294901760
      %v3206 = vsub.f32 %v1039, %v3205
      %v3207 = vand.u32 %v3206, 4294901760
      %3208 = vmatmul.mubr.f32.gmra.mrb[0].mxu0 %v3207
      %v3209 = vpop.f32.mrb[0].mxu0
      %v3210 = vadd.f32 %v3079, %v3209
      %v3211 = vpop.f32.mrb[0].mxu0
      %3212 = vmatprep.mubr.f32.mxu0 0.0
      %v3213 = vand.u32 %v1042, 4294901760
      %v3214 = vsub.f32 %v1042, %v3213
      %v3215 = vand.u32 %v3214, 4294901760
      %3216 = vmatmul.mubr.f32.gmra.mrb[0].mxu0 %v3215
      %v3217 = vpop.f32.mrb[0].mxu0
      %v3218 = vadd.f32 %v3086, %v3217
      %v3219 = vpop.f32.mrb[0].mxu0
      %3220 = vmatprep.mubr.f32.mxu0 0.0
      %v3221 = vand.u32 %v1045, 4294901760
      %v3222 = vsub.f32 %v1045, %v3221
      %v3223 = vand.u32 %v3222, 4294901760
      %3224 = vmatmul.mubr.f32.gmra.mrb[0].mxu0 %v3223
      %v3225 = vpop.f32.mrb[0].mxu0
      %v3226 = vadd.f32 %v3093, %v3225
      %v3227 = vpop.f32.mrb[0].mxu0
      %3228 = vmatprep.mubr.f32.mxu0 0.0
      %v3229 = vand.u32 %v1048, 4294901760
      %v3230 = vsub.f32 %v1048, %v3229
      %v3231 = vand.u32 %v3230, 4294901760
      %3232 = vmatmul.mubr.f32.gmra.mrb[0].mxu0 %v3231
      %v3233 = vpop.f32.mrb[0].mxu0
      %v3234 = vadd.f32 %v3100, %v3233
      %v3235 = vpop.f32.mrb[0].mxu0
      %3236 = vmatprep.mubr.f32.mxu0 0.0
      %v3237 = vand.u32 %v1051, 4294901760
      %v3238 = vsub.f32 %v1051, %v3237
      %v3239 = vand.u32 %v3238, 4294901760
      %3240 = vmatmul.mubr.f32.gmra.mrb[0].mxu0 %v3239
      %v3241 = vpop.f32.mrb[0].mxu0
      %v3242 = vadd.f32 %v3107, %v3241
      %v3243 = vpop.f32.mrb[0].mxu0
      %3244 = vmatprep.mubr.f32.mxu0 0.0
      %v3245 = vand.u32 %v1054, 4294901760
      %v3246 = vsub.f32 %v1054, %v3245
      %v3247 = vand.u32 %v3246, 4294901760
      %3248 = vmatmul.mubr.f32.gmra.mrb[0].mxu0 %v3247
      %v3249 = vpop.f32.mrb[0].mxu0
      %v3250 = vadd.f32 %v3114, %v3249
      %v3251 = vpop.f32.mrb[0].mxu0
      %3252 = vmatprep.mubr.f32.mxu0 0.0
      %v3253 = vand.u32 %v1057, 4294901760
      %v3254 = vsub.f32 %v1057, %v3253
      %v3255 = vand.u32 %v3254, 4294901760
      %3256 = vmatmul.mubr.f32.gmra.mrb[0].mxu0 %v3255
      %v3257 = vpop.f32.mrb[0].mxu0
      %v3258 = vadd.f32 %v3121, %v3257
      %v3259 = vpop.f32.mrb[0].mxu0
      %3260 = vdwg.mxu0
      %3261 = vmatprep.subr.mxu0 0.0
      %v3262 = vand.u32 %v2636, 4294901760
      %v3263 = vsub.f32 %v2636, %v3262
      %v3264 = vand.u32 %v3263, 4294901760
      %3265 = vmatpush1.msra.mxu0 %v3264
      %3266 = vmatprep.subr.mxu0 0.0
      %v3267 = vand.u32 %v2642, 4294901760
      %v3268 = vsub.f32 %v2642, %v3267
      %v3269 = vand.u32 %v3268, 4294901760
      %3270 = vmatpush1.msra.mxu0 %v3269
      %3271 = vmatprep.subr.mxu0 0.0
      %v3272 = vand.u32 %v2648, 4294901760
      %v3273 = vsub.f32 %v2648, %v3272
      %v3274 = vand.u32 %v3273, 4294901760
      %3275 = vmatpush1.msra.mxu0 %v3274
      %3276 = vmatprep.subr.mxu0 0.0
      %v3277 = vand.u32 %v2654, 4294901760
      %v3278 = vsub.f32 %v2654, %v3277
      %v3279 = vand.u32 %v3278, 4294901760
      %3280 = vmatpush1.msra.mxu0 %v3279
      %3281 = vmatprep.subr.mxu0 0.0
      %v3282 = vand.u32 %v2660, 4294901760
      %v3283 = vsub.f32 %v2660, %v3282
      %v3284 = vand.u32 %v3283, 4294901760
      %3285 = vmatpush1.msra.mxu0 %v3284
      %3286 = vmatprep.subr.mxu0 0.0
      %v3287 = vand.u32 %v2666, 4294901760
      %v3288 = vsub.f32 %v2666, %v3287
      %v3289 = vand.u32 %v3288, 4294901760
      %3290 = vmatpush1.msra.mxu0 %v3289
      %3291 = vmatprep.subr.mxu0 0.0
      %v3292 = vand.u32 %v2672, 4294901760
      %v3293 = vsub.f32 %v2672, %v3292
      %v3294 = vand.u32 %v3293, 4294901760
      %3295 = vmatpush1.msra.mxu0 %v3294
      %3296 = vmatprep.subr.mxu0 0.0
      %v3297 = vand.u32 %v2678, 4294901760
      %v3298 = vsub.f32 %v2678, %v3297
      %v3299 = vand.u32 %v3298, 4294901760
      %3300 = vmatpush1.msra.mxu0 %v3299
      %3301 = vmatprep.subr.mxu0 0.0
      %3302 = vmatpush1.msra.mxu0 0.0
      %3303 = vmatprep.subr.mxu0 0.0
      %3304 = vmatpush1.msra.mxu0 0.0
      %3305 = vmatprep.subr.mxu0 0.0
      %3306 = vmatpush1.msra.mxu0 0.0
      %3307 = vmatprep.subr.mxu0 0.0
      %3308 = vmatpush1.msra.mxu0 0.0
      %3309 = vmatprep.subr.mxu0 0.0
      %3310 = vmatpush1.msra.mxu0 0.0
      %3311 = vmatprep.subr.mxu0 0.0
      %3312 = vmatpush1.msra.mxu0 0.0
      %3313 = vmatprep.subr.mxu0 0.0
      %3314 = vmatpush1.msra.mxu0 0.0
      %3315 = vmatprep.subr.mxu0 0.0
      %3316 = vmatpush1.msra.mxu0 0.0
      %3317 = vmatprep.subr.mxu0 0.0
      %3318 = vmatpush1.msra.mxu0 0.0
      %3319 = vmatprep.subr.mxu0 0.0
      %3320 = vmatpush1.msra.mxu0 0.0
      %3321 = vmatprep.subr.mxu0 0.0
      %3322 = vmatpush1.msra.mxu0 0.0
      %3323 = vmatprep.subr.mxu0 0.0
      %3324 = vmatpush1.msra.mxu0 0.0
      %3325 = vmatprep.subr.mxu0 0.0
      %3326 = vmatpush1.msra.mxu0 0.0
      %3327 = vmatprep.subr.mxu0 0.0
      %3328 = vmatpush1.msra.mxu0 0.0
      %3329 = vmatprep.subr.mxu0 0.0
      %3330 = vmatpush1.msra.mxu0 0.0
      %3331 = vmatprep.subr.mxu0 0.0
      %3332 = vmatpush1.msra.mxu0 0.0
      %3333 = vmatprep.subr.mxu0 0.0
      %3334 = vmatpush1.msra.mxu0 0.0
      %3335 = vmatprep.subr.mxu0 0.0
      %3336 = vmatpush1.msra.mxu0 0.0
      %3337 = vmatprep.subr.mxu0 0.0
      %3338 = vmatpush1.msra.mxu0 0.0
      %3339 = vmatprep.subr.mxu0 0.0
      %3340 = vmatpush1.msra.mxu0 0.0
      %3341 = vmatprep.subr.mxu0 0.0
      %3342 = vmatpush1.msra.mxu0 0.0
      %3343 = vmatprep.subr.mxu0 0.0
      %3344 = vmatpush1.msra.mxu0 0.0
      %3345 = vmatprep.subr.mxu0 0.0
      %3346 = vmatpush1.msra.mxu0 0.0
      %3347 = vmatprep.subr.mxu0 0.0
      %3348 = vmatpush1.msra.mxu0 0.0
      %3349 = vmatprep.mubr.f32.mxu0 0.0
      %v3350 = vand.u32 %v1036, 4294901760
      %3351 = vmatmul.mubr.f32.gmra.mrb[0].mxu0 %v3350
      %v3352 = vpop.f32.mrb[0].mxu0
      %v3353 = vadd.f32 %v3202, %v3352
      %v3354 = vpop.f32.mrb[0].mxu0
      %3355 = vmatprep.mubr.f32.mxu0 0.0
      %v3356 = vand.u32 %v1039, 4294901760
      %3357 = vmatmul.mubr.f32.gmra.mrb[0].mxu0 %v3356
      %v3358 = vpop.f32.mrb[0].mxu0
      %v3359 = vadd.f32 %v3210, %v3358
      %v3360 = vpop.f32.mrb[0].mxu0
      %3361 = vmatprep.mubr.f32.mxu0 0.0
      %v3362 = vand.u32 %v1042, 4294901760
      %3363 = vmatmul.mubr.f32.gmra.mrb[0].mxu0 %v3362
      %v3364 = vpop.f32.mrb[0].mxu0
      %v3365 = vadd.f32 %v3218, %v3364
      %v3366 = vpop.f32.mrb[0].mxu0
      %3367 = vmatprep.mubr.f32.mxu0 0.0
      %v3368 = vand.u32 %v1045, 4294901760
      %3369 = vmatmul.mubr.f32.gmra.mrb[0].mxu0 %v3368
      %v3370 = vpop.f32.mrb[0].mxu0
      %v3371 = vadd.f32 %v3226, %v3370
      %v3372 = vpop.f32.mrb[0].mxu0
      %3373 = vmatprep.mubr.f32.mxu0 0.0
      %v3374 = vand.u32 %v1048, 4294901760
      %3375 = vmatmul.mubr.f32.gmra.mrb[0].mxu0 %v3374
      %v3376 = vpop.f32.mrb[0].mxu0
      %v3377 = vadd.f32 %v3234, %v3376
      %v3378 = vpop.f32.mrb[0].mxu0
      %3379 = vmatprep.mubr.f32.mxu0 0.0
      %v3380 = vand.u32 %v1051, 4294901760
      %3381 = vmatmul.mubr.f32.gmra.mrb[0].mxu0 %v3380
      %v3382 = vpop.f32.mrb[0].mxu0
      %v3383 = vadd.f32 %v3242, %v3382
      %v3384 = vpop.f32.mrb[0].mxu0
      %3385 = vmatprep.mubr.f32.mxu0 0.0
      %v3386 = vand.u32 %v1054, 4294901760
      %3387 = vmatmul.mubr.f32.gmra.mrb[0].mxu0 %v3386
      %v3388 = vpop.f32.mrb[0].mxu0
      %v3389 = vadd.f32 %v3250, %v3388
      %v3390 = vpop.f32.mrb[0].mxu0
      %3391 = vmatprep.mubr.f32.mxu0 0.0
      %v3392 = vand.u32 %v1057, 4294901760
      %3393 = vmatmul.mubr.f32.gmra.mrb[0].mxu0 %v3392
      %v3394 = vpop.f32.mrb[0].mxu0
      %v3395 = vadd.f32 %v3258, %v3394
      %v3396 = vpop.f32.mrb[0].mxu0
      %3397 = vdwg.mxu0
      %3398 = vmatprep.subr.mxu0 0.0
      %v3399 = vand.u32 %v2636, 4294901760
      %3400 = vmatpush1.msra.mxu0 %v3399
      %3401 = vmatprep.subr.mxu0 0.0
      %v3402 = vand.u32 %v2642, 4294901760
      %3403 = vmatpush1.msra.mxu0 %v3402
      %3404 = vmatprep.subr.mxu0 0.0
      %v3405 = vand.u32 %v2648, 4294901760
      %3406 = vmatpush1.msra.mxu0 %v3405
      %3407 = vmatprep.subr.mxu0 0.0
      %v3408 = vand.u32 %v2654, 4294901760
      %3409 = vmatpush1.msra.mxu0 %v3408
      %3410 = vmatprep.subr.mxu0 0.0
      %v3411 = vand.u32 %v2660, 4294901760
      %3412 = vmatpush1.msra.mxu0 %v3411
      %3413 = vmatprep.subr.mxu0 0.0
      %v3414 = vand.u32 %v2666, 4294901760
      %3415 = vmatpush1.msra.mxu0 %v3414
      %3416 = vmatprep.subr.mxu0 0.0
      %v3417 = vand.u32 %v2672, 4294901760
      %3418 = vmatpush1.msra.mxu0 %v3417
      %3419 = vmatprep.subr.mxu0 0.0
      %v3420 = vand.u32 %v2678, 4294901760
      %3421 = vmatpush1.msra.mxu0 %v3420
      %3422 = vmatprep.subr.mxu0 0.0
      %3423 = vmatpush1.msra.mxu0 0.0
      %3424 = vmatprep.subr.mxu0 0.0
      %3425 = vmatpush1.msra.mxu0 0.0
      %3426 = vmatprep.subr.mxu0 0.0
      %3427 = vmatpush1.msra.mxu0 0.0
      %3428 = vmatprep.subr.mxu0 0.0
      %3429 = vmatpush1.msra.mxu0 0.0
      %3430 = vmatprep.subr.mxu0 0.0
      %3431 = vmatpush1.msra.mxu0 0.0
      %3432 = vmatprep.subr.mxu0 0.0
      %3433 = vmatpush1.msra.mxu0 0.0
      %3434 = vmatprep.subr.mxu0 0.0
      %3435 = vmatpush1.msra.mxu0 0.0
      %3436 = vmatprep.subr.mxu0 0.0
      %3437 = vmatpush1.msra.mxu0 0.0
      %3438 = vmatprep.subr.mxu0 0.0
      %3439 = vmatpush1.msra.mxu0 0.0
      %3440 = vmatprep.subr.mxu0 0.0
      %3441 = vmatpush1.msra.mxu0 0.0
      %3442 = vmatprep.subr.mxu0 0.0
      %3443 = vmatpush1.msra.mxu0 0.0
      %3444 = vmatprep.subr.mxu0 0.0
      %3445 = vmatpush1.msra.mxu0 0.0
      %3446 = vmatprep.subr.mxu0 0.0
      %3447 = vmatpush1.msra.mxu0 0.0
      %3448 = vmatprep.subr.mxu0 0.0
      %3449 = vmatpush1.msra.mxu0 0.0
      %3450 = vmatprep.subr.mxu0 0.0
      %3451 = vmatpush1.msra.mxu0 0.0
      %3452 = vmatprep.subr.mxu0 0.0
      %3453 = vmatpush1.msra.mxu0 0.0
      %3454 = vmatprep.subr.mxu0 0.0
      %3455 = vmatpush1.msra.mxu0 0.0
      %3456 = vmatprep.subr.mxu0 0.0
      %3457 = vmatpush1.msra.mxu0 0.0
      %3458 = vmatprep.subr.mxu0 0.0
      %3459 = vmatpush1.msra.mxu0 0.0
      %3460 = vmatprep.subr.mxu0 0.0
      %3461 = vmatpush1.msra.mxu0 0.0
      %3462 = vmatprep.subr.mxu0 0.0
      %3463 = vmatpush1.msra.mxu0 0.0
      %3464 = vmatprep.subr.mxu0 0.0
      %3465 = vmatpush1.msra.mxu0 0.0
      %3466 = vmatprep.subr.mxu0 0.0
      %3467 = vmatpush1.msra.mxu0 0.0
      %3468 = vmatprep.subr.mxu0 0.0
      %3469 = vmatpush1.msra.mxu0 0.0
      %3470 = vmatprep.mubr.f32.mxu0 0.0
      %v3471 = vand.u32 %v1036, 4294901760
      %3472 = vmatmul.mubr.f32.gmra.mrb[0].mxu0 %v3471
      %v3473 = vpop.f32.mrb[0].mxu0
      %v3474 = vadd.f32 %v3353, %v3473
      %v3475 = vpop.f32.mrb[0].mxu0
      %3476 = vmatprep.mubr.f32.mxu0 0.0
      %v3477 = vand.u32 %v1039, 4294901760
      %3478 = vmatmul.mubr.f32.gmra.mrb[0].mxu0 %v3477
      %v3479 = vpop.f32.mrb[0].mxu0
      %v3480 = vadd.f32 %v3359, %v3479
      %v3481 = vpop.f32.mrb[0].mxu0
      %3482 = vmatprep.mubr.f32.mxu0 0.0
      %v3483 = vand.u32 %v1042, 4294901760
      %3484 = vmatmul.mubr.f32.gmra.mrb[0].mxu0 %v3483
      %v3485 = vpop.f32.mrb[0].mxu0
      %v3486 = vadd.f32 %v3365, %v3485
      %v3487 = vpop.f32.mrb[0].mxu0
      %3488 = vmatprep.mubr.f32.mxu0 0.0
      %v3489 = vand.u32 %v1045, 4294901760
      %3490 = vmatmul.mubr.f32.gmra.mrb[0].mxu0 %v3489
      %v3491 = vpop.f32.mrb[0].mxu0
      %v3492 = vadd.f32 %v3371, %v3491
      %v3493 = vpop.f32.mrb[0].mxu0
      %3494 = vmatprep.mubr.f32.mxu0 0.0
      %v3495 = vand.u32 %v1048, 4294901760
      %3496 = vmatmul.mubr.f32.gmra.mrb[0].mxu0 %v3495
      %v3497 = vpop.f32.mrb[0].mxu0
      %v3498 = vadd.f32 %v3377, %v3497
      %v3499 = vpop.f32.mrb[0].mxu0
      %3500 = vmatprep.mubr.f32.mxu0 0.0
      %v3501 = vand.u32 %v1051, 4294901760
      %3502 = vmatmul.mubr.f32.gmra.mrb[0].mxu0 %v3501
      %v3503 = vpop.f32.mrb[0].mxu0
      %v3504 = vadd.f32 %v3383, %v3503
      %v3505 = vpop.f32.mrb[0].mxu0
      %3506 = vmatprep.mubr.f32.mxu0 0.0
      %v3507 = vand.u32 %v1054, 4294901760
      %3508 = vmatmul.mubr.f32.gmra.mrb[0].mxu0 %v3507
      %v3509 = vpop.f32.mrb[0].mxu0
      %v3510 = vadd.f32 %v3389, %v3509
      %v3511 = vpop.f32.mrb[0].mxu0
      %3512 = vmatprep.mubr.f32.mxu0 0.0
      %v3513 = vand.u32 %v1057, 4294901760
      %3514 = vmatmul.mubr.f32.gmra.mrb[0].mxu0 %v3513
      %v3515 = vpop.f32.mrb[0].mxu0
      %v3516 = vadd.f32 %v3395, %v3515
      %v3517 = vpop.f32.mrb[0].mxu0
      %3518 = vdwg.mxu0
      %v3519 = vmul.f32 %v223, %v223
      %v3520 = vmul.f32 %v224, %v224
      %v3521 = vmul.f32 %v225, %v225
      %v3522 = vmul.f32 %v226, %v226
      %v3523 = vmul.f32 %v227, %v227
      %v3524 = vmul.f32 %v228, %v228
      %v3525 = vmul.f32 %v229, %v229
      %v3526 = vmul.f32 %v230, %v230
      %v3528 = vsel %vm249, %v3519, 0
      %v3531 = vsel %vm249, %v3520, 0
      %v3534 = vsel %vm249, %v3521, 0
      %v3537 = vsel %vm249, %v3522, 0
      %v3540 = vsel %vm249, %v3523, 0
      %v3543 = vsel %vm249, %v3524, 0
      %v3546 = vsel %vm249, %v3525, 0
      %v3549 = vsel %vm249, %v3526, 0
      %3551 = vmatprep.subr.mxu0 0.0
      %v3552 = vand.u32 %v247, 4294901760
      %3553 = vmatpush1.msra.mxu0 %v3552
      %3554 = vmatprep.subr.mxu0 0.0
      %v3555 = vand.u32 %v248, 4294901760
      %3556 = vmatpush1.msra.mxu0 %v3555
      %3557 = vmatprep.subr.mxu0 0.0
      %3558 = vmatpush1.msra.mxu0 0.0
      %3559 = vmatprep.subr.mxu0 0.0
      %3560 = vmatpush1.msra.mxu0 0.0
      %3561 = vmatprep.subr.mxu0 0.0
      %3562 = vmatpush1.msra.mxu0 0.0
      %3563 = vmatprep.subr.mxu0 0.0
      %3564 = vmatpush1.msra.mxu0 0.0
      %3565 = vmatprep.subr.mxu0 0.0
      %3566 = vmatpush1.msra.mxu0 0.0
      %3567 = vmatprep.subr.mxu0 0.0
      %3568 = vmatpush1.msra.mxu0 0.0
      %3569 = vmatprep.subr.mxu0 0.0
      %3570 = vmatpush1.msra.mxu0 0.0
      %3571 = vmatprep.subr.mxu0 0.0
      %3572 = vmatpush1.msra.mxu0 0.0
      %3573 = vmatprep.subr.mxu0 0.0
      %3574 = vmatpush1.msra.mxu0 0.0
      %3575 = vmatprep.subr.mxu0 0.0
      %3576 = vmatpush1.msra.mxu0 0.0
      %3577 = vmatprep.subr.mxu0 0.0
      %3578 = vmatpush1.msra.mxu0 0.0
      %3579 = vmatprep.subr.mxu0 0.0
      %3580 = vmatpush1.msra.mxu0 0.0
      %3581 = vmatprep.subr.mxu0 0.0
      %3582 = vmatpush1.msra.mxu0 0.0
      %3583 = vmatprep.subr.mxu0 0.0
      %3584 = vmatpush1.msra.mxu0 0.0
      %3585 = vmatprep.subr.mxu0 0.0
      %3586 = vmatpush1.msra.mxu0 0.0
      %3587 = vmatprep.subr.mxu0 0.0
      %3588 = vmatpush1.msra.mxu0 0.0
      %3589 = vmatprep.subr.mxu0 0.0
      %3590 = vmatpush1.msra.mxu0 0.0
      %3591 = vmatprep.subr.mxu0 0.0
      %3592 = vmatpush1.msra.mxu0 0.0
      %3593 = vmatprep.subr.mxu0 0.0
      %3594 = vmatpush1.msra.mxu0 0.0
      %3595 = vmatprep.subr.mxu0 0.0
      %3596 = vmatpush1.msra.mxu0 0.0
      %3597 = vmatprep.subr.mxu0 0.0
      %3598 = vmatpush1.msra.mxu0 0.0
      %3599 = vmatprep.subr.mxu0 0.0
      %3600 = vmatpush1.msra.mxu0 0.0
      %3601 = vmatprep.subr.mxu0 0.0
      %3602 = vmatpush1.msra.mxu0 0.0
      %3603 = vmatprep.subr.mxu0 0.0
      %3604 = vmatpush1.msra.mxu0 0.0
      %3605 = vmatprep.subr.mxu0 0.0
      %3606 = vmatpush1.msra.mxu0 0.0
      %3607 = vmatprep.subr.mxu0 0.0
      %3608 = vmatpush1.msra.mxu0 0.0
      %3609 = vmatprep.subr.mxu0 0.0
      %3610 = vmatpush1.msra.mxu0 0.0
      %3611 = vmatprep.subr.mxu0 0.0
      %3612 = vmatpush1.msra.mxu0 0.0
      %3613 = vmatprep.subr.mxu0 0.0
      %3614 = vmatpush1.msra.mxu0 0.0
      %3615 = vmatprep.subr.mxu0 0.0
      %3616 = vmatpush1.msra.mxu0 0.0
      %3617 = vmatprep.mubr.f32.mxu0 0.0
      %v3618 = vand.u32 %v3528, 4294901760
      %v3619 = vsub.f32 %v3528, %v3618
      %v3620 = vand.u32 %v3619, 4294901760
      %v3621 = vsub.f32 %v3619, %v3620
      %v3622 = vand.u32 %v3621, 4294901760
      %3623 = vmatmul.mubr.f32.gmra.mrb[0].mxu0 %v3622
      %v3624 = vpop.f32.mrb[0].mxu0
      %v3625 = vadd.f32 0.0, %v3624
      %v3626 = vpop.f32.mrb[0].mxu0
      %3627 = vmatprep.mubr.f32.mxu0 0.0
      %v3628 = vand.u32 %v3531, 4294901760
      %v3629 = vsub.f32 %v3531, %v3628
      %v3630 = vand.u32 %v3629, 4294901760
      %v3631 = vsub.f32 %v3629, %v3630
      %v3632 = vand.u32 %v3631, 4294901760
      %3633 = vmatmul.mubr.f32.gmra.mrb[0].mxu0 %v3632
      %v3634 = vpop.f32.mrb[0].mxu0
      %v3635 = vadd.f32 0.0, %v3634
      %v3636 = vpop.f32.mrb[0].mxu0
      %3637 = vmatprep.mubr.f32.mxu0 0.0
      %v3638 = vand.u32 %v3534, 4294901760
      %v3639 = vsub.f32 %v3534, %v3638
      %v3640 = vand.u32 %v3639, 4294901760
      %v3641 = vsub.f32 %v3639, %v3640
      %v3642 = vand.u32 %v3641, 4294901760
      %3643 = vmatmul.mubr.f32.gmra.mrb[0].mxu0 %v3642
      %v3644 = vpop.f32.mrb[0].mxu0
      %v3645 = vadd.f32 0.0, %v3644
      %v3646 = vpop.f32.mrb[0].mxu0
      %3647 = vmatprep.mubr.f32.mxu0 0.0
      %v3648 = vand.u32 %v3537, 4294901760
      %v3649 = vsub.f32 %v3537, %v3648
      %v3650 = vand.u32 %v3649, 4294901760
      %v3651 = vsub.f32 %v3649, %v3650
      %v3652 = vand.u32 %v3651, 4294901760
      %3653 = vmatmul.mubr.f32.gmra.mrb[0].mxu0 %v3652
      %v3654 = vpop.f32.mrb[0].mxu0
      %v3655 = vadd.f32 0.0, %v3654
      %v3656 = vpop.f32.mrb[0].mxu0
      %3657 = vmatprep.mubr.f32.mxu0 0.0
      %v3658 = vand.u32 %v3540, 4294901760
      %v3659 = vsub.f32 %v3540, %v3658
      %v3660 = vand.u32 %v3659, 4294901760
      %v3661 = vsub.f32 %v3659, %v3660
      %v3662 = vand.u32 %v3661, 4294901760
      %3663 = vmatmul.mubr.f32.gmra.mrb[0].mxu0 %v3662
      %v3664 = vpop.f32.mrb[0].mxu0
      %v3665 = vadd.f32 0.0, %v3664
      %v3666 = vpop.f32.mrb[0].mxu0
      %3667 = vmatprep.mubr.f32.mxu0 0.0
      %v3668 = vand.u32 %v3543, 4294901760
      %v3669 = vsub.f32 %v3543, %v3668
      %v3670 = vand.u32 %v3669, 4294901760
      %v3671 = vsub.f32 %v3669, %v3670
      %v3672 = vand.u32 %v3671, 4294901760
      %3673 = vmatmul.mubr.f32.gmra.mrb[0].mxu0 %v3672
      %v3674 = vpop.f32.mrb[0].mxu0
      %v3675 = vadd.f32 0.0, %v3674
      %v3676 = vpop.f32.mrb[0].mxu0
      %3677 = vmatprep.mubr.f32.mxu0 0.0
      %v3678 = vand.u32 %v3546, 4294901760
      %v3679 = vsub.f32 %v3546, %v3678
      %v3680 = vand.u32 %v3679, 4294901760
      %v3681 = vsub.f32 %v3679, %v3680
      %v3682 = vand.u32 %v3681, 4294901760
      %3683 = vmatmul.mubr.f32.gmra.mrb[0].mxu0 %v3682
      %v3684 = vpop.f32.mrb[0].mxu0
      %v3685 = vadd.f32 0.0, %v3684
      %v3686 = vpop.f32.mrb[0].mxu0
      %3687 = vmatprep.mubr.f32.mxu0 0.0
      %v3688 = vand.u32 %v3549, 4294901760
      %v3689 = vsub.f32 %v3549, %v3688
      %v3690 = vand.u32 %v3689, 4294901760
      %v3691 = vsub.f32 %v3689, %v3690
      %v3692 = vand.u32 %v3691, 4294901760
      %3693 = vmatmul.mubr.f32.gmra.mrb[0].mxu0 %v3692
      %v3694 = vpop.f32.mrb[0].mxu0
      %v3695 = vadd.f32 0.0, %v3694
      %v3696 = vpop.f32.mrb[0].mxu0
      %3697 = vdwg.mxu0
      %3698 = vmatprep.subr.mxu0 0.0
      %v3699 = vand.u32 %v247, 4294901760
      %v3700 = vsub.f32 %v247, %v3699
      %v3701 = vand.u32 %v3700, 4294901760
      %v3702 = vsub.f32 %v3700, %v3701
      %v3703 = vand.u32 %v3702, 4294901760
      %3704 = vmatpush1.msra.mxu0 %v3703
      %3705 = vmatprep.subr.mxu0 0.0
      %v3706 = vand.u32 %v248, 4294901760
      %v3707 = vsub.f32 %v248, %v3706
      %v3708 = vand.u32 %v3707, 4294901760
      %v3709 = vsub.f32 %v3707, %v3708
      %v3710 = vand.u32 %v3709, 4294901760
      %3711 = vmatpush1.msra.mxu0 %v3710
      %3712 = vmatprep.subr.mxu0 0.0
      %3713 = vmatpush1.msra.mxu0 0.0
      %3714 = vmatprep.subr.mxu0 0.0
      %3715 = vmatpush1.msra.mxu0 0.0
      %3716 = vmatprep.subr.mxu0 0.0
      %3717 = vmatpush1.msra.mxu0 0.0
      %3718 = vmatprep.subr.mxu0 0.0
      %3719 = vmatpush1.msra.mxu0 0.0
      %3720 = vmatprep.subr.mxu0 0.0
      %3721 = vmatpush1.msra.mxu0 0.0
      %3722 = vmatprep.subr.mxu0 0.0
      %3723 = vmatpush1.msra.mxu0 0.0
      %3724 = vmatprep.subr.mxu0 0.0
      %3725 = vmatpush1.msra.mxu0 0.0
      %3726 = vmatprep.subr.mxu0 0.0
      %3727 = vmatpush1.msra.mxu0 0.0
      %3728 = vmatprep.subr.mxu0 0.0
      %3729 = vmatpush1.msra.mxu0 0.0
      %3730 = vmatprep.subr.mxu0 0.0
      %3731 = vmatpush1.msra.mxu0 0.0
      %3732 = vmatprep.subr.mxu0 0.0
      %3733 = vmatpush1.msra.mxu0 0.0
      %3734 = vmatprep.subr.mxu0 0.0
      %3735 = vmatpush1.msra.mxu0 0.0
      %3736 = vmatprep.subr.mxu0 0.0
      %3737 = vmatpush1.msra.mxu0 0.0
      %3738 = vmatprep.subr.mxu0 0.0
      %3739 = vmatpush1.msra.mxu0 0.0
      %3740 = vmatprep.subr.mxu0 0.0
      %3741 = vmatpush1.msra.mxu0 0.0
      %3742 = vmatprep.subr.mxu0 0.0
      %3743 = vmatpush1.msra.mxu0 0.0
      %3744 = vmatprep.subr.mxu0 0.0
      %3745 = vmatpush1.msra.mxu0 0.0
      %3746 = vmatprep.subr.mxu0 0.0
      %3747 = vmatpush1.msra.mxu0 0.0
      %3748 = vmatprep.subr.mxu0 0.0
      %3749 = vmatpush1.msra.mxu0 0.0
      %3750 = vmatprep.subr.mxu0 0.0
      %3751 = vmatpush1.msra.mxu0 0.0
      %3752 = vmatprep.subr.mxu0 0.0
      %3753 = vmatpush1.msra.mxu0 0.0
      %3754 = vmatprep.subr.mxu0 0.0
      %3755 = vmatpush1.msra.mxu0 0.0
      %3756 = vmatprep.subr.mxu0 0.0
      %3757 = vmatpush1.msra.mxu0 0.0
      %3758 = vmatprep.subr.mxu0 0.0
      %3759 = vmatpush1.msra.mxu0 0.0
      %3760 = vmatprep.subr.mxu0 0.0
      %3761 = vmatpush1.msra.mxu0 0.0
      %3762 = vmatprep.subr.mxu0 0.0
      %3763 = vmatpush1.msra.mxu0 0.0
      %3764 = vmatprep.subr.mxu0 0.0
      %3765 = vmatpush1.msra.mxu0 0.0
      %3766 = vmatprep.subr.mxu0 0.0
      %3767 = vmatpush1.msra.mxu0 0.0
      %3768 = vmatprep.subr.mxu0 0.0
      %3769 = vmatpush1.msra.mxu0 0.0
      %3770 = vmatprep.subr.mxu0 0.0
      %3771 = vmatpush1.msra.mxu0 0.0
      %3772 = vmatprep.mubr.f32.mxu0 0.0
      %v3773 = vand.u32 %v3528, 4294901760
      %3774 = vmatmul.mubr.f32.gmra.mrb[0].mxu0 %v3773
      %v3775 = vpop.f32.mrb[0].mxu0
      %v3776 = vadd.f32 %v3625, %v3775
      %v3777 = vpop.f32.mrb[0].mxu0
      %3778 = vmatprep.mubr.f32.mxu0 0.0
      %v3779 = vand.u32 %v3531, 4294901760
      %3780 = vmatmul.mubr.f32.gmra.mrb[0].mxu0 %v3779
      %v3781 = vpop.f32.mrb[0].mxu0
      %v3782 = vadd.f32 %v3635, %v3781
      %v3783 = vpop.f32.mrb[0].mxu0
      %3784 = vmatprep.mubr.f32.mxu0 0.0
      %v3785 = vand.u32 %v3534, 4294901760
      %3786 = vmatmul.mubr.f32.gmra.mrb[0].mxu0 %v3785
      %v3787 = vpop.f32.mrb[0].mxu0
      %v3788 = vadd.f32 %v3645, %v3787
      %v3789 = vpop.f32.mrb[0].mxu0
      %3790 = vmatprep.mubr.f32.mxu0 0.0
      %v3791 = vand.u32 %v3537, 4294901760
      %3792 = vmatmul.mubr.f32.gmra.mrb[0].mxu0 %v3791
      %v3793 = vpop.f32.mrb[0].mxu0
      %v3794 = vadd.f32 %v3655, %v3793
      %v3795 = vpop.f32.mrb[0].mxu0
      %3796 = vmatprep.mubr.f32.mxu0 0.0
      %v3797 = vand.u32 %v3540, 4294901760
      %3798 = vmatmul.mubr.f32.gmra.mrb[0].mxu0 %v3797
      %v3799 = vpop.f32.mrb[0].mxu0
      %v3800 = vadd.f32 %v3665, %v3799
      %v3801 = vpop.f32.mrb[0].mxu0
      %3802 = vmatprep.mubr.f32.mxu0 0.0
      %v3803 = vand.u32 %v3543, 4294901760
      %3804 = vmatmul.mubr.f32.gmra.mrb[0].mxu0 %v3803
      %v3805 = vpop.f32.mrb[0].mxu0
      %v3806 = vadd.f32 %v3675, %v3805
      %v3807 = vpop.f32.mrb[0].mxu0
      %3808 = vmatprep.mubr.f32.mxu0 0.0
      %v3809 = vand.u32 %v3546, 4294901760
      %3810 = vmatmul.mubr.f32.gmra.mrb[0].mxu0 %v3809
      %v3811 = vpop.f32.mrb[0].mxu0
      %v3812 = vadd.f32 %v3685, %v3811
      %v3813 = vpop.f32.mrb[0].mxu0
      %3814 = vmatprep.mubr.f32.mxu0 0.0
      %v3815 = vand.u32 %v3549, 4294901760
      %3816 = vmatmul.mubr.f32.gmra.mrb[0].mxu0 %v3815
      %v3817 = vpop.f32.mrb[0].mxu0
      %v3818 = vadd.f32 %v3695, %v3817
      %v3819 = vpop.f32.mrb[0].mxu0
      %3820 = vdwg.mxu0
      %3821 = vmatprep.subr.mxu0 0.0
      %v3822 = vand.u32 %v247, 4294901760
      %v3823 = vsub.f32 %v247, %v3822
      %3824 = vmatpush1.msra.mxu0 %v3823
      %3825 = vmatprep.subr.mxu0 0.0
      %v3826 = vand.u32 %v248, 4294901760
      %v3827 = vsub.f32 %v248, %v3826
      %3828 = vmatpush1.msra.mxu0 %v3827
      %3829 = vmatprep.subr.mxu0 0.0
      %3830 = vmatpush1.msra.mxu0 0.0
      %3831 = vmatprep.subr.mxu0 0.0
      %3832 = vmatpush1.msra.mxu0 0.0
      %3833 = vmatprep.subr.mxu0 0.0
      %3834 = vmatpush1.msra.mxu0 0.0
      %3835 = vmatprep.subr.mxu0 0.0
      %3836 = vmatpush1.msra.mxu0 0.0
      %3837 = vmatprep.subr.mxu0 0.0
      %3838 = vmatpush1.msra.mxu0 0.0
      %3839 = vmatprep.subr.mxu0 0.0
      %3840 = vmatpush1.msra.mxu0 0.0
      %3841 = vmatprep.subr.mxu0 0.0
      %3842 = vmatpush1.msra.mxu0 0.0
      %3843 = vmatprep.subr.mxu0 0.0
      %3844 = vmatpush1.msra.mxu0 0.0
      %3845 = vmatprep.subr.mxu0 0.0
      %3846 = vmatpush1.msra.mxu0 0.0
      %3847 = vmatprep.subr.mxu0 0.0
      %3848 = vmatpush1.msra.mxu0 0.0
      %3849 = vmatprep.subr.mxu0 0.0
      %3850 = vmatpush1.msra.mxu0 0.0
      %3851 = vmatprep.subr.mxu0 0.0
      %3852 = vmatpush1.msra.mxu0 0.0
      %3853 = vmatprep.subr.mxu0 0.0
      %3854 = vmatpush1.msra.mxu0 0.0
      %3855 = vmatprep.subr.mxu0 0.0
      %3856 = vmatpush1.msra.mxu0 0.0
      %3857 = vmatprep.subr.mxu0 0.0
      %3858 = vmatpush1.msra.mxu0 0.0
      %3859 = vmatprep.subr.mxu0 0.0
      %3860 = vmatpush1.msra.mxu0 0.0
      %3861 = vmatprep.subr.mxu0 0.0
      %3862 = vmatpush1.msra.mxu0 0.0
      %3863 = vmatprep.subr.mxu0 0.0
      %3864 = vmatpush1.msra.mxu0 0.0
      %3865 = vmatprep.subr.mxu0 0.0
      %3866 = vmatpush1.msra.mxu0 0.0
      %3867 = vmatprep.subr.mxu0 0.0
      %3868 = vmatpush1.msra.mxu0 0.0
      %3869 = vmatprep.subr.mxu0 0.0
      %3870 = vmatpush1.msra.mxu0 0.0
      %3871 = vmatprep.subr.mxu0 0.0
      %3872 = vmatpush1.msra.mxu0 0.0
      %3873 = vmatprep.subr.mxu0 0.0
      %3874 = vmatpush1.msra.mxu0 0.0
      %3875 = vmatprep.subr.mxu0 0.0
      %3876 = vmatpush1.msra.mxu0 0.0
      %3877 = vmatprep.subr.mxu0 0.0
      %3878 = vmatpush1.msra.mxu0 0.0
      %3879 = vmatprep.subr.mxu0 0.0
      %3880 = vmatpush1.msra.mxu0 0.0
      %3881 = vmatprep.subr.mxu0 0.0
      %3882 = vmatpush1.msra.mxu0 0.0
      %3883 = vmatprep.subr.mxu0 0.0
      %3884 = vmatpush1.msra.mxu0 0.0
      %3885 = vmatprep.subr.mxu0 0.0
      %3886 = vmatpush1.msra.mxu0 0.0
      %3887 = vmatprep.subr.mxu0 0.0
      %3888 = vmatpush1.msra.mxu0 0.0
      %3889 = vmatprep.mubr.f32.mxu0 0.0
      %v3890 = vand.u32 %v3528, 4294901760
      %v3891 = vsub.f32 %v3528, %v3890
      %3892 = vmatmul.mubr.f32.gmra.mrb[0].mxu0 %v3891
      %v3893 = vpop.f32.mrb[0].mxu0
      %v3894 = vadd.f32 %v3776, %v3893
      %v3895 = vpop.f32.mrb[0].mxu0
      %3896 = vmatprep.mubr.f32.mxu0 0.0
      %v3897 = vand.u32 %v3531, 4294901760
      %v3898 = vsub.f32 %v3531, %v3897
      %3899 = vmatmul.mubr.f32.gmra.mrb[0].mxu0 %v3898
      %v3900 = vpop.f32.mrb[0].mxu0
      %v3901 = vadd.f32 %v3782, %v3900
      %v3902 = vpop.f32.mrb[0].mxu0
      %3903 = vmatprep.mubr.f32.mxu0 0.0
      %v3904 = vand.u32 %v3534, 4294901760
      %v3905 = vsub.f32 %v3534, %v3904
      %3906 = vmatmul.mubr.f32.gmra.mrb[0].mxu0 %v3905
      %v3907 = vpop.f32.mrb[0].mxu0
      %v3908 = vadd.f32 %v3788, %v3907
      %v3909 = vpop.f32.mrb[0].mxu0
      %3910 = vmatprep.mubr.f32.mxu0 0.0
      %v3911 = vand.u32 %v3537, 4294901760
      %v3912 = vsub.f32 %v3537, %v3911
      %3913 = vmatmul.mubr.f32.gmra.mrb[0].mxu0 %v3912
      %v3914 = vpop.f32.mrb[0].mxu0
      %v3915 = vadd.f32 %v3794, %v3914
      %v3916 = vpop.f32.mrb[0].mxu0
      %3917 = vmatprep.mubr.f32.mxu0 0.0
      %v3918 = vand.u32 %v3540, 4294901760
      %v3919 = vsub.f32 %v3540, %v3918
      %3920 = vmatmul.mubr.f32.gmra.mrb[0].mxu0 %v3919
      %v3921 = vpop.f32.mrb[0].mxu0
      %v3922 = vadd.f32 %v3800, %v3921
      %v3923 = vpop.f32.mrb[0].mxu0
      %3924 = vmatprep.mubr.f32.mxu0 0.0
      %v3925 = vand.u32 %v3543, 4294901760
      %v3926 = vsub.f32 %v3543, %v3925
      %3927 = vmatmul.mubr.f32.gmra.mrb[0].mxu0 %v3926
      %v3928 = vpop.f32.mrb[0].mxu0
      %v3929 = vadd.f32 %v3806, %v3928
      %v3930 = vpop.f32.mrb[0].mxu0
      %3931 = vmatprep.mubr.f32.mxu0 0.0
      %v3932 = vand.u32 %v3546, 4294901760
      %v3933 = vsub.f32 %v3546, %v3932
      %3934 = vmatmul.mubr.f32.gmra.mrb[0].mxu0 %v3933
      %v3935 = vpop.f32.mrb[0].mxu0
      %v3936 = vadd.f32 %v3812, %v3935
      %v3937 = vpop.f32.mrb[0].mxu0
      %3938 = vmatprep.mubr.f32.mxu0 0.0
      %v3939 = vand.u32 %v3549, 4294901760
      %v3940 = vsub.f32 %v3549, %v3939
      %3941 = vmatmul.mubr.f32.gmra.mrb[0].mxu0 %v3940
      %v3942 = vpop.f32.mrb[0].mxu0
      %v3943 = vadd.f32 %v3818, %v3942
      %v3944 = vpop.f32.mrb[0].mxu0
      %3945 = vdwg.mxu0
      %3946 = vmatprep.subr.mxu0 0.0
      %v3947 = vand.u32 %v247, 4294901760
      %3948 = vmatpush1.msra.mxu0 %v3947
      %3949 = vmatprep.subr.mxu0 0.0
      %v3950 = vand.u32 %v248, 4294901760
      %3951 = vmatpush1.msra.mxu0 %v3950
      %3952 = vmatprep.subr.mxu0 0.0
      %3953 = vmatpush1.msra.mxu0 0.0
      %3954 = vmatprep.subr.mxu0 0.0
      %3955 = vmatpush1.msra.mxu0 0.0
      %3956 = vmatprep.subr.mxu0 0.0
      %3957 = vmatpush1.msra.mxu0 0.0
      %3958 = vmatprep.subr.mxu0 0.0
      %3959 = vmatpush1.msra.mxu0 0.0
      %3960 = vmatprep.subr.mxu0 0.0
      %3961 = vmatpush1.msra.mxu0 0.0
      %3962 = vmatprep.subr.mxu0 0.0
      %3963 = vmatpush1.msra.mxu0 0.0
      %3964 = vmatprep.subr.mxu0 0.0
      %3965 = vmatpush1.msra.mxu0 0.0
      %3966 = vmatprep.subr.mxu0 0.0
      %3967 = vmatpush1.msra.mxu0 0.0
      %3968 = vmatprep.subr.mxu0 0.0
      %3969 = vmatpush1.msra.mxu0 0.0
      %3970 = vmatprep.subr.mxu0 0.0
      %3971 = vmatpush1.msra.mxu0 0.0
      %3972 = vmatprep.subr.mxu0 0.0
      %3973 = vmatpush1.msra.mxu0 0.0
      %3974 = vmatprep.subr.mxu0 0.0
      %3975 = vmatpush1.msra.mxu0 0.0
      %3976 = vmatprep.subr.mxu0 0.0
      %3977 = vmatpush1.msra.mxu0 0.0
      %3978 = vmatprep.subr.mxu0 0.0
      %3979 = vmatpush1.msra.mxu0 0.0
      %3980 = vmatprep.subr.mxu0 0.0
      %3981 = vmatpush1.msra.mxu0 0.0
      %3982 = vmatprep.subr.mxu0 0.0
      %3983 = vmatpush1.msra.mxu0 0.0
      %3984 = vmatprep.subr.mxu0 0.0
      %3985 = vmatpush1.msra.mxu0 0.0
      %3986 = vmatprep.subr.mxu0 0.0
      %3987 = vmatpush1.msra.mxu0 0.0
      %3988 = vmatprep.subr.mxu0 0.0
      %3989 = vmatpush1.msra.mxu0 0.0
      %3990 = vmatprep.subr.mxu0 0.0
      %3991 = vmatpush1.msra.mxu0 0.0
      %3992 = vmatprep.subr.mxu0 0.0
      %3993 = vmatpush1.msra.mxu0 0.0
      %3994 = vmatprep.subr.mxu0 0.0
      %3995 = vmatpush1.msra.mxu0 0.0
      %3996 = vmatprep.subr.mxu0 0.0
      %3997 = vmatpush1.msra.mxu0 0.0
      %3998 = vmatprep.subr.mxu0 0.0
      %3999 = vmatpush1.msra.mxu0 0.0
      %4000 = vmatprep.subr.mxu0 0.0
      %4001 = vmatpush1.msra.mxu0 0.0
      %4002 = vmatprep.subr.mxu0 0.0
      %4003 = vmatpush1.msra.mxu0 0.0
      %4004 = vmatprep.subr.mxu0 0.0
      %4005 = vmatpush1.msra.mxu0 0.0
      %4006 = vmatprep.subr.mxu0 0.0
      %4007 = vmatpush1.msra.mxu0 0.0
      %4008 = vmatprep.subr.mxu0 0.0
      %4009 = vmatpush1.msra.mxu0 0.0
      %4010 = vmatprep.subr.mxu0 0.0
      %4011 = vmatpush1.msra.mxu0 0.0
      %4012 = vmatprep.mubr.f32.mxu0 0.0
      %v4013 = vand.u32 %v3528, 4294901760
      %v4014 = vsub.f32 %v3528, %v4013
      %v4015 = vand.u32 %v4014, 4294901760
      %4016 = vmatmul.mubr.f32.gmra.mrb[0].mxu0 %v4015
      %v4017 = vpop.f32.mrb[0].mxu0
      %v4018 = vadd.f32 %v3894, %v4017
      %v4019 = vpop.f32.mrb[0].mxu0
      %4020 = vmatprep.mubr.f32.mxu0 0.0
      %v4021 = vand.u32 %v3531, 4294901760
      %v4022 = vsub.f32 %v3531, %v4021
      %v4023 = vand.u32 %v4022, 4294901760
      %4024 = vmatmul.mubr.f32.gmra.mrb[0].mxu0 %v4023
      %v4025 = vpop.f32.mrb[0].mxu0
      %v4026 = vadd.f32 %v3901, %v4025
      %v4027 = vpop.f32.mrb[0].mxu0
      %4028 = vmatprep.mubr.f32.mxu0 0.0
      %v4029 = vand.u32 %v3534, 4294901760
      %v4030 = vsub.f32 %v3534, %v4029
      %v4031 = vand.u32 %v4030, 4294901760
      %4032 = vmatmul.mubr.f32.gmra.mrb[0].mxu0 %v4031
      %v4033 = vpop.f32.mrb[0].mxu0
      %v4034 = vadd.f32 %v3908, %v4033
      %v4035 = vpop.f32.mrb[0].mxu0
      %4036 = vmatprep.mubr.f32.mxu0 0.0
      %v4037 = vand.u32 %v3537, 4294901760
      %v4038 = vsub.f32 %v3537, %v4037
      %v4039 = vand.u32 %v4038, 4294901760
      %4040 = vmatmul.mubr.f32.gmra.mrb[0].mxu0 %v4039
      %v4041 = vpop.f32.mrb[0].mxu0
      %v4042 = vadd.f32 %v3915, %v4041
      %v4043 = vpop.f32.mrb[0].mxu0
      %4044 = vmatprep.mubr.f32.mxu0 0.0
      %v4045 = vand.u32 %v3540, 4294901760
      %v4046 = vsub.f32 %v3540, %v4045
      %v4047 = vand.u32 %v4046, 4294901760
      %4048 = vmatmul.mubr.f32.gmra.mrb[0].mxu0 %v4047
      %v4049 = vpop.f32.mrb[0].mxu0
      %v4050 = vadd.f32 %v3922, %v4049
      %v4051 = vpop.f32.mrb[0].mxu0
      %4052 = vmatprep.mubr.f32.mxu0 0.0
      %v4053 = vand.u32 %v3543, 4294901760
      %v4054 = vsub.f32 %v3543, %v4053
      %v4055 = vand.u32 %v4054, 4294901760
      %4056 = vmatmul.mubr.f32.gmra.mrb[0].mxu0 %v4055
      %v4057 = vpop.f32.mrb[0].mxu0
      %v4058 = vadd.f32 %v3929, %v4057
      %v4059 = vpop.f32.mrb[0].mxu0
      %4060 = vmatprep.mubr.f32.mxu0 0.0
      %v4061 = vand.u32 %v3546, 4294901760
      %v4062 = vsub.f32 %v3546, %v4061
      %v4063 = vand.u32 %v4062, 4294901760
      %4064 = vmatmul.mubr.f32.gmra.mrb[0].mxu0 %v4063
      %v4065 = vpop.f32.mrb[0].mxu0
      %v4066 = vadd.f32 %v3936, %v4065
      %v4067 = vpop.f32.mrb[0].mxu0
      %4068 = vmatprep.mubr.f32.mxu0 0.0
      %v4069 = vand.u32 %v3549, 4294901760
      %v4070 = vsub.f32 %v3549, %v4069
      %v4071 = vand.u32 %v4070, 4294901760
      %4072 = vmatmul.mubr.f32.gmra.mrb[0].mxu0 %v4071
      %v4073 = vpop.f32.mrb[0].mxu0
      %v4074 = vadd.f32 %v3943, %v4073
      %v4075 = vpop.f32.mrb[0].mxu0
      %4076 = vdwg.mxu0
      %4077 = vmatprep.subr.mxu0 0.0
      %v4078 = vand.u32 %v247, 4294901760
      %v4079 = vsub.f32 %v247, %v4078
      %v4080 = vand.u32 %v4079, 4294901760
      %4081 = vmatpush1.msra.mxu0 %v4080
      %4082 = vmatprep.subr.mxu0 0.0
      %v4083 = vand.u32 %v248, 4294901760
      %v4084 = vsub.f32 %v248, %v4083
      %v4085 = vand.u32 %v4084, 4294901760
      %4086 = vmatpush1.msra.mxu0 %v4085
      %4087 = vmatprep.subr.mxu0 0.0
      %4088 = vmatpush1.msra.mxu0 0.0
      %4089 = vmatprep.subr.mxu0 0.0
      %4090 = vmatpush1.msra.mxu0 0.0
      %4091 = vmatprep.subr.mxu0 0.0
      %4092 = vmatpush1.msra.mxu0 0.0
      %4093 = vmatprep.subr.mxu0 0.0
      %4094 = vmatpush1.msra.mxu0 0.0
      %4095 = vmatprep.subr.mxu0 0.0
      %4096 = vmatpush1.msra.mxu0 0.0
      %4097 = vmatprep.subr.mxu0 0.0
      %4098 = vmatpush1.msra.mxu0 0.0
      %4099 = vmatprep.subr.mxu0 0.0
      %4100 = vmatpush1.msra.mxu0 0.0
      %4101 = vmatprep.subr.mxu0 0.0
      %4102 = vmatpush1.msra.mxu0 0.0
      %4103 = vmatprep.subr.mxu0 0.0
      %4104 = vmatpush1.msra.mxu0 0.0
      %4105 = vmatprep.subr.mxu0 0.0
      %4106 = vmatpush1.msra.mxu0 0.0
      %4107 = vmatprep.subr.mxu0 0.0
      %4108 = vmatpush1.msra.mxu0 0.0
      %4109 = vmatprep.subr.mxu0 0.0
      %4110 = vmatpush1.msra.mxu0 0.0
      %4111 = vmatprep.subr.mxu0 0.0
      %4112 = vmatpush1.msra.mxu0 0.0
      %4113 = vmatprep.subr.mxu0 0.0
      %4114 = vmatpush1.msra.mxu0 0.0
      %4115 = vmatprep.subr.mxu0 0.0
      %4116 = vmatpush1.msra.mxu0 0.0
      %4117 = vmatprep.subr.mxu0 0.0
      %4118 = vmatpush1.msra.mxu0 0.0
      %4119 = vmatprep.subr.mxu0 0.0
      %4120 = vmatpush1.msra.mxu0 0.0
      %4121 = vmatprep.subr.mxu0 0.0
      %4122 = vmatpush1.msra.mxu0 0.0
      %4123 = vmatprep.subr.mxu0 0.0
      %4124 = vmatpush1.msra.mxu0 0.0
      %4125 = vmatprep.subr.mxu0 0.0
      %4126 = vmatpush1.msra.mxu0 0.0
      %4127 = vmatprep.subr.mxu0 0.0
      %4128 = vmatpush1.msra.mxu0 0.0
      %4129 = vmatprep.subr.mxu0 0.0
      %4130 = vmatpush1.msra.mxu0 0.0
      %4131 = vmatprep.subr.mxu0 0.0
      %4132 = vmatpush1.msra.mxu0 0.0
      %4133 = vmatprep.subr.mxu0 0.0
      %4134 = vmatpush1.msra.mxu0 0.0
      %4135 = vmatprep.subr.mxu0 0.0
      %4136 = vmatpush1.msra.mxu0 0.0
      %4137 = vmatprep.subr.mxu0 0.0
      %4138 = vmatpush1.msra.mxu0 0.0
      %4139 = vmatprep.subr.mxu0 0.0
      %4140 = vmatpush1.msra.mxu0 0.0
      %4141 = vmatprep.subr.mxu0 0.0
      %4142 = vmatpush1.msra.mxu0 0.0
      %4143 = vmatprep.subr.mxu0 0.0
      %4144 = vmatpush1.msra.mxu0 0.0
      %4145 = vmatprep.subr.mxu0 0.0
      %4146 = vmatpush1.msra.mxu0 0.0
      %4147 = vmatprep.mubr.f32.mxu0 0.0
      %v4148 = vand.u32 %v3528, 4294901760
      %4149 = vmatmul.mubr.f32.gmra.mrb[0].mxu0 %v4148
      %v4150 = vpop.f32.mrb[0].mxu0
      %v4151 = vadd.f32 %v4018, %v4150
      %v4152 = vpop.f32.mrb[0].mxu0
      %4153 = vmatprep.mubr.f32.mxu0 0.0
      %v4154 = vand.u32 %v3531, 4294901760
      %4155 = vmatmul.mubr.f32.gmra.mrb[0].mxu0 %v4154
      %v4156 = vpop.f32.mrb[0].mxu0
      %v4157 = vadd.f32 %v4026, %v4156
      %v4158 = vpop.f32.mrb[0].mxu0
      %4159 = vmatprep.mubr.f32.mxu0 0.0
      %v4160 = vand.u32 %v3534, 4294901760
      %4161 = vmatmul.mubr.f32.gmra.mrb[0].mxu0 %v4160
      %v4162 = vpop.f32.mrb[0].mxu0
      %v4163 = vadd.f32 %v4034, %v4162
      %v4164 = vpop.f32.mrb[0].mxu0
      %4165 = vmatprep.mubr.f32.mxu0 0.0
      %v4166 = vand.u32 %v3537, 4294901760
      %4167 = vmatmul.mubr.f32.gmra.mrb[0].mxu0 %v4166
      %v4168 = vpop.f32.mrb[0].mxu0
      %v4169 = vadd.f32 %v4042, %v4168
      %v4170 = vpop.f32.mrb[0].mxu0
      %4171 = vmatprep.mubr.f32.mxu0 0.0
      %v4172 = vand.u32 %v3540, 4294901760
      %4173 = vmatmul.mubr.f32.gmra.mrb[0].mxu0 %v4172
      %v4174 = vpop.f32.mrb[0].mxu0
      %v4175 = vadd.f32 %v4050, %v4174
      %v4176 = vpop.f32.mrb[0].mxu0
      %4177 = vmatprep.mubr.f32.mxu0 0.0
      %v4178 = vand.u32 %v3543, 4294901760
      %4179 = vmatmul.mubr.f32.gmra.mrb[0].mxu0 %v4178
      %v4180 = vpop.f32.mrb[0].mxu0
      %v4181 = vadd.f32 %v4058, %v4180
      %v4182 = vpop.f32.mrb[0].mxu0
      %4183 = vmatprep.mubr.f32.mxu0 0.0
      %v4184 = vand.u32 %v3546, 4294901760
      %4185 = vmatmul.mubr.f32.gmra.mrb[0].mxu0 %v4184
      %v4186 = vpop.f32.mrb[0].mxu0
      %v4187 = vadd.f32 %v4066, %v4186
      %v4188 = vpop.f32.mrb[0].mxu0
      %4189 = vmatprep.mubr.f32.mxu0 0.0
      %v4190 = vand.u32 %v3549, 4294901760
      %4191 = vmatmul.mubr.f32.gmra.mrb[0].mxu0 %v4190
      %v4192 = vpop.f32.mrb[0].mxu0
      %v4193 = vadd.f32 %v4074, %v4192
      %v4194 = vpop.f32.mrb[0].mxu0
      %4195 = vdwg.mxu0
      %4196 = vmatprep.subr.mxu0 0.0
      %v4197 = vand.u32 %v247, 4294901760
      %4198 = vmatpush1.msra.mxu0 %v4197
      %4199 = vmatprep.subr.mxu0 0.0
      %v4200 = vand.u32 %v248, 4294901760
      %4201 = vmatpush1.msra.mxu0 %v4200
      %4202 = vmatprep.subr.mxu0 0.0
      %4203 = vmatpush1.msra.mxu0 0.0
      %4204 = vmatprep.subr.mxu0 0.0
      %4205 = vmatpush1.msra.mxu0 0.0
      %4206 = vmatprep.subr.mxu0 0.0
      %4207 = vmatpush1.msra.mxu0 0.0
      %4208 = vmatprep.subr.mxu0 0.0
      %4209 = vmatpush1.msra.mxu0 0.0
      %4210 = vmatprep.subr.mxu0 0.0
      %4211 = vmatpush1.msra.mxu0 0.0
      %4212 = vmatprep.subr.mxu0 0.0
      %4213 = vmatpush1.msra.mxu0 0.0
      %4214 = vmatprep.subr.mxu0 0.0
      %4215 = vmatpush1.msra.mxu0 0.0
      %4216 = vmatprep.subr.mxu0 0.0
      %4217 = vmatpush1.msra.mxu0 0.0
      %4218 = vmatprep.subr.mxu0 0.0
      %4219 = vmatpush1.msra.mxu0 0.0
      %4220 = vmatprep.subr.mxu0 0.0
      %4221 = vmatpush1.msra.mxu0 0.0
      %4222 = vmatprep.subr.mxu0 0.0
      %4223 = vmatpush1.msra.mxu0 0.0
      %4224 = vmatprep.subr.mxu0 0.0
      %4225 = vmatpush1.msra.mxu0 0.0
      %4226 = vmatprep.subr.mxu0 0.0
      %4227 = vmatpush1.msra.mxu0 0.0
      %4228 = vmatprep.subr.mxu0 0.0
      %4229 = vmatpush1.msra.mxu0 0.0
      %4230 = vmatprep.subr.mxu0 0.0
      %4231 = vmatpush1.msra.mxu0 0.0
      %4232 = vmatprep.subr.mxu0 0.0
      %4233 = vmatpush1.msra.mxu0 0.0
      %4234 = vmatprep.subr.mxu0 0.0
      %4235 = vmatpush1.msra.mxu0 0.0
      %4236 = vmatprep.subr.mxu0 0.0
      %4237 = vmatpush1.msra.mxu0 0.0
      %4238 = vmatprep.subr.mxu0 0.0
      %4239 = vmatpush1.msra.mxu0 0.0
      %4240 = vmatprep.subr.mxu0 0.0
      %4241 = vmatpush1.msra.mxu0 0.0
      %4242 = vmatprep.subr.mxu0 0.0
      %4243 = vmatpush1.msra.mxu0 0.0
      %4244 = vmatprep.subr.mxu0 0.0
      %4245 = vmatpush1.msra.mxu0 0.0
      %4246 = vmatprep.subr.mxu0 0.0
      %4247 = vmatpush1.msra.mxu0 0.0
      %4248 = vmatprep.subr.mxu0 0.0
      %4249 = vmatpush1.msra.mxu0 0.0
      %4250 = vmatprep.subr.mxu0 0.0
      %4251 = vmatpush1.msra.mxu0 0.0
      %4252 = vmatprep.subr.mxu0 0.0
      %4253 = vmatpush1.msra.mxu0 0.0
      %4254 = vmatprep.subr.mxu0 0.0
      %4255 = vmatpush1.msra.mxu0 0.0
      %4256 = vmatprep.subr.mxu0 0.0
      %4257 = vmatpush1.msra.mxu0 0.0
      %4258 = vmatprep.subr.mxu0 0.0
      %4259 = vmatpush1.msra.mxu0 0.0
      %4260 = vmatprep.subr.mxu0 0.0
      %4261 = vmatpush1.msra.mxu0 0.0
      %4262 = vmatprep.mubr.f32.mxu0 0.0
      %v4263 = vand.u32 %v3528, 4294901760
      %4264 = vmatmul.mubr.f32.gmra.mrb[0].mxu0 %v4263
      %v4265 = vpop.f32.mrb[0].mxu0
      %v4266 = vadd.f32 %v4151, %v4265
      %v4267 = vpop.f32.mrb[0].mxu0
      %4268 = vmatprep.mubr.f32.mxu0 0.0
      %v4269 = vand.u32 %v3531, 4294901760
      %4270 = vmatmul.mubr.f32.gmra.mrb[0].mxu0 %v4269
      %v4271 = vpop.f32.mrb[0].mxu0
      %v4272 = vadd.f32 %v4157, %v4271
      %v4273 = vpop.f32.mrb[0].mxu0
      %4274 = vmatprep.mubr.f32.mxu0 0.0
      %v4275 = vand.u32 %v3534, 4294901760
      %4276 = vmatmul.mubr.f32.gmra.mrb[0].mxu0 %v4275
      %v4277 = vpop.f32.mrb[0].mxu0
      %v4278 = vadd.f32 %v4163, %v4277
      %v4279 = vpop.f32.mrb[0].mxu0
      %4280 = vmatprep.mubr.f32.mxu0 0.0
      %v4281 = vand.u32 %v3537, 4294901760
      %4282 = vmatmul.mubr.f32.gmra.mrb[0].mxu0 %v4281
      %v4283 = vpop.f32.mrb[0].mxu0
      %v4284 = vadd.f32 %v4169, %v4283
      %v4285 = vpop.f32.mrb[0].mxu0
      %4286 = vmatprep.mubr.f32.mxu0 0.0
      %v4287 = vand.u32 %v3540, 4294901760
      %4288 = vmatmul.mubr.f32.gmra.mrb[0].mxu0 %v4287
      %v4289 = vpop.f32.mrb[0].mxu0
      %v4290 = vadd.f32 %v4175, %v4289
      %v4291 = vpop.f32.mrb[0].mxu0
      %4292 = vmatprep.mubr.f32.mxu0 0.0
      %v4293 = vand.u32 %v3543, 4294901760
      %4294 = vmatmul.mubr.f32.gmra.mrb[0].mxu0 %v4293
      %v4295 = vpop.f32.mrb[0].mxu0
      %v4296 = vadd.f32 %v4181, %v4295
      %v4297 = vpop.f32.mrb[0].mxu0
      %4298 = vmatprep.mubr.f32.mxu0 0.0
      %v4299 = vand.u32 %v3546, 4294901760
      %4300 = vmatmul.mubr.f32.gmra.mrb[0].mxu0 %v4299
      %v4301 = vpop.f32.mrb[0].mxu0
      %v4302 = vadd.f32 %v4187, %v4301
      %v4303 = vpop.f32.mrb[0].mxu0
      %4304 = vmatprep.mubr.f32.mxu0 0.0
      %v4305 = vand.u32 %v3549, 4294901760
      %4306 = vmatmul.mubr.f32.gmra.mrb[0].mxu0 %v4305
      %v4307 = vpop.f32.mrb[0].mxu0
      %v4308 = vadd.f32 %v4193, %v4307
      %v4309 = vpop.f32.mrb[0].mxu0
      %4310 = vdwg.mxu0
      %4311 = vmatprep.subr.mxu0 0.0
      %v4312 = vand.u32 %v4266, 4294901760
      %4313 = vmatpush1.msra.mxu0 %v4312
      %4314 = vmatprep.subr.mxu0 0.0
      %v4315 = vand.u32 %v4272, 4294901760
      %4316 = vmatpush1.msra.mxu0 %v4315
      %4317 = vmatprep.subr.mxu0 0.0
      %v4318 = vand.u32 %v4278, 4294901760
      %4319 = vmatpush1.msra.mxu0 %v4318
      %4320 = vmatprep.subr.mxu0 0.0
      %v4321 = vand.u32 %v4284, 4294901760
      %4322 = vmatpush1.msra.mxu0 %v4321
      %4323 = vmatprep.subr.mxu0 0.0
      %v4324 = vand.u32 %v4290, 4294901760
      %4325 = vmatpush1.msra.mxu0 %v4324
      %4326 = vmatprep.subr.mxu0 0.0
      %v4327 = vand.u32 %v4296, 4294901760
      %4328 = vmatpush1.msra.mxu0 %v4327
      %4329 = vmatprep.subr.mxu0 0.0
      %v4330 = vand.u32 %v4302, 4294901760
      %4331 = vmatpush1.msra.mxu0 %v4330
      %4332 = vmatprep.subr.mxu0 0.0
      %v4333 = vand.u32 %v4308, 4294901760
      %4334 = vmatpush1.msra.mxu0 %v4333
      %4335 = vmatprep.subr.mxu0 0.0
      %4336 = vmatpush1.msra.mxu0 0.0
      %4337 = vmatprep.subr.mxu0 0.0
      %4338 = vmatpush1.msra.mxu0 0.0
      %4339 = vmatprep.subr.mxu0 0.0
      %4340 = vmatpush1.msra.mxu0 0.0
      %4341 = vmatprep.subr.mxu0 0.0
      %4342 = vmatpush1.msra.mxu0 0.0
      %4343 = vmatprep.subr.mxu0 0.0
      %4344 = vmatpush1.msra.mxu0 0.0
      %4345 = vmatprep.subr.mxu0 0.0
      %4346 = vmatpush1.msra.mxu0 0.0
      %4347 = vmatprep.subr.mxu0 0.0
      %4348 = vmatpush1.msra.mxu0 0.0
      %4349 = vmatprep.subr.mxu0 0.0
      %4350 = vmatpush1.msra.mxu0 0.0
      %4351 = vmatprep.subr.mxu0 0.0
      %4352 = vmatpush1.msra.mxu0 0.0
      %4353 = vmatprep.subr.mxu0 0.0
      %4354 = vmatpush1.msra.mxu0 0.0
      %4355 = vmatprep.subr.mxu0 0.0
      %4356 = vmatpush1.msra.mxu0 0.0
      %4357 = vmatprep.subr.mxu0 0.0
      %4358 = vmatpush1.msra.mxu0 0.0
      %4359 = vmatprep.subr.mxu0 0.0
      %4360 = vmatpush1.msra.mxu0 0.0
      %4361 = vmatprep.subr.mxu0 0.0
      %4362 = vmatpush1.msra.mxu0 0.0
      %4363 = vmatprep.subr.mxu0 0.0
      %4364 = vmatpush1.msra.mxu0 0.0
      %4365 = vmatprep.subr.mxu0 0.0
      %4366 = vmatpush1.msra.mxu0 0.0
      %4367 = vmatprep.subr.mxu0 0.0
      %4368 = vmatpush1.msra.mxu0 0.0
      %4369 = vmatprep.subr.mxu0 0.0
      %4370 = vmatpush1.msra.mxu0 0.0
      %4371 = vmatprep.subr.mxu0 0.0
      %4372 = vmatpush1.msra.mxu0 0.0
      %4373 = vmatprep.subr.mxu0 0.0
      %4374 = vmatpush1.msra.mxu0 0.0
      %4375 = vmatprep.subr.mxu0 0.0
      %4376 = vmatpush1.msra.mxu0 0.0
      %4377 = vmatprep.subr.mxu0 0.0
      %4378 = vmatpush1.msra.mxu0 0.0
      %4379 = vmatprep.subr.mxu0 0.0
      %4380 = vmatpush1.msra.mxu0 0.0
      %4381 = vmatprep.subr.mxu0 0.0
      %4382 = vmatpush1.msra.mxu0 0.0
      %4383 = vmatprep.mubr.f32.mxu0 0.0
      %v4384 = vand.u32 %v1036, 4294901760
      %v4385 = vsub.f32 %v1036, %v4384
      %v4386 = vand.u32 %v4385, 4294901760
      %v4387 = vsub.f32 %v4385, %v4386
      %v4388 = vand.u32 %v4387, 4294901760
      %4389 = vmatmul.mubr.f32.gmra.mrb[0].mxu0 %v4388
      %v4390 = vpop.f32.mrb[0].mxu0
      %v4391 = vadd.f32 0.0, %v4390
      %v4392 = vpop.f32.mrb[0].mxu0
      %4393 = vmatprep.mubr.f32.mxu0 0.0
      %v4394 = vand.u32 %v1039, 4294901760
      %v4395 = vsub.f32 %v1039, %v4394
      %v4396 = vand.u32 %v4395, 4294901760
      %v4397 = vsub.f32 %v4395, %v4396
      %v4398 = vand.u32 %v4397, 4294901760
      %4399 = vmatmul.mubr.f32.gmra.mrb[0].mxu0 %v4398
      %v4400 = vpop.f32.mrb[0].mxu0
      %v4401 = vadd.f32 0.0, %v4400
      %v4402 = vpop.f32.mrb[0].mxu0
      %4403 = vmatprep.mubr.f32.mxu0 0.0
      %v4404 = vand.u32 %v1042, 4294901760
      %v4405 = vsub.f32 %v1042, %v4404
      %v4406 = vand.u32 %v4405, 4294901760
      %v4407 = vsub.f32 %v4405, %v4406
      %v4408 = vand.u32 %v4407, 4294901760
      %4409 = vmatmul.mubr.f32.gmra.mrb[0].mxu0 %v4408
      %v4410 = vpop.f32.mrb[0].mxu0
      %v4411 = vadd.f32 0.0, %v4410
      %v4412 = vpop.f32.mrb[0].mxu0
      %4413 = vmatprep.mubr.f32.mxu0 0.0
      %v4414 = vand.u32 %v1045, 4294901760
      %v4415 = vsub.f32 %v1045, %v4414
      %v4416 = vand.u32 %v4415, 4294901760
      %v4417 = vsub.f32 %v4415, %v4416
      %v4418 = vand.u32 %v4417, 4294901760
      %4419 = vmatmul.mubr.f32.gmra.mrb[0].mxu0 %v4418
      %v4420 = vpop.f32.mrb[0].mxu0
      %v4421 = vadd.f32 0.0, %v4420
      %v4422 = vpop.f32.mrb[0].mxu0
      %4423 = vmatprep.mubr.f32.mxu0 0.0
      %v4424 = vand.u32 %v1048, 4294901760
      %v4425 = vsub.f32 %v1048, %v4424
      %v4426 = vand.u32 %v4425, 4294901760
      %v4427 = vsub.f32 %v4425, %v4426
      %v4428 = vand.u32 %v4427, 4294901760
      %4429 = vmatmul.mubr.f32.gmra.mrb[0].mxu0 %v4428
      %v4430 = vpop.f32.mrb[0].mxu0
      %v4431 = vadd.f32 0.0, %v4430
      %v4432 = vpop.f32.mrb[0].mxu0
      %4433 = vmatprep.mubr.f32.mxu0 0.0
      %v4434 = vand.u32 %v1051, 4294901760
      %v4435 = vsub.f32 %v1051, %v4434
      %v4436 = vand.u32 %v4435, 4294901760
      %v4437 = vsub.f32 %v4435, %v4436
      %v4438 = vand.u32 %v4437, 4294901760
      %4439 = vmatmul.mubr.f32.gmra.mrb[0].mxu0 %v4438
      %v4440 = vpop.f32.mrb[0].mxu0
      %v4441 = vadd.f32 0.0, %v4440
      %v4442 = vpop.f32.mrb[0].mxu0
      %4443 = vmatprep.mubr.f32.mxu0 0.0
      %v4444 = vand.u32 %v1054, 4294901760
      %v4445 = vsub.f32 %v1054, %v4444
      %v4446 = vand.u32 %v4445, 4294901760
      %v4447 = vsub.f32 %v4445, %v4446
      %v4448 = vand.u32 %v4447, 4294901760
      %4449 = vmatmul.mubr.f32.gmra.mrb[0].mxu0 %v4448
      %v4450 = vpop.f32.mrb[0].mxu0
      %v4451 = vadd.f32 0.0, %v4450
      %v4452 = vpop.f32.mrb[0].mxu0
      %4453 = vmatprep.mubr.f32.mxu0 0.0
      %v4454 = vand.u32 %v1057, 4294901760
      %v4455 = vsub.f32 %v1057, %v4454
      %v4456 = vand.u32 %v4455, 4294901760
      %v4457 = vsub.f32 %v4455, %v4456
      %v4458 = vand.u32 %v4457, 4294901760
      %4459 = vmatmul.mubr.f32.gmra.mrb[0].mxu0 %v4458
      %v4460 = vpop.f32.mrb[0].mxu0
      %v4461 = vadd.f32 0.0, %v4460
      %v4462 = vpop.f32.mrb[0].mxu0
      %4463 = vdwg.mxu0
      %4464 = vmatprep.subr.mxu0 0.0
      %v4465 = vand.u32 %v4266, 4294901760
      %v4466 = vsub.f32 %v4266, %v4465
      %v4467 = vand.u32 %v4466, 4294901760
      %v4468 = vsub.f32 %v4466, %v4467
      %v4469 = vand.u32 %v4468, 4294901760
      %4470 = vmatpush1.msra.mxu0 %v4469
      %4471 = vmatprep.subr.mxu0 0.0
      %v4472 = vand.u32 %v4272, 4294901760
      %v4473 = vsub.f32 %v4272, %v4472
      %v4474 = vand.u32 %v4473, 4294901760
      %v4475 = vsub.f32 %v4473, %v4474
      %v4476 = vand.u32 %v4475, 4294901760
      %4477 = vmatpush1.msra.mxu0 %v4476
      %4478 = vmatprep.subr.mxu0 0.0
      %v4479 = vand.u32 %v4278, 4294901760
      %v4480 = vsub.f32 %v4278, %v4479
      %v4481 = vand.u32 %v4480, 4294901760
      %v4482 = vsub.f32 %v4480, %v4481
      %v4483 = vand.u32 %v4482, 4294901760
      %4484 = vmatpush1.msra.mxu0 %v4483
      %4485 = vmatprep.subr.mxu0 0.0
      %v4486 = vand.u32 %v4284, 4294901760
      %v4487 = vsub.f32 %v4284, %v4486
      %v4488 = vand.u32 %v4487, 4294901760
      %v4489 = vsub.f32 %v4487, %v4488
      %v4490 = vand.u32 %v4489, 4294901760
      %4491 = vmatpush1.msra.mxu0 %v4490
      %4492 = vmatprep.subr.mxu0 0.0
      %v4493 = vand.u32 %v4290, 4294901760
      %v4494 = vsub.f32 %v4290, %v4493
      %v4495 = vand.u32 %v4494, 4294901760
      %v4496 = vsub.f32 %v4494, %v4495
      %v4497 = vand.u32 %v4496, 4294901760
      %4498 = vmatpush1.msra.mxu0 %v4497
      %4499 = vmatprep.subr.mxu0 0.0
      %v4500 = vand.u32 %v4296, 4294901760
      %v4501 = vsub.f32 %v4296, %v4500
      %v4502 = vand.u32 %v4501, 4294901760
      %v4503 = vsub.f32 %v4501, %v4502
      %v4504 = vand.u32 %v4503, 4294901760
      %4505 = vmatpush1.msra.mxu0 %v4504
      %4506 = vmatprep.subr.mxu0 0.0
      %v4507 = vand.u32 %v4302, 4294901760
      %v4508 = vsub.f32 %v4302, %v4507
      %v4509 = vand.u32 %v4508, 4294901760
      %v4510 = vsub.f32 %v4508, %v4509
      %v4511 = vand.u32 %v4510, 4294901760
      %4512 = vmatpush1.msra.mxu0 %v4511
      %4513 = vmatprep.subr.mxu0 0.0
      %v4514 = vand.u32 %v4308, 4294901760
      %v4515 = vsub.f32 %v4308, %v4514
      %v4516 = vand.u32 %v4515, 4294901760
      %v4517 = vsub.f32 %v4515, %v4516
      %v4518 = vand.u32 %v4517, 4294901760
      %4519 = vmatpush1.msra.mxu0 %v4518
      %4520 = vmatprep.subr.mxu0 0.0
      %4521 = vmatpush1.msra.mxu0 0.0
      %4522 = vmatprep.subr.mxu0 0.0
      %4523 = vmatpush1.msra.mxu0 0.0
      %4524 = vmatprep.subr.mxu0 0.0
      %4525 = vmatpush1.msra.mxu0 0.0
      %4526 = vmatprep.subr.mxu0 0.0
      %4527 = vmatpush1.msra.mxu0 0.0
      %4528 = vmatprep.subr.mxu0 0.0
      %4529 = vmatpush1.msra.mxu0 0.0
      %4530 = vmatprep.subr.mxu0 0.0
      %4531 = vmatpush1.msra.mxu0 0.0
      %4532 = vmatprep.subr.mxu0 0.0
      %4533 = vmatpush1.msra.mxu0 0.0
      %4534 = vmatprep.subr.mxu0 0.0
      %4535 = vmatpush1.msra.mxu0 0.0
      %4536 = vmatprep.subr.mxu0 0.0
      %4537 = vmatpush1.msra.mxu0 0.0
      %4538 = vmatprep.subr.mxu0 0.0
      %4539 = vmatpush1.msra.mxu0 0.0
      %4540 = vmatprep.subr.mxu0 0.0
      %4541 = vmatpush1.msra.mxu0 0.0
      %4542 = vmatprep.subr.mxu0 0.0
      %4543 = vmatpush1.msra.mxu0 0.0
      %4544 = vmatprep.subr.mxu0 0.0
      %4545 = vmatpush1.msra.mxu0 0.0
      %4546 = vmatprep.subr.mxu0 0.0
      %4547 = vmatpush1.msra.mxu0 0.0
      %4548 = vmatprep.subr.mxu0 0.0
      %4549 = vmatpush1.msra.mxu0 0.0
      %4550 = vmatprep.subr.mxu0 0.0
      %4551 = vmatpush1.msra.mxu0 0.0
      %4552 = vmatprep.subr.mxu0 0.0
      %4553 = vmatpush1.msra.mxu0 0.0
      %4554 = vmatprep.subr.mxu0 0.0
      %4555 = vmatpush1.msra.mxu0 0.0
      %4556 = vmatprep.subr.mxu0 0.0
      %4557 = vmatpush1.msra.mxu0 0.0
      %4558 = vmatprep.subr.mxu0 0.0
      %4559 = vmatpush1.msra.mxu0 0.0
      %4560 = vmatprep.subr.mxu0 0.0
      %4561 = vmatpush1.msra.mxu0 0.0
      %4562 = vmatprep.subr.mxu0 0.0
      %4563 = vmatpush1.msra.mxu0 0.0
      %4564 = vmatprep.subr.mxu0 0.0
      %4565 = vmatpush1.msra.mxu0 0.0
      %4566 = vmatprep.subr.mxu0 0.0
      %4567 = vmatpush1.msra.mxu0 0.0
      %4568 = vmatprep.mubr.f32.mxu0 0.0
      %v4569 = vand.u32 %v1036, 4294901760
      %4570 = vmatmul.mubr.f32.gmra.mrb[0].mxu0 %v4569
      %v4571 = vpop.f32.mrb[0].mxu0
      %v4572 = vadd.f32 %v4391, %v4571
      %v4573 = vpop.f32.mrb[0].mxu0
      %4574 = vmatprep.mubr.f32.mxu0 0.0
      %v4575 = vand.u32 %v1039, 4294901760
      %4576 = vmatmul.mubr.f32.gmra.mrb[0].mxu0 %v4575
      %v4577 = vpop.f32.mrb[0].mxu0
      %v4578 = vadd.f32 %v4401, %v4577
      %v4579 = vpop.f32.mrb[0].mxu0
      %4580 = vmatprep.mubr.f32.mxu0 0.0
      %v4581 = vand.u32 %v1042, 4294901760
      %4582 = vmatmul.mubr.f32.gmra.mrb[0].mxu0 %v4581
      %v4583 = vpop.f32.mrb[0].mxu0
      %v4584 = vadd.f32 %v4411, %v4583
      %v4585 = vpop.f32.mrb[0].mxu0
      %4586 = vmatprep.mubr.f32.mxu0 0.0
      %v4587 = vand.u32 %v1045, 4294901760
      %4588 = vmatmul.mubr.f32.gmra.mrb[0].mxu0 %v4587
      %v4589 = vpop.f32.mrb[0].mxu0
      %v4590 = vadd.f32 %v4421, %v4589
      %v4591 = vpop.f32.mrb[0].mxu0
      %4592 = vmatprep.mubr.f32.mxu0 0.0
      %v4593 = vand.u32 %v1048, 4294901760
      %4594 = vmatmul.mubr.f32.gmra.mrb[0].mxu0 %v4593
      %v4595 = vpop.f32.mrb[0].mxu0
      %v4596 = vadd.f32 %v4431, %v4595
      %v4597 = vpop.f32.mrb[0].mxu0
      %4598 = vmatprep.mubr.f32.mxu0 0.0
      %v4599 = vand.u32 %v1051, 4294901760
      %4600 = vmatmul.mubr.f32.gmra.mrb[0].mxu0 %v4599
      %v4601 = vpop.f32.mrb[0].mxu0
      %v4602 = vadd.f32 %v4441, %v4601
      %v4603 = vpop.f32.mrb[0].mxu0
      %4604 = vmatprep.mubr.f32.mxu0 0.0
      %v4605 = vand.u32 %v1054, 4294901760
      %4606 = vmatmul.mubr.f32.gmra.mrb[0].mxu0 %v4605
      %v4607 = vpop.f32.mrb[0].mxu0
      %v4608 = vadd.f32 %v4451, %v4607
      %v4609 = vpop.f32.mrb[0].mxu0
      %4610 = vmatprep.mubr.f32.mxu0 0.0
      %v4611 = vand.u32 %v1057, 4294901760
      %4612 = vmatmul.mubr.f32.gmra.mrb[0].mxu0 %v4611
      %v4613 = vpop.f32.mrb[0].mxu0
      %v4614 = vadd.f32 %v4461, %v4613
      %v4615 = vpop.f32.mrb[0].mxu0
      %4616 = vdwg.mxu0
      %4617 = vmatprep.subr.mxu0 0.0
      %v4618 = vand.u32 %v4266, 4294901760
      %v4619 = vsub.f32 %v4266, %v4618
      %4620 = vmatpush1.msra.mxu0 %v4619
      %4621 = vmatprep.subr.mxu0 0.0
      %v4622 = vand.u32 %v4272, 4294901760
      %v4623 = vsub.f32 %v4272, %v4622
      %4624 = vmatpush1.msra.mxu0 %v4623
      %4625 = vmatprep.subr.mxu0 0.0
      %v4626 = vand.u32 %v4278, 4294901760
      %v4627 = vsub.f32 %v4278, %v4626
      %4628 = vmatpush1.msra.mxu0 %v4627
      %4629 = vmatprep.subr.mxu0 0.0
      %v4630 = vand.u32 %v4284, 4294901760
      %v4631 = vsub.f32 %v4284, %v4630
      %4632 = vmatpush1.msra.mxu0 %v4631
      %4633 = vmatprep.subr.mxu0 0.0
      %v4634 = vand.u32 %v4290, 4294901760
      %v4635 = vsub.f32 %v4290, %v4634
      %4636 = vmatpush1.msra.mxu0 %v4635
      %4637 = vmatprep.subr.mxu0 0.0
      %v4638 = vand.u32 %v4296, 4294901760
      %v4639 = vsub.f32 %v4296, %v4638
      %4640 = vmatpush1.msra.mxu0 %v4639
      %4641 = vmatprep.subr.mxu0 0.0
      %v4642 = vand.u32 %v4302, 4294901760
      %v4643 = vsub.f32 %v4302, %v4642
      %4644 = vmatpush1.msra.mxu0 %v4643
      %4645 = vmatprep.subr.mxu0 0.0
      %v4646 = vand.u32 %v4308, 4294901760
      %v4647 = vsub.f32 %v4308, %v4646
      %4648 = vmatpush1.msra.mxu0 %v4647
      %4649 = vmatprep.subr.mxu0 0.0
      %4650 = vmatpush1.msra.mxu0 0.0
      %4651 = vmatprep.subr.mxu0 0.0
      %4652 = vmatpush1.msra.mxu0 0.0
      %4653 = vmatprep.subr.mxu0 0.0
      %4654 = vmatpush1.msra.mxu0 0.0
      %4655 = vmatprep.subr.mxu0 0.0
      %4656 = vmatpush1.msra.mxu0 0.0
      %4657 = vmatprep.subr.mxu0 0.0
      %4658 = vmatpush1.msra.mxu0 0.0
      %4659 = vmatprep.subr.mxu0 0.0
      %4660 = vmatpush1.msra.mxu0 0.0
      %4661 = vmatprep.subr.mxu0 0.0
      %4662 = vmatpush1.msra.mxu0 0.0
      %4663 = vmatprep.subr.mxu0 0.0
      %4664 = vmatpush1.msra.mxu0 0.0
      %4665 = vmatprep.subr.mxu0 0.0
      %4666 = vmatpush1.msra.mxu0 0.0
      %4667 = vmatprep.subr.mxu0 0.0
      %4668 = vmatpush1.msra.mxu0 0.0
      %4669 = vmatprep.subr.mxu0 0.0
      %4670 = vmatpush1.msra.mxu0 0.0
      %4671 = vmatprep.subr.mxu0 0.0
      %4672 = vmatpush1.msra.mxu0 0.0
      %4673 = vmatprep.subr.mxu0 0.0
      %4674 = vmatpush1.msra.mxu0 0.0
      %4675 = vmatprep.subr.mxu0 0.0
      %4676 = vmatpush1.msra.mxu0 0.0
      %4677 = vmatprep.subr.mxu0 0.0
      %4678 = vmatpush1.msra.mxu0 0.0
      %4679 = vmatprep.subr.mxu0 0.0
      %4680 = vmatpush1.msra.mxu0 0.0
      %4681 = vmatprep.subr.mxu0 0.0
      %4682 = vmatpush1.msra.mxu0 0.0
      %4683 = vmatprep.subr.mxu0 0.0
      %4684 = vmatpush1.msra.mxu0 0.0
      %4685 = vmatprep.subr.mxu0 0.0
      %4686 = vmatpush1.msra.mxu0 0.0
      %4687 = vmatprep.subr.mxu0 0.0
      %4688 = vmatpush1.msra.mxu0 0.0
      %4689 = vmatprep.subr.mxu0 0.0
      %4690 = vmatpush1.msra.mxu0 0.0
      %4691 = vmatprep.subr.mxu0 0.0
      %4692 = vmatpush1.msra.mxu0 0.0
      %4693 = vmatprep.subr.mxu0 0.0
      %4694 = vmatpush1.msra.mxu0 0.0
      %4695 = vmatprep.subr.mxu0 0.0
      %4696 = vmatpush1.msra.mxu0 0.0
      %4697 = vmatprep.mubr.f32.mxu0 0.0
      %v4698 = vand.u32 %v1036, 4294901760
      %v4699 = vsub.f32 %v1036, %v4698
      %4700 = vmatmul.mubr.f32.gmra.mrb[0].mxu0 %v4699
      %v4701 = vpop.f32.mrb[0].mxu0
      %v4702 = vadd.f32 %v4572, %v4701
      %v4703 = vpop.f32.mrb[0].mxu0
      %4704 = vmatprep.mubr.f32.mxu0 0.0
      %v4705 = vand.u32 %v1039, 4294901760
      %v4706 = vsub.f32 %v1039, %v4705
      %4707 = vmatmul.mubr.f32.gmra.mrb[0].mxu0 %v4706
      %v4708 = vpop.f32.mrb[0].mxu0
      %v4709 = vadd.f32 %v4578, %v4708
      %v4710 = vpop.f32.mrb[0].mxu0
      %4711 = vmatprep.mubr.f32.mxu0 0.0
      %v4712 = vand.u32 %v1042, 4294901760
      %v4713 = vsub.f32 %v1042, %v4712
      %4714 = vmatmul.mubr.f32.gmra.mrb[0].mxu0 %v4713
      %v4715 = vpop.f32.mrb[0].mxu0
      %v4716 = vadd.f32 %v4584, %v4715
      %v4717 = vpop.f32.mrb[0].mxu0
      %4718 = vmatprep.mubr.f32.mxu0 0.0
      %v4719 = vand.u32 %v1045, 4294901760
      %v4720 = vsub.f32 %v1045, %v4719
      %4721 = vmatmul.mubr.f32.gmra.mrb[0].mxu0 %v4720
      %v4722 = vpop.f32.mrb[0].mxu0
      %v4723 = vadd.f32 %v4590, %v4722
      %v4724 = vpop.f32.mrb[0].mxu0
      %4725 = vmatprep.mubr.f32.mxu0 0.0
      %v4726 = vand.u32 %v1048, 4294901760
      %v4727 = vsub.f32 %v1048, %v4726
      %4728 = vmatmul.mubr.f32.gmra.mrb[0].mxu0 %v4727
      %v4729 = vpop.f32.mrb[0].mxu0
      %v4730 = vadd.f32 %v4596, %v4729
      %v4731 = vpop.f32.mrb[0].mxu0
      %4732 = vmatprep.mubr.f32.mxu0 0.0
      %v4733 = vand.u32 %v1051, 4294901760
      %v4734 = vsub.f32 %v1051, %v4733
      %4735 = vmatmul.mubr.f32.gmra.mrb[0].mxu0 %v4734
      %v4736 = vpop.f32.mrb[0].mxu0
      %v4737 = vadd.f32 %v4602, %v4736
      %v4738 = vpop.f32.mrb[0].mxu0
      %4739 = vmatprep.mubr.f32.mxu0 0.0
      %v4740 = vand.u32 %v1054, 4294901760
      %v4741 = vsub.f32 %v1054, %v4740
      %4742 = vmatmul.mubr.f32.gmra.mrb[0].mxu0 %v4741
      %v4743 = vpop.f32.mrb[0].mxu0
      %v4744 = vadd.f32 %v4608, %v4743
      %v4745 = vpop.f32.mrb[0].mxu0
      %4746 = vmatprep.mubr.f32.mxu0 0.0
      %v4747 = vand.u32 %v1057, 4294901760
      %v4748 = vsub.f32 %v1057, %v4747
      %4749 = vmatmul.mubr.f32.gmra.mrb[0].mxu0 %v4748
      %v4750 = vpop.f32.mrb[0].mxu0
      %v4751 = vadd.f32 %v4614, %v4750
      %v4752 = vpop.f32.mrb[0].mxu0
      %4753 = vdwg.mxu0
      %4754 = vmatprep.subr.mxu0 0.0
      %v4755 = vand.u32 %v4266, 4294901760
      %4756 = vmatpush1.msra.mxu0 %v4755
      %4757 = vmatprep.subr.mxu0 0.0
      %v4758 = vand.u32 %v4272, 4294901760
      %4759 = vmatpush1.msra.mxu0 %v4758
      %4760 = vmatprep.subr.mxu0 0.0
      %v4761 = vand.u32 %v4278, 4294901760
      %4762 = vmatpush1.msra.mxu0 %v4761
      %4763 = vmatprep.subr.mxu0 0.0
      %v4764 = vand.u32 %v4284, 4294901760
      %4765 = vmatpush1.msra.mxu0 %v4764
      %4766 = vmatprep.subr.mxu0 0.0
      %v4767 = vand.u32 %v4290, 4294901760
      %4768 = vmatpush1.msra.mxu0 %v4767
      %4769 = vmatprep.subr.mxu0 0.0
      %v4770 = vand.u32 %v4296, 4294901760
      %4771 = vmatpush1.msra.mxu0 %v4770
      %4772 = vmatprep.subr.mxu0 0.0
      %v4773 = vand.u32 %v4302, 4294901760
      %4774 = vmatpush1.msra.mxu0 %v4773
      %4775 = vmatprep.subr.mxu0 0.0
      %v4776 = vand.u32 %v4308, 4294901760
      %4777 = vmatpush1.msra.mxu0 %v4776
      %4778 = vmatprep.subr.mxu0 0.0
      %4779 = vmatpush1.msra.mxu0 0.0
      %4780 = vmatprep.subr.mxu0 0.0
      %4781 = vmatpush1.msra.mxu0 0.0
      %4782 = vmatprep.subr.mxu0 0.0
      %4783 = vmatpush1.msra.mxu0 0.0
      %4784 = vmatprep.subr.mxu0 0.0
      %4785 = vmatpush1.msra.mxu0 0.0
      %4786 = vmatprep.subr.mxu0 0.0
      %4787 = vmatpush1.msra.mxu0 0.0
      %4788 = vmatprep.subr.mxu0 0.0
      %4789 = vmatpush1.msra.mxu0 0.0
      %4790 = vmatprep.subr.mxu0 0.0
      %4791 = vmatpush1.msra.mxu0 0.0
      %4792 = vmatprep.subr.mxu0 0.0
      %4793 = vmatpush1.msra.mxu0 0.0
      %4794 = vmatprep.subr.mxu0 0.0
      %4795 = vmatpush1.msra.mxu0 0.0
      %4796 = vmatprep.subr.mxu0 0.0
      %4797 = vmatpush1.msra.mxu0 0.0
      %4798 = vmatprep.subr.mxu0 0.0
      %4799 = vmatpush1.msra.mxu0 0.0
      %4800 = vmatprep.subr.mxu0 0.0
      %4801 = vmatpush1.msra.mxu0 0.0
      %4802 = vmatprep.subr.mxu0 0.0
      %4803 = vmatpush1.msra.mxu0 0.0
      %4804 = vmatprep.subr.mxu0 0.0
      %4805 = vmatpush1.msra.mxu0 0.0
      %4806 = vmatprep.subr.mxu0 0.0
      %4807 = vmatpush1.msra.mxu0 0.0
      %4808 = vmatprep.subr.mxu0 0.0
      %4809 = vmatpush1.msra.mxu0 0.0
      %4810 = vmatprep.subr.mxu0 0.0
      %4811 = vmatpush1.msra.mxu0 0.0
      %4812 = vmatprep.subr.mxu0 0.0
      %4813 = vmatpush1.msra.mxu0 0.0
      %4814 = vmatprep.subr.mxu0 0.0
      %4815 = vmatpush1.msra.mxu0 0.0
      %4816 = vmatprep.subr.mxu0 0.0
      %4817 = vmatpush1.msra.mxu0 0.0
      %4818 = vmatprep.subr.mxu0 0.0
      %4819 = vmatpush1.msra.mxu0 0.0
      %4820 = vmatprep.subr.mxu0 0.0
      %4821 = vmatpush1.msra.mxu0 0.0
      %4822 = vmatprep.subr.mxu0 0.0
      %4823 = vmatpush1.msra.mxu0 0.0
      %4824 = vmatprep.subr.mxu0 0.0
      %4825 = vmatpush1.msra.mxu0 0.0
      %4826 = vmatprep.mubr.f32.mxu0 0.0
      %v4827 = vand.u32 %v1036, 4294901760
      %v4828 = vsub.f32 %v1036, %v4827
      %v4829 = vand.u32 %v4828, 4294901760
      %4830 = vmatmul.mubr.f32.gmra.mrb[0].mxu0 %v4829
      %v4831 = vpop.f32.mrb[0].mxu0
      %v4832 = vadd.f32 %v4702, %v4831
      %v4833 = vpop.f32.mrb[0].mxu0
      %4834 = vmatprep.mubr.f32.mxu0 0.0
      %v4835 = vand.u32 %v1039, 4294901760
      %v4836 = vsub.f32 %v1039, %v4835
      %v4837 = vand.u32 %v4836, 4294901760
      %4838 = vmatmul.mubr.f32.gmra.mrb[0].mxu0 %v4837
      %v4839 = vpop.f32.mrb[0].mxu0
      %v4840 = vadd.f32 %v4709, %v4839
      %v4841 = vpop.f32.mrb[0].mxu0
      %4842 = vmatprep.mubr.f32.mxu0 0.0
      %v4843 = vand.u32 %v1042, 4294901760
      %v4844 = vsub.f32 %v1042, %v4843
      %v4845 = vand.u32 %v4844, 4294901760
      %4846 = vmatmul.mubr.f32.gmra.mrb[0].mxu0 %v4845
      %v4847 = vpop.f32.mrb[0].mxu0
      %v4848 = vadd.f32 %v4716, %v4847
      %v4849 = vpop.f32.mrb[0].mxu0
      %4850 = vmatprep.mubr.f32.mxu0 0.0
      %v4851 = vand.u32 %v1045, 4294901760
      %v4852 = vsub.f32 %v1045, %v4851
      %v4853 = vand.u32 %v4852, 4294901760
      %4854 = vmatmul.mubr.f32.gmra.mrb[0].mxu0 %v4853
      %v4855 = vpop.f32.mrb[0].mxu0
      %v4856 = vadd.f32 %v4723, %v4855
      %v4857 = vpop.f32.mrb[0].mxu0
      %4858 = vmatprep.mubr.f32.mxu0 0.0
      %v4859 = vand.u32 %v1048, 4294901760
      %v4860 = vsub.f32 %v1048, %v4859
      %v4861 = vand.u32 %v4860, 4294901760
      %4862 = vmatmul.mubr.f32.gmra.mrb[0].mxu0 %v4861
      %v4863 = vpop.f32.mrb[0].mxu0
      %v4864 = vadd.f32 %v4730, %v4863
      %v4865 = vpop.f32.mrb[0].mxu0
      %4866 = vmatprep.mubr.f32.mxu0 0.0
      %v4867 = vand.u32 %v1051, 4294901760
      %v4868 = vsub.f32 %v1051, %v4867
      %v4869 = vand.u32 %v4868, 4294901760
      %4870 = vmatmul.mubr.f32.gmra.mrb[0].mxu0 %v4869
      %v4871 = vpop.f32.mrb[0].mxu0
      %v4872 = vadd.f32 %v4737, %v4871
      %v4873 = vpop.f32.mrb[0].mxu0
      %4874 = vmatprep.mubr.f32.mxu0 0.0
      %v4875 = vand.u32 %v1054, 4294901760
      %v4876 = vsub.f32 %v1054, %v4875
      %v4877 = vand.u32 %v4876, 4294901760
      %4878 = vmatmul.mubr.f32.gmra.mrb[0].mxu0 %v4877
      %v4879 = vpop.f32.mrb[0].mxu0
      %v4880 = vadd.f32 %v4744, %v4879
      %v4881 = vpop.f32.mrb[0].mxu0
      %4882 = vmatprep.mubr.f32.mxu0 0.0
      %v4883 = vand.u32 %v1057, 4294901760
      %v4884 = vsub.f32 %v1057, %v4883
      %v4885 = vand.u32 %v4884, 4294901760
      %4886 = vmatmul.mubr.f32.gmra.mrb[0].mxu0 %v4885
      %v4887 = vpop.f32.mrb[0].mxu0
      %v4888 = vadd.f32 %v4751, %v4887
      %v4889 = vpop.f32.mrb[0].mxu0
      %4890 = vdwg.mxu0
      %4891 = vmatprep.subr.mxu0 0.0
      %v4892 = vand.u32 %v4266, 4294901760
      %v4893 = vsub.f32 %v4266, %v4892
      %v4894 = vand.u32 %v4893, 4294901760
      %4895 = vmatpush1.msra.mxu0 %v4894
      %4896 = vmatprep.subr.mxu0 0.0
      %v4897 = vand.u32 %v4272, 4294901760
      %v4898 = vsub.f32 %v4272, %v4897
      %v4899 = vand.u32 %v4898, 4294901760
      %4900 = vmatpush1.msra.mxu0 %v4899
      %4901 = vmatprep.subr.mxu0 0.0
      %v4902 = vand.u32 %v4278, 4294901760
      %v4903 = vsub.f32 %v4278, %v4902
      %v4904 = vand.u32 %v4903, 4294901760
      %4905 = vmatpush1.msra.mxu0 %v4904
      %4906 = vmatprep.subr.mxu0 0.0
      %v4907 = vand.u32 %v4284, 4294901760
      %v4908 = vsub.f32 %v4284, %v4907
      %v4909 = vand.u32 %v4908, 4294901760
      %4910 = vmatpush1.msra.mxu0 %v4909
      %4911 = vmatprep.subr.mxu0 0.0
      %v4912 = vand.u32 %v4290, 4294901760
      %v4913 = vsub.f32 %v4290, %v4912
      %v4914 = vand.u32 %v4913, 4294901760
      %4915 = vmatpush1.msra.mxu0 %v4914
      %4916 = vmatprep.subr.mxu0 0.0
      %v4917 = vand.u32 %v4296, 4294901760
      %v4918 = vsub.f32 %v4296, %v4917
      %v4919 = vand.u32 %v4918, 4294901760
      %4920 = vmatpush1.msra.mxu0 %v4919
      %4921 = vmatprep.subr.mxu0 0.0
      %v4922 = vand.u32 %v4302, 4294901760
      %v4923 = vsub.f32 %v4302, %v4922
      %v4924 = vand.u32 %v4923, 4294901760
      %4925 = vmatpush1.msra.mxu0 %v4924
      %4926 = vmatprep.subr.mxu0 0.0
      %v4927 = vand.u32 %v4308, 4294901760
      %v4928 = vsub.f32 %v4308, %v4927
      %v4929 = vand.u32 %v4928, 4294901760
      %4930 = vmatpush1.msra.mxu0 %v4929
      %4931 = vmatprep.subr.mxu0 0.0
      %4932 = vmatpush1.msra.mxu0 0.0
      %4933 = vmatprep.subr.mxu0 0.0
      %4934 = vmatpush1.msra.mxu0 0.0
      %4935 = vmatprep.subr.mxu0 0.0
      %4936 = vmatpush1.msra.mxu0 0.0
      %4937 = vmatprep.subr.mxu0 0.0
      %4938 = vmatpush1.msra.mxu0 0.0
      %4939 = vmatprep.subr.mxu0 0.0
      %4940 = vmatpush1.msra.mxu0 0.0
      %4941 = vmatprep.subr.mxu0 0.0
      %4942 = vmatpush1.msra.mxu0 0.0
      %4943 = vmatprep.subr.mxu0 0.0
      %4944 = vmatpush1.msra.mxu0 0.0
      %4945 = vmatprep.subr.mxu0 0.0
      %4946 = vmatpush1.msra.mxu0 0.0
      %4947 = vmatprep.subr.mxu0 0.0
      %4948 = vmatpush1.msra.mxu0 0.0
      %4949 = vmatprep.subr.mxu0 0.0
      %4950 = vmatpush1.msra.mxu0 0.0
      %4951 = vmatprep.subr.mxu0 0.0
      %4952 = vmatpush1.msra.mxu0 0.0
      %4953 = vmatprep.subr.mxu0 0.0
      %4954 = vmatpush1.msra.mxu0 0.0
      %4955 = vmatprep.subr.mxu0 0.0
      %4956 = vmatpush1.msra.mxu0 0.0
      %4957 = vmatprep.subr.mxu0 0.0
      %4958 = vmatpush1.msra.mxu0 0.0
      %4959 = vmatprep.subr.mxu0 0.0
      %4960 = vmatpush1.msra.mxu0 0.0
      %4961 = vmatprep.subr.mxu0 0.0
      %4962 = vmatpush1.msra.mxu0 0.0
      %4963 = vmatprep.subr.mxu0 0.0
      %4964 = vmatpush1.msra.mxu0 0.0
      %4965 = vmatprep.subr.mxu0 0.0
      %4966 = vmatpush1.msra.mxu0 0.0
      %4967 = vmatprep.subr.mxu0 0.0
      %4968 = vmatpush1.msra.mxu0 0.0
      %4969 = vmatprep.subr.mxu0 0.0
      %4970 = vmatpush1.msra.mxu0 0.0
      %4971 = vmatprep.subr.mxu0 0.0
      %4972 = vmatpush1.msra.mxu0 0.0
      %4973 = vmatprep.subr.mxu0 0.0
      %4974 = vmatpush1.msra.mxu0 0.0
      %4975 = vmatprep.subr.mxu0 0.0
      %4976 = vmatpush1.msra.mxu0 0.0
      %4977 = vmatprep.subr.mxu0 0.0
      %4978 = vmatpush1.msra.mxu0 0.0
      %4979 = vmatprep.mubr.f32.mxu0 0.0
      %v4980 = vand.u32 %v1036, 4294901760
      %4981 = vmatmul.mubr.f32.gmra.mrb[0].mxu0 %v4980
      %v4982 = vpop.f32.mrb[0].mxu0
      %v4983 = vadd.f32 %v4832, %v4982
      %v4984 = vpop.f32.mrb[0].mxu0
      %4985 = vmatprep.mubr.f32.mxu0 0.0
      %v4986 = vand.u32 %v1039, 4294901760
      %4987 = vmatmul.mubr.f32.gmra.mrb[0].mxu0 %v4986
      %v4988 = vpop.f32.mrb[0].mxu0
      %v4989 = vadd.f32 %v4840, %v4988
      %v4990 = vpop.f32.mrb[0].mxu0
      %4991 = vmatprep.mubr.f32.mxu0 0.0
      %v4992 = vand.u32 %v1042, 4294901760
      %4993 = vmatmul.mubr.f32.gmra.mrb[0].mxu0 %v4992
      %v4994 = vpop.f32.mrb[0].mxu0
      %v4995 = vadd.f32 %v4848, %v4994
      %v4996 = vpop.f32.mrb[0].mxu0
      %4997 = vmatprep.mubr.f32.mxu0 0.0
      %v4998 = vand.u32 %v1045, 4294901760
      %4999 = vmatmul.mubr.f32.gmra.mrb[0].mxu0 %v4998
      %v5000 = vpop.f32.mrb[0].mxu0
      %v5001 = vadd.f32 %v4856, %v5000
      %v5002 = vpop.f32.mrb[0].mxu0
      %5003 = vmatprep.mubr.f32.mxu0 0.0
      %v5004 = vand.u32 %v1048, 4294901760
      %5005 = vmatmul.mubr.f32.gmra.mrb[0].mxu0 %v5004
      %v5006 = vpop.f32.mrb[0].mxu0
      %v5007 = vadd.f32 %v4864, %v5006
      %v5008 = vpop.f32.mrb[0].mxu0
      %5009 = vmatprep.mubr.f32.mxu0 0.0
      %v5010 = vand.u32 %v1051, 4294901760
      %5011 = vmatmul.mubr.f32.gmra.mrb[0].mxu0 %v5010
      %v5012 = vpop.f32.mrb[0].mxu0
      %v5013 = vadd.f32 %v4872, %v5012
      %v5014 = vpop.f32.mrb[0].mxu0
      %5015 = vmatprep.mubr.f32.mxu0 0.0
      %v5016 = vand.u32 %v1054, 4294901760
      %5017 = vmatmul.mubr.f32.gmra.mrb[0].mxu0 %v5016
      %v5018 = vpop.f32.mrb[0].mxu0
      %v5019 = vadd.f32 %v4880, %v5018
      %v5020 = vpop.f32.mrb[0].mxu0
      %5021 = vmatprep.mubr.f32.mxu0 0.0
      %v5022 = vand.u32 %v1057, 4294901760
      %5023 = vmatmul.mubr.f32.gmra.mrb[0].mxu0 %v5022
      %v5024 = vpop.f32.mrb[0].mxu0
      %v5025 = vadd.f32 %v4888, %v5024
      %v5026 = vpop.f32.mrb[0].mxu0
      %5027 = vdwg.mxu0
      %5028 = vmatprep.subr.mxu0 0.0
      %v5029 = vand.u32 %v4266, 4294901760
      %5030 = vmatpush1.msra.mxu0 %v5029
      %5031 = vmatprep.subr.mxu0 0.0
      %v5032 = vand.u32 %v4272, 4294901760
      %5033 = vmatpush1.msra.mxu0 %v5032
      %5034 = vmatprep.subr.mxu0 0.0
      %v5035 = vand.u32 %v4278, 4294901760
      %5036 = vmatpush1.msra.mxu0 %v5035
      %5037 = vmatprep.subr.mxu0 0.0
      %v5038 = vand.u32 %v4284, 4294901760
      %5039 = vmatpush1.msra.mxu0 %v5038
      %5040 = vmatprep.subr.mxu0 0.0
      %v5041 = vand.u32 %v4290, 4294901760
      %5042 = vmatpush1.msra.mxu0 %v5041
      %5043 = vmatprep.subr.mxu0 0.0
      %v5044 = vand.u32 %v4296, 4294901760
      %5045 = vmatpush1.msra.mxu0 %v5044
      %5046 = vmatprep.subr.mxu0 0.0
      %v5047 = vand.u32 %v4302, 4294901760
      %5048 = vmatpush1.msra.mxu0 %v5047
      %5049 = vmatprep.subr.mxu0 0.0
      %v5050 = vand.u32 %v4308, 4294901760
      %5051 = vmatpush1.msra.mxu0 %v5050
      %5052 = vmatprep.subr.mxu0 0.0
      %5053 = vmatpush1.msra.mxu0 0.0
      %5054 = vmatprep.subr.mxu0 0.0
      %5055 = vmatpush1.msra.mxu0 0.0
      %5056 = vmatprep.subr.mxu0 0.0
      %5057 = vmatpush1.msra.mxu0 0.0
      %5058 = vmatprep.subr.mxu0 0.0
      %5059 = vmatpush1.msra.mxu0 0.0
      %5060 = vmatprep.subr.mxu0 0.0
      %5061 = vmatpush1.msra.mxu0 0.0
      %5062 = vmatprep.subr.mxu0 0.0
      %5063 = vmatpush1.msra.mxu0 0.0
      %5064 = vmatprep.subr.mxu0 0.0
      %5065 = vmatpush1.msra.mxu0 0.0
      %5066 = vmatprep.subr.mxu0 0.0
      %5067 = vmatpush1.msra.mxu0 0.0
      %5068 = vmatprep.subr.mxu0 0.0
      %5069 = vmatpush1.msra.mxu0 0.0
      %5070 = vmatprep.subr.mxu0 0.0
      %5071 = vmatpush1.msra.mxu0 0.0
      %5072 = vmatprep.subr.mxu0 0.0
      %5073 = vmatpush1.msra.mxu0 0.0
      %5074 = vmatprep.subr.mxu0 0.0
      %5075 = vmatpush1.msra.mxu0 0.0
      %5076 = vmatprep.subr.mxu0 0.0
      %5077 = vmatpush1.msra.mxu0 0.0
      %5078 = vmatprep.subr.mxu0 0.0
      %5079 = vmatpush1.msra.mxu0 0.0
      %5080 = vmatprep.subr.mxu0 0.0
      %5081 = vmatpush1.msra.mxu0 0.0
      %5082 = vmatprep.subr.mxu0 0.0
      %5083 = vmatpush1.msra.mxu0 0.0
      %5084 = vmatprep.subr.mxu0 0.0
      %5085 = vmatpush1.msra.mxu0 0.0
      %5086 = vmatprep.subr.mxu0 0.0
      %5087 = vmatpush1.msra.mxu0 0.0
      %5088 = vmatprep.subr.mxu0 0.0
      %5089 = vmatpush1.msra.mxu0 0.0
      %5090 = vmatprep.subr.mxu0 0.0
      %5091 = vmatpush1.msra.mxu0 0.0
      %5092 = vmatprep.subr.mxu0 0.0
      %5093 = vmatpush1.msra.mxu0 0.0
      %5094 = vmatprep.subr.mxu0 0.0
      %5095 = vmatpush1.msra.mxu0 0.0
      %5096 = vmatprep.subr.mxu0 0.0
      %5097 = vmatpush1.msra.mxu0 0.0
      %5098 = vmatprep.subr.mxu0 0.0
      %5099 = vmatpush1.msra.mxu0 0.0
      %5100 = vmatprep.mubr.f32.mxu0 0.0
      %v5101 = vand.u32 %v1036, 4294901760
      %5102 = vmatmul.mubr.f32.gmra.mrb[0].mxu0 %v5101
      %v5103 = vpop.f32.mrb[0].mxu0
      %v5104 = vadd.f32 %v4983, %v5103
      %v5105 = vpop.f32.mrb[0].mxu0
      %5106 = vmatprep.mubr.f32.mxu0 0.0
      %v5107 = vand.u32 %v1039, 4294901760
      %5108 = vmatmul.mubr.f32.gmra.mrb[0].mxu0 %v5107
      %v5109 = vpop.f32.mrb[0].mxu0
      %v5110 = vadd.f32 %v4989, %v5109
      %v5111 = vpop.f32.mrb[0].mxu0
      %5112 = vmatprep.mubr.f32.mxu0 0.0
      %v5113 = vand.u32 %v1042, 4294901760
      %5114 = vmatmul.mubr.f32.gmra.mrb[0].mxu0 %v5113
      %v5115 = vpop.f32.mrb[0].mxu0
      %v5116 = vadd.f32 %v4995, %v5115
      %v5117 = vpop.f32.mrb[0].mxu0
      %5118 = vmatprep.mubr.f32.mxu0 0.0
      %v5119 = vand.u32 %v1045, 4294901760
      %5120 = vmatmul.mubr.f32.gmra.mrb[0].mxu0 %v5119
      %v5121 = vpop.f32.mrb[0].mxu0
      %v5122 = vadd.f32 %v5001, %v5121
      %v5123 = vpop.f32.mrb[0].mxu0
      %5124 = vmatprep.mubr.f32.mxu0 0.0
      %v5125 = vand.u32 %v1048, 4294901760
      %5126 = vmatmul.mubr.f32.gmra.mrb[0].mxu0 %v5125
      %v5127 = vpop.f32.mrb[0].mxu0
      %v5128 = vadd.f32 %v5007, %v5127
      %v5129 = vpop.f32.mrb[0].mxu0
      %5130 = vmatprep.mubr.f32.mxu0 0.0
      %v5131 = vand.u32 %v1051, 4294901760
      %5132 = vmatmul.mubr.f32.gmra.mrb[0].mxu0 %v5131
      %v5133 = vpop.f32.mrb[0].mxu0
      %v5134 = vadd.f32 %v5013, %v5133
      %v5135 = vpop.f32.mrb[0].mxu0
      %5136 = vmatprep.mubr.f32.mxu0 0.0
      %v5137 = vand.u32 %v1054, 4294901760
      %5138 = vmatmul.mubr.f32.gmra.mrb[0].mxu0 %v5137
      %v5139 = vpop.f32.mrb[0].mxu0
      %v5140 = vadd.f32 %v5019, %v5139
      %v5141 = vpop.f32.mrb[0].mxu0
      %5142 = vmatprep.mubr.f32.mxu0 0.0
      %v5143 = vand.u32 %v1057, 4294901760
      %5144 = vmatmul.mubr.f32.gmra.mrb[0].mxu0 %v5143
      %v5145 = vpop.f32.mrb[0].mxu0
      %v5146 = vadd.f32 %v5025, %v5145
      %v5147 = vpop.f32.mrb[0].mxu0
      %5148 = vdwg.mxu0
      %v5149 = vmul.f32 %v231, %v231
      %v5150 = vmul.f32 %v232, %v232
      %v5151 = vmul.f32 %v233, %v233
      %v5152 = vmul.f32 %v234, %v234
      %v5153 = vmul.f32 %v235, %v235
      %v5154 = vmul.f32 %v236, %v236
      %v5155 = vmul.f32 %v237, %v237
      %v5156 = vmul.f32 %v238, %v238
      %v5158 = vsel %vm249, %v5149, 0
      %v5161 = vsel %vm249, %v5150, 0
      %v5164 = vsel %vm249, %v5151, 0
      %v5167 = vsel %vm249, %v5152, 0
      %v5170 = vsel %vm249, %v5153, 0
      %v5173 = vsel %vm249, %v5154, 0
      %v5176 = vsel %vm249, %v5155, 0
      %v5179 = vsel %vm249, %v5156, 0
      %5181 = vmatprep.subr.mxu0 0.0
      %v5182 = vand.u32 %v247, 4294901760
      %5183 = vmatpush1.msra.mxu0 %v5182
      %5184 = vmatprep.subr.mxu0 0.0
      %v5185 = vand.u32 %v248, 4294901760
      %5186 = vmatpush1.msra.mxu0 %v5185
      %5187 = vmatprep.subr.mxu0 0.0
      %5188 = vmatpush1.msra.mxu0 0.0
      %5189 = vmatprep.subr.mxu0 0.0
      %5190 = vmatpush1.msra.mxu0 0.0
      %5191 = vmatprep.subr.mxu0 0.0
      %5192 = vmatpush1.msra.mxu0 0.0
      %5193 = vmatprep.subr.mxu0 0.0
      %5194 = vmatpush1.msra.mxu0 0.0
      %5195 = vmatprep.subr.mxu0 0.0
      %5196 = vmatpush1.msra.mxu0 0.0
      %5197 = vmatprep.subr.mxu0 0.0
      %5198 = vmatpush1.msra.mxu0 0.0
      %5199 = vmatprep.subr.mxu0 0.0
      %5200 = vmatpush1.msra.mxu0 0.0
      %5201 = vmatprep.subr.mxu0 0.0
      %5202 = vmatpush1.msra.mxu0 0.0
      %5203 = vmatprep.subr.mxu0 0.0
      %5204 = vmatpush1.msra.mxu0 0.0
      %5205 = vmatprep.subr.mxu0 0.0
      %5206 = vmatpush1.msra.mxu0 0.0
      %5207 = vmatprep.subr.mxu0 0.0
      %5208 = vmatpush1.msra.mxu0 0.0
      %5209 = vmatprep.subr.mxu0 0.0
      %5210 = vmatpush1.msra.mxu0 0.0
      %5211 = vmatprep.subr.mxu0 0.0
      %5212 = vmatpush1.msra.mxu0 0.0
      %5213 = vmatprep.subr.mxu0 0.0
      %5214 = vmatpush1.msra.mxu0 0.0
      %5215 = vmatprep.subr.mxu0 0.0
      %5216 = vmatpush1.msra.mxu0 0.0
      %5217 = vmatprep.subr.mxu0 0.0
      %5218 = vmatpush1.msra.mxu0 0.0
      %5219 = vmatprep.subr.mxu0 0.0
      %5220 = vmatpush1.msra.mxu0 0.0
      %5221 = vmatprep.subr.mxu0 0.0
      %5222 = vmatpush1.msra.mxu0 0.0
      %5223 = vmatprep.subr.mxu0 0.0
      %5224 = vmatpush1.msra.mxu0 0.0
      %5225 = vmatprep.subr.mxu0 0.0
      %5226 = vmatpush1.msra.mxu0 0.0
      %5227 = vmatprep.subr.mxu0 0.0
      %5228 = vmatpush1.msra.mxu0 0.0
      %5229 = vmatprep.subr.mxu0 0.0
      %5230 = vmatpush1.msra.mxu0 0.0
      %5231 = vmatprep.subr.mxu0 0.0
      %5232 = vmatpush1.msra.mxu0 0.0
      %5233 = vmatprep.subr.mxu0 0.0
      %5234 = vmatpush1.msra.mxu0 0.0
      %5235 = vmatprep.subr.mxu0 0.0
      %5236 = vmatpush1.msra.mxu0 0.0
      %5237 = vmatprep.subr.mxu0 0.0
      %5238 = vmatpush1.msra.mxu0 0.0
      %5239 = vmatprep.subr.mxu0 0.0
      %5240 = vmatpush1.msra.mxu0 0.0
      %5241 = vmatprep.subr.mxu0 0.0
      %5242 = vmatpush1.msra.mxu0 0.0
      %5243 = vmatprep.subr.mxu0 0.0
      %5244 = vmatpush1.msra.mxu0 0.0
      %5245 = vmatprep.subr.mxu0 0.0
      %5246 = vmatpush1.msra.mxu0 0.0
      %5247 = vmatprep.mubr.f32.mxu0 0.0
      %v5248 = vand.u32 %v5158, 4294901760
      %v5249 = vsub.f32 %v5158, %v5248
      %v5250 = vand.u32 %v5249, 4294901760
      %v5251 = vsub.f32 %v5249, %v5250
      %v5252 = vand.u32 %v5251, 4294901760
      %5253 = vmatmul.mubr.f32.gmra.mrb[0].mxu0 %v5252
      %v5254 = vpop.f32.mrb[0].mxu0
      %v5255 = vadd.f32 0.0, %v5254
      %v5256 = vpop.f32.mrb[0].mxu0
      %5257 = vmatprep.mubr.f32.mxu0 0.0
      %v5258 = vand.u32 %v5161, 4294901760
      %v5259 = vsub.f32 %v5161, %v5258
      %v5260 = vand.u32 %v5259, 4294901760
      %v5261 = vsub.f32 %v5259, %v5260
      %v5262 = vand.u32 %v5261, 4294901760
      %5263 = vmatmul.mubr.f32.gmra.mrb[0].mxu0 %v5262
      %v5264 = vpop.f32.mrb[0].mxu0
      %v5265 = vadd.f32 0.0, %v5264
      %v5266 = vpop.f32.mrb[0].mxu0
      %5267 = vmatprep.mubr.f32.mxu0 0.0
      %v5268 = vand.u32 %v5164, 4294901760
      %v5269 = vsub.f32 %v5164, %v5268
      %v5270 = vand.u32 %v5269, 4294901760
      %v5271 = vsub.f32 %v5269, %v5270
      %v5272 = vand.u32 %v5271, 4294901760
      %5273 = vmatmul.mubr.f32.gmra.mrb[0].mxu0 %v5272
      %v5274 = vpop.f32.mrb[0].mxu0
      %v5275 = vadd.f32 0.0, %v5274
      %v5276 = vpop.f32.mrb[0].mxu0
      %5277 = vmatprep.mubr.f32.mxu0 0.0
      %v5278 = vand.u32 %v5167, 4294901760
      %v5279 = vsub.f32 %v5167, %v5278
      %v5280 = vand.u32 %v5279, 4294901760
      %v5281 = vsub.f32 %v5279, %v5280
      %v5282 = vand.u32 %v5281, 4294901760
      %5283 = vmatmul.mubr.f32.gmra.mrb[0].mxu0 %v5282
      %v5284 = vpop.f32.mrb[0].mxu0
      %v5285 = vadd.f32 0.0, %v5284
      %v5286 = vpop.f32.mrb[0].mxu0
      %5287 = vmatprep.mubr.f32.mxu0 0.0
      %v5288 = vand.u32 %v5170, 4294901760
      %v5289 = vsub.f32 %v5170, %v5288
      %v5290 = vand.u32 %v5289, 4294901760
      %v5291 = vsub.f32 %v5289, %v5290
      %v5292 = vand.u32 %v5291, 4294901760
      %5293 = vmatmul.mubr.f32.gmra.mrb[0].mxu0 %v5292
      %v5294 = vpop.f32.mrb[0].mxu0
      %v5295 = vadd.f32 0.0, %v5294
      %v5296 = vpop.f32.mrb[0].mxu0
      %5297 = vmatprep.mubr.f32.mxu0 0.0
      %v5298 = vand.u32 %v5173, 4294901760
      %v5299 = vsub.f32 %v5173, %v5298
      %v5300 = vand.u32 %v5299, 4294901760
      %v5301 = vsub.f32 %v5299, %v5300
      %v5302 = vand.u32 %v5301, 4294901760
      %5303 = vmatmul.mubr.f32.gmra.mrb[0].mxu0 %v5302
      %v5304 = vpop.f32.mrb[0].mxu0
      %v5305 = vadd.f32 0.0, %v5304
      %v5306 = vpop.f32.mrb[0].mxu0
      %5307 = vmatprep.mubr.f32.mxu0 0.0
      %v5308 = vand.u32 %v5176, 4294901760
      %v5309 = vsub.f32 %v5176, %v5308
      %v5310 = vand.u32 %v5309, 4294901760
      %v5311 = vsub.f32 %v5309, %v5310
      %v5312 = vand.u32 %v5311, 4294901760
      %5313 = vmatmul.mubr.f32.gmra.mrb[0].mxu0 %v5312
      %v5314 = vpop.f32.mrb[0].mxu0
      %v5315 = vadd.f32 0.0, %v5314
      %v5316 = vpop.f32.mrb[0].mxu0
      %5317 = vmatprep.mubr.f32.mxu0 0.0
      %v5318 = vand.u32 %v5179, 4294901760
      %v5319 = vsub.f32 %v5179, %v5318
      %v5320 = vand.u32 %v5319, 4294901760
      %v5321 = vsub.f32 %v5319, %v5320
      %v5322 = vand.u32 %v5321, 4294901760
      %5323 = vmatmul.mubr.f32.gmra.mrb[0].mxu0 %v5322
      %v5324 = vpop.f32.mrb[0].mxu0
      %v5325 = vadd.f32 0.0, %v5324
      %v5326 = vpop.f32.mrb[0].mxu0
      %5327 = vdwg.mxu0
      %5328 = vmatprep.subr.mxu0 0.0
      %v5329 = vand.u32 %v247, 4294901760
      %v5330 = vsub.f32 %v247, %v5329
      %v5331 = vand.u32 %v5330, 4294901760
      %v5332 = vsub.f32 %v5330, %v5331
      %v5333 = vand.u32 %v5332, 4294901760
      %5334 = vmatpush1.msra.mxu0 %v5333
      %5335 = vmatprep.subr.mxu0 0.0
      %v5336 = vand.u32 %v248, 4294901760
      %v5337 = vsub.f32 %v248, %v5336
      %v5338 = vand.u32 %v5337, 4294901760
      %v5339 = vsub.f32 %v5337, %v5338
      %v5340 = vand.u32 %v5339, 4294901760
      %5341 = vmatpush1.msra.mxu0 %v5340
      %5342 = vmatprep.subr.mxu0 0.0
      %5343 = vmatpush1.msra.mxu0 0.0
      %5344 = vmatprep.subr.mxu0 0.0
      %5345 = vmatpush1.msra.mxu0 0.0
      %5346 = vmatprep.subr.mxu0 0.0
      %5347 = vmatpush1.msra.mxu0 0.0
      %5348 = vmatprep.subr.mxu0 0.0
      %5349 = vmatpush1.msra.mxu0 0.0
      %5350 = vmatprep.subr.mxu0 0.0
      %5351 = vmatpush1.msra.mxu0 0.0
      %5352 = vmatprep.subr.mxu0 0.0
      %5353 = vmatpush1.msra.mxu0 0.0
      %5354 = vmatprep.subr.mxu0 0.0
      %5355 = vmatpush1.msra.mxu0 0.0
      %5356 = vmatprep.subr.mxu0 0.0
      %5357 = vmatpush1.msra.mxu0 0.0
      %5358 = vmatprep.subr.mxu0 0.0
      %5359 = vmatpush1.msra.mxu0 0.0
      %5360 = vmatprep.subr.mxu0 0.0
      %5361 = vmatpush1.msra.mxu0 0.0
      %5362 = vmatprep.subr.mxu0 0.0
      %5363 = vmatpush1.msra.mxu0 0.0
      %5364 = vmatprep.subr.mxu0 0.0
      %5365 = vmatpush1.msra.mxu0 0.0
      %5366 = vmatprep.subr.mxu0 0.0
      %5367 = vmatpush1.msra.mxu0 0.0
      %5368 = vmatprep.subr.mxu0 0.0
      %5369 = vmatpush1.msra.mxu0 0.0
      %5370 = vmatprep.subr.mxu0 0.0
      %5371 = vmatpush1.msra.mxu0 0.0
      %5372 = vmatprep.subr.mxu0 0.0
      %5373 = vmatpush1.msra.mxu0 0.0
      %5374 = vmatprep.subr.mxu0 0.0
      %5375 = vmatpush1.msra.mxu0 0.0
      %5376 = vmatprep.subr.mxu0 0.0
      %5377 = vmatpush1.msra.mxu0 0.0
      %5378 = vmatprep.subr.mxu0 0.0
      %5379 = vmatpush1.msra.mxu0 0.0
      %5380 = vmatprep.subr.mxu0 0.0
      %5381 = vmatpush1.msra.mxu0 0.0
      %5382 = vmatprep.subr.mxu0 0.0
      %5383 = vmatpush1.msra.mxu0 0.0
      %5384 = vmatprep.subr.mxu0 0.0
      %5385 = vmatpush1.msra.mxu0 0.0
      %5386 = vmatprep.subr.mxu0 0.0
      %5387 = vmatpush1.msra.mxu0 0.0
      %5388 = vmatprep.subr.mxu0 0.0
      %5389 = vmatpush1.msra.mxu0 0.0
      %5390 = vmatprep.subr.mxu0 0.0
      %5391 = vmatpush1.msra.mxu0 0.0
      %5392 = vmatprep.subr.mxu0 0.0
      %5393 = vmatpush1.msra.mxu0 0.0
      %5394 = vmatprep.subr.mxu0 0.0
      %5395 = vmatpush1.msra.mxu0 0.0
      %5396 = vmatprep.subr.mxu0 0.0
      %5397 = vmatpush1.msra.mxu0 0.0
      %5398 = vmatprep.subr.mxu0 0.0
      %5399 = vmatpush1.msra.mxu0 0.0
      %5400 = vmatprep.subr.mxu0 0.0
      %5401 = vmatpush1.msra.mxu0 0.0
      %5402 = vmatprep.mubr.f32.mxu0 0.0
      %v5403 = vand.u32 %v5158, 4294901760
      %5404 = vmatmul.mubr.f32.gmra.mrb[0].mxu0 %v5403
      %v5405 = vpop.f32.mrb[0].mxu0
      %v5406 = vadd.f32 %v5255, %v5405
      %v5407 = vpop.f32.mrb[0].mxu0
      %5408 = vmatprep.mubr.f32.mxu0 0.0
      %v5409 = vand.u32 %v5161, 4294901760
      %5410 = vmatmul.mubr.f32.gmra.mrb[0].mxu0 %v5409
      %v5411 = vpop.f32.mrb[0].mxu0
      %v5412 = vadd.f32 %v5265, %v5411
      %v5413 = vpop.f32.mrb[0].mxu0
      %5414 = vmatprep.mubr.f32.mxu0 0.0
      %v5415 = vand.u32 %v5164, 4294901760
      %5416 = vmatmul.mubr.f32.gmra.mrb[0].mxu0 %v5415
      %v5417 = vpop.f32.mrb[0].mxu0
      %v5418 = vadd.f32 %v5275, %v5417
      %v5419 = vpop.f32.mrb[0].mxu0
      %5420 = vmatprep.mubr.f32.mxu0 0.0
      %v5421 = vand.u32 %v5167, 4294901760
      %5422 = vmatmul.mubr.f32.gmra.mrb[0].mxu0 %v5421
      %v5423 = vpop.f32.mrb[0].mxu0
      %v5424 = vadd.f32 %v5285, %v5423
      %v5425 = vpop.f32.mrb[0].mxu0
      %5426 = vmatprep.mubr.f32.mxu0 0.0
      %v5427 = vand.u32 %v5170, 4294901760
      %5428 = vmatmul.mubr.f32.gmra.mrb[0].mxu0 %v5427
      %v5429 = vpop.f32.mrb[0].mxu0
      %v5430 = vadd.f32 %v5295, %v5429
      %v5431 = vpop.f32.mrb[0].mxu0
      %5432 = vmatprep.mubr.f32.mxu0 0.0
      %v5433 = vand.u32 %v5173, 4294901760
      %5434 = vmatmul.mubr.f32.gmra.mrb[0].mxu0 %v5433
      %v5435 = vpop.f32.mrb[0].mxu0
      %v5436 = vadd.f32 %v5305, %v5435
      %v5437 = vpop.f32.mrb[0].mxu0
      %5438 = vmatprep.mubr.f32.mxu0 0.0
      %v5439 = vand.u32 %v5176, 4294901760
      %5440 = vmatmul.mubr.f32.gmra.mrb[0].mxu0 %v5439
      %v5441 = vpop.f32.mrb[0].mxu0
      %v5442 = vadd.f32 %v5315, %v5441
      %v5443 = vpop.f32.mrb[0].mxu0
      %5444 = vmatprep.mubr.f32.mxu0 0.0
      %v5445 = vand.u32 %v5179, 4294901760
      %5446 = vmatmul.mubr.f32.gmra.mrb[0].mxu0 %v5445
      %v5447 = vpop.f32.mrb[0].mxu0
      %v5448 = vadd.f32 %v5325, %v5447
      %v5449 = vpop.f32.mrb[0].mxu0
      %5450 = vdwg.mxu0
      %5451 = vmatprep.subr.mxu0 0.0
      %v5452 = vand.u32 %v247, 4294901760
      %v5453 = vsub.f32 %v247, %v5452
      %5454 = vmatpush1.msra.mxu0 %v5453
      %5455 = vmatprep.subr.mxu0 0.0
      %v5456 = vand.u32 %v248, 4294901760
      %v5457 = vsub.f32 %v248, %v5456
      %5458 = vmatpush1.msra.mxu0 %v5457
      %5459 = vmatprep.subr.mxu0 0.0
      %5460 = vmatpush1.msra.mxu0 0.0
      %5461 = vmatprep.subr.mxu0 0.0
      %5462 = vmatpush1.msra.mxu0 0.0
      %5463 = vmatprep.subr.mxu0 0.0
      %5464 = vmatpush1.msra.mxu0 0.0
      %5465 = vmatprep.subr.mxu0 0.0
      %5466 = vmatpush1.msra.mxu0 0.0
      %5467 = vmatprep.subr.mxu0 0.0
      %5468 = vmatpush1.msra.mxu0 0.0
      %5469 = vmatprep.subr.mxu0 0.0
      %5470 = vmatpush1.msra.mxu0 0.0
      %5471 = vmatprep.subr.mxu0 0.0
      %5472 = vmatpush1.msra.mxu0 0.0
      %5473 = vmatprep.subr.mxu0 0.0
      %5474 = vmatpush1.msra.mxu0 0.0
      %5475 = vmatprep.subr.mxu0 0.0
      %5476 = vmatpush1.msra.mxu0 0.0
      %5477 = vmatprep.subr.mxu0 0.0
      %5478 = vmatpush1.msra.mxu0 0.0
      %5479 = vmatprep.subr.mxu0 0.0
      %5480 = vmatpush1.msra.mxu0 0.0
      %5481 = vmatprep.subr.mxu0 0.0
      %5482 = vmatpush1.msra.mxu0 0.0
      %5483 = vmatprep.subr.mxu0 0.0
      %5484 = vmatpush1.msra.mxu0 0.0
      %5485 = vmatprep.subr.mxu0 0.0
      %5486 = vmatpush1.msra.mxu0 0.0
      %5487 = vmatprep.subr.mxu0 0.0
      %5488 = vmatpush1.msra.mxu0 0.0
      %5489 = vmatprep.subr.mxu0 0.0
      %5490 = vmatpush1.msra.mxu0 0.0
      %5491 = vmatprep.subr.mxu0 0.0
      %5492 = vmatpush1.msra.mxu0 0.0
      %5493 = vmatprep.subr.mxu0 0.0
      %5494 = vmatpush1.msra.mxu0 0.0
      %5495 = vmatprep.subr.mxu0 0.0
      %5496 = vmatpush1.msra.mxu0 0.0
      %5497 = vmatprep.subr.mxu0 0.0
      %5498 = vmatpush1.msra.mxu0 0.0
      %5499 = vmatprep.subr.mxu0 0.0
      %5500 = vmatpush1.msra.mxu0 0.0
      %5501 = vmatprep.subr.mxu0 0.0
      %5502 = vmatpush1.msra.mxu0 0.0
      %5503 = vmatprep.subr.mxu0 0.0
      %5504 = vmatpush1.msra.mxu0 0.0
      %5505 = vmatprep.subr.mxu0 0.0
      %5506 = vmatpush1.msra.mxu0 0.0
      %5507 = vmatprep.subr.mxu0 0.0
      %5508 = vmatpush1.msra.mxu0 0.0
      %5509 = vmatprep.subr.mxu0 0.0
      %5510 = vmatpush1.msra.mxu0 0.0
      %5511 = vmatprep.subr.mxu0 0.0
      %5512 = vmatpush1.msra.mxu0 0.0
      %5513 = vmatprep.subr.mxu0 0.0
      %5514 = vmatpush1.msra.mxu0 0.0
      %5515 = vmatprep.subr.mxu0 0.0
      %5516 = vmatpush1.msra.mxu0 0.0
      %5517 = vmatprep.subr.mxu0 0.0
      %5518 = vmatpush1.msra.mxu0 0.0
      %5519 = vmatprep.mubr.f32.mxu0 0.0
      %v5520 = vand.u32 %v5158, 4294901760
      %v5521 = vsub.f32 %v5158, %v5520
      %5522 = vmatmul.mubr.f32.gmra.mrb[0].mxu0 %v5521
      %v5523 = vpop.f32.mrb[0].mxu0
      %v5524 = vadd.f32 %v5406, %v5523
      %v5525 = vpop.f32.mrb[0].mxu0
      %5526 = vmatprep.mubr.f32.mxu0 0.0
      %v5527 = vand.u32 %v5161, 4294901760
      %v5528 = vsub.f32 %v5161, %v5527
      %5529 = vmatmul.mubr.f32.gmra.mrb[0].mxu0 %v5528
      %v5530 = vpop.f32.mrb[0].mxu0
      %v5531 = vadd.f32 %v5412, %v5530
      %v5532 = vpop.f32.mrb[0].mxu0
      %5533 = vmatprep.mubr.f32.mxu0 0.0
      %v5534 = vand.u32 %v5164, 4294901760
      %v5535 = vsub.f32 %v5164, %v5534
      %5536 = vmatmul.mubr.f32.gmra.mrb[0].mxu0 %v5535
      %v5537 = vpop.f32.mrb[0].mxu0
      %v5538 = vadd.f32 %v5418, %v5537
      %v5539 = vpop.f32.mrb[0].mxu0
      %5540 = vmatprep.mubr.f32.mxu0 0.0
      %v5541 = vand.u32 %v5167, 4294901760
      %v5542 = vsub.f32 %v5167, %v5541
      %5543 = vmatmul.mubr.f32.gmra.mrb[0].mxu0 %v5542
      %v5544 = vpop.f32.mrb[0].mxu0
      %v5545 = vadd.f32 %v5424, %v5544
      %v5546 = vpop.f32.mrb[0].mxu0
      %5547 = vmatprep.mubr.f32.mxu0 0.0
      %v5548 = vand.u32 %v5170, 4294901760
      %v5549 = vsub.f32 %v5170, %v5548
      %5550 = vmatmul.mubr.f32.gmra.mrb[0].mxu0 %v5549
      %v5551 = vpop.f32.mrb[0].mxu0
      %v5552 = vadd.f32 %v5430, %v5551
      %v5553 = vpop.f32.mrb[0].mxu0
      %5554 = vmatprep.mubr.f32.mxu0 0.0
      %v5555 = vand.u32 %v5173, 4294901760
      %v5556 = vsub.f32 %v5173, %v5555
      %5557 = vmatmul.mubr.f32.gmra.mrb[0].mxu0 %v5556
      %v5558 = vpop.f32.mrb[0].mxu0
      %v5559 = vadd.f32 %v5436, %v5558
      %v5560 = vpop.f32.mrb[0].mxu0
      %5561 = vmatprep.mubr.f32.mxu0 0.0
      %v5562 = vand.u32 %v5176, 4294901760
      %v5563 = vsub.f32 %v5176, %v5562
      %5564 = vmatmul.mubr.f32.gmra.mrb[0].mxu0 %v5563
      %v5565 = vpop.f32.mrb[0].mxu0
      %v5566 = vadd.f32 %v5442, %v5565
      %v5567 = vpop.f32.mrb[0].mxu0
      %5568 = vmatprep.mubr.f32.mxu0 0.0
      %v5569 = vand.u32 %v5179, 4294901760
      %v5570 = vsub.f32 %v5179, %v5569
      %5571 = vmatmul.mubr.f32.gmra.mrb[0].mxu0 %v5570
      %v5572 = vpop.f32.mrb[0].mxu0
      %v5573 = vadd.f32 %v5448, %v5572
      %v5574 = vpop.f32.mrb[0].mxu0
      %5575 = vdwg.mxu0
      %5576 = vmatprep.subr.mxu0 0.0
      %v5577 = vand.u32 %v247, 4294901760
      %5578 = vmatpush1.msra.mxu0 %v5577
      %5579 = vmatprep.subr.mxu0 0.0
      %v5580 = vand.u32 %v248, 4294901760
      %5581 = vmatpush1.msra.mxu0 %v5580
      %5582 = vmatprep.subr.mxu0 0.0
      %5583 = vmatpush1.msra.mxu0 0.0
      %5584 = vmatprep.subr.mxu0 0.0
      %5585 = vmatpush1.msra.mxu0 0.0
      %5586 = vmatprep.subr.mxu0 0.0
      %5587 = vmatpush1.msra.mxu0 0.0
      %5588 = vmatprep.subr.mxu0 0.0
      %5589 = vmatpush1.msra.mxu0 0.0
      %5590 = vmatprep.subr.mxu0 0.0
      %5591 = vmatpush1.msra.mxu0 0.0
      %5592 = vmatprep.subr.mxu0 0.0
      %5593 = vmatpush1.msra.mxu0 0.0
      %5594 = vmatprep.subr.mxu0 0.0
      %5595 = vmatpush1.msra.mxu0 0.0
      %5596 = vmatprep.subr.mxu0 0.0
      %5597 = vmatpush1.msra.mxu0 0.0
      %5598 = vmatprep.subr.mxu0 0.0
      %5599 = vmatpush1.msra.mxu0 0.0
      %5600 = vmatprep.subr.mxu0 0.0
      %5601 = vmatpush1.msra.mxu0 0.0
      %5602 = vmatprep.subr.mxu0 0.0
      %5603 = vmatpush1.msra.mxu0 0.0
      %5604 = vmatprep.subr.mxu0 0.0
      %5605 = vmatpush1.msra.mxu0 0.0
      %5606 = vmatprep.subr.mxu0 0.0
      %5607 = vmatpush1.msra.mxu0 0.0
      %5608 = vmatprep.subr.mxu0 0.0
      %5609 = vmatpush1.msra.mxu0 0.0
      %5610 = vmatprep.subr.mxu0 0.0
      %5611 = vmatpush1.msra.mxu0 0.0
      %5612 = vmatprep.subr.mxu0 0.0
      %5613 = vmatpush1.msra.mxu0 0.0
      %5614 = vmatprep.subr.mxu0 0.0
      %5615 = vmatpush1.msra.mxu0 0.0
      %5616 = vmatprep.subr.mxu0 0.0
      %5617 = vmatpush1.msra.mxu0 0.0
      %5618 = vmatprep.subr.mxu0 0.0
      %5619 = vmatpush1.msra.mxu0 0.0
      %5620 = vmatprep.subr.mxu0 0.0
      %5621 = vmatpush1.msra.mxu0 0.0
      %5622 = vmatprep.subr.mxu0 0.0
      %5623 = vmatpush1.msra.mxu0 0.0
      %5624 = vmatprep.subr.mxu0 0.0
      %5625 = vmatpush1.msra.mxu0 0.0
      %5626 = vmatprep.subr.mxu0 0.0
      %5627 = vmatpush1.msra.mxu0 0.0
      %5628 = vmatprep.subr.mxu0 0.0
      %5629 = vmatpush1.msra.mxu0 0.0
      %5630 = vmatprep.subr.mxu0 0.0
      %5631 = vmatpush1.msra.mxu0 0.0
      %5632 = vmatprep.subr.mxu0 0.0
      %5633 = vmatpush1.msra.mxu0 0.0
      %5634 = vmatprep.subr.mxu0 0.0
      %5635 = vmatpush1.msra.mxu0 0.0
      %5636 = vmatprep.subr.mxu0 0.0
      %5637 = vmatpush1.msra.mxu0 0.0
      %5638 = vmatprep.subr.mxu0 0.0
      %5639 = vmatpush1.msra.mxu0 0.0
      %5640 = vmatprep.subr.mxu0 0.0
      %5641 = vmatpush1.msra.mxu0 0.0
      %5642 = vmatprep.mubr.f32.mxu0 0.0
      %v5643 = vand.u32 %v5158, 4294901760
      %v5644 = vsub.f32 %v5158, %v5643
      %v5645 = vand.u32 %v5644, 4294901760
      %5646 = vmatmul.mubr.f32.gmra.mrb[0].mxu0 %v5645
      %v5647 = vpop.f32.mrb[0].mxu0
      %v5648 = vadd.f32 %v5524, %v5647
      %v5649 = vpop.f32.mrb[0].mxu0
      %5650 = vmatprep.mubr.f32.mxu0 0.0
      %v5651 = vand.u32 %v5161, 4294901760
      %v5652 = vsub.f32 %v5161, %v5651
      %v5653 = vand.u32 %v5652, 4294901760
      %5654 = vmatmul.mubr.f32.gmra.mrb[0].mxu0 %v5653
      %v5655 = vpop.f32.mrb[0].mxu0
      %v5656 = vadd.f32 %v5531, %v5655
      %v5657 = vpop.f32.mrb[0].mxu0
      %5658 = vmatprep.mubr.f32.mxu0 0.0
      %v5659 = vand.u32 %v5164, 4294901760
      %v5660 = vsub.f32 %v5164, %v5659
      %v5661 = vand.u32 %v5660, 4294901760
      %5662 = vmatmul.mubr.f32.gmra.mrb[0].mxu0 %v5661
      %v5663 = vpop.f32.mrb[0].mxu0
      %v5664 = vadd.f32 %v5538, %v5663
      %v5665 = vpop.f32.mrb[0].mxu0
      %5666 = vmatprep.mubr.f32.mxu0 0.0
      %v5667 = vand.u32 %v5167, 4294901760
      %v5668 = vsub.f32 %v5167, %v5667
      %v5669 = vand.u32 %v5668, 4294901760
      %5670 = vmatmul.mubr.f32.gmra.mrb[0].mxu0 %v5669
      %v5671 = vpop.f32.mrb[0].mxu0
      %v5672 = vadd.f32 %v5545, %v5671
      %v5673 = vpop.f32.mrb[0].mxu0
      %5674 = vmatprep.mubr.f32.mxu0 0.0
      %v5675 = vand.u32 %v5170, 4294901760
      %v5676 = vsub.f32 %v5170, %v5675
      %v5677 = vand.u32 %v5676, 4294901760
      %5678 = vmatmul.mubr.f32.gmra.mrb[0].mxu0 %v5677
      %v5679 = vpop.f32.mrb[0].mxu0
      %v5680 = vadd.f32 %v5552, %v5679
      %v5681 = vpop.f32.mrb[0].mxu0
      %5682 = vmatprep.mubr.f32.mxu0 0.0
      %v5683 = vand.u32 %v5173, 4294901760
      %v5684 = vsub.f32 %v5173, %v5683
      %v5685 = vand.u32 %v5684, 4294901760
      %5686 = vmatmul.mubr.f32.gmra.mrb[0].mxu0 %v5685
      %v5687 = vpop.f32.mrb[0].mxu0
      %v5688 = vadd.f32 %v5559, %v5687
      %v5689 = vpop.f32.mrb[0].mxu0
      %5690 = vmatprep.mubr.f32.mxu0 0.0
      %v5691 = vand.u32 %v5176, 4294901760
      %v5692 = vsub.f32 %v5176, %v5691
      %v5693 = vand.u32 %v5692, 4294901760
      %5694 = vmatmul.mubr.f32.gmra.mrb[0].mxu0 %v5693
      %v5695 = vpop.f32.mrb[0].mxu0
      %v5696 = vadd.f32 %v5566, %v5695
      %v5697 = vpop.f32.mrb[0].mxu0
      %5698 = vmatprep.mubr.f32.mxu0 0.0
      %v5699 = vand.u32 %v5179, 4294901760
      %v5700 = vsub.f32 %v5179, %v5699
      %v5701 = vand.u32 %v5700, 4294901760
      %5702 = vmatmul.mubr.f32.gmra.mrb[0].mxu0 %v5701
      %v5703 = vpop.f32.mrb[0].mxu0
      %v5704 = vadd.f32 %v5573, %v5703
      %v5705 = vpop.f32.mrb[0].mxu0
      %5706 = vdwg.mxu0
      %5707 = vmatprep.subr.mxu0 0.0
      %v5708 = vand.u32 %v247, 4294901760
      %v5709 = vsub.f32 %v247, %v5708
      %v5710 = vand.u32 %v5709, 4294901760
      %5711 = vmatpush1.msra.mxu0 %v5710
      %5712 = vmatprep.subr.mxu0 0.0
      %v5713 = vand.u32 %v248, 4294901760
      %v5714 = vsub.f32 %v248, %v5713
      %v5715 = vand.u32 %v5714, 4294901760
      %5716 = vmatpush1.msra.mxu0 %v5715
      %5717 = vmatprep.subr.mxu0 0.0
      %5718 = vmatpush1.msra.mxu0 0.0
      %5719 = vmatprep.subr.mxu0 0.0
      %5720 = vmatpush1.msra.mxu0 0.0
      %5721 = vmatprep.subr.mxu0 0.0
      %5722 = vmatpush1.msra.mxu0 0.0
      %5723 = vmatprep.subr.mxu0 0.0
      %5724 = vmatpush1.msra.mxu0 0.0
      %5725 = vmatprep.subr.mxu0 0.0
      %5726 = vmatpush1.msra.mxu0 0.0
      %5727 = vmatprep.subr.mxu0 0.0
      %5728 = vmatpush1.msra.mxu0 0.0
      %5729 = vmatprep.subr.mxu0 0.0
      %5730 = vmatpush1.msra.mxu0 0.0
      %5731 = vmatprep.subr.mxu0 0.0
      %5732 = vmatpush1.msra.mxu0 0.0
      %5733 = vmatprep.subr.mxu0 0.0
      %5734 = vmatpush1.msra.mxu0 0.0
      %5735 = vmatprep.subr.mxu0 0.0
      %5736 = vmatpush1.msra.mxu0 0.0
      %5737 = vmatprep.subr.mxu0 0.0
      %5738 = vmatpush1.msra.mxu0 0.0
      %5739 = vmatprep.subr.mxu0 0.0
      %5740 = vmatpush1.msra.mxu0 0.0
      %5741 = vmatprep.subr.mxu0 0.0
      %5742 = vmatpush1.msra.mxu0 0.0
      %5743 = vmatprep.subr.mxu0 0.0
      %5744 = vmatpush1.msra.mxu0 0.0
      %5745 = vmatprep.subr.mxu0 0.0
      %5746 = vmatpush1.msra.mxu0 0.0
      %5747 = vmatprep.subr.mxu0 0.0
      %5748 = vmatpush1.msra.mxu0 0.0
      %5749 = vmatprep.subr.mxu0 0.0
      %5750 = vmatpush1.msra.mxu0 0.0
      %5751 = vmatprep.subr.mxu0 0.0
      %5752 = vmatpush1.msra.mxu0 0.0
      %5753 = vmatprep.subr.mxu0 0.0
      %5754 = vmatpush1.msra.mxu0 0.0
      %5755 = vmatprep.subr.mxu0 0.0
      %5756 = vmatpush1.msra.mxu0 0.0
      %5757 = vmatprep.subr.mxu0 0.0
      %5758 = vmatpush1.msra.mxu0 0.0
      %5759 = vmatprep.subr.mxu0 0.0
      %5760 = vmatpush1.msra.mxu0 0.0
      %5761 = vmatprep.subr.mxu0 0.0
      %5762 = vmatpush1.msra.mxu0 0.0
      %5763 = vmatprep.subr.mxu0 0.0
      %5764 = vmatpush1.msra.mxu0 0.0
      %5765 = vmatprep.subr.mxu0 0.0
      %5766 = vmatpush1.msra.mxu0 0.0
      %5767 = vmatprep.subr.mxu0 0.0
      %5768 = vmatpush1.msra.mxu0 0.0
      %5769 = vmatprep.subr.mxu0 0.0
      %5770 = vmatpush1.msra.mxu0 0.0
      %5771 = vmatprep.subr.mxu0 0.0
      %5772 = vmatpush1.msra.mxu0 0.0
      %5773 = vmatprep.subr.mxu0 0.0
      %5774 = vmatpush1.msra.mxu0 0.0
      %5775 = vmatprep.subr.mxu0 0.0
      %5776 = vmatpush1.msra.mxu0 0.0
      %5777 = vmatprep.mubr.f32.mxu0 0.0
      %v5778 = vand.u32 %v5158, 4294901760
      %5779 = vmatmul.mubr.f32.gmra.mrb[0].mxu0 %v5778
      %v5780 = vpop.f32.mrb[0].mxu0
      %v5781 = vadd.f32 %v5648, %v5780
      %v5782 = vpop.f32.mrb[0].mxu0
      %5783 = vmatprep.mubr.f32.mxu0 0.0
      %v5784 = vand.u32 %v5161, 4294901760
      %5785 = vmatmul.mubr.f32.gmra.mrb[0].mxu0 %v5784
      %v5786 = vpop.f32.mrb[0].mxu0
      %v5787 = vadd.f32 %v5656, %v5786
      %v5788 = vpop.f32.mrb[0].mxu0
      %5789 = vmatprep.mubr.f32.mxu0 0.0
      %v5790 = vand.u32 %v5164, 4294901760
      %5791 = vmatmul.mubr.f32.gmra.mrb[0].mxu0 %v5790
      %v5792 = vpop.f32.mrb[0].mxu0
      %v5793 = vadd.f32 %v5664, %v5792
      %v5794 = vpop.f32.mrb[0].mxu0
      %5795 = vmatprep.mubr.f32.mxu0 0.0
      %v5796 = vand.u32 %v5167, 4294901760
      %5797 = vmatmul.mubr.f32.gmra.mrb[0].mxu0 %v5796
      %v5798 = vpop.f32.mrb[0].mxu0
      %v5799 = vadd.f32 %v5672, %v5798
      %v5800 = vpop.f32.mrb[0].mxu0
      %5801 = vmatprep.mubr.f32.mxu0 0.0
      %v5802 = vand.u32 %v5170, 4294901760
      %5803 = vmatmul.mubr.f32.gmra.mrb[0].mxu0 %v5802
      %v5804 = vpop.f32.mrb[0].mxu0
      %v5805 = vadd.f32 %v5680, %v5804
      %v5806 = vpop.f32.mrb[0].mxu0
      %5807 = vmatprep.mubr.f32.mxu0 0.0
      %v5808 = vand.u32 %v5173, 4294901760
      %5809 = vmatmul.mubr.f32.gmra.mrb[0].mxu0 %v5808
      %v5810 = vpop.f32.mrb[0].mxu0
      %v5811 = vadd.f32 %v5688, %v5810
      %v5812 = vpop.f32.mrb[0].mxu0
      %5813 = vmatprep.mubr.f32.mxu0 0.0
      %v5814 = vand.u32 %v5176, 4294901760
      %5815 = vmatmul.mubr.f32.gmra.mrb[0].mxu0 %v5814
      %v5816 = vpop.f32.mrb[0].mxu0
      %v5817 = vadd.f32 %v5696, %v5816
      %v5818 = vpop.f32.mrb[0].mxu0
      %5819 = vmatprep.mubr.f32.mxu0 0.0
      %v5820 = vand.u32 %v5179, 4294901760
      %5821 = vmatmul.mubr.f32.gmra.mrb[0].mxu0 %v5820
      %v5822 = vpop.f32.mrb[0].mxu0
      %v5823 = vadd.f32 %v5704, %v5822
      %v5824 = vpop.f32.mrb[0].mxu0
      %5825 = vdwg.mxu0
      %5826 = vmatprep.subr.mxu0 0.0
      %v5827 = vand.u32 %v247, 4294901760
      %5828 = vmatpush1.msra.mxu0 %v5827
      %5829 = vmatprep.subr.mxu0 0.0
      %v5830 = vand.u32 %v248, 4294901760
      %5831 = vmatpush1.msra.mxu0 %v5830
      %5832 = vmatprep.subr.mxu0 0.0
      %5833 = vmatpush1.msra.mxu0 0.0
      %5834 = vmatprep.subr.mxu0 0.0
      %5835 = vmatpush1.msra.mxu0 0.0
      %5836 = vmatprep.subr.mxu0 0.0
      %5837 = vmatpush1.msra.mxu0 0.0
      %5838 = vmatprep.subr.mxu0 0.0
      %5839 = vmatpush1.msra.mxu0 0.0
      %5840 = vmatprep.subr.mxu0 0.0
      %5841 = vmatpush1.msra.mxu0 0.0
      %5842 = vmatprep.subr.mxu0 0.0
      %5843 = vmatpush1.msra.mxu0 0.0
      %5844 = vmatprep.subr.mxu0 0.0
      %5845 = vmatpush1.msra.mxu0 0.0
      %5846 = vmatprep.subr.mxu0 0.0
      %5847 = vmatpush1.msra.mxu0 0.0
      %5848 = vmatprep.subr.mxu0 0.0
      %5849 = vmatpush1.msra.mxu0 0.0
      %5850 = vmatprep.subr.mxu0 0.0
      %5851 = vmatpush1.msra.mxu0 0.0
      %5852 = vmatprep.subr.mxu0 0.0
      %5853 = vmatpush1.msra.mxu0 0.0
      %5854 = vmatprep.subr.mxu0 0.0
      %5855 = vmatpush1.msra.mxu0 0.0
      %5856 = vmatprep.subr.mxu0 0.0
      %5857 = vmatpush1.msra.mxu0 0.0
      %5858 = vmatprep.subr.mxu0 0.0
      %5859 = vmatpush1.msra.mxu0 0.0
      %5860 = vmatprep.subr.mxu0 0.0
      %5861 = vmatpush1.msra.mxu0 0.0
      %5862 = vmatprep.subr.mxu0 0.0
      %5863 = vmatpush1.msra.mxu0 0.0
      %5864 = vmatprep.subr.mxu0 0.0
      %5865 = vmatpush1.msra.mxu0 0.0
      %5866 = vmatprep.subr.mxu0 0.0
      %5867 = vmatpush1.msra.mxu0 0.0
      %5868 = vmatprep.subr.mxu0 0.0
      %5869 = vmatpush1.msra.mxu0 0.0
      %5870 = vmatprep.subr.mxu0 0.0
      %5871 = vmatpush1.msra.mxu0 0.0
      %5872 = vmatprep.subr.mxu0 0.0
      %5873 = vmatpush1.msra.mxu0 0.0
      %5874 = vmatprep.subr.mxu0 0.0
      %5875 = vmatpush1.msra.mxu0 0.0
      %5876 = vmatprep.subr.mxu0 0.0
      %5877 = vmatpush1.msra.mxu0 0.0
      %5878 = vmatprep.subr.mxu0 0.0
      %5879 = vmatpush1.msra.mxu0 0.0
      %5880 = vmatprep.subr.mxu0 0.0
      %5881 = vmatpush1.msra.mxu0 0.0
      %5882 = vmatprep.subr.mxu0 0.0
      %5883 = vmatpush1.msra.mxu0 0.0
      %5884 = vmatprep.subr.mxu0 0.0
      %5885 = vmatpush1.msra.mxu0 0.0
      %5886 = vmatprep.subr.mxu0 0.0
      %5887 = vmatpush1.msra.mxu0 0.0
      %5888 = vmatprep.subr.mxu0 0.0
      %5889 = vmatpush1.msra.mxu0 0.0
      %5890 = vmatprep.subr.mxu0 0.0
      %5891 = vmatpush1.msra.mxu0 0.0
      %5892 = vmatprep.mubr.f32.mxu0 0.0
      %v5893 = vand.u32 %v5158, 4294901760
      %5894 = vmatmul.mubr.f32.gmra.mrb[0].mxu0 %v5893
      %v5895 = vpop.f32.mrb[0].mxu0
      %v5896 = vadd.f32 %v5781, %v5895
      %v5897 = vpop.f32.mrb[0].mxu0
      %5898 = vmatprep.mubr.f32.mxu0 0.0
      %v5899 = vand.u32 %v5161, 4294901760
      %5900 = vmatmul.mubr.f32.gmra.mrb[0].mxu0 %v5899
      %v5901 = vpop.f32.mrb[0].mxu0
      %v5902 = vadd.f32 %v5787, %v5901
      %v5903 = vpop.f32.mrb[0].mxu0
      %5904 = vmatprep.mubr.f32.mxu0 0.0
      %v5905 = vand.u32 %v5164, 4294901760
      %5906 = vmatmul.mubr.f32.gmra.mrb[0].mxu0 %v5905
      %v5907 = vpop.f32.mrb[0].mxu0
      %v5908 = vadd.f32 %v5793, %v5907
      %v5909 = vpop.f32.mrb[0].mxu0
      %5910 = vmatprep.mubr.f32.mxu0 0.0
      %v5911 = vand.u32 %v5167, 4294901760
      %5912 = vmatmul.mubr.f32.gmra.mrb[0].mxu0 %v5911
      %v5913 = vpop.f32.mrb[0].mxu0
      %v5914 = vadd.f32 %v5799, %v5913
      %v5915 = vpop.f32.mrb[0].mxu0
      %5916 = vmatprep.mubr.f32.mxu0 0.0
      %v5917 = vand.u32 %v5170, 4294901760
      %5918 = vmatmul.mubr.f32.gmra.mrb[0].mxu0 %v5917
      %v5919 = vpop.f32.mrb[0].mxu0
      %v5920 = vadd.f32 %v5805, %v5919
      %v5921 = vpop.f32.mrb[0].mxu0
      %5922 = vmatprep.mubr.f32.mxu0 0.0
      %v5923 = vand.u32 %v5173, 4294901760
      %5924 = vmatmul.mubr.f32.gmra.mrb[0].mxu0 %v5923
      %v5925 = vpop.f32.mrb[0].mxu0
      %v5926 = vadd.f32 %v5811, %v5925
      %v5927 = vpop.f32.mrb[0].mxu0
      %5928 = vmatprep.mubr.f32.mxu0 0.0
      %v5929 = vand.u32 %v5176, 4294901760
      %5930 = vmatmul.mubr.f32.gmra.mrb[0].mxu0 %v5929
      %v5931 = vpop.f32.mrb[0].mxu0
      %v5932 = vadd.f32 %v5817, %v5931
      %v5933 = vpop.f32.mrb[0].mxu0
      %5934 = vmatprep.mubr.f32.mxu0 0.0
      %v5935 = vand.u32 %v5179, 4294901760
      %5936 = vmatmul.mubr.f32.gmra.mrb[0].mxu0 %v5935
      %v5937 = vpop.f32.mrb[0].mxu0
      %v5938 = vadd.f32 %v5823, %v5937
      %v5939 = vpop.f32.mrb[0].mxu0
      %5940 = vdwg.mxu0
      %5941 = vmatprep.subr.mxu0 0.0
      %v5942 = vand.u32 %v5896, 4294901760
      %5943 = vmatpush1.msra.mxu0 %v5942
      %5944 = vmatprep.subr.mxu0 0.0
      %v5945 = vand.u32 %v5902, 4294901760
      %5946 = vmatpush1.msra.mxu0 %v5945
      %5947 = vmatprep.subr.mxu0 0.0
      %v5948 = vand.u32 %v5908, 4294901760
      %5949 = vmatpush1.msra.mxu0 %v5948
      %5950 = vmatprep.subr.mxu0 0.0
      %v5951 = vand.u32 %v5914, 4294901760
      %5952 = vmatpush1.msra.mxu0 %v5951
      %5953 = vmatprep.subr.mxu0 0.0
      %v5954 = vand.u32 %v5920, 4294901760
      %5955 = vmatpush1.msra.mxu0 %v5954
      %5956 = vmatprep.subr.mxu0 0.0
      %v5957 = vand.u32 %v5926, 4294901760
      %5958 = vmatpush1.msra.mxu0 %v5957
      %5959 = vmatprep.subr.mxu0 0.0
      %v5960 = vand.u32 %v5932, 4294901760
      %5961 = vmatpush1.msra.mxu0 %v5960
      %5962 = vmatprep.subr.mxu0 0.0
      %v5963 = vand.u32 %v5938, 4294901760
      %5964 = vmatpush1.msra.mxu0 %v5963
      %5965 = vmatprep.subr.mxu0 0.0
      %5966 = vmatpush1.msra.mxu0 0.0
      %5967 = vmatprep.subr.mxu0 0.0
      %5968 = vmatpush1.msra.mxu0 0.0
      %5969 = vmatprep.subr.mxu0 0.0
      %5970 = vmatpush1.msra.mxu0 0.0
      %5971 = vmatprep.subr.mxu0 0.0
      %5972 = vmatpush1.msra.mxu0 0.0
      %5973 = vmatprep.subr.mxu0 0.0
      %5974 = vmatpush1.msra.mxu0 0.0
      %5975 = vmatprep.subr.mxu0 0.0
      %5976 = vmatpush1.msra.mxu0 0.0
      %5977 = vmatprep.subr.mxu0 0.0
      %5978 = vmatpush1.msra.mxu0 0.0
      %5979 = vmatprep.subr.mxu0 0.0
      %5980 = vmatpush1.msra.mxu0 0.0
      %5981 = vmatprep.subr.mxu0 0.0
      %5982 = vmatpush1.msra.mxu0 0.0
      %5983 = vmatprep.subr.mxu0 0.0
      %5984 = vmatpush1.msra.mxu0 0.0
      %5985 = vmatprep.subr.mxu0 0.0
      %5986 = vmatpush1.msra.mxu0 0.0
      %5987 = vmatprep.subr.mxu0 0.0
      %5988 = vmatpush1.msra.mxu0 0.0
      %5989 = vmatprep.subr.mxu0 0.0
      %5990 = vmatpush1.msra.mxu0 0.0
      %5991 = vmatprep.subr.mxu0 0.0
      %5992 = vmatpush1.msra.mxu0 0.0
      %5993 = vmatprep.subr.mxu0 0.0
      %5994 = vmatpush1.msra.mxu0 0.0
      %5995 = vmatprep.subr.mxu0 0.0
      %5996 = vmatpush1.msra.mxu0 0.0
      %5997 = vmatprep.subr.mxu0 0.0
      %5998 = vmatpush1.msra.mxu0 0.0
      %5999 = vmatprep.subr.mxu0 0.0
      %6000 = vmatpush1.msra.mxu0 0.0
      %6001 = vmatprep.subr.mxu0 0.0
      %6002 = vmatpush1.msra.mxu0 0.0
      %6003 = vmatprep.subr.mxu0 0.0
      %6004 = vmatpush1.msra.mxu0 0.0
      %6005 = vmatprep.subr.mxu0 0.0
      %6006 = vmatpush1.msra.mxu0 0.0
      %6007 = vmatprep.subr.mxu0 0.0
      %6008 = vmatpush1.msra.mxu0 0.0
      %6009 = vmatprep.subr.mxu0 0.0
      %6010 = vmatpush1.msra.mxu0 0.0
      %6011 = vmatprep.subr.mxu0 0.0
      %6012 = vmatpush1.msra.mxu0 0.0
      %6013 = vmatprep.mubr.f32.mxu0 0.0
      %v6014 = vand.u32 %v1036, 4294901760
      %v6015 = vsub.f32 %v1036, %v6014
      %v6016 = vand.u32 %v6015, 4294901760
      %v6017 = vsub.f32 %v6015, %v6016
      %v6018 = vand.u32 %v6017, 4294901760
      %6019 = vmatmul.mubr.f32.gmra.mrb[0].mxu0 %v6018
      %v6020 = vpop.f32.mrb[0].mxu0
      %v6021 = vadd.f32 0.0, %v6020
      %v6022 = vpop.f32.mrb[0].mxu0
      %6023 = vmatprep.mubr.f32.mxu0 0.0
      %v6024 = vand.u32 %v1039, 4294901760
      %v6025 = vsub.f32 %v1039, %v6024
      %v6026 = vand.u32 %v6025, 4294901760
      %v6027 = vsub.f32 %v6025, %v6026
      %v6028 = vand.u32 %v6027, 4294901760
      %6029 = vmatmul.mubr.f32.gmra.mrb[0].mxu0 %v6028
      %v6030 = vpop.f32.mrb[0].mxu0
      %v6031 = vadd.f32 0.0, %v6030
      %v6032 = vpop.f32.mrb[0].mxu0
      %6033 = vmatprep.mubr.f32.mxu0 0.0
      %v6034 = vand.u32 %v1042, 4294901760
      %v6035 = vsub.f32 %v1042, %v6034
      %v6036 = vand.u32 %v6035, 4294901760
      %v6037 = vsub.f32 %v6035, %v6036
      %v6038 = vand.u32 %v6037, 4294901760
      %6039 = vmatmul.mubr.f32.gmra.mrb[0].mxu0 %v6038
      %v6040 = vpop.f32.mrb[0].mxu0
      %v6041 = vadd.f32 0.0, %v6040
      %v6042 = vpop.f32.mrb[0].mxu0
      %6043 = vmatprep.mubr.f32.mxu0 0.0
      %v6044 = vand.u32 %v1045, 4294901760
      %v6045 = vsub.f32 %v1045, %v6044
      %v6046 = vand.u32 %v6045, 4294901760
      %v6047 = vsub.f32 %v6045, %v6046
      %v6048 = vand.u32 %v6047, 4294901760
      %6049 = vmatmul.mubr.f32.gmra.mrb[0].mxu0 %v6048
      %v6050 = vpop.f32.mrb[0].mxu0
      %v6051 = vadd.f32 0.0, %v6050
      %v6052 = vpop.f32.mrb[0].mxu0
      %6053 = vmatprep.mubr.f32.mxu0 0.0
      %v6054 = vand.u32 %v1048, 4294901760
      %v6055 = vsub.f32 %v1048, %v6054
      %v6056 = vand.u32 %v6055, 4294901760
      %v6057 = vsub.f32 %v6055, %v6056
      %v6058 = vand.u32 %v6057, 4294901760
      %6059 = vmatmul.mubr.f32.gmra.mrb[0].mxu0 %v6058
      %v6060 = vpop.f32.mrb[0].mxu0
      %v6061 = vadd.f32 0.0, %v6060
      %v6062 = vpop.f32.mrb[0].mxu0
      %6063 = vmatprep.mubr.f32.mxu0 0.0
      %v6064 = vand.u32 %v1051, 4294901760
      %v6065 = vsub.f32 %v1051, %v6064
      %v6066 = vand.u32 %v6065, 4294901760
      %v6067 = vsub.f32 %v6065, %v6066
      %v6068 = vand.u32 %v6067, 4294901760
      %6069 = vmatmul.mubr.f32.gmra.mrb[0].mxu0 %v6068
      %v6070 = vpop.f32.mrb[0].mxu0
      %v6071 = vadd.f32 0.0, %v6070
      %v6072 = vpop.f32.mrb[0].mxu0
      %6073 = vmatprep.mubr.f32.mxu0 0.0
      %v6074 = vand.u32 %v1054, 4294901760
      %v6075 = vsub.f32 %v1054, %v6074
      %v6076 = vand.u32 %v6075, 4294901760
      %v6077 = vsub.f32 %v6075, %v6076
      %v6078 = vand.u32 %v6077, 4294901760
      %6079 = vmatmul.mubr.f32.gmra.mrb[0].mxu0 %v6078
      %v6080 = vpop.f32.mrb[0].mxu0
      %v6081 = vadd.f32 0.0, %v6080
      %v6082 = vpop.f32.mrb[0].mxu0
      %6083 = vmatprep.mubr.f32.mxu0 0.0
      %v6084 = vand.u32 %v1057, 4294901760
      %v6085 = vsub.f32 %v1057, %v6084
      %v6086 = vand.u32 %v6085, 4294901760
      %v6087 = vsub.f32 %v6085, %v6086
      %v6088 = vand.u32 %v6087, 4294901760
      %6089 = vmatmul.mubr.f32.gmra.mrb[0].mxu0 %v6088
      %v6090 = vpop.f32.mrb[0].mxu0
      %v6091 = vadd.f32 0.0, %v6090
      %v6092 = vpop.f32.mrb[0].mxu0
      %6093 = vdwg.mxu0
      %6094 = vmatprep.subr.mxu0 0.0
      %v6095 = vand.u32 %v5896, 4294901760
      %v6096 = vsub.f32 %v5896, %v6095
      %v6097 = vand.u32 %v6096, 4294901760
      %v6098 = vsub.f32 %v6096, %v6097
      %v6099 = vand.u32 %v6098, 4294901760
      %6100 = vmatpush1.msra.mxu0 %v6099
      %6101 = vmatprep.subr.mxu0 0.0
      %v6102 = vand.u32 %v5902, 4294901760
      %v6103 = vsub.f32 %v5902, %v6102
      %v6104 = vand.u32 %v6103, 4294901760
      %v6105 = vsub.f32 %v6103, %v6104
      %v6106 = vand.u32 %v6105, 4294901760
      %6107 = vmatpush1.msra.mxu0 %v6106
      %6108 = vmatprep.subr.mxu0 0.0
      %v6109 = vand.u32 %v5908, 4294901760
      %v6110 = vsub.f32 %v5908, %v6109
      %v6111 = vand.u32 %v6110, 4294901760
      %v6112 = vsub.f32 %v6110, %v6111
      %v6113 = vand.u32 %v6112, 4294901760
      %6114 = vmatpush1.msra.mxu0 %v6113
      %6115 = vmatprep.subr.mxu0 0.0
      %v6116 = vand.u32 %v5914, 4294901760
      %v6117 = vsub.f32 %v5914, %v6116
      %v6118 = vand.u32 %v6117, 4294901760
      %v6119 = vsub.f32 %v6117, %v6118
      %v6120 = vand.u32 %v6119, 4294901760
      %6121 = vmatpush1.msra.mxu0 %v6120
      %6122 = vmatprep.subr.mxu0 0.0
      %v6123 = vand.u32 %v5920, 4294901760
      %v6124 = vsub.f32 %v5920, %v6123
      %v6125 = vand.u32 %v6124, 4294901760
      %v6126 = vsub.f32 %v6124, %v6125
      %v6127 = vand.u32 %v6126, 4294901760
      %6128 = vmatpush1.msra.mxu0 %v6127
      %6129 = vmatprep.subr.mxu0 0.0
      %v6130 = vand.u32 %v5926, 4294901760
      %v6131 = vsub.f32 %v5926, %v6130
      %v6132 = vand.u32 %v6131, 4294901760
      %v6133 = vsub.f32 %v6131, %v6132
      %v6134 = vand.u32 %v6133, 4294901760
      %6135 = vmatpush1.msra.mxu0 %v6134
      %6136 = vmatprep.subr.mxu0 0.0
      %v6137 = vand.u32 %v5932, 4294901760
      %v6138 = vsub.f32 %v5932, %v6137
      %v6139 = vand.u32 %v6138, 4294901760
      %v6140 = vsub.f32 %v6138, %v6139
      %v6141 = vand.u32 %v6140, 4294901760
      %6142 = vmatpush1.msra.mxu0 %v6141
      %6143 = vmatprep.subr.mxu0 0.0
      %v6144 = vand.u32 %v5938, 4294901760
      %v6145 = vsub.f32 %v5938, %v6144
      %v6146 = vand.u32 %v6145, 4294901760
      %v6147 = vsub.f32 %v6145, %v6146
      %v6148 = vand.u32 %v6147, 4294901760
      %6149 = vmatpush1.msra.mxu0 %v6148
      %6150 = vmatprep.subr.mxu0 0.0
      %6151 = vmatpush1.msra.mxu0 0.0
      %6152 = vmatprep.subr.mxu0 0.0
      %6153 = vmatpush1.msra.mxu0 0.0
      %6154 = vmatprep.subr.mxu0 0.0
      %6155 = vmatpush1.msra.mxu0 0.0
      %6156 = vmatprep.subr.mxu0 0.0
      %6157 = vmatpush1.msra.mxu0 0.0
      %6158 = vmatprep.subr.mxu0 0.0
      %6159 = vmatpush1.msra.mxu0 0.0
      %6160 = vmatprep.subr.mxu0 0.0
      %6161 = vmatpush1.msra.mxu0 0.0
      %6162 = vmatprep.subr.mxu0 0.0
      %6163 = vmatpush1.msra.mxu0 0.0
      %6164 = vmatprep.subr.mxu0 0.0
      %6165 = vmatpush1.msra.mxu0 0.0
      %6166 = vmatprep.subr.mxu0 0.0
      %6167 = vmatpush1.msra.mxu0 0.0
      %6168 = vmatprep.subr.mxu0 0.0
      %6169 = vmatpush1.msra.mxu0 0.0
      %6170 = vmatprep.subr.mxu0 0.0
      %6171 = vmatpush1.msra.mxu0 0.0
      %6172 = vmatprep.subr.mxu0 0.0
      %6173 = vmatpush1.msra.mxu0 0.0
      %6174 = vmatprep.subr.mxu0 0.0
      %6175 = vmatpush1.msra.mxu0 0.0
      %6176 = vmatprep.subr.mxu0 0.0
      %6177 = vmatpush1.msra.mxu0 0.0
      %6178 = vmatprep.subr.mxu0 0.0
      %6179 = vmatpush1.msra.mxu0 0.0
      %6180 = vmatprep.subr.mxu0 0.0
      %6181 = vmatpush1.msra.mxu0 0.0
      %6182 = vmatprep.subr.mxu0 0.0
      %6183 = vmatpush1.msra.mxu0 0.0
      %6184 = vmatprep.subr.mxu0 0.0
      %6185 = vmatpush1.msra.mxu0 0.0
      %6186 = vmatprep.subr.mxu0 0.0
      %6187 = vmatpush1.msra.mxu0 0.0
      %6188 = vmatprep.subr.mxu0 0.0
      %6189 = vmatpush1.msra.mxu0 0.0
      %6190 = vmatprep.subr.mxu0 0.0
      %6191 = vmatpush1.msra.mxu0 0.0
      %6192 = vmatprep.subr.mxu0 0.0
      %6193 = vmatpush1.msra.mxu0 0.0
      %6194 = vmatprep.subr.mxu0 0.0
      %6195 = vmatpush1.msra.mxu0 0.0
      %6196 = vmatprep.subr.mxu0 0.0
      %6197 = vmatpush1.msra.mxu0 0.0
      %6198 = vmatprep.mubr.f32.mxu0 0.0
      %v6199 = vand.u32 %v1036, 4294901760
      %6200 = vmatmul.mubr.f32.gmra.mrb[0].mxu0 %v6199
      %v6201 = vpop.f32.mrb[0].mxu0
      %v6202 = vadd.f32 %v6021, %v6201
      %v6203 = vpop.f32.mrb[0].mxu0
      %6204 = vmatprep.mubr.f32.mxu0 0.0
      %v6205 = vand.u32 %v1039, 4294901760
      %6206 = vmatmul.mubr.f32.gmra.mrb[0].mxu0 %v6205
      %v6207 = vpop.f32.mrb[0].mxu0
      %v6208 = vadd.f32 %v6031, %v6207
      %v6209 = vpop.f32.mrb[0].mxu0
      %6210 = vmatprep.mubr.f32.mxu0 0.0
      %v6211 = vand.u32 %v1042, 4294901760
      %6212 = vmatmul.mubr.f32.gmra.mrb[0].mxu0 %v6211
      %v6213 = vpop.f32.mrb[0].mxu0
      %v6214 = vadd.f32 %v6041, %v6213
      %v6215 = vpop.f32.mrb[0].mxu0
      %6216 = vmatprep.mubr.f32.mxu0 0.0
      %v6217 = vand.u32 %v1045, 4294901760
      %6218 = vmatmul.mubr.f32.gmra.mrb[0].mxu0 %v6217
      %v6219 = vpop.f32.mrb[0].mxu0
      %v6220 = vadd.f32 %v6051, %v6219
      %v6221 = vpop.f32.mrb[0].mxu0
      %6222 = vmatprep.mubr.f32.mxu0 0.0
      %v6223 = vand.u32 %v1048, 4294901760
      %6224 = vmatmul.mubr.f32.gmra.mrb[0].mxu0 %v6223
      %v6225 = vpop.f32.mrb[0].mxu0
      %v6226 = vadd.f32 %v6061, %v6225
      %v6227 = vpop.f32.mrb[0].mxu0
      %6228 = vmatprep.mubr.f32.mxu0 0.0
      %v6229 = vand.u32 %v1051, 4294901760
      %6230 = vmatmul.mubr.f32.gmra.mrb[0].mxu0 %v6229
      %v6231 = vpop.f32.mrb[0].mxu0
      %v6232 = vadd.f32 %v6071, %v6231
      %v6233 = vpop.f32.mrb[0].mxu0
      %6234 = vmatprep.mubr.f32.mxu0 0.0
      %v6235 = vand.u32 %v1054, 4294901760
      %6236 = vmatmul.mubr.f32.gmra.mrb[0].mxu0 %v6235
      %v6237 = vpop.f32.mrb[0].mxu0
      %v6238 = vadd.f32 %v6081, %v6237
      %v6239 = vpop.f32.mrb[0].mxu0
      %6240 = vmatprep.mubr.f32.mxu0 0.0
      %v6241 = vand.u32 %v1057, 4294901760
      %6242 = vmatmul.mubr.f32.gmra.mrb[0].mxu0 %v6241
      %v6243 = vpop.f32.mrb[0].mxu0
      %v6244 = vadd.f32 %v6091, %v6243
      %v6245 = vpop.f32.mrb[0].mxu0
      %6246 = vdwg.mxu0
      %6247 = vmatprep.subr.mxu0 0.0
      %v6248 = vand.u32 %v5896, 4294901760
      %v6249 = vsub.f32 %v5896, %v6248
      %6250 = vmatpush1.msra.mxu0 %v6249
      %6251 = vmatprep.subr.mxu0 0.0
      %v6252 = vand.u32 %v5902, 4294901760
      %v6253 = vsub.f32 %v5902, %v6252
      %6254 = vmatpush1.msra.mxu0 %v6253
      %6255 = vmatprep.subr.mxu0 0.0
      %v6256 = vand.u32 %v5908, 4294901760
      %v6257 = vsub.f32 %v5908, %v6256
      %6258 = vmatpush1.msra.mxu0 %v6257
      %6259 = vmatprep.subr.mxu0 0.0
      %v6260 = vand.u32 %v5914, 4294901760
      %v6261 = vsub.f32 %v5914, %v6260
      %6262 = vmatpush1.msra.mxu0 %v6261
      %6263 = vmatprep.subr.mxu0 0.0
      %v6264 = vand.u32 %v5920, 4294901760
      %v6265 = vsub.f32 %v5920, %v6264
      %6266 = vmatpush1.msra.mxu0 %v6265
      %6267 = vmatprep.subr.mxu0 0.0
      %v6268 = vand.u32 %v5926, 4294901760
      %v6269 = vsub.f32 %v5926, %v6268
      %6270 = vmatpush1.msra.mxu0 %v6269
      %6271 = vmatprep.subr.mxu0 0.0
      %v6272 = vand.u32 %v5932, 4294901760
      %v6273 = vsub.f32 %v5932, %v6272
      %6274 = vmatpush1.msra.mxu0 %v6273
      %6275 = vmatprep.subr.mxu0 0.0
      %v6276 = vand.u32 %v5938, 4294901760
      %v6277 = vsub.f32 %v5938, %v6276
      %6278 = vmatpush1.msra.mxu0 %v6277
      %6279 = vmatprep.subr.mxu0 0.0
      %6280 = vmatpush1.msra.mxu0 0.0
      %6281 = vmatprep.subr.mxu0 0.0
      %6282 = vmatpush1.msra.mxu0 0.0
      %6283 = vmatprep.subr.mxu0 0.0
      %6284 = vmatpush1.msra.mxu0 0.0
      %6285 = vmatprep.subr.mxu0 0.0
      %6286 = vmatpush1.msra.mxu0 0.0
      %6287 = vmatprep.subr.mxu0 0.0
      %6288 = vmatpush1.msra.mxu0 0.0
      %6289 = vmatprep.subr.mxu0 0.0
      %6290 = vmatpush1.msra.mxu0 0.0
      %6291 = vmatprep.subr.mxu0 0.0
      %6292 = vmatpush1.msra.mxu0 0.0
      %6293 = vmatprep.subr.mxu0 0.0
      %6294 = vmatpush1.msra.mxu0 0.0
      %6295 = vmatprep.subr.mxu0 0.0
      %6296 = vmatpush1.msra.mxu0 0.0
      %6297 = vmatprep.subr.mxu0 0.0
      %6298 = vmatpush1.msra.mxu0 0.0
      %6299 = vmatprep.subr.mxu0 0.0
      %6300 = vmatpush1.msra.mxu0 0.0
      %6301 = vmatprep.subr.mxu0 0.0
      %6302 = vmatpush1.msra.mxu0 0.0
      %6303 = vmatprep.subr.mxu0 0.0
      %6304 = vmatpush1.msra.mxu0 0.0
      %6305 = vmatprep.subr.mxu0 0.0
      %6306 = vmatpush1.msra.mxu0 0.0
      %6307 = vmatprep.subr.mxu0 0.0
      %6308 = vmatpush1.msra.mxu0 0.0
      %6309 = vmatprep.subr.mxu0 0.0
      %6310 = vmatpush1.msra.mxu0 0.0
      %6311 = vmatprep.subr.mxu0 0.0
      %6312 = vmatpush1.msra.mxu0 0.0
      %6313 = vmatprep.subr.mxu0 0.0
      %6314 = vmatpush1.msra.mxu0 0.0
      %6315 = vmatprep.subr.mxu0 0.0
      %6316 = vmatpush1.msra.mxu0 0.0
      %6317 = vmatprep.subr.mxu0 0.0
      %6318 = vmatpush1.msra.mxu0 0.0
      %6319 = vmatprep.subr.mxu0 0.0
      %6320 = vmatpush1.msra.mxu0 0.0
      %6321 = vmatprep.subr.mxu0 0.0
      %6322 = vmatpush1.msra.mxu0 0.0
      %6323 = vmatprep.subr.mxu0 0.0
      %6324 = vmatpush1.msra.mxu0 0.0
      %6325 = vmatprep.subr.mxu0 0.0
      %6326 = vmatpush1.msra.mxu0 0.0
      %6327 = vmatprep.mubr.f32.mxu0 0.0
      %v6328 = vand.u32 %v1036, 4294901760
      %v6329 = vsub.f32 %v1036, %v6328
      %6330 = vmatmul.mubr.f32.gmra.mrb[0].mxu0 %v6329
      %v6331 = vpop.f32.mrb[0].mxu0
      %v6332 = vadd.f32 %v6202, %v6331
      %v6333 = vpop.f32.mrb[0].mxu0
      %6334 = vmatprep.mubr.f32.mxu0 0.0
      %v6335 = vand.u32 %v1039, 4294901760
      %v6336 = vsub.f32 %v1039, %v6335
      %6337 = vmatmul.mubr.f32.gmra.mrb[0].mxu0 %v6336
      %v6338 = vpop.f32.mrb[0].mxu0
      %v6339 = vadd.f32 %v6208, %v6338
      %v6340 = vpop.f32.mrb[0].mxu0
      %6341 = vmatprep.mubr.f32.mxu0 0.0
      %v6342 = vand.u32 %v1042, 4294901760
      %v6343 = vsub.f32 %v1042, %v6342
      %6344 = vmatmul.mubr.f32.gmra.mrb[0].mxu0 %v6343
      %v6345 = vpop.f32.mrb[0].mxu0
      %v6346 = vadd.f32 %v6214, %v6345
      %v6347 = vpop.f32.mrb[0].mxu0
      %6348 = vmatprep.mubr.f32.mxu0 0.0
      %v6349 = vand.u32 %v1045, 4294901760
      %v6350 = vsub.f32 %v1045, %v6349
      %6351 = vmatmul.mubr.f32.gmra.mrb[0].mxu0 %v6350
      %v6352 = vpop.f32.mrb[0].mxu0
      %v6353 = vadd.f32 %v6220, %v6352
      %v6354 = vpop.f32.mrb[0].mxu0
      %6355 = vmatprep.mubr.f32.mxu0 0.0
      %v6356 = vand.u32 %v1048, 4294901760
      %v6357 = vsub.f32 %v1048, %v6356
      %6358 = vmatmul.mubr.f32.gmra.mrb[0].mxu0 %v6357
      %v6359 = vpop.f32.mrb[0].mxu0
      %v6360 = vadd.f32 %v6226, %v6359
      %v6361 = vpop.f32.mrb[0].mxu0
      %6362 = vmatprep.mubr.f32.mxu0 0.0
      %v6363 = vand.u32 %v1051, 4294901760
      %v6364 = vsub.f32 %v1051, %v6363
      %6365 = vmatmul.mubr.f32.gmra.mrb[0].mxu0 %v6364
      %v6366 = vpop.f32.mrb[0].mxu0
      %v6367 = vadd.f32 %v6232, %v6366
      %v6368 = vpop.f32.mrb[0].mxu0
      %6369 = vmatprep.mubr.f32.mxu0 0.0
      %v6370 = vand.u32 %v1054, 4294901760
      %v6371 = vsub.f32 %v1054, %v6370
      %6372 = vmatmul.mubr.f32.gmra.mrb[0].mxu0 %v6371
      %v6373 = vpop.f32.mrb[0].mxu0
      %v6374 = vadd.f32 %v6238, %v6373
      %v6375 = vpop.f32.mrb[0].mxu0
      %6376 = vmatprep.mubr.f32.mxu0 0.0
      %v6377 = vand.u32 %v1057, 4294901760
      %v6378 = vsub.f32 %v1057, %v6377
      %6379 = vmatmul.mubr.f32.gmra.mrb[0].mxu0 %v6378
      %v6380 = vpop.f32.mrb[0].mxu0
      %v6381 = vadd.f32 %v6244, %v6380
      %v6382 = vpop.f32.mrb[0].mxu0
      %6383 = vdwg.mxu0
      %6384 = vmatprep.subr.mxu0 0.0
      %v6385 = vand.u32 %v5896, 4294901760
      %6386 = vmatpush1.msra.mxu0 %v6385
      %6387 = vmatprep.subr.mxu0 0.0
      %v6388 = vand.u32 %v5902, 4294901760
      %6389 = vmatpush1.msra.mxu0 %v6388
      %6390 = vmatprep.subr.mxu0 0.0
      %v6391 = vand.u32 %v5908, 4294901760
      %6392 = vmatpush1.msra.mxu0 %v6391
      %6393 = vmatprep.subr.mxu0 0.0
      %v6394 = vand.u32 %v5914, 4294901760
      %6395 = vmatpush1.msra.mxu0 %v6394
      %6396 = vmatprep.subr.mxu0 0.0
      %v6397 = vand.u32 %v5920, 4294901760
      %6398 = vmatpush1.msra.mxu0 %v6397
      %6399 = vmatprep.subr.mxu0 0.0
      %v6400 = vand.u32 %v5926, 4294901760
      %6401 = vmatpush1.msra.mxu0 %v6400
      %6402 = vmatprep.subr.mxu0 0.0
      %v6403 = vand.u32 %v5932, 4294901760
      %6404 = vmatpush1.msra.mxu0 %v6403
      %6405 = vmatprep.subr.mxu0 0.0
      %v6406 = vand.u32 %v5938, 4294901760
      %6407 = vmatpush1.msra.mxu0 %v6406
      %6408 = vmatprep.subr.mxu0 0.0
      %6409 = vmatpush1.msra.mxu0 0.0
      %6410 = vmatprep.subr.mxu0 0.0
      %6411 = vmatpush1.msra.mxu0 0.0
      %6412 = vmatprep.subr.mxu0 0.0
      %6413 = vmatpush1.msra.mxu0 0.0
      %6414 = vmatprep.subr.mxu0 0.0
      %6415 = vmatpush1.msra.mxu0 0.0
      %6416 = vmatprep.subr.mxu0 0.0
      %6417 = vmatpush1.msra.mxu0 0.0
      %6418 = vmatprep.subr.mxu0 0.0
      %6419 = vmatpush1.msra.mxu0 0.0
      %6420 = vmatprep.subr.mxu0 0.0
      %6421 = vmatpush1.msra.mxu0 0.0
      %6422 = vmatprep.subr.mxu0 0.0
      %6423 = vmatpush1.msra.mxu0 0.0
      %6424 = vmatprep.subr.mxu0 0.0
      %6425 = vmatpush1.msra.mxu0 0.0
      %6426 = vmatprep.subr.mxu0 0.0
      %6427 = vmatpush1.msra.mxu0 0.0
      %6428 = vmatprep.subr.mxu0 0.0
      %6429 = vmatpush1.msra.mxu0 0.0
      %6430 = vmatprep.subr.mxu0 0.0
      %6431 = vmatpush1.msra.mxu0 0.0
      %6432 = vmatprep.subr.mxu0 0.0
      %6433 = vmatpush1.msra.mxu0 0.0
      %6434 = vmatprep.subr.mxu0 0.0
      %6435 = vmatpush1.msra.mxu0 0.0
      %6436 = vmatprep.subr.mxu0 0.0
      %6437 = vmatpush1.msra.mxu0 0.0
      %6438 = vmatprep.subr.mxu0 0.0
      %6439 = vmatpush1.msra.mxu0 0.0
      %6440 = vmatprep.subr.mxu0 0.0
      %6441 = vmatpush1.msra.mxu0 0.0
      %6442 = vmatprep.subr.mxu0 0.0
      %6443 = vmatpush1.msra.mxu0 0.0
      %6444 = vmatprep.subr.mxu0 0.0
      %6445 = vmatpush1.msra.mxu0 0.0
      %6446 = vmatprep.subr.mxu0 0.0
      %6447 = vmatpush1.msra.mxu0 0.0
      %6448 = vmatprep.subr.mxu0 0.0
      %6449 = vmatpush1.msra.mxu0 0.0
      %6450 = vmatprep.subr.mxu0 0.0
      %6451 = vmatpush1.msra.mxu0 0.0
      %6452 = vmatprep.subr.mxu0 0.0
      %6453 = vmatpush1.msra.mxu0 0.0
      %6454 = vmatprep.subr.mxu0 0.0
      %6455 = vmatpush1.msra.mxu0 0.0
      %6456 = vmatprep.mubr.f32.mxu0 0.0
      %v6457 = vand.u32 %v1036, 4294901760
      %v6458 = vsub.f32 %v1036, %v6457
      %v6459 = vand.u32 %v6458, 4294901760
      %6460 = vmatmul.mubr.f32.gmra.mrb[0].mxu0 %v6459
      %v6461 = vpop.f32.mrb[0].mxu0
      %v6462 = vadd.f32 %v6332, %v6461
      %v6463 = vpop.f32.mrb[0].mxu0
      %6464 = vmatprep.mubr.f32.mxu0 0.0
      %v6465 = vand.u32 %v1039, 4294901760
      %v6466 = vsub.f32 %v1039, %v6465
      %v6467 = vand.u32 %v6466, 4294901760
      %6468 = vmatmul.mubr.f32.gmra.mrb[0].mxu0 %v6467
      %v6469 = vpop.f32.mrb[0].mxu0
      %v6470 = vadd.f32 %v6339, %v6469
      %v6471 = vpop.f32.mrb[0].mxu0
      %6472 = vmatprep.mubr.f32.mxu0 0.0
      %v6473 = vand.u32 %v1042, 4294901760
      %v6474 = vsub.f32 %v1042, %v6473
      %v6475 = vand.u32 %v6474, 4294901760
      %6476 = vmatmul.mubr.f32.gmra.mrb[0].mxu0 %v6475
      %v6477 = vpop.f32.mrb[0].mxu0
      %v6478 = vadd.f32 %v6346, %v6477
      %v6479 = vpop.f32.mrb[0].mxu0
      %6480 = vmatprep.mubr.f32.mxu0 0.0
      %v6481 = vand.u32 %v1045, 4294901760
      %v6482 = vsub.f32 %v1045, %v6481
      %v6483 = vand.u32 %v6482, 4294901760
      %6484 = vmatmul.mubr.f32.gmra.mrb[0].mxu0 %v6483
      %v6485 = vpop.f32.mrb[0].mxu0
      %v6486 = vadd.f32 %v6353, %v6485
      %v6487 = vpop.f32.mrb[0].mxu0
      %6488 = vmatprep.mubr.f32.mxu0 0.0
      %v6489 = vand.u32 %v1048, 4294901760
      %v6490 = vsub.f32 %v1048, %v6489
      %v6491 = vand.u32 %v6490, 4294901760
      %6492 = vmatmul.mubr.f32.gmra.mrb[0].mxu0 %v6491
      %v6493 = vpop.f32.mrb[0].mxu0
      %v6494 = vadd.f32 %v6360, %v6493
      %v6495 = vpop.f32.mrb[0].mxu0
      %6496 = vmatprep.mubr.f32.mxu0 0.0
      %v6497 = vand.u32 %v1051, 4294901760
      %v6498 = vsub.f32 %v1051, %v6497
      %v6499 = vand.u32 %v6498, 4294901760
      %6500 = vmatmul.mubr.f32.gmra.mrb[0].mxu0 %v6499
      %v6501 = vpop.f32.mrb[0].mxu0
      %v6502 = vadd.f32 %v6367, %v6501
      %v6503 = vpop.f32.mrb[0].mxu0
      %6504 = vmatprep.mubr.f32.mxu0 0.0
      %v6505 = vand.u32 %v1054, 4294901760
      %v6506 = vsub.f32 %v1054, %v6505
      %v6507 = vand.u32 %v6506, 4294901760
      %6508 = vmatmul.mubr.f32.gmra.mrb[0].mxu0 %v6507
      %v6509 = vpop.f32.mrb[0].mxu0
      %v6510 = vadd.f32 %v6374, %v6509
      %v6511 = vpop.f32.mrb[0].mxu0
      %6512 = vmatprep.mubr.f32.mxu0 0.0
      %v6513 = vand.u32 %v1057, 4294901760
      %v6514 = vsub.f32 %v1057, %v6513
      %v6515 = vand.u32 %v6514, 4294901760
      %6516 = vmatmul.mubr.f32.gmra.mrb[0].mxu0 %v6515
      %v6517 = vpop.f32.mrb[0].mxu0
      %v6518 = vadd.f32 %v6381, %v6517
      %v6519 = vpop.f32.mrb[0].mxu0
      %6520 = vdwg.mxu0
      %6521 = vmatprep.subr.mxu0 0.0
      %v6522 = vand.u32 %v5896, 4294901760
      %v6523 = vsub.f32 %v5896, %v6522
      %v6524 = vand.u32 %v6523, 4294901760
      %6525 = vmatpush1.msra.mxu0 %v6524
      %6526 = vmatprep.subr.mxu0 0.0
      %v6527 = vand.u32 %v5902, 4294901760
      %v6528 = vsub.f32 %v5902, %v6527
      %v6529 = vand.u32 %v6528, 4294901760
      %6530 = vmatpush1.msra.mxu0 %v6529
      %6531 = vmatprep.subr.mxu0 0.0
      %v6532 = vand.u32 %v5908, 4294901760
      %v6533 = vsub.f32 %v5908, %v6532
      %v6534 = vand.u32 %v6533, 4294901760
      %6535 = vmatpush1.msra.mxu0 %v6534
      %6536 = vmatprep.subr.mxu0 0.0
      %v6537 = vand.u32 %v5914, 4294901760
      %v6538 = vsub.f32 %v5914, %v6537
      %v6539 = vand.u32 %v6538, 4294901760
      %6540 = vmatpush1.msra.mxu0 %v6539
      %6541 = vmatprep.subr.mxu0 0.0
      %v6542 = vand.u32 %v5920, 4294901760
      %v6543 = vsub.f32 %v5920, %v6542
      %v6544 = vand.u32 %v6543, 4294901760
      %6545 = vmatpush1.msra.mxu0 %v6544
      %6546 = vmatprep.subr.mxu0 0.0
      %v6547 = vand.u32 %v5926, 4294901760
      %v6548 = vsub.f32 %v5926, %v6547
      %v6549 = vand.u32 %v6548, 4294901760
      %6550 = vmatpush1.msra.mxu0 %v6549
      %6551 = vmatprep.subr.mxu0 0.0
      %v6552 = vand.u32 %v5932, 4294901760
      %v6553 = vsub.f32 %v5932, %v6552
      %v6554 = vand.u32 %v6553, 4294901760
      %6555 = vmatpush1.msra.mxu0 %v6554
      %6556 = vmatprep.subr.mxu0 0.0
      %v6557 = vand.u32 %v5938, 4294901760
      %v6558 = vsub.f32 %v5938, %v6557
      %v6559 = vand.u32 %v6558, 4294901760
      %6560 = vmatpush1.msra.mxu0 %v6559
      %6561 = vmatprep.subr.mxu0 0.0
      %6562 = vmatpush1.msra.mxu0 0.0
      %6563 = vmatprep.subr.mxu0 0.0
      %6564 = vmatpush1.msra.mxu0 0.0
      %6565 = vmatprep.subr.mxu0 0.0
      %6566 = vmatpush1.msra.mxu0 0.0
      %6567 = vmatprep.subr.mxu0 0.0
      %6568 = vmatpush1.msra.mxu0 0.0
      %6569 = vmatprep.subr.mxu0 0.0
      %6570 = vmatpush1.msra.mxu0 0.0
      %6571 = vmatprep.subr.mxu0 0.0
      %6572 = vmatpush1.msra.mxu0 0.0
      %6573 = vmatprep.subr.mxu0 0.0
      %6574 = vmatpush1.msra.mxu0 0.0
      %6575 = vmatprep.subr.mxu0 0.0
      %6576 = vmatpush1.msra.mxu0 0.0
      %6577 = vmatprep.subr.mxu0 0.0
      %6578 = vmatpush1.msra.mxu0 0.0
      %6579 = vmatprep.subr.mxu0 0.0
      %6580 = vmatpush1.msra.mxu0 0.0
      %6581 = vmatprep.subr.mxu0 0.0
      %6582 = vmatpush1.msra.mxu0 0.0
      %6583 = vmatprep.subr.mxu0 0.0
      %6584 = vmatpush1.msra.mxu0 0.0
      %6585 = vmatprep.subr.mxu0 0.0
      %6586 = vmatpush1.msra.mxu0 0.0
      %6587 = vmatprep.subr.mxu0 0.0
      %6588 = vmatpush1.msra.mxu0 0.0
      %6589 = vmatprep.subr.mxu0 0.0
      %6590 = vmatpush1.msra.mxu0 0.0
      %6591 = vmatprep.subr.mxu0 0.0
      %6592 = vmatpush1.msra.mxu0 0.0
      %6593 = vmatprep.subr.mxu0 0.0
      %6594 = vmatpush1.msra.mxu0 0.0
      %6595 = vmatprep.subr.mxu0 0.0
      %6596 = vmatpush1.msra.mxu0 0.0
      %6597 = vmatprep.subr.mxu0 0.0
      %6598 = vmatpush1.msra.mxu0 0.0
      %6599 = vmatprep.subr.mxu0 0.0
      %6600 = vmatpush1.msra.mxu0 0.0
      %6601 = vmatprep.subr.mxu0 0.0
      %6602 = vmatpush1.msra.mxu0 0.0
      %6603 = vmatprep.subr.mxu0 0.0
      %6604 = vmatpush1.msra.mxu0 0.0
      %6605 = vmatprep.subr.mxu0 0.0
      %6606 = vmatpush1.msra.mxu0 0.0
      %6607 = vmatprep.subr.mxu0 0.0
      %6608 = vmatpush1.msra.mxu0 0.0
      %6609 = vmatprep.mubr.f32.mxu0 0.0
      %v6610 = vand.u32 %v1036, 4294901760
      %6611 = vmatmul.mubr.f32.gmra.mrb[0].mxu0 %v6610
      %v6612 = vpop.f32.mrb[0].mxu0
      %v6613 = vadd.f32 %v6462, %v6612
      %v6614 = vpop.f32.mrb[0].mxu0
      %6615 = vmatprep.mubr.f32.mxu0 0.0
      %v6616 = vand.u32 %v1039, 4294901760
      %6617 = vmatmul.mubr.f32.gmra.mrb[0].mxu0 %v6616
      %v6618 = vpop.f32.mrb[0].mxu0
      %v6619 = vadd.f32 %v6470, %v6618
      %v6620 = vpop.f32.mrb[0].mxu0
      %6621 = vmatprep.mubr.f32.mxu0 0.0
      %v6622 = vand.u32 %v1042, 4294901760
      %6623 = vmatmul.mubr.f32.gmra.mrb[0].mxu0 %v6622
      %v6624 = vpop.f32.mrb[0].mxu0
      %v6625 = vadd.f32 %v6478, %v6624
      %v6626 = vpop.f32.mrb[0].mxu0
      %6627 = vmatprep.mubr.f32.mxu0 0.0
      %v6628 = vand.u32 %v1045, 4294901760
      %6629 = vmatmul.mubr.f32.gmra.mrb[0].mxu0 %v6628
      %v6630 = vpop.f32.mrb[0].mxu0
      %v6631 = vadd.f32 %v6486, %v6630
      %v6632 = vpop.f32.mrb[0].mxu0
      %6633 = vmatprep.mubr.f32.mxu0 0.0
      %v6634 = vand.u32 %v1048, 4294901760
      %6635 = vmatmul.mubr.f32.gmra.mrb[0].mxu0 %v6634
      %v6636 = vpop.f32.mrb[0].mxu0
      %v6637 = vadd.f32 %v6494, %v6636
      %v6638 = vpop.f32.mrb[0].mxu0
      %6639 = vmatprep.mubr.f32.mxu0 0.0
      %v6640 = vand.u32 %v1051, 4294901760
      %6641 = vmatmul.mubr.f32.gmra.mrb[0].mxu0 %v6640
      %v6642 = vpop.f32.mrb[0].mxu0
      %v6643 = vadd.f32 %v6502, %v6642
      %v6644 = vpop.f32.mrb[0].mxu0
      %6645 = vmatprep.mubr.f32.mxu0 0.0
      %v6646 = vand.u32 %v1054, 4294901760
      %6647 = vmatmul.mubr.f32.gmra.mrb[0].mxu0 %v6646
      %v6648 = vpop.f32.mrb[0].mxu0
      %v6649 = vadd.f32 %v6510, %v6648
      %v6650 = vpop.f32.mrb[0].mxu0
      %6651 = vmatprep.mubr.f32.mxu0 0.0
      %v6652 = vand.u32 %v1057, 4294901760
      %6653 = vmatmul.mubr.f32.gmra.mrb[0].mxu0 %v6652
      %v6654 = vpop.f32.mrb[0].mxu0
      %v6655 = vadd.f32 %v6518, %v6654
      %v6656 = vpop.f32.mrb[0].mxu0
      %6657 = vdwg.mxu0
      %6658 = vmatprep.subr.mxu0 0.0
      %v6659 = vand.u32 %v5896, 4294901760
      %6660 = vmatpush1.msra.mxu0 %v6659
      %6661 = vmatprep.subr.mxu0 0.0
      %v6662 = vand.u32 %v5902, 4294901760
      %6663 = vmatpush1.msra.mxu0 %v6662
      %6664 = vmatprep.subr.mxu0 0.0
      %v6665 = vand.u32 %v5908, 4294901760
      %6666 = vmatpush1.msra.mxu0 %v6665
      %6667 = vmatprep.subr.mxu0 0.0
      %v6668 = vand.u32 %v5914, 4294901760
      %6669 = vmatpush1.msra.mxu0 %v6668
      %6670 = vmatprep.subr.mxu0 0.0
      %v6671 = vand.u32 %v5920, 4294901760
      %6672 = vmatpush1.msra.mxu0 %v6671
      %6673 = vmatprep.subr.mxu0 0.0
      %v6674 = vand.u32 %v5926, 4294901760
      %6675 = vmatpush1.msra.mxu0 %v6674
      %6676 = vmatprep.subr.mxu0 0.0
      %v6677 = vand.u32 %v5932, 4294901760
      %6678 = vmatpush1.msra.mxu0 %v6677
      %6679 = vmatprep.subr.mxu0 0.0
      %v6680 = vand.u32 %v5938, 4294901760
      %6681 = vmatpush1.msra.mxu0 %v6680
      %6682 = vmatprep.subr.mxu0 0.0
      %6683 = vmatpush1.msra.mxu0 0.0
      %6684 = vmatprep.subr.mxu0 0.0
      %6685 = vmatpush1.msra.mxu0 0.0
      %6686 = vmatprep.subr.mxu0 0.0
      %6687 = vmatpush1.msra.mxu0 0.0
      %6688 = vmatprep.subr.mxu0 0.0
      %6689 = vmatpush1.msra.mxu0 0.0
      %6690 = vmatprep.subr.mxu0 0.0
      %6691 = vmatpush1.msra.mxu0 0.0
      %6692 = vmatprep.subr.mxu0 0.0
      %6693 = vmatpush1.msra.mxu0 0.0
      %6694 = vmatprep.subr.mxu0 0.0
      %6695 = vmatpush1.msra.mxu0 0.0
      %6696 = vmatprep.subr.mxu0 0.0
      %6697 = vmatpush1.msra.mxu0 0.0
      %6698 = vmatprep.subr.mxu0 0.0
      %6699 = vmatpush1.msra.mxu0 0.0
      %6700 = vmatprep.subr.mxu0 0.0
      %6701 = vmatpush1.msra.mxu0 0.0
      %6702 = vmatprep.subr.mxu0 0.0
      %6703 = vmatpush1.msra.mxu0 0.0
      %6704 = vmatprep.subr.mxu0 0.0
      %6705 = vmatpush1.msra.mxu0 0.0
      %6706 = vmatprep.subr.mxu0 0.0
      %6707 = vmatpush1.msra.mxu0 0.0
      %6708 = vmatprep.subr.mxu0 0.0
      %6709 = vmatpush1.msra.mxu0 0.0
      %6710 = vmatprep.subr.mxu0 0.0
      %6711 = vmatpush1.msra.mxu0 0.0
      %6712 = vmatprep.subr.mxu0 0.0
      %6713 = vmatpush1.msra.mxu0 0.0
      %6714 = vmatprep.subr.mxu0 0.0
      %6715 = vmatpush1.msra.mxu0 0.0
      %6716 = vmatprep.subr.mxu0 0.0
      %6717 = vmatpush1.msra.mxu0 0.0
      %6718 = vmatprep.subr.mxu0 0.0
      %6719 = vmatpush1.msra.mxu0 0.0
      %6720 = vmatprep.subr.mxu0 0.0
      %6721 = vmatpush1.msra.mxu0 0.0
      %6722 = vmatprep.subr.mxu0 0.0
      %6723 = vmatpush1.msra.mxu0 0.0
      %6724 = vmatprep.subr.mxu0 0.0
      %6725 = vmatpush1.msra.mxu0 0.0
      %6726 = vmatprep.subr.mxu0 0.0
      %6727 = vmatpush1.msra.mxu0 0.0
      %6728 = vmatprep.subr.mxu0 0.0
      %6729 = vmatpush1.msra.mxu0 0.0
      %6730 = vmatprep.mubr.f32.mxu0 0.0
      %v6731 = vand.u32 %v1036, 4294901760
      %6732 = vmatmul.mubr.f32.gmra.mrb[0].mxu0 %v6731
      %v6733 = vpop.f32.mrb[0].mxu0
      %v6734 = vadd.f32 %v6613, %v6733
      %v6735 = vpop.f32.mrb[0].mxu0
      %6736 = vmatprep.mubr.f32.mxu0 0.0
      %v6737 = vand.u32 %v1039, 4294901760
      %6738 = vmatmul.mubr.f32.gmra.mrb[0].mxu0 %v6737
      %v6739 = vpop.f32.mrb[0].mxu0
      %v6740 = vadd.f32 %v6619, %v6739
      %v6741 = vpop.f32.mrb[0].mxu0
      %6742 = vmatprep.mubr.f32.mxu0 0.0
      %v6743 = vand.u32 %v1042, 4294901760
      %6744 = vmatmul.mubr.f32.gmra.mrb[0].mxu0 %v6743
      %v6745 = vpop.f32.mrb[0].mxu0
      %v6746 = vadd.f32 %v6625, %v6745
      %v6747 = vpop.f32.mrb[0].mxu0
      %6748 = vmatprep.mubr.f32.mxu0 0.0
      %v6749 = vand.u32 %v1045, 4294901760
      %6750 = vmatmul.mubr.f32.gmra.mrb[0].mxu0 %v6749
      %v6751 = vpop.f32.mrb[0].mxu0
      %v6752 = vadd.f32 %v6631, %v6751
      %v6753 = vpop.f32.mrb[0].mxu0
      %6754 = vmatprep.mubr.f32.mxu0 0.0
      %v6755 = vand.u32 %v1048, 4294901760
      %6756 = vmatmul.mubr.f32.gmra.mrb[0].mxu0 %v6755
      %v6757 = vpop.f32.mrb[0].mxu0
      %v6758 = vadd.f32 %v6637, %v6757
      %v6759 = vpop.f32.mrb[0].mxu0
      %6760 = vmatprep.mubr.f32.mxu0 0.0
      %v6761 = vand.u32 %v1051, 4294901760
      %6762 = vmatmul.mubr.f32.gmra.mrb[0].mxu0 %v6761
      %v6763 = vpop.f32.mrb[0].mxu0
      %v6764 = vadd.f32 %v6643, %v6763
      %v6765 = vpop.f32.mrb[0].mxu0
      %6766 = vmatprep.mubr.f32.mxu0 0.0
      %v6767 = vand.u32 %v1054, 4294901760
      %6768 = vmatmul.mubr.f32.gmra.mrb[0].mxu0 %v6767
      %v6769 = vpop.f32.mrb[0].mxu0
      %v6770 = vadd.f32 %v6649, %v6769
      %v6771 = vpop.f32.mrb[0].mxu0
      %6772 = vmatprep.mubr.f32.mxu0 0.0
      %v6773 = vand.u32 %v1057, 4294901760
      %6774 = vmatmul.mubr.f32.gmra.mrb[0].mxu0 %v6773
      %v6775 = vpop.f32.mrb[0].mxu0
      %v6776 = vadd.f32 %v6655, %v6775
      %v6777 = vpop.f32.mrb[0].mxu0
      %6778 = vdwg.mxu0
      %v6779 = vmul.f32 %v223, %v231
      %v6780 = vmul.f32 %v224, %v232
      %v6781 = vmul.f32 %v225, %v233
      %v6782 = vmul.f32 %v226, %v234
      %v6783 = vmul.f32 %v227, %v235
      %v6784 = vmul.f32 %v228, %v236
      %v6785 = vmul.f32 %v229, %v237
      %v6786 = vmul.f32 %v230, %v238
      %v6788 = vsel %vm249, %v6779, 0
      %v6791 = vsel %vm249, %v6780, 0
      %v6794 = vsel %vm249, %v6781, 0
      %v6797 = vsel %vm249, %v6782, 0
      %v6800 = vsel %vm249, %v6783, 0
      %v6803 = vsel %vm249, %v6784, 0
      %v6806 = vsel %vm249, %v6785, 0
      %v6809 = vsel %vm249, %v6786, 0
      %6811 = vmatprep.subr.mxu0 0.0
      %v6812 = vand.u32 %v247, 4294901760
      %6813 = vmatpush1.msra.mxu0 %v6812
      %6814 = vmatprep.subr.mxu0 0.0
      %v6815 = vand.u32 %v248, 4294901760
      %6816 = vmatpush1.msra.mxu0 %v6815
      %6817 = vmatprep.subr.mxu0 0.0
      %6818 = vmatpush1.msra.mxu0 0.0
      %6819 = vmatprep.subr.mxu0 0.0
      %6820 = vmatpush1.msra.mxu0 0.0
      %6821 = vmatprep.subr.mxu0 0.0
      %6822 = vmatpush1.msra.mxu0 0.0
      %6823 = vmatprep.subr.mxu0 0.0
      %6824 = vmatpush1.msra.mxu0 0.0
      %6825 = vmatprep.subr.mxu0 0.0
      %6826 = vmatpush1.msra.mxu0 0.0
      %6827 = vmatprep.subr.mxu0 0.0
      %6828 = vmatpush1.msra.mxu0 0.0
      %6829 = vmatprep.subr.mxu0 0.0
      %6830 = vmatpush1.msra.mxu0 0.0
      %6831 = vmatprep.subr.mxu0 0.0
      %6832 = vmatpush1.msra.mxu0 0.0
      %6833 = vmatprep.subr.mxu0 0.0
      %6834 = vmatpush1.msra.mxu0 0.0
      %6835 = vmatprep.subr.mxu0 0.0
      %6836 = vmatpush1.msra.mxu0 0.0
      %6837 = vmatprep.subr.mxu0 0.0
      %6838 = vmatpush1.msra.mxu0 0.0
      %6839 = vmatprep.subr.mxu0 0.0
      %6840 = vmatpush1.msra.mxu0 0.0
      %6841 = vmatprep.subr.mxu0 0.0
      %6842 = vmatpush1.msra.mxu0 0.0
      %6843 = vmatprep.subr.mxu0 0.0
      %6844 = vmatpush1.msra.mxu0 0.0
      %6845 = vmatprep.subr.mxu0 0.0
      %6846 = vmatpush1.msra.mxu0 0.0
      %6847 = vmatprep.subr.mxu0 0.0
      %6848 = vmatpush1.msra.mxu0 0.0
      %6849 = vmatprep.subr.mxu0 0.0
      %6850 = vmatpush1.msra.mxu0 0.0
      %6851 = vmatprep.subr.mxu0 0.0
      %6852 = vmatpush1.msra.mxu0 0.0
      %6853 = vmatprep.subr.mxu0 0.0
      %6854 = vmatpush1.msra.mxu0 0.0
      %6855 = vmatprep.subr.mxu0 0.0
      %6856 = vmatpush1.msra.mxu0 0.0
      %6857 = vmatprep.subr.mxu0 0.0
      %6858 = vmatpush1.msra.mxu0 0.0
      %6859 = vmatprep.subr.mxu0 0.0
      %6860 = vmatpush1.msra.mxu0 0.0
      %6861 = vmatprep.subr.mxu0 0.0
      %6862 = vmatpush1.msra.mxu0 0.0
      %6863 = vmatprep.subr.mxu0 0.0
      %6864 = vmatpush1.msra.mxu0 0.0
      %6865 = vmatprep.subr.mxu0 0.0
      %6866 = vmatpush1.msra.mxu0 0.0
      %6867 = vmatprep.subr.mxu0 0.0
      %6868 = vmatpush1.msra.mxu0 0.0
      %6869 = vmatprep.subr.mxu0 0.0
      %6870 = vmatpush1.msra.mxu0 0.0
      %6871 = vmatprep.subr.mxu0 0.0
      %6872 = vmatpush1.msra.mxu0 0.0
      %6873 = vmatprep.subr.mxu0 0.0
      %6874 = vmatpush1.msra.mxu0 0.0
      %6875 = vmatprep.subr.mxu0 0.0
      %6876 = vmatpush1.msra.mxu0 0.0
      %6877 = vmatprep.mubr.f32.mxu0 0.0
      %v6878 = vand.u32 %v6788, 4294901760
      %v6879 = vsub.f32 %v6788, %v6878
      %v6880 = vand.u32 %v6879, 4294901760
      %v6881 = vsub.f32 %v6879, %v6880
      %v6882 = vand.u32 %v6881, 4294901760
      %6883 = vmatmul.mubr.f32.gmra.mrb[0].mxu0 %v6882
      %v6884 = vpop.f32.mrb[0].mxu0
      %v6885 = vadd.f32 0.0, %v6884
      %v6886 = vpop.f32.mrb[0].mxu0
      %6887 = vmatprep.mubr.f32.mxu0 0.0
      %v6888 = vand.u32 %v6791, 4294901760
      %v6889 = vsub.f32 %v6791, %v6888
      %v6890 = vand.u32 %v6889, 4294901760
      %v6891 = vsub.f32 %v6889, %v6890
      %v6892 = vand.u32 %v6891, 4294901760
      %6893 = vmatmul.mubr.f32.gmra.mrb[0].mxu0 %v6892
      %v6894 = vpop.f32.mrb[0].mxu0
      %v6895 = vadd.f32 0.0, %v6894
      %v6896 = vpop.f32.mrb[0].mxu0
      %6897 = vmatprep.mubr.f32.mxu0 0.0
      %v6898 = vand.u32 %v6794, 4294901760
      %v6899 = vsub.f32 %v6794, %v6898
      %v6900 = vand.u32 %v6899, 4294901760
      %v6901 = vsub.f32 %v6899, %v6900
      %v6902 = vand.u32 %v6901, 4294901760
      %6903 = vmatmul.mubr.f32.gmra.mrb[0].mxu0 %v6902
      %v6904 = vpop.f32.mrb[0].mxu0
      %v6905 = vadd.f32 0.0, %v6904
      %v6906 = vpop.f32.mrb[0].mxu0
      %6907 = vmatprep.mubr.f32.mxu0 0.0
      %v6908 = vand.u32 %v6797, 4294901760
      %v6909 = vsub.f32 %v6797, %v6908
      %v6910 = vand.u32 %v6909, 4294901760
      %v6911 = vsub.f32 %v6909, %v6910
      %v6912 = vand.u32 %v6911, 4294901760
      %6913 = vmatmul.mubr.f32.gmra.mrb[0].mxu0 %v6912
      %v6914 = vpop.f32.mrb[0].mxu0
      %v6915 = vadd.f32 0.0, %v6914
      %v6916 = vpop.f32.mrb[0].mxu0
      %6917 = vmatprep.mubr.f32.mxu0 0.0
      %v6918 = vand.u32 %v6800, 4294901760
      %v6919 = vsub.f32 %v6800, %v6918
      %v6920 = vand.u32 %v6919, 4294901760
      %v6921 = vsub.f32 %v6919, %v6920
      %v6922 = vand.u32 %v6921, 4294901760
      %6923 = vmatmul.mubr.f32.gmra.mrb[0].mxu0 %v6922
      %v6924 = vpop.f32.mrb[0].mxu0
      %v6925 = vadd.f32 0.0, %v6924
      %v6926 = vpop.f32.mrb[0].mxu0
      %6927 = vmatprep.mubr.f32.mxu0 0.0
      %v6928 = vand.u32 %v6803, 4294901760
      %v6929 = vsub.f32 %v6803, %v6928
      %v6930 = vand.u32 %v6929, 4294901760
      %v6931 = vsub.f32 %v6929, %v6930
      %v6932 = vand.u32 %v6931, 4294901760
      %6933 = vmatmul.mubr.f32.gmra.mrb[0].mxu0 %v6932
      %v6934 = vpop.f32.mrb[0].mxu0
      %v6935 = vadd.f32 0.0, %v6934
      %v6936 = vpop.f32.mrb[0].mxu0
      %6937 = vmatprep.mubr.f32.mxu0 0.0
      %v6938 = vand.u32 %v6806, 4294901760
      %v6939 = vsub.f32 %v6806, %v6938
      %v6940 = vand.u32 %v6939, 4294901760
      %v6941 = vsub.f32 %v6939, %v6940
      %v6942 = vand.u32 %v6941, 4294901760
      %6943 = vmatmul.mubr.f32.gmra.mrb[0].mxu0 %v6942
      %v6944 = vpop.f32.mrb[0].mxu0
      %v6945 = vadd.f32 0.0, %v6944
      %v6946 = vpop.f32.mrb[0].mxu0
      %6947 = vmatprep.mubr.f32.mxu0 0.0
      %v6948 = vand.u32 %v6809, 4294901760
      %v6949 = vsub.f32 %v6809, %v6948
      %v6950 = vand.u32 %v6949, 4294901760
      %v6951 = vsub.f32 %v6949, %v6950
      %v6952 = vand.u32 %v6951, 4294901760
      %6953 = vmatmul.mubr.f32.gmra.mrb[0].mxu0 %v6952
      %v6954 = vpop.f32.mrb[0].mxu0
      %v6955 = vadd.f32 0.0, %v6954
      %v6956 = vpop.f32.mrb[0].mxu0
      %6957 = vdwg.mxu0
      %6958 = vmatprep.subr.mxu0 0.0
      %v6959 = vand.u32 %v247, 4294901760
      %v6960 = vsub.f32 %v247, %v6959
      %v6961 = vand.u32 %v6960, 4294901760
      %v6962 = vsub.f32 %v6960, %v6961
      %v6963 = vand.u32 %v6962, 4294901760
      %6964 = vmatpush1.msra.mxu0 %v6963
      %6965 = vmatprep.subr.mxu0 0.0
      %v6966 = vand.u32 %v248, 4294901760
      %v6967 = vsub.f32 %v248, %v6966
      %v6968 = vand.u32 %v6967, 4294901760
      %v6969 = vsub.f32 %v6967, %v6968
      %v6970 = vand.u32 %v6969, 4294901760
      %6971 = vmatpush1.msra.mxu0 %v6970
      %6972 = vmatprep.subr.mxu0 0.0
      %6973 = vmatpush1.msra.mxu0 0.0
      %6974 = vmatprep.subr.mxu0 0.0
      %6975 = vmatpush1.msra.mxu0 0.0
      %6976 = vmatprep.subr.mxu0 0.0
      %6977 = vmatpush1.msra.mxu0 0.0
      %6978 = vmatprep.subr.mxu0 0.0
      %6979 = vmatpush1.msra.mxu0 0.0
      %6980 = vmatprep.subr.mxu0 0.0
      %6981 = vmatpush1.msra.mxu0 0.0
      %6982 = vmatprep.subr.mxu0 0.0
      %6983 = vmatpush1.msra.mxu0 0.0
      %6984 = vmatprep.subr.mxu0 0.0
      %6985 = vmatpush1.msra.mxu0 0.0
      %6986 = vmatprep.subr.mxu0 0.0
      %6987 = vmatpush1.msra.mxu0 0.0
      %6988 = vmatprep.subr.mxu0 0.0
      %6989 = vmatpush1.msra.mxu0 0.0
      %6990 = vmatprep.subr.mxu0 0.0
      %6991 = vmatpush1.msra.mxu0 0.0
      %6992 = vmatprep.subr.mxu0 0.0
      %6993 = vmatpush1.msra.mxu0 0.0
      %6994 = vmatprep.subr.mxu0 0.0
      %6995 = vmatpush1.msra.mxu0 0.0
      %6996 = vmatprep.subr.mxu0 0.0
      %6997 = vmatpush1.msra.mxu0 0.0
      %6998 = vmatprep.subr.mxu0 0.0
      %6999 = vmatpush1.msra.mxu0 0.0
      %7000 = vmatprep.subr.mxu0 0.0
      %7001 = vmatpush1.msra.mxu0 0.0
      %7002 = vmatprep.subr.mxu0 0.0
      %7003 = vmatpush1.msra.mxu0 0.0
      %7004 = vmatprep.subr.mxu0 0.0
      %7005 = vmatpush1.msra.mxu0 0.0
      %7006 = vmatprep.subr.mxu0 0.0
      %7007 = vmatpush1.msra.mxu0 0.0
      %7008 = vmatprep.subr.mxu0 0.0
      %7009 = vmatpush1.msra.mxu0 0.0
      %7010 = vmatprep.subr.mxu0 0.0
      %7011 = vmatpush1.msra.mxu0 0.0
      %7012 = vmatprep.subr.mxu0 0.0
      %7013 = vmatpush1.msra.mxu0 0.0
      %7014 = vmatprep.subr.mxu0 0.0
      %7015 = vmatpush1.msra.mxu0 0.0
      %7016 = vmatprep.subr.mxu0 0.0
      %7017 = vmatpush1.msra.mxu0 0.0
      %7018 = vmatprep.subr.mxu0 0.0
      %7019 = vmatpush1.msra.mxu0 0.0
      %7020 = vmatprep.subr.mxu0 0.0
      %7021 = vmatpush1.msra.mxu0 0.0
      %7022 = vmatprep.subr.mxu0 0.0
      %7023 = vmatpush1.msra.mxu0 0.0
      %7024 = vmatprep.subr.mxu0 0.0
      %7025 = vmatpush1.msra.mxu0 0.0
      %7026 = vmatprep.subr.mxu0 0.0
      %7027 = vmatpush1.msra.mxu0 0.0
      %7028 = vmatprep.subr.mxu0 0.0
      %7029 = vmatpush1.msra.mxu0 0.0
      %7030 = vmatprep.subr.mxu0 0.0
      %7031 = vmatpush1.msra.mxu0 0.0
      %7032 = vmatprep.mubr.f32.mxu0 0.0
      %v7033 = vand.u32 %v6788, 4294901760
      %7034 = vmatmul.mubr.f32.gmra.mrb[0].mxu0 %v7033
      %v7035 = vpop.f32.mrb[0].mxu0
      %v7036 = vadd.f32 %v6885, %v7035
      %v7037 = vpop.f32.mrb[0].mxu0
      %7038 = vmatprep.mubr.f32.mxu0 0.0
      %v7039 = vand.u32 %v6791, 4294901760
      %7040 = vmatmul.mubr.f32.gmra.mrb[0].mxu0 %v7039
      %v7041 = vpop.f32.mrb[0].mxu0
      %v7042 = vadd.f32 %v6895, %v7041
      %v7043 = vpop.f32.mrb[0].mxu0
      %7044 = vmatprep.mubr.f32.mxu0 0.0
      %v7045 = vand.u32 %v6794, 4294901760
      %7046 = vmatmul.mubr.f32.gmra.mrb[0].mxu0 %v7045
      %v7047 = vpop.f32.mrb[0].mxu0
      %v7048 = vadd.f32 %v6905, %v7047
      %v7049 = vpop.f32.mrb[0].mxu0
      %7050 = vmatprep.mubr.f32.mxu0 0.0
      %v7051 = vand.u32 %v6797, 4294901760
      %7052 = vmatmul.mubr.f32.gmra.mrb[0].mxu0 %v7051
      %v7053 = vpop.f32.mrb[0].mxu0
      %v7054 = vadd.f32 %v6915, %v7053
      %v7055 = vpop.f32.mrb[0].mxu0
      %7056 = vmatprep.mubr.f32.mxu0 0.0
      %v7057 = vand.u32 %v6800, 4294901760
      %7058 = vmatmul.mubr.f32.gmra.mrb[0].mxu0 %v7057
      %v7059 = vpop.f32.mrb[0].mxu0
      %v7060 = vadd.f32 %v6925, %v7059
      %v7061 = vpop.f32.mrb[0].mxu0
      %7062 = vmatprep.mubr.f32.mxu0 0.0
      %v7063 = vand.u32 %v6803, 4294901760
      %7064 = vmatmul.mubr.f32.gmra.mrb[0].mxu0 %v7063
      %v7065 = vpop.f32.mrb[0].mxu0
      %v7066 = vadd.f32 %v6935, %v7065
      %v7067 = vpop.f32.mrb[0].mxu0
      %7068 = vmatprep.mubr.f32.mxu0 0.0
      %v7069 = vand.u32 %v6806, 4294901760
      %7070 = vmatmul.mubr.f32.gmra.mrb[0].mxu0 %v7069
      %v7071 = vpop.f32.mrb[0].mxu0
      %v7072 = vadd.f32 %v6945, %v7071
      %v7073 = vpop.f32.mrb[0].mxu0
      %7074 = vmatprep.mubr.f32.mxu0 0.0
      %v7075 = vand.u32 %v6809, 4294901760
      %7076 = vmatmul.mubr.f32.gmra.mrb[0].mxu0 %v7075
      %v7077 = vpop.f32.mrb[0].mxu0
      %v7078 = vadd.f32 %v6955, %v7077
      %v7079 = vpop.f32.mrb[0].mxu0
      %7080 = vdwg.mxu0
      %7081 = vmatprep.subr.mxu0 0.0
      %v7082 = vand.u32 %v247, 4294901760
      %v7083 = vsub.f32 %v247, %v7082
      %7084 = vmatpush1.msra.mxu0 %v7083
      %7085 = vmatprep.subr.mxu0 0.0
      %v7086 = vand.u32 %v248, 4294901760
      %v7087 = vsub.f32 %v248, %v7086
      %7088 = vmatpush1.msra.mxu0 %v7087
      %7089 = vmatprep.subr.mxu0 0.0
      %7090 = vmatpush1.msra.mxu0 0.0
      %7091 = vmatprep.subr.mxu0 0.0
      %7092 = vmatpush1.msra.mxu0 0.0
      %7093 = vmatprep.subr.mxu0 0.0
      %7094 = vmatpush1.msra.mxu0 0.0
      %7095 = vmatprep.subr.mxu0 0.0
      %7096 = vmatpush1.msra.mxu0 0.0
      %7097 = vmatprep.subr.mxu0 0.0
      %7098 = vmatpush1.msra.mxu0 0.0
      %7099 = vmatprep.subr.mxu0 0.0
      %7100 = vmatpush1.msra.mxu0 0.0
      %7101 = vmatprep.subr.mxu0 0.0
      %7102 = vmatpush1.msra.mxu0 0.0
      %7103 = vmatprep.subr.mxu0 0.0
      %7104 = vmatpush1.msra.mxu0 0.0
      %7105 = vmatprep.subr.mxu0 0.0
      %7106 = vmatpush1.msra.mxu0 0.0
      %7107 = vmatprep.subr.mxu0 0.0
      %7108 = vmatpush1.msra.mxu0 0.0
      %7109 = vmatprep.subr.mxu0 0.0
      %7110 = vmatpush1.msra.mxu0 0.0
      %7111 = vmatprep.subr.mxu0 0.0
      %7112 = vmatpush1.msra.mxu0 0.0
      %7113 = vmatprep.subr.mxu0 0.0
      %7114 = vmatpush1.msra.mxu0 0.0
      %7115 = vmatprep.subr.mxu0 0.0
      %7116 = vmatpush1.msra.mxu0 0.0
      %7117 = vmatprep.subr.mxu0 0.0
      %7118 = vmatpush1.msra.mxu0 0.0
      %7119 = vmatprep.subr.mxu0 0.0
      %7120 = vmatpush1.msra.mxu0 0.0
      %7121 = vmatprep.subr.mxu0 0.0
      %7122 = vmatpush1.msra.mxu0 0.0
      %7123 = vmatprep.subr.mxu0 0.0
      %7124 = vmatpush1.msra.mxu0 0.0
      %7125 = vmatprep.subr.mxu0 0.0
      %7126 = vmatpush1.msra.mxu0 0.0
      %7127 = vmatprep.subr.mxu0 0.0
      %7128 = vmatpush1.msra.mxu0 0.0
      %7129 = vmatprep.subr.mxu0 0.0
      %7130 = vmatpush1.msra.mxu0 0.0
      %7131 = vmatprep.subr.mxu0 0.0
      %7132 = vmatpush1.msra.mxu0 0.0
      %7133 = vmatprep.subr.mxu0 0.0
      %7134 = vmatpush1.msra.mxu0 0.0
      %7135 = vmatprep.subr.mxu0 0.0
      %7136 = vmatpush1.msra.mxu0 0.0
      %7137 = vmatprep.subr.mxu0 0.0
      %7138 = vmatpush1.msra.mxu0 0.0
      %7139 = vmatprep.subr.mxu0 0.0
      %7140 = vmatpush1.msra.mxu0 0.0
      %7141 = vmatprep.subr.mxu0 0.0
      %7142 = vmatpush1.msra.mxu0 0.0
      %7143 = vmatprep.subr.mxu0 0.0
      %7144 = vmatpush1.msra.mxu0 0.0
      %7145 = vmatprep.subr.mxu0 0.0
      %7146 = vmatpush1.msra.mxu0 0.0
      %7147 = vmatprep.subr.mxu0 0.0
      %7148 = vmatpush1.msra.mxu0 0.0
      %7149 = vmatprep.mubr.f32.mxu0 0.0
      %v7150 = vand.u32 %v6788, 4294901760
      %v7151 = vsub.f32 %v6788, %v7150
      %7152 = vmatmul.mubr.f32.gmra.mrb[0].mxu0 %v7151
      %v7153 = vpop.f32.mrb[0].mxu0
      %v7154 = vadd.f32 %v7036, %v7153
      %v7155 = vpop.f32.mrb[0].mxu0
      %7156 = vmatprep.mubr.f32.mxu0 0.0
      %v7157 = vand.u32 %v6791, 4294901760
      %v7158 = vsub.f32 %v6791, %v7157
      %7159 = vmatmul.mubr.f32.gmra.mrb[0].mxu0 %v7158
      %v7160 = vpop.f32.mrb[0].mxu0
      %v7161 = vadd.f32 %v7042, %v7160
      %v7162 = vpop.f32.mrb[0].mxu0
      %7163 = vmatprep.mubr.f32.mxu0 0.0
      %v7164 = vand.u32 %v6794, 4294901760
      %v7165 = vsub.f32 %v6794, %v7164
      %7166 = vmatmul.mubr.f32.gmra.mrb[0].mxu0 %v7165
      %v7167 = vpop.f32.mrb[0].mxu0
      %v7168 = vadd.f32 %v7048, %v7167
      %v7169 = vpop.f32.mrb[0].mxu0
      %7170 = vmatprep.mubr.f32.mxu0 0.0
      %v7171 = vand.u32 %v6797, 4294901760
      %v7172 = vsub.f32 %v6797, %v7171
      %7173 = vmatmul.mubr.f32.gmra.mrb[0].mxu0 %v7172
      %v7174 = vpop.f32.mrb[0].mxu0
      %v7175 = vadd.f32 %v7054, %v7174
      %v7176 = vpop.f32.mrb[0].mxu0
      %7177 = vmatprep.mubr.f32.mxu0 0.0
      %v7178 = vand.u32 %v6800, 4294901760
      %v7179 = vsub.f32 %v6800, %v7178
      %7180 = vmatmul.mubr.f32.gmra.mrb[0].mxu0 %v7179
      %v7181 = vpop.f32.mrb[0].mxu0
      %v7182 = vadd.f32 %v7060, %v7181
      %v7183 = vpop.f32.mrb[0].mxu0
      %7184 = vmatprep.mubr.f32.mxu0 0.0
      %v7185 = vand.u32 %v6803, 4294901760
      %v7186 = vsub.f32 %v6803, %v7185
      %7187 = vmatmul.mubr.f32.gmra.mrb[0].mxu0 %v7186
      %v7188 = vpop.f32.mrb[0].mxu0
      %v7189 = vadd.f32 %v7066, %v7188
      %v7190 = vpop.f32.mrb[0].mxu0
      %7191 = vmatprep.mubr.f32.mxu0 0.0
      %v7192 = vand.u32 %v6806, 4294901760
      %v7193 = vsub.f32 %v6806, %v7192
      %7194 = vmatmul.mubr.f32.gmra.mrb[0].mxu0 %v7193
      %v7195 = vpop.f32.mrb[0].mxu0
      %v7196 = vadd.f32 %v7072, %v7195
      %v7197 = vpop.f32.mrb[0].mxu0
      %7198 = vmatprep.mubr.f32.mxu0 0.0
      %v7199 = vand.u32 %v6809, 4294901760
      %v7200 = vsub.f32 %v6809, %v7199
      %7201 = vmatmul.mubr.f32.gmra.mrb[0].mxu0 %v7200
      %v7202 = vpop.f32.mrb[0].mxu0
      %v7203 = vadd.f32 %v7078, %v7202
      %v7204 = vpop.f32.mrb[0].mxu0
      %7205 = vdwg.mxu0
      %7206 = vmatprep.subr.mxu0 0.0
      %v7207 = vand.u32 %v247, 4294901760
      %7208 = vmatpush1.msra.mxu0 %v7207
      %7209 = vmatprep.subr.mxu0 0.0
      %v7210 = vand.u32 %v248, 4294901760
      %7211 = vmatpush1.msra.mxu0 %v7210
      %7212 = vmatprep.subr.mxu0 0.0
      %7213 = vmatpush1.msra.mxu0 0.0
      %7214 = vmatprep.subr.mxu0 0.0
      %7215 = vmatpush1.msra.mxu0 0.0
      %7216 = vmatprep.subr.mxu0 0.0
      %7217 = vmatpush1.msra.mxu0 0.0
      %7218 = vmatprep.subr.mxu0 0.0
      %7219 = vmatpush1.msra.mxu0 0.0
      %7220 = vmatprep.subr.mxu0 0.0
      %7221 = vmatpush1.msra.mxu0 0.0
      %7222 = vmatprep.subr.mxu0 0.0
      %7223 = vmatpush1.msra.mxu0 0.0
      %7224 = vmatprep.subr.mxu0 0.0
      %7225 = vmatpush1.msra.mxu0 0.0
      %7226 = vmatprep.subr.mxu0 0.0
      %7227 = vmatpush1.msra.mxu0 0.0
      %7228 = vmatprep.subr.mxu0 0.0
      %7229 = vmatpush1.msra.mxu0 0.0
      %7230 = vmatprep.subr.mxu0 0.0
      %7231 = vmatpush1.msra.mxu0 0.0
      %7232 = vmatprep.subr.mxu0 0.0
      %7233 = vmatpush1.msra.mxu0 0.0
      %7234 = vmatprep.subr.mxu0 0.0
      %7235 = vmatpush1.msra.mxu0 0.0
      %7236 = vmatprep.subr.mxu0 0.0
      %7237 = vmatpush1.msra.mxu0 0.0
      %7238 = vmatprep.subr.mxu0 0.0
      %7239 = vmatpush1.msra.mxu0 0.0
      %7240 = vmatprep.subr.mxu0 0.0
      %7241 = vmatpush1.msra.mxu0 0.0
      %7242 = vmatprep.subr.mxu0 0.0
      %7243 = vmatpush1.msra.mxu0 0.0
      %7244 = vmatprep.subr.mxu0 0.0
      %7245 = vmatpush1.msra.mxu0 0.0
      %7246 = vmatprep.subr.mxu0 0.0
      %7247 = vmatpush1.msra.mxu0 0.0
      %7248 = vmatprep.subr.mxu0 0.0
      %7249 = vmatpush1.msra.mxu0 0.0
      %7250 = vmatprep.subr.mxu0 0.0
      %7251 = vmatpush1.msra.mxu0 0.0
      %7252 = vmatprep.subr.mxu0 0.0
      %7253 = vmatpush1.msra.mxu0 0.0
      %7254 = vmatprep.subr.mxu0 0.0
      %7255 = vmatpush1.msra.mxu0 0.0
      %7256 = vmatprep.subr.mxu0 0.0
      %7257 = vmatpush1.msra.mxu0 0.0
      %7258 = vmatprep.subr.mxu0 0.0
      %7259 = vmatpush1.msra.mxu0 0.0
      %7260 = vmatprep.subr.mxu0 0.0
      %7261 = vmatpush1.msra.mxu0 0.0
      %7262 = vmatprep.subr.mxu0 0.0
      %7263 = vmatpush1.msra.mxu0 0.0
      %7264 = vmatprep.subr.mxu0 0.0
      %7265 = vmatpush1.msra.mxu0 0.0
      %7266 = vmatprep.subr.mxu0 0.0
      %7267 = vmatpush1.msra.mxu0 0.0
      %7268 = vmatprep.subr.mxu0 0.0
      %7269 = vmatpush1.msra.mxu0 0.0
      %7270 = vmatprep.subr.mxu0 0.0
      %7271 = vmatpush1.msra.mxu0 0.0
      %7272 = vmatprep.mubr.f32.mxu0 0.0
      %v7273 = vand.u32 %v6788, 4294901760
      %v7274 = vsub.f32 %v6788, %v7273
      %v7275 = vand.u32 %v7274, 4294901760
      %7276 = vmatmul.mubr.f32.gmra.mrb[0].mxu0 %v7275
      %v7277 = vpop.f32.mrb[0].mxu0
      %v7278 = vadd.f32 %v7154, %v7277
      %v7279 = vpop.f32.mrb[0].mxu0
      %7280 = vmatprep.mubr.f32.mxu0 0.0
      %v7281 = vand.u32 %v6791, 4294901760
      %v7282 = vsub.f32 %v6791, %v7281
      %v7283 = vand.u32 %v7282, 4294901760
      %7284 = vmatmul.mubr.f32.gmra.mrb[0].mxu0 %v7283
      %v7285 = vpop.f32.mrb[0].mxu0
      %v7286 = vadd.f32 %v7161, %v7285
      %v7287 = vpop.f32.mrb[0].mxu0
      %7288 = vmatprep.mubr.f32.mxu0 0.0
      %v7289 = vand.u32 %v6794, 4294901760
      %v7290 = vsub.f32 %v6794, %v7289
      %v7291 = vand.u32 %v7290, 4294901760
      %7292 = vmatmul.mubr.f32.gmra.mrb[0].mxu0 %v7291
      %v7293 = vpop.f32.mrb[0].mxu0
      %v7294 = vadd.f32 %v7168, %v7293
      %v7295 = vpop.f32.mrb[0].mxu0
      %7296 = vmatprep.mubr.f32.mxu0 0.0
      %v7297 = vand.u32 %v6797, 4294901760
      %v7298 = vsub.f32 %v6797, %v7297
      %v7299 = vand.u32 %v7298, 4294901760
      %7300 = vmatmul.mubr.f32.gmra.mrb[0].mxu0 %v7299
      %v7301 = vpop.f32.mrb[0].mxu0
      %v7302 = vadd.f32 %v7175, %v7301
      %v7303 = vpop.f32.mrb[0].mxu0
      %7304 = vmatprep.mubr.f32.mxu0 0.0
      %v7305 = vand.u32 %v6800, 4294901760
      %v7306 = vsub.f32 %v6800, %v7305
      %v7307 = vand.u32 %v7306, 4294901760
      %7308 = vmatmul.mubr.f32.gmra.mrb[0].mxu0 %v7307
      %v7309 = vpop.f32.mrb[0].mxu0
      %v7310 = vadd.f32 %v7182, %v7309
      %v7311 = vpop.f32.mrb[0].mxu0
      %7312 = vmatprep.mubr.f32.mxu0 0.0
      %v7313 = vand.u32 %v6803, 4294901760
      %v7314 = vsub.f32 %v6803, %v7313
      %v7315 = vand.u32 %v7314, 4294901760
      %7316 = vmatmul.mubr.f32.gmra.mrb[0].mxu0 %v7315
      %v7317 = vpop.f32.mrb[0].mxu0
      %v7318 = vadd.f32 %v7189, %v7317
      %v7319 = vpop.f32.mrb[0].mxu0
      %7320 = vmatprep.mubr.f32.mxu0 0.0
      %v7321 = vand.u32 %v6806, 4294901760
      %v7322 = vsub.f32 %v6806, %v7321
      %v7323 = vand.u32 %v7322, 4294901760
      %7324 = vmatmul.mubr.f32.gmra.mrb[0].mxu0 %v7323
      %v7325 = vpop.f32.mrb[0].mxu0
      %v7326 = vadd.f32 %v7196, %v7325
      %v7327 = vpop.f32.mrb[0].mxu0
      %7328 = vmatprep.mubr.f32.mxu0 0.0
      %v7329 = vand.u32 %v6809, 4294901760
      %v7330 = vsub.f32 %v6809, %v7329
      %v7331 = vand.u32 %v7330, 4294901760
      %7332 = vmatmul.mubr.f32.gmra.mrb[0].mxu0 %v7331
      %v7333 = vpop.f32.mrb[0].mxu0
      %v7334 = vadd.f32 %v7203, %v7333
      %v7335 = vpop.f32.mrb[0].mxu0
      %7336 = vdwg.mxu0
      %7337 = vmatprep.subr.mxu0 0.0
      %v7338 = vand.u32 %v247, 4294901760
      %v7339 = vsub.f32 %v247, %v7338
      %v7340 = vand.u32 %v7339, 4294901760
      %7341 = vmatpush1.msra.mxu0 %v7340
      %7342 = vmatprep.subr.mxu0 0.0
      %v7343 = vand.u32 %v248, 4294901760
      %v7344 = vsub.f32 %v248, %v7343
      %v7345 = vand.u32 %v7344, 4294901760
      %7346 = vmatpush1.msra.mxu0 %v7345
      %7347 = vmatprep.subr.mxu0 0.0
      %7348 = vmatpush1.msra.mxu0 0.0
      %7349 = vmatprep.subr.mxu0 0.0
      %7350 = vmatpush1.msra.mxu0 0.0
      %7351 = vmatprep.subr.mxu0 0.0
      %7352 = vmatpush1.msra.mxu0 0.0
      %7353 = vmatprep.subr.mxu0 0.0
      %7354 = vmatpush1.msra.mxu0 0.0
      %7355 = vmatprep.subr.mxu0 0.0
      %7356 = vmatpush1.msra.mxu0 0.0
      %7357 = vmatprep.subr.mxu0 0.0
      %7358 = vmatpush1.msra.mxu0 0.0
      %7359 = vmatprep.subr.mxu0 0.0
      %7360 = vmatpush1.msra.mxu0 0.0
      %7361 = vmatprep.subr.mxu0 0.0
      %7362 = vmatpush1.msra.mxu0 0.0
      %7363 = vmatprep.subr.mxu0 0.0
      %7364 = vmatpush1.msra.mxu0 0.0
      %7365 = vmatprep.subr.mxu0 0.0
      %7366 = vmatpush1.msra.mxu0 0.0
      %7367 = vmatprep.subr.mxu0 0.0
      %7368 = vmatpush1.msra.mxu0 0.0
      %7369 = vmatprep.subr.mxu0 0.0
      %7370 = vmatpush1.msra.mxu0 0.0
      %7371 = vmatprep.subr.mxu0 0.0
      %7372 = vmatpush1.msra.mxu0 0.0
      %7373 = vmatprep.subr.mxu0 0.0
      %7374 = vmatpush1.msra.mxu0 0.0
      %7375 = vmatprep.subr.mxu0 0.0
      %7376 = vmatpush1.msra.mxu0 0.0
      %7377 = vmatprep.subr.mxu0 0.0
      %7378 = vmatpush1.msra.mxu0 0.0
      %7379 = vmatprep.subr.mxu0 0.0
      %7380 = vmatpush1.msra.mxu0 0.0
      %7381 = vmatprep.subr.mxu0 0.0
      %7382 = vmatpush1.msra.mxu0 0.0
      %7383 = vmatprep.subr.mxu0 0.0
      %7384 = vmatpush1.msra.mxu0 0.0
      %7385 = vmatprep.subr.mxu0 0.0
      %7386 = vmatpush1.msra.mxu0 0.0
      %7387 = vmatprep.subr.mxu0 0.0
      %7388 = vmatpush1.msra.mxu0 0.0
      %7389 = vmatprep.subr.mxu0 0.0
      %7390 = vmatpush1.msra.mxu0 0.0
      %7391 = vmatprep.subr.mxu0 0.0
      %7392 = vmatpush1.msra.mxu0 0.0
      %7393 = vmatprep.subr.mxu0 0.0
      %7394 = vmatpush1.msra.mxu0 0.0
      %7395 = vmatprep.subr.mxu0 0.0
      %7396 = vmatpush1.msra.mxu0 0.0
      %7397 = vmatprep.subr.mxu0 0.0
      %7398 = vmatpush1.msra.mxu0 0.0
      %7399 = vmatprep.subr.mxu0 0.0
      %7400 = vmatpush1.msra.mxu0 0.0
      %7401 = vmatprep.subr.mxu0 0.0
      %7402 = vmatpush1.msra.mxu0 0.0
      %7403 = vmatprep.subr.mxu0 0.0
      %7404 = vmatpush1.msra.mxu0 0.0
      %7405 = vmatprep.subr.mxu0 0.0
      %7406 = vmatpush1.msra.mxu0 0.0
      %7407 = vmatprep.mubr.f32.mxu0 0.0
      %v7408 = vand.u32 %v6788, 4294901760
      %7409 = vmatmul.mubr.f32.gmra.mrb[0].mxu0 %v7408
      %v7410 = vpop.f32.mrb[0].mxu0
      %v7411 = vadd.f32 %v7278, %v7410
      %v7412 = vpop.f32.mrb[0].mxu0
      %7413 = vmatprep.mubr.f32.mxu0 0.0
      %v7414 = vand.u32 %v6791, 4294901760
      %7415 = vmatmul.mubr.f32.gmra.mrb[0].mxu0 %v7414
      %v7416 = vpop.f32.mrb[0].mxu0
      %v7417 = vadd.f32 %v7286, %v7416
      %v7418 = vpop.f32.mrb[0].mxu0
      %7419 = vmatprep.mubr.f32.mxu0 0.0
      %v7420 = vand.u32 %v6794, 4294901760
      %7421 = vmatmul.mubr.f32.gmra.mrb[0].mxu0 %v7420
      %v7422 = vpop.f32.mrb[0].mxu0
      %v7423 = vadd.f32 %v7294, %v7422
      %v7424 = vpop.f32.mrb[0].mxu0
      %7425 = vmatprep.mubr.f32.mxu0 0.0
      %v7426 = vand.u32 %v6797, 4294901760
      %7427 = vmatmul.mubr.f32.gmra.mrb[0].mxu0 %v7426
      %v7428 = vpop.f32.mrb[0].mxu0
      %v7429 = vadd.f32 %v7302, %v7428
      %v7430 = vpop.f32.mrb[0].mxu0
      %7431 = vmatprep.mubr.f32.mxu0 0.0
      %v7432 = vand.u32 %v6800, 4294901760
      %7433 = vmatmul.mubr.f32.gmra.mrb[0].mxu0 %v7432
      %v7434 = vpop.f32.mrb[0].mxu0
      %v7435 = vadd.f32 %v7310, %v7434
      %v7436 = vpop.f32.mrb[0].mxu0
      %7437 = vmatprep.mubr.f32.mxu0 0.0
      %v7438 = vand.u32 %v6803, 4294901760
      %7439 = vmatmul.mubr.f32.gmra.mrb[0].mxu0 %v7438
      %v7440 = vpop.f32.mrb[0].mxu0
      %v7441 = vadd.f32 %v7318, %v7440
      %v7442 = vpop.f32.mrb[0].mxu0
      %7443 = vmatprep.mubr.f32.mxu0 0.0
      %v7444 = vand.u32 %v6806, 4294901760
      %7445 = vmatmul.mubr.f32.gmra.mrb[0].mxu0 %v7444
      %v7446 = vpop.f32.mrb[0].mxu0
      %v7447 = vadd.f32 %v7326, %v7446
      %v7448 = vpop.f32.mrb[0].mxu0
      %7449 = vmatprep.mubr.f32.mxu0 0.0
      %v7450 = vand.u32 %v6809, 4294901760
      %7451 = vmatmul.mubr.f32.gmra.mrb[0].mxu0 %v7450
      %v7452 = vpop.f32.mrb[0].mxu0
      %v7453 = vadd.f32 %v7334, %v7452
      %v7454 = vpop.f32.mrb[0].mxu0
      %7455 = vdwg.mxu0
      %7456 = vmatprep.subr.mxu0 0.0
      %v7457 = vand.u32 %v247, 4294901760
      %7458 = vmatpush1.msra.mxu0 %v7457
      %7459 = vmatprep.subr.mxu0 0.0
      %v7460 = vand.u32 %v248, 4294901760
      %7461 = vmatpush1.msra.mxu0 %v7460
      %7462 = vmatprep.subr.mxu0 0.0
      %7463 = vmatpush1.msra.mxu0 0.0
      %7464 = vmatprep.subr.mxu0 0.0
      %7465 = vmatpush1.msra.mxu0 0.0
      %7466 = vmatprep.subr.mxu0 0.0
      %7467 = vmatpush1.msra.mxu0 0.0
      %7468 = vmatprep.subr.mxu0 0.0
      %7469 = vmatpush1.msra.mxu0 0.0
      %7470 = vmatprep.subr.mxu0 0.0
      %7471 = vmatpush1.msra.mxu0 0.0
      %7472 = vmatprep.subr.mxu0 0.0
      %7473 = vmatpush1.msra.mxu0 0.0
      %7474 = vmatprep.subr.mxu0 0.0
      %7475 = vmatpush1.msra.mxu0 0.0
      %7476 = vmatprep.subr.mxu0 0.0
      %7477 = vmatpush1.msra.mxu0 0.0
      %7478 = vmatprep.subr.mxu0 0.0
      %7479 = vmatpush1.msra.mxu0 0.0
      %7480 = vmatprep.subr.mxu0 0.0
      %7481 = vmatpush1.msra.mxu0 0.0
      %7482 = vmatprep.subr.mxu0 0.0
      %7483 = vmatpush1.msra.mxu0 0.0
      %7484 = vmatprep.subr.mxu0 0.0
      %7485 = vmatpush1.msra.mxu0 0.0
      %7486 = vmatprep.subr.mxu0 0.0
      %7487 = vmatpush1.msra.mxu0 0.0
      %7488 = vmatprep.subr.mxu0 0.0
      %7489 = vmatpush1.msra.mxu0 0.0
      %7490 = vmatprep.subr.mxu0 0.0
      %7491 = vmatpush1.msra.mxu0 0.0
      %7492 = vmatprep.subr.mxu0 0.0
      %7493 = vmatpush1.msra.mxu0 0.0
      %7494 = vmatprep.subr.mxu0 0.0
      %7495 = vmatpush1.msra.mxu0 0.0
      %7496 = vmatprep.subr.mxu0 0.0
      %7497 = vmatpush1.msra.mxu0 0.0
      %7498 = vmatprep.subr.mxu0 0.0
      %7499 = vmatpush1.msra.mxu0 0.0
      %7500 = vmatprep.subr.mxu0 0.0
      %7501 = vmatpush1.msra.mxu0 0.0
      %7502 = vmatprep.subr.mxu0 0.0
      %7503 = vmatpush1.msra.mxu0 0.0
      %7504 = vmatprep.subr.mxu0 0.0
      %7505 = vmatpush1.msra.mxu0 0.0
      %7506 = vmatprep.subr.mxu0 0.0
      %7507 = vmatpush1.msra.mxu0 0.0
      %7508 = vmatprep.subr.mxu0 0.0
      %7509 = vmatpush1.msra.mxu0 0.0
      %7510 = vmatprep.subr.mxu0 0.0
      %7511 = vmatpush1.msra.mxu0 0.0
      %7512 = vmatprep.subr.mxu0 0.0
      %7513 = vmatpush1.msra.mxu0 0.0
      %7514 = vmatprep.subr.mxu0 0.0
      %7515 = vmatpush1.msra.mxu0 0.0
      %7516 = vmatprep.subr.mxu0 0.0
      %7517 = vmatpush1.msra.mxu0 0.0
      %7518 = vmatprep.subr.mxu0 0.0
      %7519 = vmatpush1.msra.mxu0 0.0
      %7520 = vmatprep.subr.mxu0 0.0
      %7521 = vmatpush1.msra.mxu0 0.0
      %7522 = vmatprep.mubr.f32.mxu0 0.0
      %v7523 = vand.u32 %v6788, 4294901760
      %7524 = vmatmul.mubr.f32.gmra.mrb[0].mxu0 %v7523
      %v7525 = vpop.f32.mrb[0].mxu0
      %v7526 = vadd.f32 %v7411, %v7525
      %v7527 = vpop.f32.mrb[0].mxu0
      %7528 = vmatprep.mubr.f32.mxu0 0.0
      %v7529 = vand.u32 %v6791, 4294901760
      %7530 = vmatmul.mubr.f32.gmra.mrb[0].mxu0 %v7529
      %v7531 = vpop.f32.mrb[0].mxu0
      %v7532 = vadd.f32 %v7417, %v7531
      %v7533 = vpop.f32.mrb[0].mxu0
      %7534 = vmatprep.mubr.f32.mxu0 0.0
      %v7535 = vand.u32 %v6794, 4294901760
      %7536 = vmatmul.mubr.f32.gmra.mrb[0].mxu0 %v7535
      %v7537 = vpop.f32.mrb[0].mxu0
      %v7538 = vadd.f32 %v7423, %v7537
      %v7539 = vpop.f32.mrb[0].mxu0
      %7540 = vmatprep.mubr.f32.mxu0 0.0
      %v7541 = vand.u32 %v6797, 4294901760
      %7542 = vmatmul.mubr.f32.gmra.mrb[0].mxu0 %v7541
      %v7543 = vpop.f32.mrb[0].mxu0
      %v7544 = vadd.f32 %v7429, %v7543
      %v7545 = vpop.f32.mrb[0].mxu0
      %7546 = vmatprep.mubr.f32.mxu0 0.0
      %v7547 = vand.u32 %v6800, 4294901760
      %7548 = vmatmul.mubr.f32.gmra.mrb[0].mxu0 %v7547
      %v7549 = vpop.f32.mrb[0].mxu0
      %v7550 = vadd.f32 %v7435, %v7549
      %v7551 = vpop.f32.mrb[0].mxu0
      %7552 = vmatprep.mubr.f32.mxu0 0.0
      %v7553 = vand.u32 %v6803, 4294901760
      %7554 = vmatmul.mubr.f32.gmra.mrb[0].mxu0 %v7553
      %v7555 = vpop.f32.mrb[0].mxu0
      %v7556 = vadd.f32 %v7441, %v7555
      %v7557 = vpop.f32.mrb[0].mxu0
      %7558 = vmatprep.mubr.f32.mxu0 0.0
      %v7559 = vand.u32 %v6806, 4294901760
      %7560 = vmatmul.mubr.f32.gmra.mrb[0].mxu0 %v7559
      %v7561 = vpop.f32.mrb[0].mxu0
      %v7562 = vadd.f32 %v7447, %v7561
      %v7563 = vpop.f32.mrb[0].mxu0
      %7564 = vmatprep.mubr.f32.mxu0 0.0
      %v7565 = vand.u32 %v6809, 4294901760
      %7566 = vmatmul.mubr.f32.gmra.mrb[0].mxu0 %v7565
      %v7567 = vpop.f32.mrb[0].mxu0
      %v7568 = vadd.f32 %v7453, %v7567
      %v7569 = vpop.f32.mrb[0].mxu0
      %7570 = vdwg.mxu0
      %7571 = vmatprep.subr.mxu0 0.0
      %v7572 = vand.u32 %v7526, 4294901760
      %7573 = vmatpush1.msra.mxu0 %v7572
      %7574 = vmatprep.subr.mxu0 0.0
      %v7575 = vand.u32 %v7532, 4294901760
      %7576 = vmatpush1.msra.mxu0 %v7575
      %7577 = vmatprep.subr.mxu0 0.0
      %v7578 = vand.u32 %v7538, 4294901760
      %7579 = vmatpush1.msra.mxu0 %v7578
      %7580 = vmatprep.subr.mxu0 0.0
      %v7581 = vand.u32 %v7544, 4294901760
      %7582 = vmatpush1.msra.mxu0 %v7581
      %7583 = vmatprep.subr.mxu0 0.0
      %v7584 = vand.u32 %v7550, 4294901760
      %7585 = vmatpush1.msra.mxu0 %v7584
      %7586 = vmatprep.subr.mxu0 0.0
      %v7587 = vand.u32 %v7556, 4294901760
      %7588 = vmatpush1.msra.mxu0 %v7587
      %7589 = vmatprep.subr.mxu0 0.0
      %v7590 = vand.u32 %v7562, 4294901760
      %7591 = vmatpush1.msra.mxu0 %v7590
      %7592 = vmatprep.subr.mxu0 0.0
      %v7593 = vand.u32 %v7568, 4294901760
      %7594 = vmatpush1.msra.mxu0 %v7593
      %7595 = vmatprep.subr.mxu0 0.0
      %7596 = vmatpush1.msra.mxu0 0.0
      %7597 = vmatprep.subr.mxu0 0.0
      %7598 = vmatpush1.msra.mxu0 0.0
      %7599 = vmatprep.subr.mxu0 0.0
      %7600 = vmatpush1.msra.mxu0 0.0
      %7601 = vmatprep.subr.mxu0 0.0
      %7602 = vmatpush1.msra.mxu0 0.0
      %7603 = vmatprep.subr.mxu0 0.0
      %7604 = vmatpush1.msra.mxu0 0.0
      %7605 = vmatprep.subr.mxu0 0.0
      %7606 = vmatpush1.msra.mxu0 0.0
      %7607 = vmatprep.subr.mxu0 0.0
      %7608 = vmatpush1.msra.mxu0 0.0
      %7609 = vmatprep.subr.mxu0 0.0
      %7610 = vmatpush1.msra.mxu0 0.0
      %7611 = vmatprep.subr.mxu0 0.0
      %7612 = vmatpush1.msra.mxu0 0.0
      %7613 = vmatprep.subr.mxu0 0.0
      %7614 = vmatpush1.msra.mxu0 0.0
      %7615 = vmatprep.subr.mxu0 0.0
      %7616 = vmatpush1.msra.mxu0 0.0
      %7617 = vmatprep.subr.mxu0 0.0
      %7618 = vmatpush1.msra.mxu0 0.0
      %7619 = vmatprep.subr.mxu0 0.0
      %7620 = vmatpush1.msra.mxu0 0.0
      %7621 = vmatprep.subr.mxu0 0.0
      %7622 = vmatpush1.msra.mxu0 0.0
      %7623 = vmatprep.subr.mxu0 0.0
      %7624 = vmatpush1.msra.mxu0 0.0
      %7625 = vmatprep.subr.mxu0 0.0
      %7626 = vmatpush1.msra.mxu0 0.0
      %7627 = vmatprep.subr.mxu0 0.0
      %7628 = vmatpush1.msra.mxu0 0.0
      %7629 = vmatprep.subr.mxu0 0.0
      %7630 = vmatpush1.msra.mxu0 0.0
      %7631 = vmatprep.subr.mxu0 0.0
      %7632 = vmatpush1.msra.mxu0 0.0
      %7633 = vmatprep.subr.mxu0 0.0
      %7634 = vmatpush1.msra.mxu0 0.0
      %7635 = vmatprep.subr.mxu0 0.0
      %7636 = vmatpush1.msra.mxu0 0.0
      %7637 = vmatprep.subr.mxu0 0.0
      %7638 = vmatpush1.msra.mxu0 0.0
      %7639 = vmatprep.subr.mxu0 0.0
      %7640 = vmatpush1.msra.mxu0 0.0
      %7641 = vmatprep.subr.mxu0 0.0
      %7642 = vmatpush1.msra.mxu0 0.0
      %7643 = vmatprep.mubr.f32.mxu0 0.0
      %v7644 = vand.u32 %v1036, 4294901760
      %v7645 = vsub.f32 %v1036, %v7644
      %v7646 = vand.u32 %v7645, 4294901760
      %v7647 = vsub.f32 %v7645, %v7646
      %v7648 = vand.u32 %v7647, 4294901760
      %7649 = vmatmul.mubr.f32.gmra.mrb[0].mxu0 %v7648
      %v7650 = vpop.f32.mrb[0].mxu0
      %v7651 = vadd.f32 0.0, %v7650
      %v7652 = vpop.f32.mrb[0].mxu0
      %7653 = vmatprep.mubr.f32.mxu0 0.0
      %v7654 = vand.u32 %v1039, 4294901760
      %v7655 = vsub.f32 %v1039, %v7654
      %v7656 = vand.u32 %v7655, 4294901760
      %v7657 = vsub.f32 %v7655, %v7656
      %v7658 = vand.u32 %v7657, 4294901760
      %7659 = vmatmul.mubr.f32.gmra.mrb[0].mxu0 %v7658
      %v7660 = vpop.f32.mrb[0].mxu0
      %v7661 = vadd.f32 0.0, %v7660
      %v7662 = vpop.f32.mrb[0].mxu0
      %7663 = vmatprep.mubr.f32.mxu0 0.0
      %v7664 = vand.u32 %v1042, 4294901760
      %v7665 = vsub.f32 %v1042, %v7664
      %v7666 = vand.u32 %v7665, 4294901760
      %v7667 = vsub.f32 %v7665, %v7666
      %v7668 = vand.u32 %v7667, 4294901760
      %7669 = vmatmul.mubr.f32.gmra.mrb[0].mxu0 %v7668
      %v7670 = vpop.f32.mrb[0].mxu0
      %v7671 = vadd.f32 0.0, %v7670
      %v7672 = vpop.f32.mrb[0].mxu0
      %7673 = vmatprep.mubr.f32.mxu0 0.0
      %v7674 = vand.u32 %v1045, 4294901760
      %v7675 = vsub.f32 %v1045, %v7674
      %v7676 = vand.u32 %v7675, 4294901760
      %v7677 = vsub.f32 %v7675, %v7676
      %v7678 = vand.u32 %v7677, 4294901760
      %7679 = vmatmul.mubr.f32.gmra.mrb[0].mxu0 %v7678
      %v7680 = vpop.f32.mrb[0].mxu0
      %v7681 = vadd.f32 0.0, %v7680
      %v7682 = vpop.f32.mrb[0].mxu0
      %7683 = vmatprep.mubr.f32.mxu0 0.0
      %v7684 = vand.u32 %v1048, 4294901760
      %v7685 = vsub.f32 %v1048, %v7684
      %v7686 = vand.u32 %v7685, 4294901760
      %v7687 = vsub.f32 %v7685, %v7686
      %v7688 = vand.u32 %v7687, 4294901760
      %7689 = vmatmul.mubr.f32.gmra.mrb[0].mxu0 %v7688
      %v7690 = vpop.f32.mrb[0].mxu0
      %v7691 = vadd.f32 0.0, %v7690
      %v7692 = vpop.f32.mrb[0].mxu0
      %7693 = vmatprep.mubr.f32.mxu0 0.0
      %v7694 = vand.u32 %v1051, 4294901760
      %v7695 = vsub.f32 %v1051, %v7694
      %v7696 = vand.u32 %v7695, 4294901760
      %v7697 = vsub.f32 %v7695, %v7696
      %v7698 = vand.u32 %v7697, 4294901760
      %7699 = vmatmul.mubr.f32.gmra.mrb[0].mxu0 %v7698
      %v7700 = vpop.f32.mrb[0].mxu0
      %v7701 = vadd.f32 0.0, %v7700
      %v7702 = vpop.f32.mrb[0].mxu0
      %7703 = vmatprep.mubr.f32.mxu0 0.0
      %v7704 = vand.u32 %v1054, 4294901760
      %v7705 = vsub.f32 %v1054, %v7704
      %v7706 = vand.u32 %v7705, 4294901760
      %v7707 = vsub.f32 %v7705, %v7706
      %v7708 = vand.u32 %v7707, 4294901760
      %7709 = vmatmul.mubr.f32.gmra.mrb[0].mxu0 %v7708
      %v7710 = vpop.f32.mrb[0].mxu0
      %v7711 = vadd.f32 0.0, %v7710
      %v7712 = vpop.f32.mrb[0].mxu0
      %7713 = vmatprep.mubr.f32.mxu0 0.0
      %v7714 = vand.u32 %v1057, 4294901760
      %v7715 = vsub.f32 %v1057, %v7714
      %v7716 = vand.u32 %v7715, 4294901760
      %v7717 = vsub.f32 %v7715, %v7716
      %v7718 = vand.u32 %v7717, 4294901760
      %7719 = vmatmul.mubr.f32.gmra.mrb[0].mxu0 %v7718
      %v7720 = vpop.f32.mrb[0].mxu0
      %v7721 = vadd.f32 0.0, %v7720
      %v7722 = vpop.f32.mrb[0].mxu0
      %7723 = vdwg.mxu0
      %7724 = vmatprep.subr.mxu0 0.0
      %v7725 = vand.u32 %v7526, 4294901760
      %v7726 = vsub.f32 %v7526, %v7725
      %v7727 = vand.u32 %v7726, 4294901760
      %v7728 = vsub.f32 %v7726, %v7727
      %v7729 = vand.u32 %v7728, 4294901760
      %7730 = vmatpush1.msra.mxu0 %v7729
      %7731 = vmatprep.subr.mxu0 0.0
      %v7732 = vand.u32 %v7532, 4294901760
      %v7733 = vsub.f32 %v7532, %v7732
      %v7734 = vand.u32 %v7733, 4294901760
      %v7735 = vsub.f32 %v7733, %v7734
      %v7736 = vand.u32 %v7735, 4294901760
      %7737 = vmatpush1.msra.mxu0 %v7736
      %7738 = vmatprep.subr.mxu0 0.0
      %v7739 = vand.u32 %v7538, 4294901760
      %v7740 = vsub.f32 %v7538, %v7739
      %v7741 = vand.u32 %v7740, 4294901760
      %v7742 = vsub.f32 %v7740, %v7741
      %v7743 = vand.u32 %v7742, 4294901760
      %7744 = vmatpush1.msra.mxu0 %v7743
      %7745 = vmatprep.subr.mxu0 0.0
      %v7746 = vand.u32 %v7544, 4294901760
      %v7747 = vsub.f32 %v7544, %v7746
      %v7748 = vand.u32 %v7747, 4294901760
      %v7749 = vsub.f32 %v7747, %v7748
      %v7750 = vand.u32 %v7749, 4294901760
      %7751 = vmatpush1.msra.mxu0 %v7750
      %7752 = vmatprep.subr.mxu0 0.0
      %v7753 = vand.u32 %v7550, 4294901760
      %v7754 = vsub.f32 %v7550, %v7753
      %v7755 = vand.u32 %v7754, 4294901760
      %v7756 = vsub.f32 %v7754, %v7755
      %v7757 = vand.u32 %v7756, 4294901760
      %7758 = vmatpush1.msra.mxu0 %v7757
      %7759 = vmatprep.subr.mxu0 0.0
      %v7760 = vand.u32 %v7556, 4294901760
      %v7761 = vsub.f32 %v7556, %v7760
      %v7762 = vand.u32 %v7761, 4294901760
      %v7763 = vsub.f32 %v7761, %v7762
      %v7764 = vand.u32 %v7763, 4294901760
      %7765 = vmatpush1.msra.mxu0 %v7764
      %7766 = vmatprep.subr.mxu0 0.0
      %v7767 = vand.u32 %v7562, 4294901760
      %v7768 = vsub.f32 %v7562, %v7767
      %v7769 = vand.u32 %v7768, 4294901760
      %v7770 = vsub.f32 %v7768, %v7769
      %v7771 = vand.u32 %v7770, 4294901760
      %7772 = vmatpush1.msra.mxu0 %v7771
      %7773 = vmatprep.subr.mxu0 0.0
      %v7774 = vand.u32 %v7568, 4294901760
      %v7775 = vsub.f32 %v7568, %v7774
      %v7776 = vand.u32 %v7775, 4294901760
      %v7777 = vsub.f32 %v7775, %v7776
      %v7778 = vand.u32 %v7777, 4294901760
      %7779 = vmatpush1.msra.mxu0 %v7778
      %7780 = vmatprep.subr.mxu0 0.0
      %7781 = vmatpush1.msra.mxu0 0.0
      %7782 = vmatprep.subr.mxu0 0.0
      %7783 = vmatpush1.msra.mxu0 0.0
      %7784 = vmatprep.subr.mxu0 0.0
      %7785 = vmatpush1.msra.mxu0 0.0
      %7786 = vmatprep.subr.mxu0 0.0
      %7787 = vmatpush1.msra.mxu0 0.0
      %7788 = vmatprep.subr.mxu0 0.0
      %7789 = vmatpush1.msra.mxu0 0.0
      %7790 = vmatprep.subr.mxu0 0.0
      %7791 = vmatpush1.msra.mxu0 0.0
      %7792 = vmatprep.subr.mxu0 0.0
      %7793 = vmatpush1.msra.mxu0 0.0
      %7794 = vmatprep.subr.mxu0 0.0
      %7795 = vmatpush1.msra.mxu0 0.0
      %7796 = vmatprep.subr.mxu0 0.0
      %7797 = vmatpush1.msra.mxu0 0.0
      %7798 = vmatprep.subr.mxu0 0.0
      %7799 = vmatpush1.msra.mxu0 0.0
      %7800 = vmatprep.subr.mxu0 0.0
      %7801 = vmatpush1.msra.mxu0 0.0
      %7802 = vmatprep.subr.mxu0 0.0
      %7803 = vmatpush1.msra.mxu0 0.0
      %7804 = vmatprep.subr.mxu0 0.0
      %7805 = vmatpush1.msra.mxu0 0.0
      %7806 = vmatprep.subr.mxu0 0.0
      %7807 = vmatpush1.msra.mxu0 0.0
      %7808 = vmatprep.subr.mxu0 0.0
      %7809 = vmatpush1.msra.mxu0 0.0
      %7810 = vmatprep.subr.mxu0 0.0
      %7811 = vmatpush1.msra.mxu0 0.0
      %7812 = vmatprep.subr.mxu0 0.0
      %7813 = vmatpush1.msra.mxu0 0.0
      %7814 = vmatprep.subr.mxu0 0.0
      %7815 = vmatpush1.msra.mxu0 0.0
      %7816 = vmatprep.subr.mxu0 0.0
      %7817 = vmatpush1.msra.mxu0 0.0
      %7818 = vmatprep.subr.mxu0 0.0
      %7819 = vmatpush1.msra.mxu0 0.0
      %7820 = vmatprep.subr.mxu0 0.0
      %7821 = vmatpush1.msra.mxu0 0.0
      %7822 = vmatprep.subr.mxu0 0.0
      %7823 = vmatpush1.msra.mxu0 0.0
      %7824 = vmatprep.subr.mxu0 0.0
      %7825 = vmatpush1.msra.mxu0 0.0
      %7826 = vmatprep.subr.mxu0 0.0
      %7827 = vmatpush1.msra.mxu0 0.0
      %7828 = vmatprep.mubr.f32.mxu0 0.0
      %v7829 = vand.u32 %v1036, 4294901760
      %7830 = vmatmul.mubr.f32.gmra.mrb[0].mxu0 %v7829
      %v7831 = vpop.f32.mrb[0].mxu0
      %v7832 = vadd.f32 %v7651, %v7831
      %v7833 = vpop.f32.mrb[0].mxu0
      %7834 = vmatprep.mubr.f32.mxu0 0.0
      %v7835 = vand.u32 %v1039, 4294901760
      %7836 = vmatmul.mubr.f32.gmra.mrb[0].mxu0 %v7835
      %v7837 = vpop.f32.mrb[0].mxu0
      %v7838 = vadd.f32 %v7661, %v7837
      %v7839 = vpop.f32.mrb[0].mxu0
      %7840 = vmatprep.mubr.f32.mxu0 0.0
      %v7841 = vand.u32 %v1042, 4294901760
      %7842 = vmatmul.mubr.f32.gmra.mrb[0].mxu0 %v7841
      %v7843 = vpop.f32.mrb[0].mxu0
      %v7844 = vadd.f32 %v7671, %v7843
      %v7845 = vpop.f32.mrb[0].mxu0
      %7846 = vmatprep.mubr.f32.mxu0 0.0
      %v7847 = vand.u32 %v1045, 4294901760
      %7848 = vmatmul.mubr.f32.gmra.mrb[0].mxu0 %v7847
      %v7849 = vpop.f32.mrb[0].mxu0
      %v7850 = vadd.f32 %v7681, %v7849
      %v7851 = vpop.f32.mrb[0].mxu0
      %7852 = vmatprep.mubr.f32.mxu0 0.0
      %v7853 = vand.u32 %v1048, 4294901760
      %7854 = vmatmul.mubr.f32.gmra.mrb[0].mxu0 %v7853
      %v7855 = vpop.f32.mrb[0].mxu0
      %v7856 = vadd.f32 %v7691, %v7855
      %v7857 = vpop.f32.mrb[0].mxu0
      %7858 = vmatprep.mubr.f32.mxu0 0.0
      %v7859 = vand.u32 %v1051, 4294901760
      %7860 = vmatmul.mubr.f32.gmra.mrb[0].mxu0 %v7859
      %v7861 = vpop.f32.mrb[0].mxu0
      %v7862 = vadd.f32 %v7701, %v7861
      %v7863 = vpop.f32.mrb[0].mxu0
      %7864 = vmatprep.mubr.f32.mxu0 0.0
      %v7865 = vand.u32 %v1054, 4294901760
      %7866 = vmatmul.mubr.f32.gmra.mrb[0].mxu0 %v7865
      %v7867 = vpop.f32.mrb[0].mxu0
      %v7868 = vadd.f32 %v7711, %v7867
      %v7869 = vpop.f32.mrb[0].mxu0
      %7870 = vmatprep.mubr.f32.mxu0 0.0
      %v7871 = vand.u32 %v1057, 4294901760
      %7872 = vmatmul.mubr.f32.gmra.mrb[0].mxu0 %v7871
      %v7873 = vpop.f32.mrb[0].mxu0
      %v7874 = vadd.f32 %v7721, %v7873
      %v7875 = vpop.f32.mrb[0].mxu0
      %7876 = vdwg.mxu0
      %7877 = vmatprep.subr.mxu0 0.0
      %v7878 = vand.u32 %v7526, 4294901760
      %v7879 = vsub.f32 %v7526, %v7878
      %7880 = vmatpush1.msra.mxu0 %v7879
      %7881 = vmatprep.subr.mxu0 0.0
      %v7882 = vand.u32 %v7532, 4294901760
      %v7883 = vsub.f32 %v7532, %v7882
      %7884 = vmatpush1.msra.mxu0 %v7883
      %7885 = vmatprep.subr.mxu0 0.0
      %v7886 = vand.u32 %v7538, 4294901760
      %v7887 = vsub.f32 %v7538, %v7886
      %7888 = vmatpush1.msra.mxu0 %v7887
      %7889 = vmatprep.subr.mxu0 0.0
      %v7890 = vand.u32 %v7544, 4294901760
      %v7891 = vsub.f32 %v7544, %v7890
      %7892 = vmatpush1.msra.mxu0 %v7891
      %7893 = vmatprep.subr.mxu0 0.0
      %v7894 = vand.u32 %v7550, 4294901760
      %v7895 = vsub.f32 %v7550, %v7894
      %7896 = vmatpush1.msra.mxu0 %v7895
      %7897 = vmatprep.subr.mxu0 0.0
      %v7898 = vand.u32 %v7556, 4294901760
      %v7899 = vsub.f32 %v7556, %v7898
      %7900 = vmatpush1.msra.mxu0 %v7899
      %7901 = vmatprep.subr.mxu0 0.0
      %v7902 = vand.u32 %v7562, 4294901760
      %v7903 = vsub.f32 %v7562, %v7902
      %7904 = vmatpush1.msra.mxu0 %v7903
      %7905 = vmatprep.subr.mxu0 0.0
      %v7906 = vand.u32 %v7568, 4294901760
      %v7907 = vsub.f32 %v7568, %v7906
      %7908 = vmatpush1.msra.mxu0 %v7907
      %7909 = vmatprep.subr.mxu0 0.0
      %7910 = vmatpush1.msra.mxu0 0.0
      %7911 = vmatprep.subr.mxu0 0.0
      %7912 = vmatpush1.msra.mxu0 0.0
      %7913 = vmatprep.subr.mxu0 0.0
      %7914 = vmatpush1.msra.mxu0 0.0
      %7915 = vmatprep.subr.mxu0 0.0
      %7916 = vmatpush1.msra.mxu0 0.0
      %7917 = vmatprep.subr.mxu0 0.0
      %7918 = vmatpush1.msra.mxu0 0.0
      %7919 = vmatprep.subr.mxu0 0.0
      %7920 = vmatpush1.msra.mxu0 0.0
      %7921 = vmatprep.subr.mxu0 0.0
      %7922 = vmatpush1.msra.mxu0 0.0
      %7923 = vmatprep.subr.mxu0 0.0
      %7924 = vmatpush1.msra.mxu0 0.0
      %7925 = vmatprep.subr.mxu0 0.0
      %7926 = vmatpush1.msra.mxu0 0.0
      %7927 = vmatprep.subr.mxu0 0.0
      %7928 = vmatpush1.msra.mxu0 0.0
      %7929 = vmatprep.subr.mxu0 0.0
      %7930 = vmatpush1.msra.mxu0 0.0
      %7931 = vmatprep.subr.mxu0 0.0
      %7932 = vmatpush1.msra.mxu0 0.0
      %7933 = vmatprep.subr.mxu0 0.0
      %7934 = vmatpush1.msra.mxu0 0.0
      %7935 = vmatprep.subr.mxu0 0.0
      %7936 = vmatpush1.msra.mxu0 0.0
      %7937 = vmatprep.subr.mxu0 0.0
      %7938 = vmatpush1.msra.mxu0 0.0
      %7939 = vmatprep.subr.mxu0 0.0
      %7940 = vmatpush1.msra.mxu0 0.0
      %7941 = vmatprep.subr.mxu0 0.0
      %7942 = vmatpush1.msra.mxu0 0.0
      %7943 = vmatprep.subr.mxu0 0.0
      %7944 = vmatpush1.msra.mxu0 0.0
      %7945 = vmatprep.subr.mxu0 0.0
      %7946 = vmatpush1.msra.mxu0 0.0
      %7947 = vmatprep.subr.mxu0 0.0
      %7948 = vmatpush1.msra.mxu0 0.0
      %7949 = vmatprep.subr.mxu0 0.0
      %7950 = vmatpush1.msra.mxu0 0.0
      %7951 = vmatprep.subr.mxu0 0.0
      %7952 = vmatpush1.msra.mxu0 0.0
      %7953 = vmatprep.subr.mxu0 0.0
      %7954 = vmatpush1.msra.mxu0 0.0
      %7955 = vmatprep.subr.mxu0 0.0
      %7956 = vmatpush1.msra.mxu0 0.0
      %7957 = vmatprep.mubr.f32.mxu0 0.0
      %v7958 = vand.u32 %v1036, 4294901760
      %v7959 = vsub.f32 %v1036, %v7958
      %7960 = vmatmul.mubr.f32.gmra.mrb[0].mxu0 %v7959
      %v7961 = vpop.f32.mrb[0].mxu0
      %v7962 = vadd.f32 %v7832, %v7961
      %v7963 = vpop.f32.mrb[0].mxu0
      %7964 = vmatprep.mubr.f32.mxu0 0.0
      %v7965 = vand.u32 %v1039, 4294901760
      %v7966 = vsub.f32 %v1039, %v7965
      %7967 = vmatmul.mubr.f32.gmra.mrb[0].mxu0 %v7966
      %v7968 = vpop.f32.mrb[0].mxu0
      %v7969 = vadd.f32 %v7838, %v7968
      %v7970 = vpop.f32.mrb[0].mxu0
      %7971 = vmatprep.mubr.f32.mxu0 0.0
      %v7972 = vand.u32 %v1042, 4294901760
      %v7973 = vsub.f32 %v1042, %v7972
      %7974 = vmatmul.mubr.f32.gmra.mrb[0].mxu0 %v7973
      %v7975 = vpop.f32.mrb[0].mxu0
      %v7976 = vadd.f32 %v7844, %v7975
      %v7977 = vpop.f32.mrb[0].mxu0
      %7978 = vmatprep.mubr.f32.mxu0 0.0
      %v7979 = vand.u32 %v1045, 4294901760
      %v7980 = vsub.f32 %v1045, %v7979
      %7981 = vmatmul.mubr.f32.gmra.mrb[0].mxu0 %v7980
      %v7982 = vpop.f32.mrb[0].mxu0
      %v7983 = vadd.f32 %v7850, %v7982
      %v7984 = vpop.f32.mrb[0].mxu0
      %7985 = vmatprep.mubr.f32.mxu0 0.0
      %v7986 = vand.u32 %v1048, 4294901760
      %v7987 = vsub.f32 %v1048, %v7986
      %7988 = vmatmul.mubr.f32.gmra.mrb[0].mxu0 %v7987
      %v7989 = vpop.f32.mrb[0].mxu0
      %v7990 = vadd.f32 %v7856, %v7989
      %v7991 = vpop.f32.mrb[0].mxu0
      %7992 = vmatprep.mubr.f32.mxu0 0.0
      %v7993 = vand.u32 %v1051, 4294901760
      %v7994 = vsub.f32 %v1051, %v7993
      %7995 = vmatmul.mubr.f32.gmra.mrb[0].mxu0 %v7994
      %v7996 = vpop.f32.mrb[0].mxu0
      %v7997 = vadd.f32 %v7862, %v7996
      %v7998 = vpop.f32.mrb[0].mxu0
      %7999 = vmatprep.mubr.f32.mxu0 0.0
      %v8000 = vand.u32 %v1054, 4294901760
      %v8001 = vsub.f32 %v1054, %v8000
      %8002 = vmatmul.mubr.f32.gmra.mrb[0].mxu0 %v8001
      %v8003 = vpop.f32.mrb[0].mxu0
      %v8004 = vadd.f32 %v7868, %v8003
      %v8005 = vpop.f32.mrb[0].mxu0
      %8006 = vmatprep.mubr.f32.mxu0 0.0
      %v8007 = vand.u32 %v1057, 4294901760
      %v8008 = vsub.f32 %v1057, %v8007
      %8009 = vmatmul.mubr.f32.gmra.mrb[0].mxu0 %v8008
      %v8010 = vpop.f32.mrb[0].mxu0
      %v8011 = vadd.f32 %v7874, %v8010
      %v8012 = vpop.f32.mrb[0].mxu0
      %8013 = vdwg.mxu0
      %8014 = vmatprep.subr.mxu0 0.0
      %v8015 = vand.u32 %v7526, 4294901760
      %8016 = vmatpush1.msra.mxu0 %v8015
      %8017 = vmatprep.subr.mxu0 0.0
      %v8018 = vand.u32 %v7532, 4294901760
      %8019 = vmatpush1.msra.mxu0 %v8018
      %8020 = vmatprep.subr.mxu0 0.0
      %v8021 = vand.u32 %v7538, 4294901760
      %8022 = vmatpush1.msra.mxu0 %v8021
      %8023 = vmatprep.subr.mxu0 0.0
      %v8024 = vand.u32 %v7544, 4294901760
      %8025 = vmatpush1.msra.mxu0 %v8024
      %8026 = vmatprep.subr.mxu0 0.0
      %v8027 = vand.u32 %v7550, 4294901760
      %8028 = vmatpush1.msra.mxu0 %v8027
      %8029 = vmatprep.subr.mxu0 0.0
      %v8030 = vand.u32 %v7556, 4294901760
      %8031 = vmatpush1.msra.mxu0 %v8030
      %8032 = vmatprep.subr.mxu0 0.0
      %v8033 = vand.u32 %v7562, 4294901760
      %8034 = vmatpush1.msra.mxu0 %v8033
      %8035 = vmatprep.subr.mxu0 0.0
      %v8036 = vand.u32 %v7568, 4294901760
      %8037 = vmatpush1.msra.mxu0 %v8036
      %8038 = vmatprep.subr.mxu0 0.0
      %8039 = vmatpush1.msra.mxu0 0.0
      %8040 = vmatprep.subr.mxu0 0.0
      %8041 = vmatpush1.msra.mxu0 0.0
      %8042 = vmatprep.subr.mxu0 0.0
      %8043 = vmatpush1.msra.mxu0 0.0
      %8044 = vmatprep.subr.mxu0 0.0
      %8045 = vmatpush1.msra.mxu0 0.0
      %8046 = vmatprep.subr.mxu0 0.0
      %8047 = vmatpush1.msra.mxu0 0.0
      %8048 = vmatprep.subr.mxu0 0.0
      %8049 = vmatpush1.msra.mxu0 0.0
      %8050 = vmatprep.subr.mxu0 0.0
      %8051 = vmatpush1.msra.mxu0 0.0
      %8052 = vmatprep.subr.mxu0 0.0
      %8053 = vmatpush1.msra.mxu0 0.0
      %8054 = vmatprep.subr.mxu0 0.0
      %8055 = vmatpush1.msra.mxu0 0.0
      %8056 = vmatprep.subr.mxu0 0.0
      %8057 = vmatpush1.msra.mxu0 0.0
      %8058 = vmatprep.subr.mxu0 0.0
      %8059 = vmatpush1.msra.mxu0 0.0
      %8060 = vmatprep.subr.mxu0 0.0
      %8061 = vmatpush1.msra.mxu0 0.0
      %8062 = vmatprep.subr.mxu0 0.0
      %8063 = vmatpush1.msra.mxu0 0.0
      %8064 = vmatprep.subr.mxu0 0.0
      %8065 = vmatpush1.msra.mxu0 0.0
      %8066 = vmatprep.subr.mxu0 0.0
      %8067 = vmatpush1.msra.mxu0 0.0
      %8068 = vmatprep.subr.mxu0 0.0
      %8069 = vmatpush1.msra.mxu0 0.0
      %8070 = vmatprep.subr.mxu0 0.0
      %8071 = vmatpush1.msra.mxu0 0.0
      %8072 = vmatprep.subr.mxu0 0.0
      %8073 = vmatpush1.msra.mxu0 0.0
      %8074 = vmatprep.subr.mxu0 0.0
      %8075 = vmatpush1.msra.mxu0 0.0
      %8076 = vmatprep.subr.mxu0 0.0
      %8077 = vmatpush1.msra.mxu0 0.0
      %8078 = vmatprep.subr.mxu0 0.0
      %8079 = vmatpush1.msra.mxu0 0.0
      %8080 = vmatprep.subr.mxu0 0.0
      %8081 = vmatpush1.msra.mxu0 0.0
      %8082 = vmatprep.subr.mxu0 0.0
      %8083 = vmatpush1.msra.mxu0 0.0
      %8084 = vmatprep.subr.mxu0 0.0
      %8085 = vmatpush1.msra.mxu0 0.0
      %8086 = vmatprep.mubr.f32.mxu0 0.0
      %v8087 = vand.u32 %v1036, 4294901760
      %v8088 = vsub.f32 %v1036, %v8087
      %v8089 = vand.u32 %v8088, 4294901760
      %8090 = vmatmul.mubr.f32.gmra.mrb[0].mxu0 %v8089
      %v8091 = vpop.f32.mrb[0].mxu0
      %v8092 = vadd.f32 %v7962, %v8091
      %v8093 = vpop.f32.mrb[0].mxu0
      %8094 = vmatprep.mubr.f32.mxu0 0.0
      %v8095 = vand.u32 %v1039, 4294901760
      %v8096 = vsub.f32 %v1039, %v8095
      %v8097 = vand.u32 %v8096, 4294901760
      %8098 = vmatmul.mubr.f32.gmra.mrb[0].mxu0 %v8097
      %v8099 = vpop.f32.mrb[0].mxu0
      %v8100 = vadd.f32 %v7969, %v8099
      %v8101 = vpop.f32.mrb[0].mxu0
      %8102 = vmatprep.mubr.f32.mxu0 0.0
      %v8103 = vand.u32 %v1042, 4294901760
      %v8104 = vsub.f32 %v1042, %v8103
      %v8105 = vand.u32 %v8104, 4294901760
      %8106 = vmatmul.mubr.f32.gmra.mrb[0].mxu0 %v8105
      %v8107 = vpop.f32.mrb[0].mxu0
      %v8108 = vadd.f32 %v7976, %v8107
      %v8109 = vpop.f32.mrb[0].mxu0
      %8110 = vmatprep.mubr.f32.mxu0 0.0
      %v8111 = vand.u32 %v1045, 4294901760
      %v8112 = vsub.f32 %v1045, %v8111
      %v8113 = vand.u32 %v8112, 4294901760
      %8114 = vmatmul.mubr.f32.gmra.mrb[0].mxu0 %v8113
      %v8115 = vpop.f32.mrb[0].mxu0
      %v8116 = vadd.f32 %v7983, %v8115
      %v8117 = vpop.f32.mrb[0].mxu0
      %8118 = vmatprep.mubr.f32.mxu0 0.0
      %v8119 = vand.u32 %v1048, 4294901760
      %v8120 = vsub.f32 %v1048, %v8119
      %v8121 = vand.u32 %v8120, 4294901760
      %8122 = vmatmul.mubr.f32.gmra.mrb[0].mxu0 %v8121
      %v8123 = vpop.f32.mrb[0].mxu0
      %v8124 = vadd.f32 %v7990, %v8123
      %v8125 = vpop.f32.mrb[0].mxu0
      %8126 = vmatprep.mubr.f32.mxu0 0.0
      %v8127 = vand.u32 %v1051, 4294901760
      %v8128 = vsub.f32 %v1051, %v8127
      %v8129 = vand.u32 %v8128, 4294901760
      %8130 = vmatmul.mubr.f32.gmra.mrb[0].mxu0 %v8129
      %v8131 = vpop.f32.mrb[0].mxu0
      %v8132 = vadd.f32 %v7997, %v8131
      %v8133 = vpop.f32.mrb[0].mxu0
      %8134 = vmatprep.mubr.f32.mxu0 0.0
      %v8135 = vand.u32 %v1054, 4294901760
      %v8136 = vsub.f32 %v1054, %v8135
      %v8137 = vand.u32 %v8136, 4294901760
      %8138 = vmatmul.mubr.f32.gmra.mrb[0].mxu0 %v8137
      %v8139 = vpop.f32.mrb[0].mxu0
      %v8140 = vadd.f32 %v8004, %v8139
      %v8141 = vpop.f32.mrb[0].mxu0
      %8142 = vmatprep.mubr.f32.mxu0 0.0
      %v8143 = vand.u32 %v1057, 4294901760
      %v8144 = vsub.f32 %v1057, %v8143
      %v8145 = vand.u32 %v8144, 4294901760
      %8146 = vmatmul.mubr.f32.gmra.mrb[0].mxu0 %v8145
      %v8147 = vpop.f32.mrb[0].mxu0
      %v8148 = vadd.f32 %v8011, %v8147
      %v8149 = vpop.f32.mrb[0].mxu0
      %8150 = vdwg.mxu0
      %8151 = vmatprep.subr.mxu0 0.0
      %v8152 = vand.u32 %v7526, 4294901760
      %v8153 = vsub.f32 %v7526, %v8152
      %v8154 = vand.u32 %v8153, 4294901760
      %8155 = vmatpush1.msra.mxu0 %v8154
      %8156 = vmatprep.subr.mxu0 0.0
      %v8157 = vand.u32 %v7532, 4294901760
      %v8158 = vsub.f32 %v7532, %v8157
      %v8159 = vand.u32 %v8158, 4294901760
      %8160 = vmatpush1.msra.mxu0 %v8159
      %8161 = vmatprep.subr.mxu0 0.0
      %v8162 = vand.u32 %v7538, 4294901760
      %v8163 = vsub.f32 %v7538, %v8162
      %v8164 = vand.u32 %v8163, 4294901760
      %8165 = vmatpush1.msra.mxu0 %v8164
      %8166 = vmatprep.subr.mxu0 0.0
      %v8167 = vand.u32 %v7544, 4294901760
      %v8168 = vsub.f32 %v7544, %v8167
      %v8169 = vand.u32 %v8168, 4294901760
      %8170 = vmatpush1.msra.mxu0 %v8169
      %8171 = vmatprep.subr.mxu0 0.0
      %v8172 = vand.u32 %v7550, 4294901760
      %v8173 = vsub.f32 %v7550, %v8172
      %v8174 = vand.u32 %v8173, 4294901760
      %8175 = vmatpush1.msra.mxu0 %v8174
      %8176 = vmatprep.subr.mxu0 0.0
      %v8177 = vand.u32 %v7556, 4294901760
      %v8178 = vsub.f32 %v7556, %v8177
      %v8179 = vand.u32 %v8178, 4294901760
      %8180 = vmatpush1.msra.mxu0 %v8179
      %8181 = vmatprep.subr.mxu0 0.0
      %v8182 = vand.u32 %v7562, 4294901760
      %v8183 = vsub.f32 %v7562, %v8182
      %v8184 = vand.u32 %v8183, 4294901760
      %8185 = vmatpush1.msra.mxu0 %v8184
      %8186 = vmatprep.subr.mxu0 0.0
      %v8187 = vand.u32 %v7568, 4294901760
      %v8188 = vsub.f32 %v7568, %v8187
      %v8189 = vand.u32 %v8188, 4294901760
      %8190 = vmatpush1.msra.mxu0 %v8189
      %8191 = vmatprep.subr.mxu0 0.0
      %8192 = vmatpush1.msra.mxu0 0.0
      %8193 = vmatprep.subr.mxu0 0.0
      %8194 = vmatpush1.msra.mxu0 0.0
      %8195 = vmatprep.subr.mxu0 0.0
      %8196 = vmatpush1.msra.mxu0 0.0
      %8197 = vmatprep.subr.mxu0 0.0
      %8198 = vmatpush1.msra.mxu0 0.0
      %8199 = vmatprep.subr.mxu0 0.0
      %8200 = vmatpush1.msra.mxu0 0.0
      %8201 = vmatprep.subr.mxu0 0.0
      %8202 = vmatpush1.msra.mxu0 0.0
      %8203 = vmatprep.subr.mxu0 0.0
      %8204 = vmatpush1.msra.mxu0 0.0
      %8205 = vmatprep.subr.mxu0 0.0
      %8206 = vmatpush1.msra.mxu0 0.0
      %8207 = vmatprep.subr.mxu0 0.0
      %8208 = vmatpush1.msra.mxu0 0.0
      %8209 = vmatprep.subr.mxu0 0.0
      %8210 = vmatpush1.msra.mxu0 0.0
      %8211 = vmatprep.subr.mxu0 0.0
      %8212 = vmatpush1.msra.mxu0 0.0
      %8213 = vmatprep.subr.mxu0 0.0
      %8214 = vmatpush1.msra.mxu0 0.0
      %8215 = vmatprep.subr.mxu0 0.0
      %8216 = vmatpush1.msra.mxu0 0.0
      %8217 = vmatprep.subr.mxu0 0.0
      %8218 = vmatpush1.msra.mxu0 0.0
      %8219 = vmatprep.subr.mxu0 0.0
      %8220 = vmatpush1.msra.mxu0 0.0
      %8221 = vmatprep.subr.mxu0 0.0
      %8222 = vmatpush1.msra.mxu0 0.0
      %8223 = vmatprep.subr.mxu0 0.0
      %8224 = vmatpush1.msra.mxu0 0.0
      %8225 = vmatprep.subr.mxu0 0.0
      %8226 = vmatpush1.msra.mxu0 0.0
      %8227 = vmatprep.subr.mxu0 0.0
      %8228 = vmatpush1.msra.mxu0 0.0
      %8229 = vmatprep.subr.mxu0 0.0
      %8230 = vmatpush1.msra.mxu0 0.0
      %8231 = vmatprep.subr.mxu0 0.0
      %8232 = vmatpush1.msra.mxu0 0.0
      %8233 = vmatprep.subr.mxu0 0.0
      %8234 = vmatpush1.msra.mxu0 0.0
      %8235 = vmatprep.subr.mxu0 0.0
      %8236 = vmatpush1.msra.mxu0 0.0
      %8237 = vmatprep.subr.mxu0 0.0
      %8238 = vmatpush1.msra.mxu0 0.0
      %8239 = vmatprep.mubr.f32.mxu0 0.0
      %v8240 = vand.u32 %v1036, 4294901760
      %8241 = vmatmul.mubr.f32.gmra.mrb[0].mxu0 %v8240
      %v8242 = vpop.f32.mrb[0].mxu0
      %v8243 = vadd.f32 %v8092, %v8242
      %v8244 = vpop.f32.mrb[0].mxu0
      %8245 = vmatprep.mubr.f32.mxu0 0.0
      %v8246 = vand.u32 %v1039, 4294901760
      %8247 = vmatmul.mubr.f32.gmra.mrb[0].mxu0 %v8246
      %v8248 = vpop.f32.mrb[0].mxu0
      %v8249 = vadd.f32 %v8100, %v8248
      %v8250 = vpop.f32.mrb[0].mxu0
      %8251 = vmatprep.mubr.f32.mxu0 0.0
      %v8252 = vand.u32 %v1042, 4294901760
      %8253 = vmatmul.mubr.f32.gmra.mrb[0].mxu0 %v8252
      %v8254 = vpop.f32.mrb[0].mxu0
      %v8255 = vadd.f32 %v8108, %v8254
      %v8256 = vpop.f32.mrb[0].mxu0
      %8257 = vmatprep.mubr.f32.mxu0 0.0
      %v8258 = vand.u32 %v1045, 4294901760
      %8259 = vmatmul.mubr.f32.gmra.mrb[0].mxu0 %v8258
      %v8260 = vpop.f32.mrb[0].mxu0
      %v8261 = vadd.f32 %v8116, %v8260
      %v8262 = vpop.f32.mrb[0].mxu0
      %8263 = vmatprep.mubr.f32.mxu0 0.0
      %v8264 = vand.u32 %v1048, 4294901760
      %8265 = vmatmul.mubr.f32.gmra.mrb[0].mxu0 %v8264
      %v8266 = vpop.f32.mrb[0].mxu0
      %v8267 = vadd.f32 %v8124, %v8266
      %v8268 = vpop.f32.mrb[0].mxu0
      %8269 = vmatprep.mubr.f32.mxu0 0.0
      %v8270 = vand.u32 %v1051, 4294901760
      %8271 = vmatmul.mubr.f32.gmra.mrb[0].mxu0 %v8270
      %v8272 = vpop.f32.mrb[0].mxu0
      %v8273 = vadd.f32 %v8132, %v8272
      %v8274 = vpop.f32.mrb[0].mxu0
      %8275 = vmatprep.mubr.f32.mxu0 0.0
      %v8276 = vand.u32 %v1054, 4294901760
      %8277 = vmatmul.mubr.f32.gmra.mrb[0].mxu0 %v8276
      %v8278 = vpop.f32.mrb[0].mxu0
      %v8279 = vadd.f32 %v8140, %v8278
      %v8280 = vpop.f32.mrb[0].mxu0
      %8281 = vmatprep.mubr.f32.mxu0 0.0
      %v8282 = vand.u32 %v1057, 4294901760
      %8283 = vmatmul.mubr.f32.gmra.mrb[0].mxu0 %v8282
      %v8284 = vpop.f32.mrb[0].mxu0
      %v8285 = vadd.f32 %v8148, %v8284
      %v8286 = vpop.f32.mrb[0].mxu0
      %8287 = vdwg.mxu0
      %8288 = vmatprep.subr.mxu0 0.0
      %v8289 = vand.u32 %v7526, 4294901760
      %8290 = vmatpush1.msra.mxu0 %v8289
      %8291 = vmatprep.subr.mxu0 0.0
      %v8292 = vand.u32 %v7532, 4294901760
      %8293 = vmatpush1.msra.mxu0 %v8292
      %8294 = vmatprep.subr.mxu0 0.0
      %v8295 = vand.u32 %v7538, 4294901760
      %8296 = vmatpush1.msra.mxu0 %v8295
      %8297 = vmatprep.subr.mxu0 0.0
      %v8298 = vand.u32 %v7544, 4294901760
      %8299 = vmatpush1.msra.mxu0 %v8298
      %8300 = vmatprep.subr.mxu0 0.0
      %v8301 = vand.u32 %v7550, 4294901760
      %8302 = vmatpush1.msra.mxu0 %v8301
      %8303 = vmatprep.subr.mxu0 0.0
      %v8304 = vand.u32 %v7556, 4294901760
      %8305 = vmatpush1.msra.mxu0 %v8304
      %8306 = vmatprep.subr.mxu0 0.0
      %v8307 = vand.u32 %v7562, 4294901760
      %8308 = vmatpush1.msra.mxu0 %v8307
      %8309 = vmatprep.subr.mxu0 0.0
      %v8310 = vand.u32 %v7568, 4294901760
      %8311 = vmatpush1.msra.mxu0 %v8310
      %8312 = vmatprep.subr.mxu0 0.0
      %8313 = vmatpush1.msra.mxu0 0.0
      %8314 = vmatprep.subr.mxu0 0.0
      %8315 = vmatpush1.msra.mxu0 0.0
      %8316 = vmatprep.subr.mxu0 0.0
      %8317 = vmatpush1.msra.mxu0 0.0
      %8318 = vmatprep.subr.mxu0 0.0
      %8319 = vmatpush1.msra.mxu0 0.0
      %8320 = vmatprep.subr.mxu0 0.0
      %8321 = vmatpush1.msra.mxu0 0.0
      %8322 = vmatprep.subr.mxu0 0.0
      %8323 = vmatpush1.msra.mxu0 0.0
      %8324 = vmatprep.subr.mxu0 0.0
      %8325 = vmatpush1.msra.mxu0 0.0
      %8326 = vmatprep.subr.mxu0 0.0
      %8327 = vmatpush1.msra.mxu0 0.0
      %8328 = vmatprep.subr.mxu0 0.0
      %8329 = vmatpush1.msra.mxu0 0.0
      %8330 = vmatprep.subr.mxu0 0.0
      %8331 = vmatpush1.msra.mxu0 0.0
      %8332 = vmatprep.subr.mxu0 0.0
      %8333 = vmatpush1.msra.mxu0 0.0
      %8334 = vmatprep.subr.mxu0 0.0
      %8335 = vmatpush1.msra.mxu0 0.0
      %8336 = vmatprep.subr.mxu0 0.0
      %8337 = vmatpush1.msra.mxu0 0.0
      %8338 = vmatprep.subr.mxu0 0.0
      %8339 = vmatpush1.msra.mxu0 0.0
      %8340 = vmatprep.subr.mxu0 0.0
      %8341 = vmatpush1.msra.mxu0 0.0
      %8342 = vmatprep.subr.mxu0 0.0
      %8343 = vmatpush1.msra.mxu0 0.0
      %8344 = vmatprep.subr.mxu0 0.0
      %8345 = vmatpush1.msra.mxu0 0.0
      %8346 = vmatprep.subr.mxu0 0.0
      %8347 = vmatpush1.msra.mxu0 0.0
      %8348 = vmatprep.subr.mxu0 0.0
      %8349 = vmatpush1.msra.mxu0 0.0
      %8350 = vmatprep.subr.mxu0 0.0
      %8351 = vmatpush1.msra.mxu0 0.0
      %8352 = vmatprep.subr.mxu0 0.0
      %8353 = vmatpush1.msra.mxu0 0.0
      %8354 = vmatprep.subr.mxu0 0.0
      %8355 = vmatpush1.msra.mxu0 0.0
      %8356 = vmatprep.subr.mxu0 0.0
      %8357 = vmatpush1.msra.mxu0 0.0
      %8358 = vmatprep.subr.mxu0 0.0
      %8359 = vmatpush1.msra.mxu0 0.0
      %8360 = vmatprep.mubr.f32.mxu0 0.0
      %v8361 = vand.u32 %v1036, 4294901760
      %8362 = vmatmul.mubr.f32.gmra.mrb[0].mxu0 %v8361
      %v8363 = vpop.f32.mrb[0].mxu0
      %v8364 = vadd.f32 %v8243, %v8363
      %v8365 = vpop.f32.mrb[0].mxu0
      %8366 = vmatprep.mubr.f32.mxu0 0.0
      %v8367 = vand.u32 %v1039, 4294901760
      %8368 = vmatmul.mubr.f32.gmra.mrb[0].mxu0 %v8367
      %v8369 = vpop.f32.mrb[0].mxu0
      %v8370 = vadd.f32 %v8249, %v8369
      %v8371 = vpop.f32.mrb[0].mxu0
      %8372 = vmatprep.mubr.f32.mxu0 0.0
      %v8373 = vand.u32 %v1042, 4294901760
      %8374 = vmatmul.mubr.f32.gmra.mrb[0].mxu0 %v8373
      %v8375 = vpop.f32.mrb[0].mxu0
      %v8376 = vadd.f32 %v8255, %v8375
      %v8377 = vpop.f32.mrb[0].mxu0
      %8378 = vmatprep.mubr.f32.mxu0 0.0
      %v8379 = vand.u32 %v1045, 4294901760
      %8380 = vmatmul.mubr.f32.gmra.mrb[0].mxu0 %v8379
      %v8381 = vpop.f32.mrb[0].mxu0
      %v8382 = vadd.f32 %v8261, %v8381
      %v8383 = vpop.f32.mrb[0].mxu0
      %8384 = vmatprep.mubr.f32.mxu0 0.0
      %v8385 = vand.u32 %v1048, 4294901760
      %8386 = vmatmul.mubr.f32.gmra.mrb[0].mxu0 %v8385
      %v8387 = vpop.f32.mrb[0].mxu0
      %v8388 = vadd.f32 %v8267, %v8387
      %v8389 = vpop.f32.mrb[0].mxu0
      %8390 = vmatprep.mubr.f32.mxu0 0.0
      %v8391 = vand.u32 %v1051, 4294901760
      %8392 = vmatmul.mubr.f32.gmra.mrb[0].mxu0 %v8391
      %v8393 = vpop.f32.mrb[0].mxu0
      %v8394 = vadd.f32 %v8273, %v8393
      %v8395 = vpop.f32.mrb[0].mxu0
      %8396 = vmatprep.mubr.f32.mxu0 0.0
      %v8397 = vand.u32 %v1054, 4294901760
      %8398 = vmatmul.mubr.f32.gmra.mrb[0].mxu0 %v8397
      %v8399 = vpop.f32.mrb[0].mxu0
      %v8400 = vadd.f32 %v8279, %v8399
      %v8401 = vpop.f32.mrb[0].mxu0
      %8402 = vmatprep.mubr.f32.mxu0 0.0
      %v8403 = vand.u32 %v1057, 4294901760
      %8404 = vmatmul.mubr.f32.gmra.mrb[0].mxu0 %v8403
      %v8405 = vpop.f32.mrb[0].mxu0
      %v8406 = vadd.f32 %v8285, %v8405
      %v8407 = vpop.f32.mrb[0].mxu0
      %8408 = vdwg.mxu0
      %v8409 = vmul.f32 %v1852, %v1852
      %v8410 = vmul.f32 %v1858, %v1858
      %v8411 = vmul.f32 %v1864, %v1864
      %v8412 = vmul.f32 %v1870, %v1870
      %v8413 = vmul.f32 %v1876, %v1876
      %v8414 = vmul.f32 %v1882, %v1882
      %v8415 = vmul.f32 %v1888, %v1888
      %v8416 = vmul.f32 %v1894, %v1894
      %v8417 = vmul.f32 %v3474, %v3474
      %v8418 = vmul.f32 %v3480, %v3480
      %v8419 = vmul.f32 %v3486, %v3486
      %v8420 = vmul.f32 %v3492, %v3492
      %v8421 = vmul.f32 %v3498, %v3498
      %v8422 = vmul.f32 %v3504, %v3504
      %v8423 = vmul.f32 %v3510, %v3510
      %v8424 = vmul.f32 %v3516, %v3516
      %v8425 = vmul.f32 %v1852, %v3474
      %v8426 = vmul.f32 %v1858, %v3480
      %v8427 = vmul.f32 %v1864, %v3486
      %v8428 = vmul.f32 %v1870, %v3492
      %v8429 = vmul.f32 %v1876, %v3498
      %v8430 = vmul.f32 %v1882, %v3504
      %v8431 = vmul.f32 %v1888, %v3510
      %v8432 = vmul.f32 %v1894, %v3516
      %v8433 = vsub.f32 %v5104, %v8409
      %v8434 = vsub.f32 %v5110, %v8410
      %v8435 = vsub.f32 %v5116, %v8411
      %v8436 = vsub.f32 %v5122, %v8412
      %v8437 = vsub.f32 %v5128, %v8413
      %v8438 = vsub.f32 %v5134, %v8414
      %v8439 = vsub.f32 %v5140, %v8415
      %v8440 = vsub.f32 %v5146, %v8416
      %v8441 = vsub.f32 %v6734, %v8417
      %v8442 = vsub.f32 %v6740, %v8418
      %v8443 = vsub.f32 %v6746, %v8419
      %v8444 = vsub.f32 %v6752, %v8420
      %v8445 = vsub.f32 %v6758, %v8421
      %v8446 = vsub.f32 %v6764, %v8422
      %v8447 = vsub.f32 %v6770, %v8423
      %v8448 = vsub.f32 %v6776, %v8424
      %v8449 = vsub.f32 %v8364, %v8425
      %v8450 = vsub.f32 %v8370, %v8426
      %v8451 = vsub.f32 %v8376, %v8427
      %v8452 = vsub.f32 %v8382, %v8428
      %v8453 = vsub.f32 %v8388, %v8429
      %v8454 = vsub.f32 %v8394, %v8430
      %v8455 = vsub.f32 %v8400, %v8431
      %v8456 = vsub.f32 %v8406, %v8432
      %v8457 = vmul.f32 %v8425, 2.0
      %v8458 = vmul.f32 %v8426, 2.0
      %v8459 = vmul.f32 %v8427, 2.0
      %v8460 = vmul.f32 %v8428, 2.0
      %v8461 = vmul.f32 %v8429, 2.0
      %v8462 = vmul.f32 %v8430, 2.0
      %v8463 = vmul.f32 %v8431, 2.0
      %v8464 = vmul.f32 %v8432, 2.0
      %v8465 = vadd.f32 %v8457, 0.0001
      %v8466 = vadd.f32 %v8458, 0.0001
      %v8467 = vadd.f32 %v8459, 0.0001
      %v8468 = vadd.f32 %v8460, 0.0001
      %v8469 = vadd.f32 %v8461, 0.0001
      %v8470 = vadd.f32 %v8462, 0.0001
      %v8471 = vadd.f32 %v8463, 0.0001
      %v8472 = vadd.f32 %v8464, 0.0001
      %v8473 = vmul.f32 %v8449, 2.0
      %v8474 = vmul.f32 %v8450, 2.0
      %v8475 = vmul.f32 %v8451, 2.0
      %v8476 = vmul.f32 %v8452, 2.0
      %v8477 = vmul.f32 %v8453, 2.0
      %v8478 = vmul.f32 %v8454, 2.0
      %v8479 = vmul.f32 %v8455, 2.0
      %v8480 = vmul.f32 %v8456, 2.0
      %v8481 = vadd.f32 %v8473, 0.0009
      %v8482 = vadd.f32 %v8474, 0.0009
      %v8483 = vadd.f32 %v8475, 0.0009
      %v8484 = vadd.f32 %v8476, 0.0009
      %v8485 = vadd.f32 %v8477, 0.0009
      %v8486 = vadd.f32 %v8478, 0.0009
      %v8487 = vadd.f32 %v8479, 0.0009
      %v8488 = vadd.f32 %v8480, 0.0009
      %v8489 = vmul.f32 %v8465, %v8481
      %v8490 = vmul.f32 %v8466, %v8482
      %v8491 = vmul.f32 %v8467, %v8483
      %v8492 = vmul.f32 %v8468, %v8484
      %v8493 = vmul.f32 %v8469, %v8485
      %v8494 = vmul.f32 %v8470, %v8486
      %v8495 = vmul.f32 %v8471, %v8487
      %v8496 = vmul.f32 %v8472, %v8488
      %v8497 = vadd.f32 %v8409, %v8417
      %v8498 = vadd.f32 %v8410, %v8418
      %v8499 = vadd.f32 %v8411, %v8419
      %v8500 = vadd.f32 %v8412, %v8420
      %v8501 = vadd.f32 %v8413, %v8421
      %v8502 = vadd.f32 %v8414, %v8422
      %v8503 = vadd.f32 %v8415, %v8423
      %v8504 = vadd.f32 %v8416, %v8424
      %v8505 = vadd.f32 %v8497, 0.0001
      %v8506 = vadd.f32 %v8498, 0.0001
      %v8507 = vadd.f32 %v8499, 0.0001
      %v8508 = vadd.f32 %v8500, 0.0001
      %v8509 = vadd.f32 %v8501, 0.0001
      %v8510 = vadd.f32 %v8502, 0.0001
      %v8511 = vadd.f32 %v8503, 0.0001
      %v8512 = vadd.f32 %v8504, 0.0001
      %v8513 = vadd.f32 %v8433, %v8441
      %v8514 = vadd.f32 %v8434, %v8442
      %v8515 = vadd.f32 %v8435, %v8443
      %v8516 = vadd.f32 %v8436, %v8444
      %v8517 = vadd.f32 %v8437, %v8445
      %v8518 = vadd.f32 %v8438, %v8446
      %v8519 = vadd.f32 %v8439, %v8447
      %v8520 = vadd.f32 %v8440, %v8448
      %v8521 = vadd.f32 %v8513, 0.0009
      %v8522 = vadd.f32 %v8514, 0.0009
      %v8523 = vadd.f32 %v8515, 0.0009
      %v8524 = vadd.f32 %v8516, 0.0009
      %v8525 = vadd.f32 %v8517, 0.0009
      %v8526 = vadd.f32 %v8518, 0.0009
      %v8527 = vadd.f32 %v8519, 0.0009
      %v8528 = vadd.f32 %v8520, 0.0009
      %v8529 = vmul.f32 %v8505, %v8521
      %v8530 = vmul.f32 %v8506, %v8522
      %v8531 = vmul.f32 %v8507, %v8523
      %v8532 = vmul.f32 %v8508, %v8524
      %v8533 = vmul.f32 %v8509, %v8525
      %v8534 = vmul.f32 %v8510, %v8526
      %v8535 = vmul.f32 %v8511, %v8527
      %v8536 = vmul.f32 %v8512, %v8528
      %v8537 = vrcp.pop %v8529
      %v8538 = vrcp.pop %v8530
      %v8539 = vrcp.pop %v8531
      %v8540 = vrcp.pop %v8532
      %v8541 = vrcp.pop %v8533
      %v8542 = vrcp.pop %v8534
      %v8543 = vrcp.pop %v8535
      %v8544 = vrcp.pop %v8536
      %v8545 = vmul.f32 %v8529, %v8537
      %v8546 = vmul.f32 %v8530, %v8538
      %v8547 = vmul.f32 %v8531, %v8539
      %v8548 = vmul.f32 %v8532, %v8540
      %v8549 = vmul.f32 %v8533, %v8541
      %v8550 = vmul.f32 %v8534, %v8542
      %v8551 = vmul.f32 %v8535, %v8543
      %v8552 = vmul.f32 %v8536, %v8544
      %v8553 = vsub.f32 2.0, %v8545
      %v8554 = vsub.f32 2.0, %v8546
      %v8555 = vsub.f32 2.0, %v8547
      %v8556 = vsub.f32 2.0, %v8548
      %v8557 = vsub.f32 2.0, %v8549
      %v8558 = vsub.f32 2.0, %v8550
      %v8559 = vsub.f32 2.0, %v8551
      %v8560 = vsub.f32 2.0, %v8552
      %v8561 = vmul.f32 %v8537, %v8553
      %v8562 = vmul.f32 %v8538, %v8554
      %v8563 = vmul.f32 %v8539, %v8555
      %v8564 = vmul.f32 %v8540, %v8556
      %v8565 = vmul.f32 %v8541, %v8557
      %v8566 = vmul.f32 %v8542, %v8558
      %v8567 = vmul.f32 %v8543, %v8559
      %v8568 = vmul.f32 %v8544, %v8560
      %v8569 = vmul.f32 %v8489, %v8561
      %v8570 = vmul.f32 %v8490, %v8562
      %v8571 = vmul.f32 %v8491, %v8563
      %v8572 = vmul.f32 %v8492, %v8564
      %v8573 = vmul.f32 %v8493, %v8565
      %v8574 = vmul.f32 %v8494, %v8566
      %v8575 = vmul.f32 %v8495, %v8567
      %v8576 = vmul.f32 %v8496, %v8568
      %v8577 = vsel %vm249, %v8569, 0.0
      %8578 = vadd.xlane.f32.xlu0 %v8577
      %v8579 = vpop.xlane.xlu0 %8578
      %v8580 = vsel %vm249, %v8570, 0.0
      %8581 = vadd.xlane.f32.xlu0 %v8580
      %v8582 = vpop.xlane.xlu0 %8581
      %v8583 = vsel %vm249, %v8571, 0.0
      %8584 = vadd.xlane.f32.xlu0 %v8583
      %v8585 = vpop.xlane.xlu0 %8584
      %v8586 = vsel %vm249, %v8572, 0.0
      %8587 = vadd.xlane.f32.xlu0 %v8586
      %v8588 = vpop.xlane.xlu0 %8587
      %v8589 = vsel %vm249, %v8573, 0.0
      %8590 = vadd.xlane.f32.xlu0 %v8589
      %v8591 = vpop.xlane.xlu0 %8590
      %v8592 = vsel %vm249, %v8574, 0.0
      %8593 = vadd.xlane.f32.xlu0 %v8592
      %v8594 = vpop.xlane.xlu0 %8593
      %v8595 = vsel %vm249, %v8575, 0.0
      %8596 = vadd.xlane.f32.xlu0 %v8595
      %v8597 = vpop.xlane.xlu0 %8596
      %v8598 = vsel %vm249, %v8576, 0.0
      %8599 = vadd.xlane.f32.xlu0 %v8598
      %v8600 = vpop.xlane.xlu0 %8599
      %vm8601 = vcmask 7168
      %8602 = vst.msk [vmem:[%s221] sm:$0xff] %vm8601, %v8579
      %8603 = vst.msk [vmem:[%s221 + $0x8] sm:$0xff] %vm8601, %v8582
      %8604 = vst.msk [vmem:[%s221 + $0x10] sm:$0xff] %vm8601, %v8585
      %8605 = vst.msk [vmem:[%s221 + $0x18] sm:$0xff] %vm8601, %v8588
      %8606 = vst.msk [vmem:[%s221 + $0x20] sm:$0xff] %vm8601, %v8591
      %8607 = vst.msk [vmem:[%s221 + $0x28] sm:$0xff] %vm8601, %v8594
      %8608 = vst.msk [vmem:[%s221 + $0x30] sm:$0xff] %vm8601, %v8597
      %8609 = vst.msk [vmem:[%s221 + $0x38] sm:$0xff] %vm8601, %v8600
      %s8610 = smul.u32 8, %s15
      %p8611 = scmp.lt.s32.totalorder %s8610, 15
      %s8612 = scalar_select %p8611, %s8610, 15
      %s8613 = smul.addr %s8612, 8
      %s8614 = scalar_lea.vmem %s4, %s8613
      // Predicated region
      $region37: #{tpu_custom_call.1} parent=35 // pred_check
        %p8615 = pneg %p127
      $region38: #{tpu_custom_call.1} parent=35 // pred_check_branch
        %8617 = sbr.rel (%p8615) target = $region40
      $region39: #{tpu_custom_call.1} parent=35 // pred_region
        %s8618 = smul.u32 8, %s15
      $region40: #{tpu_custom_call.1} parent=35 // pred_fallthru
        _
    $region36: #{tpu_custom_call.1} parent=5 // pred_fallthru
      _
    %p8619 = scmp.le.s32.totalorder 2, %s10
    // Predicated region
    $region41: #{tpu_custom_call.1} parent=5 // pred_check
      %p8620 = pneg %p8619
    $region42: #{tpu_custom_call.1} parent=5 // pred_check_branch
      %8622 = sbr.rel (%p8620) target = $region44
    $region43: #{tpu_custom_call.1} parent=5 // pred_region
      %s8623 = ssub.s32 %s10, 2
      // Predicated region
      $region45: #{tpu_custom_call.1} parent=43 // pred_check
        %p8624 = pneg %p133
      $region46: #{tpu_custom_call.1} parent=43 // pred_check_branch
        %8626 = sbr.rel (%p8624) target = $region48
      $region47: #{tpu_custom_call.1} parent=43 // pred_region
        %s8627 = smul.u32 8, %s16
        %p8628 = scmp.lt.s32.totalorder %s8627, 15
        %s8629 = scalar_select %p8628, %s8627, 15
        %s8630 = smul.addr %s8629, 8
        %s8631 = scalar_lea.vmem %s4, %s8630
      $region48: #{tpu_custom_call.1} parent=43 // pred_fallthru
        _
    $region44: #{tpu_custom_call.1} parent=5 // pred_fallthru
      _
  $region6: #{tpu_custom_call.1} parent=0 // loop_footer
    %s14 = sadd.s32 1, %s10
  $region7: #{tpu_custom_call.1} parent=0 // loop_footer_branch
    %9 = sbr.rel target = $region3
  $region8: #{tpu_custom_call.1} parent=0 // loop_exit
    _

</llo_original>
